<compile_context>
chip_gen: v7x
topology: tpu7x:2x2x1
jax: 0.10.0
libtpu: 0.0.40
codegen_flags: <defaults>
</compile_context>

<pallas_src>
import math

import jax
import jax.numpy as jnp
from jax.experimental import pallas as pl
from jax.experimental.pallas import tpu as pltpu

# ---------------- configuration (small, consistent with the module) ----------------
D_MODEL = 32          # layer['d_model']
N_HEAD = 4            # layer['nhead']
HEAD_DIM = D_MODEL // N_HEAD
D_FF = D_MODEL * 4    # d_ff_factor = 4
N_LAYER = 2
EPS = 1e-5
NEG = -1e30           # additive mask value (acts like -inf after softmax)


# ---------------- shared math -------------------------------------------------------
def _layer_norm(z, g, b):
    mu = jnp.mean(z, axis=-1, keepdims=True)
    zc = z - mu
    var = jnp.mean(zc * zc, axis=-1, keepdims=True)
    return zc * jax.lax.rsqrt(var + EPS) * g + b


def _attend(q, k, v, add_mask, wo_t, bo):
    """Multi-head attention core (inside the kernel).

    q: (Lq, D), k/v: (Lk, D), add_mask: (Lq, Lk) additive,
    wo_t: (D, D) pre-transposed out-projection, bo: (1, D).
    Heads are unrolled; each head's output is folded straight into the output
    projection (accumulation) so no lane-concatenate is needed.
    """
    scale = 1.0 / math.sqrt(HEAD_DIM)
    out = None
    for h in range(N_HEAD):
        sl = slice(h * HEAD_DIM, (h + 1) * HEAD_DIM)
        # q_h @ k_h^T without an explicit transpose (contract last dims of both).
        s = jax.lax.dot_general(q[:, sl], k[:, sl], (((1,), (1,)), ((), ())),
                                preferred_element_type=jnp.float32)
        s = s * scale + add_mask
        s = s - jnp.max(s, axis=-1, keepdims=True)
        p = jnp.exp(s)
        p = p * pl.reciprocal(jnp.sum(p, axis=-1, keepdims=True), approx=True)
        oh = jnp.dot(p, v[:, sl], preferred_element_type=jnp.float32)          # (Lq, hd)
        contrib = jnp.dot(oh, wo_t[sl, :], preferred_element_type=jnp.float32)  # (Lq, D)
        out = contrib if out is None else out + contrib
    return out + bo


# ---------------- fused Pallas kernel ------------------------------------------------
def decoder_kernel(x_ref, mem_ref, smask_ref, cmask_ref,
                   sa_w_ref, sa_b_ref, sa_wo_ref, sa_bo_ref,
                   ca_w_ref, ca_b_ref, ca_wo_ref, ca_bo_ref,
                   ff1_w_ref, ff1_b_ref, ff2_w_ref, ff2_b_ref,
                   n1_g_ref, n1_b_ref, n2_g_ref, n2_b_ref, n3_g_ref, n3_b_ref,
                   fn_g_ref, fn_b_ref, out_ref):
    """Full decoder: all layers + final norm, whole batch, one program."""
    x = x_ref[...]                 # (B*Lt, D)
    mem = mem_ref[...]             # (B*Lm, D)
    self_mask = smask_ref[...]     # (B*Lt, B*Lt) block-diag + causal, additive
    cross_mask = cmask_ref[...]    # (B*Lt, B*Lm) block-diag + key-padding, additive

    for l in range(N_LAYER):       # static unroll over layers
        # --- self-attention block: x = x + SA(norm1(x)) ---
        h = _layer_norm(x, n1_g_ref[l], n1_b_ref[l])
        qkv = jnp.dot(h, sa_w_ref[l], preferred_element_type=jnp.float32) + sa_b_ref[l]
        x = x + _attend(qkv[:, :D_MODEL], qkv[:, D_MODEL:2 * D_MODEL],
                        qkv[:, 2 * D_MODEL:], self_mask, sa_wo_ref[l], sa_bo_ref[l])

        # --- cross-attention block: x = x + MHA(norm2(x), memory) ---
        h = _layer_norm(x, n2_g_ref[l], n2_b_ref[l])
        ca_w = ca_w_ref[l]                       # (D, 3D) pre-transposed in_proj
        ca_b = ca_b_ref[l]                       # (1, 3D)
        q = jnp.dot(h, ca_w[:, :D_MODEL], preferred_element_type=jnp.float32) + ca_b[:, :D_MODEL]
        kv = jnp.dot(mem, ca_w[:, D_MODEL:], preferred_element_type=jnp.float32) + ca_b[:, D_MODEL:]
        x = x + _attend(q, kv[:, :D_MODEL], kv[:, D_MODEL:],
                        cross_mask, ca_wo_ref[l], ca_bo_ref[l])

        # --- feed-forward block: x = x + linear2(relu(linear1(norm3(x)))) ---
        h = _layer_norm(x, n3_g_ref[l], n3_b_ref[l])
        ff = jnp.maximum(jnp.dot(h, ff1_w_ref[l], preferred_element_type=jnp.float32)
                         + ff1_b_ref[l], 0.0)
        x = x + jnp.dot(ff, ff2_w_ref[l], preferred_element_type=jnp.float32) + ff2_b_ref[l]

    out_ref[...] = _layer_norm(x, fn_g_ref[...], fn_b_ref[...])


# ---------------- wrapper -------------------------------------------------------------
# (name, transpose_before_stacking)
_STACK_ORDER = (('sa_in_w', True), ('sa_in_b', False), ('sa_out_w', True), ('sa_out_b', False),
                ('ca_in_w', True), ('ca_in_b', False), ('ca_out_w', True), ('ca_out_b', False),
                ('l1_w', True), ('l1_b', False), ('l2_w', True), ('l2_b', False),
                ('n1_g', False), ('n1_b', False), ('n2_g', False), ('n2_b', False),
                ('n3_g', False), ('n3_b', False))


def _stack_params(params):
    """Stack per-layer weights along a leading layer axis, pre-transposing matrices
    so the kernel computes x @ W with no in-kernel transposes."""
    out = []
    for name, transpose in _STACK_ORDER:
        ws = [(lp[name].T if transpose else lp[name]).astype(jnp.float32) for lp in params]
        out.append(jnp.stack(ws, axis=0))
    return out


def transformer_decoder_forced(tgt_lbd, memory_lbd, memory_key_padding_mask, params, final_norm):
    """Equivalent of TransformerDecoder.forced().

    tgt_lbd: [Lt, B, D]   memory_lbd: [Lm, B, D]   memory_key_padding_mask: [B, Lm] bool
    returns: [B, Lt, D]
    """
    Lt, B, D = tgt_lbd.shape
    Lm = memory_lbd.shape[0]

    # batch-major, flattened to (B*L, D) slabs (full sublane occupancy, single program)
    x = jnp.transpose(tgt_lbd, (1, 0, 2)).reshape(B * Lt, D).astype(jnp.float32)
    mem = jnp.transpose(memory_lbd, (1, 0, 2)).reshape(B * Lm, D).astype(jnp.float32)

    # block-diagonal (over batch) + causal additive mask for self-attention
    rt = jnp.arange(B * Lt)
    same_b_self = (rt[:, None] // Lt) == (rt[None, :] // Lt)
    causal = (rt[:, None] % Lt) >= (rt[None, :] % Lt)
    self_mask = jnp.where(same_b_self & causal, 0.0, NEG).astype(jnp.float32)

    # block-diagonal (over batch) + key-padding additive mask for cross-attention
    rm = jnp.arange(B * Lm)
    same_b_cross = (rt[:, None] // Lt) == (rm[None, :] // Lm)
    kpm_flat = jnp.where(memory_key_padding_mask, NEG, 0.0).astype(jnp.float32).reshape(B * Lm)
    cross_mask = jnp.where(same_b_cross, kpm_flat[None, :], NEG).astype(jnp.float32)

    stacked = _stack_params(params)
    fn_g = final_norm['g'].astype(jnp.float32)
    fn_b = final_norm['b'].astype(jnp.float32)

    out = pl.pallas_call(
        decoder_kernel,
        out_shape=jax.ShapeDtypeStruct((B * Lt, D), jnp.float32),
        compiler_params=pltpu.CompilerParams(vmem_limit_bytes=32 * 1024 * 1024),
    )(x, mem, self_mask, cross_mask, *stacked, fn_g, fn_b)

    return out.reshape(B, Lt, D)


# ---------------- deterministic parameter init ---------------------------------------
def init_params(key):
    params = []
    for i in range(N_LAYER):
        ks = jax.random.split(jax.random.fold_in(key, i), 12)

        def w(k, shape, scale=0.05):
            return jax.random.normal(k, shape, jnp.float32) * scale

        lp = dict(
            sa_in_w=w(ks[0], (3 * D_MODEL, D_MODEL)),
            sa_in_b=w(ks[1], (1, 3 * D_MODEL), 0.01),
            sa_out_w=w(ks[2], (D_MODEL, D_MODEL)),
            sa_out_b=w(ks[3], (1, D_MODEL), 0.01),
            ca_in_w=w(ks[4], (3 * D_MODEL, D_MODEL)),
            ca_in_b=w(ks[5], (1, 3 * D_MODEL), 0.01),
            ca_out_w=w(ks[6], (D_MODEL, D_MODEL)),
            ca_out_b=w(ks[7], (1, D_MODEL), 0.01),
            l1_w=w(ks[8], (D_FF, D_MODEL)),
            l1_b=w(ks[9], (1, D_FF), 0.01),
            l2_w=w(ks[10], (D_MODEL, D_FF)),
            l2_b=w(ks[11], (1, D_MODEL), 0.01),
            n1_g=jnp.ones((1, D_MODEL), jnp.float32), n1_b=jnp.zeros((1, D_MODEL), jnp.float32),
            n2_g=jnp.ones((1, D_MODEL), jnp.float32), n2_b=jnp.zeros((1, D_MODEL), jnp.float32),
            n3_g=jnp.ones((1, D_MODEL), jnp.float32), n3_b=jnp.zeros((1, D_MODEL), jnp.float32),
        )
        params.append(lp)
    final_norm = dict(g=jnp.ones((1, D_MODEL), jnp.float32),
                      b=jnp.zeros((1, D_MODEL), jnp.float32))
    return params, final_norm


# ---------------- pure-JAX reference (original weight orientation) --------------------
def _mha_ref(q_in, kv_in, in_w, in_b, out_w, out_b, add_mask):
    q = jnp.dot(q_in, in_w[:D_MODEL].T) + in_b[0, :D_MODEL]
    k = jnp.dot(kv_in, in_w[D_MODEL:2 * D_MODEL].T) + in_b[0, D_MODEL:2 * D_MODEL]
    v = jnp.dot(kv_in, in_w[2 * D_MODEL:].T) + in_b[0, 2 * D_MODEL:]
    scale = 1.0 / math.sqrt(HEAD_DIM)
    outs = []
    for h in range(N_HEAD):
        sl = slice(h * HEAD_DIM, (h + 1) * HEAD_DIM)
        s = jnp.dot(q[:, sl], k[:, sl].T) * scale + add_mask
        p = jax.nn.softmax(s, axis=-1)
        outs.append(jnp.dot(p, v[:, sl]))
    o = jnp.concatenate(outs, axis=-1)
    return jnp.dot(o, out_w.T) + out_b[0]


def ref_forced(tgt_lbd, memory_lbd, mask_bool, params, final_norm):
    x_all = jnp.transpose(tgt_lbd, (1, 0, 2)).astype(jnp.float32)
    mem_all = jnp.transpose(memory_lbd, (1, 0, 2)).astype(jnp.float32)
    Lt = x_all.shape[1]
    ii = jnp.arange(Lt)
    causal = jnp.where(ii[:, None] >= ii[None, :], 0.0, NEG).astype(jnp.float32)
    kpm_add = jnp.where(mask_bool, NEG, 0.0).astype(jnp.float32)
    outs = []
    for b in range(x_all.shape[0]):
        xb, mb, kb = x_all[b], mem_all[b], kpm_add[b:b + 1]
        for lp in params:
            h1 = _layer_norm(xb, lp['n1_g'][0], lp['n1_b'][0])
            xb = xb + _mha_ref(h1, h1, lp['sa_in_w'], lp['sa_in_b'],
                               lp['sa_out_w'], lp['sa_out_b'], causal)
            h2 = _layer_norm(xb, lp['n2_g'][0], lp['n2_b'][0])
            xb = xb + _mha_ref(h2, mb, lp['ca_in_w'], lp['ca_in_b'],
                               lp['ca_out_w'], lp['ca_out_b'], kb)
            h3 = _layer_norm(xb, lp['n3_g'][0], lp['n3_b'][0])
            ff = jnp.maximum(jnp.dot(h3, lp['l1_w'].T) + lp['l1_b'][0], 0.0)
            xb = xb + jnp.dot(ff, lp['l2_w'].T) + lp['l2_b'][0]
        xb = _layer_norm(xb, final_norm['g'][0], final_norm['b'][0])
        outs.append(xb)
    return jnp.stack(outs, axis=0)


# ---------------- main ----------------------------------------------------------------
if __name__ == "__main__":
    B, Lt, Lm = 2, 8, 8
    key = jax.random.PRNGKey(0)
    k_tgt, k_mem, k_par = jax.random.split(key, 3)

    tgt = jax.random.normal(k_tgt, (Lt, B, D_MODEL), jnp.float32)      # [L, B, D]
    memory = jax.random.normal(k_mem, (Lm, B, D_MODEL), jnp.float32)   # [L, B, D]
    # batch 0: no padding; batch 1: last two memory positions padded
    mem_kpm = jnp.array([[False] * Lm,
                         [False] * (Lm - 2) + [True, True]], dtype=jnp.bool_)

    params, final_norm = init_params(k_par)

    out = transformer_decoder_forced(tgt, memory, mem_kpm, params, final_norm)
    out = jax.block_until_ready(out)

    ref = ref_forced(tgt, memory, mem_kpm, params, final_norm)
    assert out.shape == (B, Lt, D_MODEL), out.shape
    max_err = float(jnp.max(jnp.abs(out - ref)))
    assert max_err < 2e-3, max_err

    print("KERNEL_OK")
</pallas_src>

<mosaic_0001>
module attributes {stable_mosaic.version = 11 : i64} {
  func.func @decoder_kernel(%arg0: memref<16x32xf32, #tpu.memory_space<vmem>>, %arg1: memref<16x32xf32, #tpu.memory_space<vmem>>, %arg2: memref<16x16xf32, #tpu.memory_space<vmem>>, %arg3: memref<16x16xf32, #tpu.memory_space<vmem>>, %arg4: memref<2x32x96xf32, #tpu.memory_space<vmem>>, %arg5: memref<2x1x96xf32, #tpu.memory_space<vmem>>, %arg6: memref<2x32x32xf32, #tpu.memory_space<vmem>>, %arg7: memref<2x1x32xf32, #tpu.memory_space<vmem>>, %arg8: memref<2x32x96xf32, #tpu.memory_space<vmem>>, %arg9: memref<2x1x96xf32, #tpu.memory_space<vmem>>, %arg10: memref<2x32x32xf32, #tpu.memory_space<vmem>>, %arg11: memref<2x1x32xf32, #tpu.memory_space<vmem>>, %arg12: memref<2x32x128xf32, #tpu.memory_space<vmem>>, %arg13: memref<2x1x128xf32, #tpu.memory_space<vmem>>, %arg14: memref<2x128x32xf32, #tpu.memory_space<vmem>>, %arg15: memref<2x1x32xf32, #tpu.memory_space<vmem>>, %arg16: memref<2x1x32xf32, #tpu.memory_space<vmem>>, %arg17: memref<2x1x32xf32, #tpu.memory_space<vmem>>, %arg18: memref<2x1x32xf32, #tpu.memory_space<vmem>>, %arg19: memref<2x1x32xf32, #tpu.memory_space<vmem>>, %arg20: memref<2x1x32xf32, #tpu.memory_space<vmem>>, %arg21: memref<2x1x32xf32, #tpu.memory_space<vmem>>, %arg22: memref<1x32xf32, #tpu.memory_space<vmem>>, %arg23: memref<1x32xf32, #tpu.memory_space<vmem>>, %arg24: memref<16x32xf32, #tpu.memory_space<vmem>>) attributes {dimension_semantics = [], scalar_prefetch = 0 : i64, scratch_operands = 0 : i64, tpu.core_type = #tpu.core_type<tc>} {
    %c0 = arith.constant 0 : index
    %c0_0 = arith.constant 0 : index
    %0 = vector.load %arg0[%c0, %c0_0] : memref<16x32xf32, #tpu.memory_space<vmem>>, vector<16x32xf32>
    %c0_1 = arith.constant 0 : index
    %c0_2 = arith.constant 0 : index
    %1 = vector.load %arg1[%c0_1, %c0_2] : memref<16x32xf32, #tpu.memory_space<vmem>>, vector<16x32xf32>
    %c0_3 = arith.constant 0 : index
    %c0_4 = arith.constant 0 : index
    %2 = vector.load %arg2[%c0_3, %c0_4] : memref<16x16xf32, #tpu.memory_space<vmem>>, vector<16x16xf32>
    %c0_5 = arith.constant 0 : index
    %c0_6 = arith.constant 0 : index
    %3 = vector.load %arg3[%c0_5, %c0_6] : memref<16x16xf32, #tpu.memory_space<vmem>>, vector<16x16xf32>
    %c0_7 = arith.constant 0 : index
    %c0_8 = arith.constant 0 : index
    %c0_9 = arith.constant 0 : index
    %4 = vector.load %arg16[%c0_7, %c0_8, %c0_9] : memref<2x1x32xf32, #tpu.memory_space<vmem>>, vector<1x1x32xf32>
    %5 = vector.shape_cast %4 : vector<1x1x32xf32> to vector<1x32xf32>
    %c0_10 = arith.constant 0 : index
    %c0_11 = arith.constant 0 : index
    %c0_12 = arith.constant 0 : index
    %6 = vector.load %arg17[%c0_10, %c0_11, %c0_12] : memref<2x1x32xf32, #tpu.memory_space<vmem>>, vector<1x1x32xf32>
    %7 = vector.shape_cast %6 : vector<1x1x32xf32> to vector<1x32xf32>
    %cst = arith.constant dense<0.000000e+00> : vector<16xf32>
    %8 = vector.multi_reduction <add>, %0, %cst [1] : vector<16x32xf32> to vector<16xf32>
    %9 = vector.shape_cast %8 : vector<16xf32> to vector<16x1xf32>
    %cst_13 = arith.constant 3.200000e+01 : f32
    %10 = vector.broadcast %cst_13 : f32 to vector<16x1xf32>
    %11 = arith.divf %9, %10 : vector<16x1xf32>
    %12 = vector.broadcast %11 : vector<16x1xf32> to vector<16x32xf32>
    %13 = arith.subf %0, %12 : vector<16x32xf32>
    %14 = arith.mulf %13, %13 : vector<16x32xf32>
    %cst_14 = arith.constant dense<0.000000e+00> : vector<16xf32>
    %15 = vector.multi_reduction <add>, %14, %cst_14 [1] : vector<16x32xf32> to vector<16xf32>
    %16 = vector.shape_cast %15 : vector<16xf32> to vector<16x1xf32>
    %cst_15 = arith.constant 3.200000e+01 : f32
    %17 = vector.broadcast %cst_15 : f32 to vector<16x1xf32>
    %18 = arith.divf %16, %17 : vector<16x1xf32>
    %cst_16 = arith.constant 9.99999974E-6 : f32
    %19 = vector.broadcast %cst_16 : f32 to vector<16x1xf32>
    %20 = arith.addf %18, %19 : vector<16x1xf32>
    %21 = math.rsqrt %20 : vector<16x1xf32>
    %22 = vector.broadcast %21 : vector<16x1xf32> to vector<16x32xf32>
    %23 = arith.mulf %13, %22 : vector<16x32xf32>
    %24 = vector.broadcast %5 : vector<1x32xf32> to vector<16x32xf32>
    %25 = arith.mulf %23, %24 : vector<16x32xf32>
    %26 = vector.broadcast %7 : vector<1x32xf32> to vector<16x32xf32>
    %27 = arith.addf %25, %26 : vector<16x32xf32>
    %c0_17 = arith.constant 0 : index
    %c0_18 = arith.constant 0 : index
    %c0_19 = arith.constant 0 : index
    %28 = vector.load %arg4[%c0_17, %c0_18, %c0_19] : memref<2x32x96xf32, #tpu.memory_space<vmem>>, vector<1x32x96xf32>
    %29 = vector.shape_cast %28 : vector<1x32x96xf32> to vector<32x96xf32>
    %cst_20 = arith.constant dense<0.000000e+00> : vector<16x96xf32>
    %30 = tpu.matmul %27, %29, %cst_20 {dimension_numbers = #tpu.dot_dimension_numbers<[1], [0], [0], [1], [0, 0, 1, 1], [], []>} : vector<16x32xf32>, vector<32x96xf32>, vector<16x96xf32> -> vector<16x96xf32>
    %c0_21 = arith.constant 0 : index
    %c0_22 = arith.constant 0 : index
    %c0_23 = arith.constant 0 : index
    %31 = vector.load %arg5[%c0_21, %c0_22, %c0_23] : memref<2x1x96xf32, #tpu.memory_space<vmem>>, vector<1x1x96xf32>
    %32 = vector.shape_cast %31 : vector<1x1x96xf32> to vector<1x96xf32>
    %33 = vector.broadcast %32 : vector<1x96xf32> to vector<16x96xf32>
    %34 = arith.addf %30, %33 : vector<16x96xf32>
    %35 = vector.extract_strided_slice %34 {offsets = [0, 0], sizes = [16, 32], strides = [1, 1]} : vector<16x96xf32> to vector<16x32xf32>
    %36 = vector.extract_strided_slice %34 {offsets = [0, 32], sizes = [16, 32], strides = [1, 1]} : vector<16x96xf32> to vector<16x32xf32>
    %37 = vector.extract_strided_slice %34 {offsets = [0, 64], sizes = [16, 32], strides = [1, 1]} : vector<16x96xf32> to vector<16x32xf32>
    %c0_24 = arith.constant 0 : index
    %c0_25 = arith.constant 0 : index
    %c0_26 = arith.constant 0 : index
    %38 = vector.load %arg6[%c0_24, %c0_25, %c0_26] : memref<2x32x32xf32, #tpu.memory_space<vmem>>, vector<1x32x32xf32>
    %39 = vector.shape_cast %38 : vector<1x32x32xf32> to vector<32x32xf32>
    %c0_27 = arith.constant 0 : index
    %c0_28 = arith.constant 0 : index
    %c0_29 = arith.constant 0 : index
    %40 = vector.load %arg7[%c0_27, %c0_28, %c0_29] : memref<2x1x32xf32, #tpu.memory_space<vmem>>, vector<1x1x32xf32>
    %41 = vector.shape_cast %40 : vector<1x1x32xf32> to vector<1x32xf32>
    %42 = vector.extract_strided_slice %35 {offsets = [0, 0], sizes = [16, 8], strides = [1, 1]} : vector<16x32xf32> to vector<16x8xf32>
    %43 = vector.extract_strided_slice %36 {offsets = [0, 0], sizes = [16, 8], strides = [1, 1]} : vector<16x32xf32> to vector<16x8xf32>
    %cst_30 = arith.constant dense<0.000000e+00> : vector<16x16xf32>
    %44 = tpu.matmul %42, %43, %cst_30 {dimension_numbers = #tpu.dot_dimension_numbers<[1], [1], [0], [0], [0, 0, 1, 0], [], []>} : vector<16x8xf32>, vector<16x8xf32>, vector<16x16xf32> -> vector<16x16xf32>
    %cst_31 = arith.constant 0.353553385 : f32
    %45 = vector.broadcast %cst_31 : f32 to vector<16x16xf32>
    %46 = arith.mulf %44, %45 : vector<16x16xf32>
    %47 = arith.addf %46, %2 : vector<16x16xf32>
    %cst_32 = arith.constant dense<0xFF800000> : vector<16xf32>
    %48 = vector.multi_reduction <maximumf>, %47, %cst_32 [1] : vector<16x16xf32> to vector<16xf32>
    %49 = vector.shape_cast %48 : vector<16xf32> to vector<16x1xf32>
    %50 = vector.broadcast %49 : vector<16x1xf32> to vector<16x16xf32>
    %51 = arith.subf %47, %50 : vector<16x16xf32>
    %52 = math.exp %51 : vector<16x16xf32>
    %cst_33 = arith.constant dense<0.000000e+00> : vector<16xf32>
    %53 = vector.multi_reduction <add>, %52, %cst_33 [1] : vector<16x16xf32> to vector<16xf32>
    %54 = vector.shape_cast %53 : vector<16xf32> to vector<16x1xf32>
    %55 = tpu.reciprocal %54 {approx = true} : vector<16x1xf32> -> vector<16x1xf32>
    %56 = vector.broadcast %55 : vector<16x1xf32> to vector<16x16xf32>
    %57 = arith.mulf %52, %56 : vector<16x16xf32>
    %58 = vector.extract_strided_slice %37 {offsets = [0, 0], sizes = [16, 8], strides = [1, 1]} : vector<16x32xf32> to vector<16x8xf32>
    %cst_34 = arith.constant dense<0.000000e+00> : vector<16x8xf32>
    %59 = tpu.matmul %57, %58, %cst_34 {dimension_numbers = #tpu.dot_dimension_numbers<[1], [0], [0], [1], [0, 0, 1, 1], [], []>} : vector<16x16xf32>, vector<16x8xf32>, vector<16x8xf32> -> vector<16x8xf32>
    %60 = vector.extract_strided_slice %39 {offsets = [0, 0], sizes = [8, 32], strides = [1, 1]} : vector<32x32xf32> to vector<8x32xf32>
    %cst_35 = arith.constant dense<0.000000e+00> : vector<16x32xf32>
    %61 = tpu.matmul %59, %60, %cst_35 {dimension_numbers = #tpu.dot_dimension_numbers<[1], [0], [0], [1], [0, 0, 1, 1], [], []>} : vector<16x8xf32>, vector<8x32xf32>, vector<16x32xf32> -> vector<16x32xf32>
    %62 = vector.extract_strided_slice %35 {offsets = [0, 8], sizes = [16, 8], strides = [1, 1]} : vector<16x32xf32> to vector<16x8xf32>
    %63 = vector.extract_strided_slice %36 {offsets = [0, 8], sizes = [16, 8], strides = [1, 1]} : vector<16x32xf32> to vector<16x8xf32>
    %cst_36 = arith.constant dense<0.000000e+00> : vector<16x16xf32>
    %64 = tpu.matmul %62, %63, %cst_36 {dimension_numbers = #tpu.dot_dimension_numbers<[1], [1], [0], [0], [0, 0, 1, 0], [], []>} : vector<16x8xf32>, vector<16x8xf32>, vector<16x16xf32> -> vector<16x16xf32>
    %cst_37 = arith.constant 0.353553385 : f32
    %65 = vector.broadcast %cst_37 : f32 to vector<16x16xf32>
    %66 = arith.mulf %64, %65 : vector<16x16xf32>
    %67 = arith.addf %66, %2 : vector<16x16xf32>
    %cst_38 = arith.constant dense<0xFF800000> : vector<16xf32>
    %68 = vector.multi_reduction <maximumf>, %67, %cst_38 [1] : vector<16x16xf32> to vector<16xf32>
    %69 = vector.shape_cast %68 : vector<16xf32> to vector<16x1xf32>
    %70 = vector.broadcast %69 : vector<16x1xf32> to vector<16x16xf32>
    %71 = arith.subf %67, %70 : vector<16x16xf32>
    %72 = math.exp %71 : vector<16x16xf32>
    %cst_39 = arith.constant dense<0.000000e+00> : vector<16xf32>
    %73 = vector.multi_reduction <add>, %72, %cst_39 [1] : vector<16x16xf32> to vector<16xf32>
    %74 = vector.shape_cast %73 : vector<16xf32> to vector<16x1xf32>
    %75 = tpu.reciprocal %74 {approx = true} : vector<16x1xf32> -> vector<16x1xf32>
    %76 = vector.broadcast %75 : vector<16x1xf32> to vector<16x16xf32>
    %77 = arith.mulf %72, %76 : vector<16x16xf32>
    %78 = vector.extract_strided_slice %37 {offsets = [0, 8], sizes = [16, 8], strides = [1, 1]} : vector<16x32xf32> to vector<16x8xf32>
    %cst_40 = arith.constant dense<0.000000e+00> : vector<16x8xf32>
    %79 = tpu.matmul %77, %78, %cst_40 {dimension_numbers = #tpu.dot_dimension_numbers<[1], [0], [0], [1], [0, 0, 1, 1], [], []>} : vector<16x16xf32>, vector<16x8xf32>, vector<16x8xf32> -> vector<16x8xf32>
    %80 = vector.extract_strided_slice %39 {offsets = [8, 0], sizes = [8, 32], strides = [1, 1]} : vector<32x32xf32> to vector<8x32xf32>
    %cst_41 = arith.constant dense<0.000000e+00> : vector<16x32xf32>
    %81 = tpu.matmul %79, %80, %cst_41 {dimension_numbers = #tpu.dot_dimension_numbers<[1], [0], [0], [1], [0, 0, 1, 1], [], []>} : vector<16x8xf32>, vector<8x32xf32>, vector<16x32xf32> -> vector<16x32xf32>
    %82 = arith.addf %61, %81 : vector<16x32xf32>
    %83 = vector.extract_strided_slice %35 {offsets = [0, 16], sizes = [16, 8], strides = [1, 1]} : vector<16x32xf32> to vector<16x8xf32>
    %84 = vector.extract_strided_slice %36 {offsets = [0, 16], sizes = [16, 8], strides = [1, 1]} : vector<16x32xf32> to vector<16x8xf32>
    %cst_42 = arith.constant dense<0.000000e+00> : vector<16x16xf32>
    %85 = tpu.matmul %83, %84, %cst_42 {dimension_numbers = #tpu.dot_dimension_numbers<[1], [1], [0], [0], [0, 0, 1, 0], [], []>} : vector<16x8xf32>, vector<16x8xf32>, vector<16x16xf32> -> vector<16x16xf32>
    %cst_43 = arith.constant 0.353553385 : f32
    %86 = vector.broadcast %cst_43 : f32 to vector<16x16xf32>
    %87 = arith.mulf %85, %86 : vector<16x16xf32>
    %88 = arith.addf %87, %2 : vector<16x16xf32>
    %cst_44 = arith.constant dense<0xFF800000> : vector<16xf32>
    %89 = vector.multi_reduction <maximumf>, %88, %cst_44 [1] : vector<16x16xf32> to vector<16xf32>
    %90 = vector.shape_cast %89 : vector<16xf32> to vector<16x1xf32>
    %91 = vector.broadcast %90 : vector<16x1xf32> to vector<16x16xf32>
    %92 = arith.subf %88, %91 : vector<16x16xf32>
    %93 = math.exp %92 : vector<16x16xf32>
    %cst_45 = arith.constant dense<0.000000e+00> : vector<16xf32>
    %94 = vector.multi_reduction <add>, %93, %cst_45 [1] : vector<16x16xf32> to vector<16xf32>
    %95 = vector.shape_cast %94 : vector<16xf32> to vector<16x1xf32>
    %96 = tpu.reciprocal %95 {approx = true} : vector<16x1xf32> -> vector<16x1xf32>
    %97 = vector.broadcast %96 : vector<16x1xf32> to vector<16x16xf32>
    %98 = arith.mulf %93, %97 : vector<16x16xf32>
    %99 = vector.extract_strided_slice %37 {offsets = [0, 16], sizes = [16, 8], strides = [1, 1]} : vector<16x32xf32> to vector<16x8xf32>
    %cst_46 = arith.constant dense<0.000000e+00> : vector<16x8xf32>
    %100 = tpu.matmul %98, %99, %cst_46 {dimension_numbers = #tpu.dot_dimension_numbers<[1], [0], [0], [1], [0, 0, 1, 1], [], []>} : vector<16x16xf32>, vector<16x8xf32>, vector<16x8xf32> -> vector<16x8xf32>
    %101 = vector.extract_strided_slice %39 {offsets = [16, 0], sizes = [8, 32], strides = [1, 1]} : vector<32x32xf32> to vector<8x32xf32>
    %cst_47 = arith.constant dense<0.000000e+00> : vector<16x32xf32>
    %102 = tpu.matmul %100, %101, %cst_47 {dimension_numbers = #tpu.dot_dimension_numbers<[1], [0], [0], [1], [0, 0, 1, 1], [], []>} : vector<16x8xf32>, vector<8x32xf32>, vector<16x32xf32> -> vector<16x32xf32>
    %103 = arith.addf %82, %102 : vector<16x32xf32>
    %104 = vector.extract_strided_slice %35 {offsets = [0, 24], sizes = [16, 8], strides = [1, 1]} : vector<16x32xf32> to vector<16x8xf32>
    %105 = vector.extract_strided_slice %36 {offsets = [0, 24], sizes = [16, 8], strides = [1, 1]} : vector<16x32xf32> to vector<16x8xf32>
    %cst_48 = arith.constant dense<0.000000e+00> : vector<16x16xf32>
    %106 = tpu.matmul %104, %105, %cst_48 {dimension_numbers = #tpu.dot_dimension_numbers<[1], [1], [0], [0], [0, 0, 1, 0], [], []>} : vector<16x8xf32>, vector<16x8xf32>, vector<16x16xf32> -> vector<16x16xf32>
    %cst_49 = arith.constant 0.353553385 : f32
    %107 = vector.broadcast %cst_49 : f32 to vector<16x16xf32>
    %108 = arith.mulf %106, %107 : vector<16x16xf32>
    %109 = arith.addf %108, %2 : vector<16x16xf32>
    %cst_50 = arith.constant dense<0xFF800000> : vector<16xf32>
    %110 = vector.multi_reduction <maximumf>, %109, %cst_50 [1] : vector<16x16xf32> to vector<16xf32>
    %111 = vector.shape_cast %110 : vector<16xf32> to vector<16x1xf32>
    %112 = vector.broadcast %111 : vector<16x1xf32> to vector<16x16xf32>
    %113 = arith.subf %109, %112 : vector<16x16xf32>
    %114 = math.exp %113 : vector<16x16xf32>
    %cst_51 = arith.constant dense<0.000000e+00> : vector<16xf32>
    %115 = vector.multi_reduction <add>, %114, %cst_51 [1] : vector<16x16xf32> to vector<16xf32>
    %116 = vector.shape_cast %115 : vector<16xf32> to vector<16x1xf32>
    %117 = tpu.reciprocal %116 {approx = true} : vector<16x1xf32> -> vector<16x1xf32>
    %118 = vector.broadcast %117 : vector<16x1xf32> to vector<16x16xf32>
    %119 = arith.mulf %114, %118 : vector<16x16xf32>
    %120 = vector.extract_strided_slice %37 {offsets = [0, 24], sizes = [16, 8], strides = [1, 1]} : vector<16x32xf32> to vector<16x8xf32>
    %cst_52 = arith.constant dense<0.000000e+00> : vector<16x8xf32>
    %121 = tpu.matmul %119, %120, %cst_52 {dimension_numbers = #tpu.dot_dimension_numbers<[1], [0], [0], [1], [0, 0, 1, 1], [], []>} : vector<16x16xf32>, vector<16x8xf32>, vector<16x8xf32> -> vector<16x8xf32>
    %122 = vector.extract_strided_slice %39 {offsets = [24, 0], sizes = [8, 32], strides = [1, 1]} : vector<32x32xf32> to vector<8x32xf32>
    %cst_53 = arith.constant dense<0.000000e+00> : vector<16x32xf32>
    %123 = tpu.matmul %121, %122, %cst_53 {dimension_numbers = #tpu.dot_dimension_numbers<[1], [0], [0], [1], [0, 0, 1, 1], [], []>} : vector<16x8xf32>, vector<8x32xf32>, vector<16x32xf32> -> vector<16x32xf32>
    %124 = arith.addf %103, %123 : vector<16x32xf32>
    %125 = vector.broadcast %41 : vector<1x32xf32> to vector<16x32xf32>
    %126 = arith.addf %124, %125 : vector<16x32xf32>
    %127 = arith.addf %0, %126 : vector<16x32xf32>
    %c0_54 = arith.constant 0 : index
    %c0_55 = arith.constant 0 : index
    %c0_56 = arith.constant 0 : index
    %128 = vector.load %arg18[%c0_54, %c0_55, %c0_56] : memref<2x1x32xf32, #tpu.memory_space<vmem>>, vector<1x1x32xf32>
    %129 = vector.shape_cast %128 : vector<1x1x32xf32> to vector<1x32xf32>
    %c0_57 = arith.constant 0 : index
    %c0_58 = arith.constant 0 : index
    %c0_59 = arith.constant 0 : index
    %130 = vector.load %arg19[%c0_57, %c0_58, %c0_59] : memref<2x1x32xf32, #tpu.memory_space<vmem>>, vector<1x1x32xf32>
    %131 = vector.shape_cast %130 : vector<1x1x32xf32> to vector<1x32xf32>
    %cst_60 = arith.constant dense<0.000000e+00> : vector<16xf32>
    %132 = vector.multi_reduction <add>, %127, %cst_60 [1] : vector<16x32xf32> to vector<16xf32>
    %133 = vector.shape_cast %132 : vector<16xf32> to vector<16x1xf32>
    %cst_61 = arith.constant 3.200000e+01 : f32
    %134 = vector.broadcast %cst_61 : f32 to vector<16x1xf32>
    %135 = arith.divf %133, %134 : vector<16x1xf32>
    %136 = vector.broadcast %135 : vector<16x1xf32> to vector<16x32xf32>
    %137 = arith.subf %127, %136 : vector<16x32xf32>
    %138 = arith.mulf %137, %137 : vector<16x32xf32>
    %cst_62 = arith.constant dense<0.000000e+00> : vector<16xf32>
    %139 = vector.multi_reduction <add>, %138, %cst_62 [1] : vector<16x32xf32> to vector<16xf32>
    %140 = vector.shape_cast %139 : vector<16xf32> to vector<16x1xf32>
    %cst_63 = arith.constant 3.200000e+01 : f32
    %141 = vector.broadcast %cst_63 : f32 to vector<16x1xf32>
    %142 = arith.divf %140, %141 : vector<16x1xf32>
    %cst_64 = arith.constant 9.99999974E-6 : f32
    %143 = vector.broadcast %cst_64 : f32 to vector<16x1xf32>
    %144 = arith.addf %142, %143 : vector<16x1xf32>
    %145 = math.rsqrt %144 : vector<16x1xf32>
    %146 = vector.broadcast %145 : vector<16x1xf32> to vector<16x32xf32>
    %147 = arith.mulf %137, %146 : vector<16x32xf32>
    %148 = vector.broadcast %129 : vector<1x32xf32> to vector<16x32xf32>
    %149 = arith.mulf %147, %148 : vector<16x32xf32>
    %150 = vector.broadcast %131 : vector<1x32xf32> to vector<16x32xf32>
    %151 = arith.addf %149, %150 : vector<16x32xf32>
    %c0_65 = arith.constant 0 : index
    %c0_66 = arith.constant 0 : index
    %c0_67 = arith.constant 0 : index
    %152 = vector.load %arg8[%c0_65, %c0_66, %c0_67] : memref<2x32x96xf32, #tpu.memory_space<vmem>>, vector<1x32x96xf32>
    %153 = vector.shape_cast %152 : vector<1x32x96xf32> to vector<32x96xf32>
    %c0_68 = arith.constant 0 : index
    %c0_69 = arith.constant 0 : index
    %c0_70 = arith.constant 0 : index
    %154 = vector.load %arg9[%c0_68, %c0_69, %c0_70] : memref<2x1x96xf32, #tpu.memory_space<vmem>>, vector<1x1x96xf32>
    %155 = vector.shape_cast %154 : vector<1x1x96xf32> to vector<1x96xf32>
    %156 = vector.extract_strided_slice %153 {offsets = [0, 0], sizes = [32, 32], strides = [1, 1]} : vector<32x96xf32> to vector<32x32xf32>
    %cst_71 = arith.constant dense<0.000000e+00> : vector<16x32xf32>
    %157 = tpu.matmul %151, %156, %cst_71 {dimension_numbers = #tpu.dot_dimension_numbers<[1], [0], [0], [1], [0, 0, 1, 1], [], []>} : vector<16x32xf32>, vector<32x32xf32>, vector<16x32xf32> -> vector<16x32xf32>
    %158 = vector.extract_strided_slice %155 {offsets = [0, 0], sizes = [1, 32], strides = [1, 1]} : vector<1x96xf32> to vector<1x32xf32>
    %159 = vector.broadcast %158 : vector<1x32xf32> to vector<16x32xf32>
    %160 = arith.addf %157, %159 : vector<16x32xf32>
    %161 = vector.extract_strided_slice %153 {offsets = [0, 32], sizes = [32, 64], strides = [1, 1]} : vector<32x96xf32> to vector<32x64xf32>
    %cst_72 = arith.constant dense<0.000000e+00> : vector<16x64xf32>
    %162 = tpu.matmul %1, %161, %cst_72 {dimension_numbers = #tpu.dot_dimension_numbers<[1], [0], [0], [1], [0, 0, 1, 1], [], []>} : vector<16x32xf32>, vector<32x64xf32>, vector<16x64xf32> -> vector<16x64xf32>
    %163 = vector.extract_strided_slice %155 {offsets = [0, 32], sizes = [1, 64], strides = [1, 1]} : vector<1x96xf32> to vector<1x64xf32>
    %164 = vector.broadcast %163 : vector<1x64xf32> to vector<16x64xf32>
    %165 = arith.addf %162, %164 : vector<16x64xf32>
    %166 = vector.extract_strided_slice %165 {offsets = [0, 0], sizes = [16, 32], strides = [1, 1]} : vector<16x64xf32> to vector<16x32xf32>
    %167 = vector.extract_strided_slice %165 {offsets = [0, 32], sizes = [16, 32], strides = [1, 1]} : vector<16x64xf32> to vector<16x32xf32>
    %c0_73 = arith.constant 0 : index
    %c0_74 = arith.constant 0 : index
    %c0_75 = arith.constant 0 : index
    %168 = vector.load %arg10[%c0_73, %c0_74, %c0_75] : memref<2x32x32xf32, #tpu.memory_space<vmem>>, vector<1x32x32xf32>
    %169 = vector.shape_cast %168 : vector<1x32x32xf32> to vector<32x32xf32>
    %c0_76 = arith.constant 0 : index
    %c0_77 = arith.constant 0 : index
    %c0_78 = arith.constant 0 : index
    %170 = vector.load %arg11[%c0_76, %c0_77, %c0_78] : memref<2x1x32xf32, #tpu.memory_space<vmem>>, vector<1x1x32xf32>
    %171 = vector.shape_cast %170 : vector<1x1x32xf32> to vector<1x32xf32>
    %172 = vector.extract_strided_slice %160 {offsets = [0, 0], sizes = [16, 8], strides = [1, 1]} : vector<16x32xf32> to vector<16x8xf32>
    %173 = vector.extract_strided_slice %166 {offsets = [0, 0], sizes = [16, 8], strides = [1, 1]} : vector<16x32xf32> to vector<16x8xf32>
    %cst_79 = arith.constant dense<0.000000e+00> : vector<16x16xf32>
    %174 = tpu.matmul %172, %173, %cst_79 {dimension_numbers = #tpu.dot_dimension_numbers<[1], [1], [0], [0], [0, 0, 1, 0], [], []>} : vector<16x8xf32>, vector<16x8xf32>, vector<16x16xf32> -> vector<16x16xf32>
    %cst_80 = arith.constant 0.353553385 : f32
    %175 = vector.broadcast %cst_80 : f32 to vector<16x16xf32>
    %176 = arith.mulf %174, %175 : vector<16x16xf32>
    %177 = arith.addf %176, %3 : vector<16x16xf32>
    %cst_81 = arith.constant dense<0xFF800000> : vector<16xf32>
    %178 = vector.multi_reduction <maximumf>, %177, %cst_81 [1] : vector<16x16xf32> to vector<16xf32>
    %179 = vector.shape_cast %178 : vector<16xf32> to vector<16x1xf32>
    %180 = vector.broadcast %179 : vector<16x1xf32> to vector<16x16xf32>
    %181 = arith.subf %177, %180 : vector<16x16xf32>
    %182 = math.exp %181 : vector<16x16xf32>
    %cst_82 = arith.constant dense<0.000000e+00> : vector<16xf32>
    %183 = vector.multi_reduction <add>, %182, %cst_82 [1] : vector<16x16xf32> to vector<16xf32>
    %184 = vector.shape_cast %183 : vector<16xf32> to vector<16x1xf32>
    %185 = tpu.reciprocal %184 {approx = true} : vector<16x1xf32> -> vector<16x1xf32>
    %186 = vector.broadcast %185 : vector<16x1xf32> to vector<16x16xf32>
    %187 = arith.mulf %182, %186 : vector<16x16xf32>
    %188 = vector.extract_strided_slice %167 {offsets = [0, 0], sizes = [16, 8], strides = [1, 1]} : vector<16x32xf32> to vector<16x8xf32>
    %cst_83 = arith.constant dense<0.000000e+00> : vector<16x8xf32>
    %189 = tpu.matmul %187, %188, %cst_83 {dimension_numbers = #tpu.dot_dimension_numbers<[1], [0], [0], [1], [0, 0, 1, 1], [], []>} : vector<16x16xf32>, vector<16x8xf32>, vector<16x8xf32> -> vector<16x8xf32>
    %190 = vector.extract_strided_slice %169 {offsets = [0, 0], sizes = [8, 32], strides = [1, 1]} : vector<32x32xf32> to vector<8x32xf32>
    %cst_84 = arith.constant dense<0.000000e+00> : vector<16x32xf32>
    %191 = tpu.matmul %189, %190, %cst_84 {dimension_numbers = #tpu.dot_dimension_numbers<[1], [0], [0], [1], [0, 0, 1, 1], [], []>} : vector<16x8xf32>, vector<8x32xf32>, vector<16x32xf32> -> vector<16x32xf32>
    %192 = vector.extract_strided_slice %160 {offsets = [0, 8], sizes = [16, 8], strides = [1, 1]} : vector<16x32xf32> to vector<16x8xf32>
    %193 = vector.extract_strided_slice %166 {offsets = [0, 8], sizes = [16, 8], strides = [1, 1]} : vector<16x32xf32> to vector<16x8xf32>
    %cst_85 = arith.constant dense<0.000000e+00> : vector<16x16xf32>
    %194 = tpu.matmul %192, %193, %cst_85 {dimension_numbers = #tpu.dot_dimension_numbers<[1], [1], [0], [0], [0, 0, 1, 0], [], []>} : vector<16x8xf32>, vector<16x8xf32>, vector<16x16xf32> -> vector<16x16xf32>
    %cst_86 = arith.constant 0.353553385 : f32
    %195 = vector.broadcast %cst_86 : f32 to vector<16x16xf32>
    %196 = arith.mulf %194, %195 : vector<16x16xf32>
    %197 = arith.addf %196, %3 : vector<16x16xf32>
    %cst_87 = arith.constant dense<0xFF800000> : vector<16xf32>
    %198 = vector.multi_reduction <maximumf>, %197, %cst_87 [1] : vector<16x16xf32> to vector<16xf32>
    %199 = vector.shape_cast %198 : vector<16xf32> to vector<16x1xf32>
    %200 = vector.broadcast %199 : vector<16x1xf32> to vector<16x16xf32>
    %201 = arith.subf %197, %200 : vector<16x16xf32>
    %202 = math.exp %201 : vector<16x16xf32>
    %cst_88 = arith.constant dense<0.000000e+00> : vector<16xf32>
    %203 = vector.multi_reduction <add>, %202, %cst_88 [1] : vector<16x16xf32> to vector<16xf32>
    %204 = vector.shape_cast %203 : vector<16xf32> to vector<16x1xf32>
    %205 = tpu.reciprocal %204 {approx = true} : vector<16x1xf32> -> vector<16x1xf32>
    %206 = vector.broadcast %205 : vector<16x1xf32> to vector<16x16xf32>
    %207 = arith.mulf %202, %206 : vector<16x16xf32>
    %208 = vector.extract_strided_slice %167 {offsets = [0, 8], sizes = [16, 8], strides = [1, 1]} : vector<16x32xf32> to vector<16x8xf32>
    %cst_89 = arith.constant dense<0.000000e+00> : vector<16x8xf32>
    %209 = tpu.matmul %207, %208, %cst_89 {dimension_numbers = #tpu.dot_dimension_numbers<[1], [0], [0], [1], [0, 0, 1, 1], [], []>} : vector<16x16xf32>, vector<16x8xf32>, vector<16x8xf32> -> vector<16x8xf32>
    %210 = vector.extract_strided_slice %169 {offsets = [8, 0], sizes = [8, 32], strides = [1, 1]} : vector<32x32xf32> to vector<8x32xf32>
    %cst_90 = arith.constant dense<0.000000e+00> : vector<16x32xf32>
    %211 = tpu.matmul %209, %210, %cst_90 {dimension_numbers = #tpu.dot_dimension_numbers<[1], [0], [0], [1], [0, 0, 1, 1], [], []>} : vector<16x8xf32>, vector<8x32xf32>, vector<16x32xf32> -> vector<16x32xf32>
    %212 = arith.addf %191, %211 : vector<16x32xf32>
    %213 = vector.extract_strided_slice %160 {offsets = [0, 16], sizes = [16, 8], strides = [1, 1]} : vector<16x32xf32> to vector<16x8xf32>
    %214 = vector.extract_strided_slice %166 {offsets = [0, 16], sizes = [16, 8], strides = [1, 1]} : vector<16x32xf32> to vector<16x8xf32>
    %cst_91 = arith.constant dense<0.000000e+00> : vector<16x16xf32>
    %215 = tpu.matmul %213, %214, %cst_91 {dimension_numbers = #tpu.dot_dimension_numbers<[1], [1], [0], [0], [0, 0, 1, 0], [], []>} : vector<16x8xf32>, vector<16x8xf32>, vector<16x16xf32> -> vector<16x16xf32>
    %cst_92 = arith.constant 0.353553385 : f32
    %216 = vector.broadcast %cst_92 : f32 to vector<16x16xf32>
    %217 = arith.mulf %215, %216 : vector<16x16xf32>
    %218 = arith.addf %217, %3 : vector<16x16xf32>
    %cst_93 = arith.constant dense<0xFF800000> : vector<16xf32>
    %219 = vector.multi_reduction <maximumf>, %218, %cst_93 [1] : vector<16x16xf32> to vector<16xf32>
    %220 = vector.shape_cast %219 : vector<16xf32> to vector<16x1xf32>
    %221 = vector.broadcast %220 : vector<16x1xf32> to vector<16x16xf32>
    %222 = arith.subf %218, %221 : vector<16x16xf32>
    %223 = math.exp %222 : vector<16x16xf32>
    %cst_94 = arith.constant dense<0.000000e+00> : vector<16xf32>
    %224 = vector.multi_reduction <add>, %223, %cst_94 [1] : vector<16x16xf32> to vector<16xf32>
    %225 = vector.shape_cast %224 : vector<16xf32> to vector<16x1xf32>
    %226 = tpu.reciprocal %225 {approx = true} : vector<16x1xf32> -> vector<16x1xf32>
    %227 = vector.broadcast %226 : vector<16x1xf32> to vector<16x16xf32>
    %228 = arith.mulf %223, %227 : vector<16x16xf32>
    %229 = vector.extract_strided_slice %167 {offsets = [0, 16], sizes = [16, 8], strides = [1, 1]} : vector<16x32xf32> to vector<16x8xf32>
    %cst_95 = arith.constant dense<0.000000e+00> : vector<16x8xf32>
    %230 = tpu.matmul %228, %229, %cst_95 {dimension_numbers = #tpu.dot_dimension_numbers<[1], [0], [0], [1], [0, 0, 1, 1], [], []>} : vector<16x16xf32>, vector<16x8xf32>, vector<16x8xf32> -> vector<16x8xf32>
    %231 = vector.extract_strided_slice %169 {offsets = [16, 0], sizes = [8, 32], strides = [1, 1]} : vector<32x32xf32> to vector<8x32xf32>
    %cst_96 = arith.constant dense<0.000000e+00> : vector<16x32xf32>
    %232 = tpu.matmul %230, %231, %cst_96 {dimension_numbers = #tpu.dot_dimension_numbers<[1], [0], [0], [1], [0, 0, 1, 1], [], []>} : vector<16x8xf32>, vector<8x32xf32>, vector<16x32xf32> -> vector<16x32xf32>
    %233 = arith.addf %212, %232 : vector<16x32xf32>
    %234 = vector.extract_strided_slice %160 {offsets = [0, 24], sizes = [16, 8], strides = [1, 1]} : vector<16x32xf32> to vector<16x8xf32>
    %235 = vector.extract_strided_slice %166 {offsets = [0, 24], sizes = [16, 8], strides = [1, 1]} : vector<16x32xf32> to vector<16x8xf32>
    %cst_97 = arith.constant dense<0.000000e+00> : vector<16x16xf32>
    %236 = tpu.matmul %234, %235, %cst_97 {dimension_numbers = #tpu.dot_dimension_numbers<[1], [1], [0], [0], [0, 0, 1, 0], [], []>} : vector<16x8xf32>, vector<16x8xf32>, vector<16x16xf32> -> vector<16x16xf32>
    %cst_98 = arith.constant 0.353553385 : f32
    %237 = vector.broadcast %cst_98 : f32 to vector<16x16xf32>
    %238 = arith.mulf %236, %237 : vector<16x16xf32>
    %239 = arith.addf %238, %3 : vector<16x16xf32>
    %cst_99 = arith.constant dense<0xFF800000> : vector<16xf32>
    %240 = vector.multi_reduction <maximumf>, %239, %cst_99 [1] : vector<16x16xf32> to vector<16xf32>
    %241 = vector.shape_cast %240 : vector<16xf32> to vector<16x1xf32>
    %242 = vector.broadcast %241 : vector<16x1xf32> to vector<16x16xf32>
    %243 = arith.subf %239, %242 : vector<16x16xf32>
    %244 = math.exp %243 : vector<16x16xf32>
    %cst_100 = arith.constant dense<0.000000e+00> : vector<16xf32>
    %245 = vector.multi_reduction <add>, %244, %cst_100 [1] : vector<16x16xf32> to vector<16xf32>
    %246 = vector.shape_cast %245 : vector<16xf32> to vector<16x1xf32>
    %247 = tpu.reciprocal %246 {approx = true} : vector<16x1xf32> -> vector<16x1xf32>
    %248 = vector.broadcast %247 : vector<16x1xf32> to vector<16x16xf32>
    %249 = arith.mulf %244, %248 : vector<16x16xf32>
    %250 = vector.extract_strided_slice %167 {offsets = [0, 24], sizes = [16, 8], strides = [1, 1]} : vector<16x32xf32> to vector<16x8xf32>
    %cst_101 = arith.constant dense<0.000000e+00> : vector<16x8xf32>
    %251 = tpu.matmul %249, %250, %cst_101 {dimension_numbers = #tpu.dot_dimension_numbers<[1], [0], [0], [1], [0, 0, 1, 1], [], []>} : vector<16x16xf32>, vector<16x8xf32>, vector<16x8xf32> -> vector<16x8xf32>
    %252 = vector.extract_strided_slice %169 {offsets = [24, 0], sizes = [8, 32], strides = [1, 1]} : vector<32x32xf32> to vector<8x32xf32>
    %cst_102 = arith.constant dense<0.000000e+00> : vector<16x32xf32>
    %253 = tpu.matmul %251, %252, %cst_102 {dimension_numbers = #tpu.dot_dimension_numbers<[1], [0], [0], [1], [0, 0, 1, 1], [], []>} : vector<16x8xf32>, vector<8x32xf32>, vector<16x32xf32> -> vector<16x32xf32>
    %254 = arith.addf %233, %253 : vector<16x32xf32>
    %255 = vector.broadcast %171 : vector<1x32xf32> to vector<16x32xf32>
    %256 = arith.addf %254, %255 : vector<16x32xf32>
    %257 = arith.addf %127, %256 : vector<16x32xf32>
    %c0_103 = arith.constant 0 : index
    %c0_104 = arith.constant 0 : index
    %c0_105 = arith.constant 0 : index
    %258 = vector.load %arg20[%c0_103, %c0_104, %c0_105] : memref<2x1x32xf32, #tpu.memory_space<vmem>>, vector<1x1x32xf32>
    %259 = vector.shape_cast %258 : vector<1x1x32xf32> to vector<1x32xf32>
    %c0_106 = arith.constant 0 : index
    %c0_107 = arith.constant 0 : index
    %c0_108 = arith.constant 0 : index
    %260 = vector.load %arg21[%c0_106, %c0_107, %c0_108] : memref<2x1x32xf32, #tpu.memory_space<vmem>>, vector<1x1x32xf32>
    %261 = vector.shape_cast %260 : vector<1x1x32xf32> to vector<1x32xf32>
    %cst_109 = arith.constant dense<0.000000e+00> : vector<16xf32>
    %262 = vector.multi_reduction <add>, %257, %cst_109 [1] : vector<16x32xf32> to vector<16xf32>
    %263 = vector.shape_cast %262 : vector<16xf32> to vector<16x1xf32>
    %cst_110 = arith.constant 3.200000e+01 : f32
    %264 = vector.broadcast %cst_110 : f32 to vector<16x1xf32>
    %265 = arith.divf %263, %264 : vector<16x1xf32>
    %266 = vector.broadcast %265 : vector<16x1xf32> to vector<16x32xf32>
    %267 = arith.subf %257, %266 : vector<16x32xf32>
    %268 = arith.mulf %267, %267 : vector<16x32xf32>
    %cst_111 = arith.constant dense<0.000000e+00> : vector<16xf32>
    %269 = vector.multi_reduction <add>, %268, %cst_111 [1] : vector<16x32xf32> to vector<16xf32>
    %270 = vector.shape_cast %269 : vector<16xf32> to vector<16x1xf32>
    %cst_112 = arith.constant 3.200000e+01 : f32
    %271 = vector.broadcast %cst_112 : f32 to vector<16x1xf32>
    %272 = arith.divf %270, %271 : vector<16x1xf32>
    %cst_113 = arith.constant 9.99999974E-6 : f32
    %273 = vector.broadcast %cst_113 : f32 to vector<16x1xf32>
    %274 = arith.addf %272, %273 : vector<16x1xf32>
    %275 = math.rsqrt %274 : vector<16x1xf32>
    %276 = vector.broadcast %275 : vector<16x1xf32> to vector<16x32xf32>
    %277 = arith.mulf %267, %276 : vector<16x32xf32>
    %278 = vector.broadcast %259 : vector<1x32xf32> to vector<16x32xf32>
    %279 = arith.mulf %277, %278 : vector<16x32xf32>
    %280 = vector.broadcast %261 : vector<1x32xf32> to vector<16x32xf32>
    %281 = arith.addf %279, %280 : vector<16x32xf32>
    %c0_114 = arith.constant 0 : index
    %c0_115 = arith.constant 0 : index
    %c0_116 = arith.constant 0 : index
    %282 = vector.load %arg12[%c0_114, %c0_115, %c0_116] : memref<2x32x128xf32, #tpu.memory_space<vmem>>, vector<1x32x128xf32>
    %283 = vector.shape_cast %282 : vector<1x32x128xf32> to vector<32x128xf32>
    %cst_117 = arith.constant dense<0.000000e+00> : vector<16x128xf32>
    %284 = tpu.matmul %281, %283, %cst_117 {dimension_numbers = #tpu.dot_dimension_numbers<[1], [0], [0], [1], [0, 0, 1, 1], [], []>} : vector<16x32xf32>, vector<32x128xf32>, vector<16x128xf32> -> vector<16x128xf32>
    %c0_118 = arith.constant 0 : index
    %c0_119 = arith.constant 0 : index
    %c0_120 = arith.constant 0 : index
    %285 = vector.load %arg13[%c0_118, %c0_119, %c0_120] : memref<2x1x128xf32, #tpu.memory_space<vmem>>, vector<1x1x128xf32>
    %286 = vector.shape_cast %285 : vector<1x1x128xf32> to vector<1x128xf32>
    %287 = vector.broadcast %286 : vector<1x128xf32> to vector<16x128xf32>
    %288 = arith.addf %284, %287 : vector<16x128xf32>
    %cst_121 = arith.constant 0.000000e+00 : f32
    %289 = vector.broadcast %cst_121 : f32 to vector<16x128xf32>
    %290 = arith.maximumf %288, %289 : vector<16x128xf32>
    %c0_122 = arith.constant 0 : index
    %c0_123 = arith.constant 0 : index
    %c0_124 = arith.constant 0 : index
    %291 = vector.load %arg14[%c0_122, %c0_123, %c0_124] : memref<2x128x32xf32, #tpu.memory_space<vmem>>, vector<1x128x32xf32>
    %292 = vector.shape_cast %291 : vector<1x128x32xf32> to vector<128x32xf32>
    %cst_125 = arith.constant dense<0.000000e+00> : vector<16x32xf32>
    %293 = tpu.matmul %290, %292, %cst_125 {dimension_numbers = #tpu.dot_dimension_numbers<[1], [0], [0], [1], [0, 0, 1, 1], [], []>} : vector<16x128xf32>, vector<128x32xf32>, vector<16x32xf32> -> vector<16x32xf32>
    %294 = arith.addf %257, %293 : vector<16x32xf32>
    %c0_126 = arith.constant 0 : index
    %c0_127 = arith.constant 0 : index
    %c0_128 = arith.constant 0 : index
    %295 = vector.load %arg15[%c0_126, %c0_127, %c0_128] : memref<2x1x32xf32, #tpu.memory_space<vmem>>, vector<1x1x32xf32>
    %296 = vector.shape_cast %295 : vector<1x1x32xf32> to vector<1x32xf32>
    %297 = vector.broadcast %296 : vector<1x32xf32> to vector<16x32xf32>
    %298 = arith.addf %294, %297 : vector<16x32xf32>
    %c1 = arith.constant 1 : index
    %c0_129 = arith.constant 0 : index
    %c0_130 = arith.constant 0 : index
    %299 = vector.load %arg16[%c1, %c0_129, %c0_130] : memref<2x1x32xf32, #tpu.memory_space<vmem>>, vector<1x1x32xf32>
    %300 = vector.shape_cast %299 : vector<1x1x32xf32> to vector<1x32xf32>
    %c1_131 = arith.constant 1 : index
    %c0_132 = arith.constant 0 : index
    %c0_133 = arith.constant 0 : index
    %301 = vector.load %arg17[%c1_131, %c0_132, %c0_133] : memref<2x1x32xf32, #tpu.memory_space<vmem>>, vector<1x1x32xf32>
    %302 = vector.shape_cast %301 : vector<1x1x32xf32> to vector<1x32xf32>
    %cst_134 = arith.constant dense<0.000000e+00> : vector<16xf32>
    %303 = vector.multi_reduction <add>, %298, %cst_134 [1] : vector<16x32xf32> to vector<16xf32>
    %304 = vector.shape_cast %303 : vector<16xf32> to vector<16x1xf32>
    %cst_135 = arith.constant 3.200000e+01 : f32
    %305 = vector.broadcast %cst_135 : f32 to vector<16x1xf32>
    %306 = arith.divf %304, %305 : vector<16x1xf32>
    %307 = vector.broadcast %306 : vector<16x1xf32> to vector<16x32xf32>
    %308 = arith.subf %298, %307 : vector<16x32xf32>
    %309 = arith.mulf %308, %308 : vector<16x32xf32>
    %cst_136 = arith.constant dense<0.000000e+00> : vector<16xf32>
    %310 = vector.multi_reduction <add>, %309, %cst_136 [1] : vector<16x32xf32> to vector<16xf32>
    %311 = vector.shape_cast %310 : vector<16xf32> to vector<16x1xf32>
    %cst_137 = arith.constant 3.200000e+01 : f32
    %312 = vector.broadcast %cst_137 : f32 to vector<16x1xf32>
    %313 = arith.divf %311, %312 : vector<16x1xf32>
    %cst_138 = arith.constant 9.99999974E-6 : f32
    %314 = vector.broadcast %cst_138 : f32 to vector<16x1xf32>
    %315 = arith.addf %313, %314 : vector<16x1xf32>
    %316 = math.rsqrt %315 : vector<16x1xf32>
    %317 = vector.broadcast %316 : vector<16x1xf32> to vector<16x32xf32>
    %318 = arith.mulf %308, %317 : vector<16x32xf32>
    %319 = vector.broadcast %300 : vector<1x32xf32> to vector<16x32xf32>
    %320 = arith.mulf %318, %319 : vector<16x32xf32>
    %321 = vector.broadcast %302 : vector<1x32xf32> to vector<16x32xf32>
    %322 = arith.addf %320, %321 : vector<16x32xf32>
    %c1_139 = arith.constant 1 : index
    %c0_140 = arith.constant 0 : index
    %c0_141 = arith.constant 0 : index
    %323 = vector.load %arg4[%c1_139, %c0_140, %c0_141] : memref<2x32x96xf32, #tpu.memory_space<vmem>>, vector<1x32x96xf32>
    %324 = vector.shape_cast %323 : vector<1x32x96xf32> to vector<32x96xf32>
    %cst_142 = arith.constant dense<0.000000e+00> : vector<16x96xf32>
    %325 = tpu.matmul %322, %324, %cst_142 {dimension_numbers = #tpu.dot_dimension_numbers<[1], [0], [0], [1], [0, 0, 1, 1], [], []>} : vector<16x32xf32>, vector<32x96xf32>, vector<16x96xf32> -> vector<16x96xf32>
    %c1_143 = arith.constant 1 : index
    %c0_144 = arith.constant 0 : index
    %c0_145 = arith.constant 0 : index
    %326 = vector.load %arg5[%c1_143, %c0_144, %c0_145] : memref<2x1x96xf32, #tpu.memory_space<vmem>>, vector<1x1x96xf32>
    %327 = vector.shape_cast %326 : vector<1x1x96xf32> to vector<1x96xf32>
    %328 = vector.broadcast %327 : vector<1x96xf32> to vector<16x96xf32>
    %329 = arith.addf %325, %328 : vector<16x96xf32>
    %330 = vector.extract_strided_slice %329 {offsets = [0, 0], sizes = [16, 32], strides = [1, 1]} : vector<16x96xf32> to vector<16x32xf32>
    %331 = vector.extract_strided_slice %329 {offsets = [0, 32], sizes = [16, 32], strides = [1, 1]} : vector<16x96xf32> to vector<16x32xf32>
    %332 = vector.extract_strided_slice %329 {offsets = [0, 64], sizes = [16, 32], strides = [1, 1]} : vector<16x96xf32> to vector<16x32xf32>
    %c1_146 = arith.constant 1 : index
    %c0_147 = arith.constant 0 : index
    %c0_148 = arith.constant 0 : index
    %333 = vector.load %arg6[%c1_146, %c0_147, %c0_148] : memref<2x32x32xf32, #tpu.memory_space<vmem>>, vector<1x32x32xf32>
    %334 = vector.shape_cast %333 : vector<1x32x32xf32> to vector<32x32xf32>
    %c1_149 = arith.constant 1 : index
    %c0_150 = arith.constant 0 : index
    %c0_151 = arith.constant 0 : index
    %335 = vector.load %arg7[%c1_149, %c0_150, %c0_151] : memref<2x1x32xf32, #tpu.memory_space<vmem>>, vector<1x1x32xf32>
    %336 = vector.shape_cast %335 : vector<1x1x32xf32> to vector<1x32xf32>
    %337 = vector.extract_strided_slice %330 {offsets = [0, 0], sizes = [16, 8], strides = [1, 1]} : vector<16x32xf32> to vector<16x8xf32>
    %338 = vector.extract_strided_slice %331 {offsets = [0, 0], sizes = [16, 8], strides = [1, 1]} : vector<16x32xf32> to vector<16x8xf32>
    %cst_152 = arith.constant dense<0.000000e+00> : vector<16x16xf32>
    %339 = tpu.matmul %337, %338, %cst_152 {dimension_numbers = #tpu.dot_dimension_numbers<[1], [1], [0], [0], [0, 0, 1, 0], [], []>} : vector<16x8xf32>, vector<16x8xf32>, vector<16x16xf32> -> vector<16x16xf32>
    %cst_153 = arith.constant 0.353553385 : f32
    %340 = vector.broadcast %cst_153 : f32 to vector<16x16xf32>
    %341 = arith.mulf %339, %340 : vector<16x16xf32>
    %342 = arith.addf %341, %2 : vector<16x16xf32>
    %cst_154 = arith.constant dense<0xFF800000> : vector<16xf32>
    %343 = vector.multi_reduction <maximumf>, %342, %cst_154 [1] : vector<16x16xf32> to vector<16xf32>
    %344 = vector.shape_cast %343 : vector<16xf32> to vector<16x1xf32>
    %345 = vector.broadcast %344 : vector<16x1xf32> to vector<16x16xf32>
    %346 = arith.subf %342, %345 : vector<16x16xf32>
    %347 = math.exp %346 : vector<16x16xf32>
    %cst_155 = arith.constant dense<0.000000e+00> : vector<16xf32>
    %348 = vector.multi_reduction <add>, %347, %cst_155 [1] : vector<16x16xf32> to vector<16xf32>
    %349 = vector.shape_cast %348 : vector<16xf32> to vector<16x1xf32>
    %350 = tpu.reciprocal %349 {approx = true} : vector<16x1xf32> -> vector<16x1xf32>
    %351 = vector.broadcast %350 : vector<16x1xf32> to vector<16x16xf32>
    %352 = arith.mulf %347, %351 : vector<16x16xf32>
    %353 = vector.extract_strided_slice %332 {offsets = [0, 0], sizes = [16, 8], strides = [1, 1]} : vector<16x32xf32> to vector<16x8xf32>
    %cst_156 = arith.constant dense<0.000000e+00> : vector<16x8xf32>
    %354 = tpu.matmul %352, %353, %cst_156 {dimension_numbers = #tpu.dot_dimension_numbers<[1], [0], [0], [1], [0, 0, 1, 1], [], []>} : vector<16x16xf32>, vector<16x8xf32>, vector<16x8xf32> -> vector<16x8xf32>
    %355 = vector.extract_strided_slice %334 {offsets = [0, 0], sizes = [8, 32], strides = [1, 1]} : vector<32x32xf32> to vector<8x32xf32>
    %cst_157 = arith.constant dense<0.000000e+00> : vector<16x32xf32>
    %356 = tpu.matmul %354, %355, %cst_157 {dimension_numbers = #tpu.dot_dimension_numbers<[1], [0], [0], [1], [0, 0, 1, 1], [], []>} : vector<16x8xf32>, vector<8x32xf32>, vector<16x32xf32> -> vector<16x32xf32>
    %357 = vector.extract_strided_slice %330 {offsets = [0, 8], sizes = [16, 8], strides = [1, 1]} : vector<16x32xf32> to vector<16x8xf32>
    %358 = vector.extract_strided_slice %331 {offsets = [0, 8], sizes = [16, 8], strides = [1, 1]} : vector<16x32xf32> to vector<16x8xf32>
    %cst_158 = arith.constant dense<0.000000e+00> : vector<16x16xf32>
    %359 = tpu.matmul %357, %358, %cst_158 {dimension_numbers = #tpu.dot_dimension_numbers<[1], [1], [0], [0], [0, 0, 1, 0], [], []>} : vector<16x8xf32>, vector<16x8xf32>, vector<16x16xf32> -> vector<16x16xf32>
    %cst_159 = arith.constant 0.353553385 : f32
    %360 = vector.broadcast %cst_159 : f32 to vector<16x16xf32>
    %361 = arith.mulf %359, %360 : vector<16x16xf32>
    %362 = arith.addf %361, %2 : vector<16x16xf32>
    %cst_160 = arith.constant dense<0xFF800000> : vector<16xf32>
    %363 = vector.multi_reduction <maximumf>, %362, %cst_160 [1] : vector<16x16xf32> to vector<16xf32>
    %364 = vector.shape_cast %363 : vector<16xf32> to vector<16x1xf32>
    %365 = vector.broadcast %364 : vector<16x1xf32> to vector<16x16xf32>
    %366 = arith.subf %362, %365 : vector<16x16xf32>
    %367 = math.exp %366 : vector<16x16xf32>
    %cst_161 = arith.constant dense<0.000000e+00> : vector<16xf32>
    %368 = vector.multi_reduction <add>, %367, %cst_161 [1] : vector<16x16xf32> to vector<16xf32>
    %369 = vector.shape_cast %368 : vector<16xf32> to vector<16x1xf32>
    %370 = tpu.reciprocal %369 {approx = true} : vector<16x1xf32> -> vector<16x1xf32>
    %371 = vector.broadcast %370 : vector<16x1xf32> to vector<16x16xf32>
    %372 = arith.mulf %367, %371 : vector<16x16xf32>
    %373 = vector.extract_strided_slice %332 {offsets = [0, 8], sizes = [16, 8], strides = [1, 1]} : vector<16x32xf32> to vector<16x8xf32>
    %cst_162 = arith.constant dense<0.000000e+00> : vector<16x8xf32>
    %374 = tpu.matmul %372, %373, %cst_162 {dimension_numbers = #tpu.dot_dimension_numbers<[1], [0], [0], [1], [0, 0, 1, 1], [], []>} : vector<16x16xf32>, vector<16x8xf32>, vector<16x8xf32> -> vector<16x8xf32>
    %375 = vector.extract_strided_slice %334 {offsets = [8, 0], sizes = [8, 32], strides = [1, 1]} : vector<32x32xf32> to vector<8x32xf32>
    %cst_163 = arith.constant dense<0.000000e+00> : vector<16x32xf32>
    %376 = tpu.matmul %374, %375, %cst_163 {dimension_numbers = #tpu.dot_dimension_numbers<[1], [0], [0], [1], [0, 0, 1, 1], [], []>} : vector<16x8xf32>, vector<8x32xf32>, vector<16x32xf32> -> vector<16x32xf32>
    %377 = arith.addf %356, %376 : vector<16x32xf32>
    %378 = vector.extract_strided_slice %330 {offsets = [0, 16], sizes = [16, 8], strides = [1, 1]} : vector<16x32xf32> to vector<16x8xf32>
    %379 = vector.extract_strided_slice %331 {offsets = [0, 16], sizes = [16, 8], strides = [1, 1]} : vector<16x32xf32> to vector<16x8xf32>
    %cst_164 = arith.constant dense<0.000000e+00> : vector<16x16xf32>
    %380 = tpu.matmul %378, %379, %cst_164 {dimension_numbers = #tpu.dot_dimension_numbers<[1], [1], [0], [0], [0, 0, 1, 0], [], []>} : vector<16x8xf32>, vector<16x8xf32>, vector<16x16xf32> -> vector<16x16xf32>
    %cst_165 = arith.constant 0.353553385 : f32
    %381 = vector.broadcast %cst_165 : f32 to vector<16x16xf32>
    %382 = arith.mulf %380, %381 : vector<16x16xf32>
    %383 = arith.addf %382, %2 : vector<16x16xf32>
    %cst_166 = arith.constant dense<0xFF800000> : vector<16xf32>
    %384 = vector.multi_reduction <maximumf>, %383, %cst_166 [1] : vector<16x16xf32> to vector<16xf32>
    %385 = vector.shape_cast %384 : vector<16xf32> to vector<16x1xf32>
    %386 = vector.broadcast %385 : vector<16x1xf32> to vector<16x16xf32>
    %387 = arith.subf %383, %386 : vector<16x16xf32>
    %388 = math.exp %387 : vector<16x16xf32>
    %cst_167 = arith.constant dense<0.000000e+00> : vector<16xf32>
    %389 = vector.multi_reduction <add>, %388, %cst_167 [1] : vector<16x16xf32> to vector<16xf32>
    %390 = vector.shape_cast %389 : vector<16xf32> to vector<16x1xf32>
    %391 = tpu.reciprocal %390 {approx = true} : vector<16x1xf32> -> vector<16x1xf32>
    %392 = vector.broadcast %391 : vector<16x1xf32> to vector<16x16xf32>
    %393 = arith.mulf %388, %392 : vector<16x16xf32>
    %394 = vector.extract_strided_slice %332 {offsets = [0, 16], sizes = [16, 8], strides = [1, 1]} : vector<16x32xf32> to vector<16x8xf32>
    %cst_168 = arith.constant dense<0.000000e+00> : vector<16x8xf32>
    %395 = tpu.matmul %393, %394, %cst_168 {dimension_numbers = #tpu.dot_dimension_numbers<[1], [0], [0], [1], [0, 0, 1, 1], [], []>} : vector<16x16xf32>, vector<16x8xf32>, vector<16x8xf32> -> vector<16x8xf32>
    %396 = vector.extract_strided_slice %334 {offsets = [16, 0], sizes = [8, 32], strides = [1, 1]} : vector<32x32xf32> to vector<8x32xf32>
    %cst_169 = arith.constant dense<0.000000e+00> : vector<16x32xf32>
    %397 = tpu.matmul %395, %396, %cst_169 {dimension_numbers = #tpu.dot_dimension_numbers<[1], [0], [0], [1], [0, 0, 1, 1], [], []>} : vector<16x8xf32>, vector<8x32xf32>, vector<16x32xf32> -> vector<16x32xf32>
    %398 = arith.addf %377, %397 : vector<16x32xf32>
    %399 = vector.extract_strided_slice %330 {offsets = [0, 24], sizes = [16, 8], strides = [1, 1]} : vector<16x32xf32> to vector<16x8xf32>
    %400 = vector.extract_strided_slice %331 {offsets = [0, 24], sizes = [16, 8], strides = [1, 1]} : vector<16x32xf32> to vector<16x8xf32>
    %cst_170 = arith.constant dense<0.000000e+00> : vector<16x16xf32>
    %401 = tpu.matmul %399, %400, %cst_170 {dimension_numbers = #tpu.dot_dimension_numbers<[1], [1], [0], [0], [0, 0, 1, 0], [], []>} : vector<16x8xf32>, vector<16x8xf32>, vector<16x16xf32> -> vector<16x16xf32>
    %cst_171 = arith.constant 0.353553385 : f32
    %402 = vector.broadcast %cst_171 : f32 to vector<16x16xf32>
    %403 = arith.mulf %401, %402 : vector<16x16xf32>
    %404 = arith.addf %403, %2 : vector<16x16xf32>
    %cst_172 = arith.constant dense<0xFF800000> : vector<16xf32>
    %405 = vector.multi_reduction <maximumf>, %404, %cst_172 [1] : vector<16x16xf32> to vector<16xf32>
    %406 = vector.shape_cast %405 : vector<16xf32> to vector<16x1xf32>
    %407 = vector.broadcast %406 : vector<16x1xf32> to vector<16x16xf32>
    %408 = arith.subf %404, %407 : vector<16x16xf32>
    %409 = math.exp %408 : vector<16x16xf32>
    %cst_173 = arith.constant dense<0.000000e+00> : vector<16xf32>
    %410 = vector.multi_reduction <add>, %409, %cst_173 [1] : vector<16x16xf32> to vector<16xf32>
    %411 = vector.shape_cast %410 : vector<16xf32> to vector<16x1xf32>
    %412 = tpu.reciprocal %411 {approx = true} : vector<16x1xf32> -> vector<16x1xf32>
    %413 = vector.broadcast %412 : vector<16x1xf32> to vector<16x16xf32>
    %414 = arith.mulf %409, %413 : vector<16x16xf32>
    %415 = vector.extract_strided_slice %332 {offsets = [0, 24], sizes = [16, 8], strides = [1, 1]} : vector<16x32xf32> to vector<16x8xf32>
    %cst_174 = arith.constant dense<0.000000e+00> : vector<16x8xf32>
    %416 = tpu.matmul %414, %415, %cst_174 {dimension_numbers = #tpu.dot_dimension_numbers<[1], [0], [0], [1], [0, 0, 1, 1], [], []>} : vector<16x16xf32>, vector<16x8xf32>, vector<16x8xf32> -> vector<16x8xf32>
    %417 = vector.extract_strided_slice %334 {offsets = [24, 0], sizes = [8, 32], strides = [1, 1]} : vector<32x32xf32> to vector<8x32xf32>
    %cst_175 = arith.constant dense<0.000000e+00> : vector<16x32xf32>
    %418 = tpu.matmul %416, %417, %cst_175 {dimension_numbers = #tpu.dot_dimension_numbers<[1], [0], [0], [1], [0, 0, 1, 1], [], []>} : vector<16x8xf32>, vector<8x32xf32>, vector<16x32xf32> -> vector<16x32xf32>
    %419 = arith.addf %398, %418 : vector<16x32xf32>
    %420 = vector.broadcast %336 : vector<1x32xf32> to vector<16x32xf32>
    %421 = arith.addf %419, %420 : vector<16x32xf32>
    %422 = arith.addf %298, %421 : vector<16x32xf32>
    %c1_176 = arith.constant 1 : index
    %c0_177 = arith.constant 0 : index
    %c0_178 = arith.constant 0 : index
    %423 = vector.load %arg18[%c1_176, %c0_177, %c0_178] : memref<2x1x32xf32, #tpu.memory_space<vmem>>, vector<1x1x32xf32>
    %424 = vector.shape_cast %423 : vector<1x1x32xf32> to vector<1x32xf32>
    %c1_179 = arith.constant 1 : index
    %c0_180 = arith.constant 0 : index
    %c0_181 = arith.constant 0 : index
    %425 = vector.load %arg19[%c1_179, %c0_180, %c0_181] : memref<2x1x32xf32, #tpu.memory_space<vmem>>, vector<1x1x32xf32>
    %426 = vector.shape_cast %425 : vector<1x1x32xf32> to vector<1x32xf32>
    %cst_182 = arith.constant dense<0.000000e+00> : vector<16xf32>
    %427 = vector.multi_reduction <add>, %422, %cst_182 [1] : vector<16x32xf32> to vector<16xf32>
    %428 = vector.shape_cast %427 : vector<16xf32> to vector<16x1xf32>
    %cst_183 = arith.constant 3.200000e+01 : f32
    %429 = vector.broadcast %cst_183 : f32 to vector<16x1xf32>
    %430 = arith.divf %428, %429 : vector<16x1xf32>
    %431 = vector.broadcast %430 : vector<16x1xf32> to vector<16x32xf32>
    %432 = arith.subf %422, %431 : vector<16x32xf32>
    %433 = arith.mulf %432, %432 : vector<16x32xf32>
    %cst_184 = arith.constant dense<0.000000e+00> : vector<16xf32>
    %434 = vector.multi_reduction <add>, %433, %cst_184 [1] : vector<16x32xf32> to vector<16xf32>
    %435 = vector.shape_cast %434 : vector<16xf32> to vector<16x1xf32>
    %cst_185 = arith.constant 3.200000e+01 : f32
    %436 = vector.broadcast %cst_185 : f32 to vector<16x1xf32>
    %437 = arith.divf %435, %436 : vector<16x1xf32>
    %cst_186 = arith.constant 9.99999974E-6 : f32
    %438 = vector.broadcast %cst_186 : f32 to vector<16x1xf32>
    %439 = arith.addf %437, %438 : vector<16x1xf32>
    %440 = math.rsqrt %439 : vector<16x1xf32>
    %441 = vector.broadcast %440 : vector<16x1xf32> to vector<16x32xf32>
    %442 = arith.mulf %432, %441 : vector<16x32xf32>
    %443 = vector.broadcast %424 : vector<1x32xf32> to vector<16x32xf32>
    %444 = arith.mulf %442, %443 : vector<16x32xf32>
    %445 = vector.broadcast %426 : vector<1x32xf32> to vector<16x32xf32>
    %446 = arith.addf %444, %445 : vector<16x32xf32>
    %c1_187 = arith.constant 1 : index
    %c0_188 = arith.constant 0 : index
    %c0_189 = arith.constant 0 : index
    %447 = vector.load %arg8[%c1_187, %c0_188, %c0_189] : memref<2x32x96xf32, #tpu.memory_space<vmem>>, vector<1x32x96xf32>
    %448 = vector.shape_cast %447 : vector<1x32x96xf32> to vector<32x96xf32>
    %c1_190 = arith.constant 1 : index
    %c0_191 = arith.constant 0 : index
    %c0_192 = arith.constant 0 : index
    %449 = vector.load %arg9[%c1_190, %c0_191, %c0_192] : memref<2x1x96xf32, #tpu.memory_space<vmem>>, vector<1x1x96xf32>
    %450 = vector.shape_cast %449 : vector<1x1x96xf32> to vector<1x96xf32>
    %451 = vector.extract_strided_slice %448 {offsets = [0, 0], sizes = [32, 32], strides = [1, 1]} : vector<32x96xf32> to vector<32x32xf32>
    %cst_193 = arith.constant dense<0.000000e+00> : vector<16x32xf32>
    %452 = tpu.matmul %446, %451, %cst_193 {dimension_numbers = #tpu.dot_dimension_numbers<[1], [0], [0], [1], [0, 0, 1, 1], [], []>} : vector<16x32xf32>, vector<32x32xf32>, vector<16x32xf32> -> vector<16x32xf32>
    %453 = vector.extract_strided_slice %450 {offsets = [0, 0], sizes = [1, 32], strides = [1, 1]} : vector<1x96xf32> to vector<1x32xf32>
    %454 = vector.broadcast %453 : vector<1x32xf32> to vector<16x32xf32>
    %455 = arith.addf %452, %454 : vector<16x32xf32>
    %456 = vector.extract_strided_slice %448 {offsets = [0, 32], sizes = [32, 64], strides = [1, 1]} : vector<32x96xf32> to vector<32x64xf32>
    %cst_194 = arith.constant dense<0.000000e+00> : vector<16x64xf32>
    %457 = tpu.matmul %1, %456, %cst_194 {dimension_numbers = #tpu.dot_dimension_numbers<[1], [0], [0], [1], [0, 0, 1, 1], [], []>} : vector<16x32xf32>, vector<32x64xf32>, vector<16x64xf32> -> vector<16x64xf32>
    %458 = vector.extract_strided_slice %450 {offsets = [0, 32], sizes = [1, 64], strides = [1, 1]} : vector<1x96xf32> to vector<1x64xf32>
    %459 = vector.broadcast %458 : vector<1x64xf32> to vector<16x64xf32>
    %460 = arith.addf %457, %459 : vector<16x64xf32>
    %461 = vector.extract_strided_slice %460 {offsets = [0, 0], sizes = [16, 32], strides = [1, 1]} : vector<16x64xf32> to vector<16x32xf32>
    %462 = vector.extract_strided_slice %460 {offsets = [0, 32], sizes = [16, 32], strides = [1, 1]} : vector<16x64xf32> to vector<16x32xf32>
    %c1_195 = arith.constant 1 : index
    %c0_196 = arith.constant 0 : index
    %c0_197 = arith.constant 0 : index
    %463 = vector.load %arg10[%c1_195, %c0_196, %c0_197] : memref<2x32x32xf32, #tpu.memory_space<vmem>>, vector<1x32x32xf32>
    %464 = vector.shape_cast %463 : vector<1x32x32xf32> to vector<32x32xf32>
    %c1_198 = arith.constant 1 : index
    %c0_199 = arith.constant 0 : index
    %c0_200 = arith.constant 0 : index
    %465 = vector.load %arg11[%c1_198, %c0_199, %c0_200] : memref<2x1x32xf32, #tpu.memory_space<vmem>>, vector<1x1x32xf32>
    %466 = vector.shape_cast %465 : vector<1x1x32xf32> to vector<1x32xf32>
    %467 = vector.extract_strided_slice %455 {offsets = [0, 0], sizes = [16, 8], strides = [1, 1]} : vector<16x32xf32> to vector<16x8xf32>
    %468 = vector.extract_strided_slice %461 {offsets = [0, 0], sizes = [16, 8], strides = [1, 1]} : vector<16x32xf32> to vector<16x8xf32>
    %cst_201 = arith.constant dense<0.000000e+00> : vector<16x16xf32>
    %469 = tpu.matmul %467, %468, %cst_201 {dimension_numbers = #tpu.dot_dimension_numbers<[1], [1], [0], [0], [0, 0, 1, 0], [], []>} : vector<16x8xf32>, vector<16x8xf32>, vector<16x16xf32> -> vector<16x16xf32>
    %cst_202 = arith.constant 0.353553385 : f32
    %470 = vector.broadcast %cst_202 : f32 to vector<16x16xf32>
    %471 = arith.mulf %469, %470 : vector<16x16xf32>
    %472 = arith.addf %471, %3 : vector<16x16xf32>
    %cst_203 = arith.constant dense<0xFF800000> : vector<16xf32>
    %473 = vector.multi_reduction <maximumf>, %472, %cst_203 [1] : vector<16x16xf32> to vector<16xf32>
    %474 = vector.shape_cast %473 : vector<16xf32> to vector<16x1xf32>
    %475 = vector.broadcast %474 : vector<16x1xf32> to vector<16x16xf32>
    %476 = arith.subf %472, %475 : vector<16x16xf32>
    %477 = math.exp %476 : vector<16x16xf32>
    %cst_204 = arith.constant dense<0.000000e+00> : vector<16xf32>
    %478 = vector.multi_reduction <add>, %477, %cst_204 [1] : vector<16x16xf32> to vector<16xf32>
    %479 = vector.shape_cast %478 : vector<16xf32> to vector<16x1xf32>
    %480 = tpu.reciprocal %479 {approx = true} : vector<16x1xf32> -> vector<16x1xf32>
    %481 = vector.broadcast %480 : vector<16x1xf32> to vector<16x16xf32>
    %482 = arith.mulf %477, %481 : vector<16x16xf32>
    %483 = vector.extract_strided_slice %462 {offsets = [0, 0], sizes = [16, 8], strides = [1, 1]} : vector<16x32xf32> to vector<16x8xf32>
    %cst_205 = arith.constant dense<0.000000e+00> : vector<16x8xf32>
    %484 = tpu.matmul %482, %483, %cst_205 {dimension_numbers = #tpu.dot_dimension_numbers<[1], [0], [0], [1], [0, 0, 1, 1], [], []>} : vector<16x16xf32>, vector<16x8xf32>, vector<16x8xf32> -> vector<16x8xf32>
    %485 = vector.extract_strided_slice %464 {offsets = [0, 0], sizes = [8, 32], strides = [1, 1]} : vector<32x32xf32> to vector<8x32xf32>
    %cst_206 = arith.constant dense<0.000000e+00> : vector<16x32xf32>
    %486 = tpu.matmul %484, %485, %cst_206 {dimension_numbers = #tpu.dot_dimension_numbers<[1], [0], [0], [1], [0, 0, 1, 1], [], []>} : vector<16x8xf32>, vector<8x32xf32>, vector<16x32xf32> -> vector<16x32xf32>
    %487 = vector.extract_strided_slice %455 {offsets = [0, 8], sizes = [16, 8], strides = [1, 1]} : vector<16x32xf32> to vector<16x8xf32>
    %488 = vector.extract_strided_slice %461 {offsets = [0, 8], sizes = [16, 8], strides = [1, 1]} : vector<16x32xf32> to vector<16x8xf32>
    %cst_207 = arith.constant dense<0.000000e+00> : vector<16x16xf32>
    %489 = tpu.matmul %487, %488, %cst_207 {dimension_numbers = #tpu.dot_dimension_numbers<[1], [1], [0], [0], [0, 0, 1, 0], [], []>} : vector<16x8xf32>, vector<16x8xf32>, vector<16x16xf32> -> vector<16x16xf32>
    %cst_208 = arith.constant 0.353553385 : f32
    %490 = vector.broadcast %cst_208 : f32 to vector<16x16xf32>
    %491 = arith.mulf %489, %490 : vector<16x16xf32>
    %492 = arith.addf %491, %3 : vector<16x16xf32>
    %cst_209 = arith.constant dense<0xFF800000> : vector<16xf32>
    %493 = vector.multi_reduction <maximumf>, %492, %cst_209 [1] : vector<16x16xf32> to vector<16xf32>
    %494 = vector.shape_cast %493 : vector<16xf32> to vector<16x1xf32>
    %495 = vector.broadcast %494 : vector<16x1xf32> to vector<16x16xf32>
    %496 = arith.subf %492, %495 : vector<16x16xf32>
    %497 = math.exp %496 : vector<16x16xf32>
    %cst_210 = arith.constant dense<0.000000e+00> : vector<16xf32>
    %498 = vector.multi_reduction <add>, %497, %cst_210 [1] : vector<16x16xf32> to vector<16xf32>
    %499 = vector.shape_cast %498 : vector<16xf32> to vector<16x1xf32>
    %500 = tpu.reciprocal %499 {approx = true} : vector<16x1xf32> -> vector<16x1xf32>
    %501 = vector.broadcast %500 : vector<16x1xf32> to vector<16x16xf32>
    %502 = arith.mulf %497, %501 : vector<16x16xf32>
    %503 = vector.extract_strided_slice %462 {offsets = [0, 8], sizes = [16, 8], strides = [1, 1]} : vector<16x32xf32> to vector<16x8xf32>
    %cst_211 = arith.constant dense<0.000000e+00> : vector<16x8xf32>
    %504 = tpu.matmul %502, %503, %cst_211 {dimension_numbers = #tpu.dot_dimension_numbers<[1], [0], [0], [1], [0, 0, 1, 1], [], []>} : vector<16x16xf32>, vector<16x8xf32>, vector<16x8xf32> -> vector<16x8xf32>
    %505 = vector.extract_strided_slice %464 {offsets = [8, 0], sizes = [8, 32], strides = [1, 1]} : vector<32x32xf32> to vector<8x32xf32>
    %cst_212 = arith.constant dense<0.000000e+00> : vector<16x32xf32>
    %506 = tpu.matmul %504, %505, %cst_212 {dimension_numbers = #tpu.dot_dimension_numbers<[1], [0], [0], [1], [0, 0, 1, 1], [], []>} : vector<16x8xf32>, vector<8x32xf32>, vector<16x32xf32> -> vector<16x32xf32>
    %507 = arith.addf %486, %506 : vector<16x32xf32>
    %508 = vector.extract_strided_slice %455 {offsets = [0, 16], sizes = [16, 8], strides = [1, 1]} : vector<16x32xf32> to vector<16x8xf32>
    %509 = vector.extract_strided_slice %461 {offsets = [0, 16], sizes = [16, 8], strides = [1, 1]} : vector<16x32xf32> to vector<16x8xf32>
    %cst_213 = arith.constant dense<0.000000e+00> : vector<16x16xf32>
    %510 = tpu.matmul %508, %509, %cst_213 {dimension_numbers = #tpu.dot_dimension_numbers<[1], [1], [0], [0], [0, 0, 1, 0], [], []>} : vector<16x8xf32>, vector<16x8xf32>, vector<16x16xf32> -> vector<16x16xf32>
    %cst_214 = arith.constant 0.353553385 : f32
    %511 = vector.broadcast %cst_214 : f32 to vector<16x16xf32>
    %512 = arith.mulf %510, %511 : vector<16x16xf32>
    %513 = arith.addf %512, %3 : vector<16x16xf32>
    %cst_215 = arith.constant dense<0xFF800000> : vector<16xf32>
    %514 = vector.multi_reduction <maximumf>, %513, %cst_215 [1] : vector<16x16xf32> to vector<16xf32>
    %515 = vector.shape_cast %514 : vector<16xf32> to vector<16x1xf32>
    %516 = vector.broadcast %515 : vector<16x1xf32> to vector<16x16xf32>
    %517 = arith.subf %513, %516 : vector<16x16xf32>
    %518 = math.exp %517 : vector<16x16xf32>
    %cst_216 = arith.constant dense<0.000000e+00> : vector<16xf32>
    %519 = vector.multi_reduction <add>, %518, %cst_216 [1] : vector<16x16xf32> to vector<16xf32>
    %520 = vector.shape_cast %519 : vector<16xf32> to vector<16x1xf32>
    %521 = tpu.reciprocal %520 {approx = true} : vector<16x1xf32> -> vector<16x1xf32>
    %522 = vector.broadcast %521 : vector<16x1xf32> to vector<16x16xf32>
    %523 = arith.mulf %518, %522 : vector<16x16xf32>
    %524 = vector.extract_strided_slice %462 {offsets = [0, 16], sizes = [16, 8], strides = [1, 1]} : vector<16x32xf32> to vector<16x8xf32>
    %cst_217 = arith.constant dense<0.000000e+00> : vector<16x8xf32>
    %525 = tpu.matmul %523, %524, %cst_217 {dimension_numbers = #tpu.dot_dimension_numbers<[1], [0], [0], [1], [0, 0, 1, 1], [], []>} : vector<16x16xf32>, vector<16x8xf32>, vector<16x8xf32> -> vector<16x8xf32>
    %526 = vector.extract_strided_slice %464 {offsets = [16, 0], sizes = [8, 32], strides = [1, 1]} : vector<32x32xf32> to vector<8x32xf32>
    %cst_218 = arith.constant dense<0.000000e+00> : vector<16x32xf32>
    %527 = tpu.matmul %525, %526, %cst_218 {dimension_numbers = #tpu.dot_dimension_numbers<[1], [0], [0], [1], [0, 0, 1, 1], [], []>} : vector<16x8xf32>, vector<8x32xf32>, vector<16x32xf32> -> vector<16x32xf32>
    %528 = arith.addf %507, %527 : vector<16x32xf32>
    %529 = vector.extract_strided_slice %455 {offsets = [0, 24], sizes = [16, 8], strides = [1, 1]} : vector<16x32xf32> to vector<16x8xf32>
    %530 = vector.extract_strided_slice %461 {offsets = [0, 24], sizes = [16, 8], strides = [1, 1]} : vector<16x32xf32> to vector<16x8xf32>
    %cst_219 = arith.constant dense<0.000000e+00> : vector<16x16xf32>
    %531 = tpu.matmul %529, %530, %cst_219 {dimension_numbers = #tpu.dot_dimension_numbers<[1], [1], [0], [0], [0, 0, 1, 0], [], []>} : vector<16x8xf32>, vector<16x8xf32>, vector<16x16xf32> -> vector<16x16xf32>
    %cst_220 = arith.constant 0.353553385 : f32
    %532 = vector.broadcast %cst_220 : f32 to vector<16x16xf32>
    %533 = arith.mulf %531, %532 : vector<16x16xf32>
    %534 = arith.addf %533, %3 : vector<16x16xf32>
    %cst_221 = arith.constant dense<0xFF800000> : vector<16xf32>
    %535 = vector.multi_reduction <maximumf>, %534, %cst_221 [1] : vector<16x16xf32> to vector<16xf32>
    %536 = vector.shape_cast %535 : vector<16xf32> to vector<16x1xf32>
    %537 = vector.broadcast %536 : vector<16x1xf32> to vector<16x16xf32>
    %538 = arith.subf %534, %537 : vector<16x16xf32>
    %539 = math.exp %538 : vector<16x16xf32>
    %cst_222 = arith.constant dense<0.000000e+00> : vector<16xf32>
    %540 = vector.multi_reduction <add>, %539, %cst_222 [1] : vector<16x16xf32> to vector<16xf32>
    %541 = vector.shape_cast %540 : vector<16xf32> to vector<16x1xf32>
    %542 = tpu.reciprocal %541 {approx = true} : vector<16x1xf32> -> vector<16x1xf32>
    %543 = vector.broadcast %542 : vector<16x1xf32> to vector<16x16xf32>
    %544 = arith.mulf %539, %543 : vector<16x16xf32>
    %545 = vector.extract_strided_slice %462 {offsets = [0, 24], sizes = [16, 8], strides = [1, 1]} : vector<16x32xf32> to vector<16x8xf32>
    %cst_223 = arith.constant dense<0.000000e+00> : vector<16x8xf32>
    %546 = tpu.matmul %544, %545, %cst_223 {dimension_numbers = #tpu.dot_dimension_numbers<[1], [0], [0], [1], [0, 0, 1, 1], [], []>} : vector<16x16xf32>, vector<16x8xf32>, vector<16x8xf32> -> vector<16x8xf32>
    %547 = vector.extract_strided_slice %464 {offsets = [24, 0], sizes = [8, 32], strides = [1, 1]} : vector<32x32xf32> to vector<8x32xf32>
    %cst_224 = arith.constant dense<0.000000e+00> : vector<16x32xf32>
    %548 = tpu.matmul %546, %547, %cst_224 {dimension_numbers = #tpu.dot_dimension_numbers<[1], [0], [0], [1], [0, 0, 1, 1], [], []>} : vector<16x8xf32>, vector<8x32xf32>, vector<16x32xf32> -> vector<16x32xf32>
    %549 = arith.addf %528, %548 : vector<16x32xf32>
    %550 = vector.broadcast %466 : vector<1x32xf32> to vector<16x32xf32>
    %551 = arith.addf %549, %550 : vector<16x32xf32>
    %552 = arith.addf %422, %551 : vector<16x32xf32>
    %c1_225 = arith.constant 1 : index
    %c0_226 = arith.constant 0 : index
    %c0_227 = arith.constant 0 : index
    %553 = vector.load %arg20[%c1_225, %c0_226, %c0_227] : memref<2x1x32xf32, #tpu.memory_space<vmem>>, vector<1x1x32xf32>
    %554 = vector.shape_cast %553 : vector<1x1x32xf32> to vector<1x32xf32>
    %c1_228 = arith.constant 1 : index
    %c0_229 = arith.constant 0 : index
    %c0_230 = arith.constant 0 : index
    %555 = vector.load %arg21[%c1_228, %c0_229, %c0_230] : memref<2x1x32xf32, #tpu.memory_space<vmem>>, vector<1x1x32xf32>
    %556 = vector.shape_cast %555 : vector<1x1x32xf32> to vector<1x32xf32>
    %cst_231 = arith.constant dense<0.000000e+00> : vector<16xf32>
    %557 = vector.multi_reduction <add>, %552, %cst_231 [1] : vector<16x32xf32> to vector<16xf32>
    %558 = vector.shape_cast %557 : vector<16xf32> to vector<16x1xf32>
    %cst_232 = arith.constant 3.200000e+01 : f32
    %559 = vector.broadcast %cst_232 : f32 to vector<16x1xf32>
    %560 = arith.divf %558, %559 : vector<16x1xf32>
    %561 = vector.broadcast %560 : vector<16x1xf32> to vector<16x32xf32>
    %562 = arith.subf %552, %561 : vector<16x32xf32>
    %563 = arith.mulf %562, %562 : vector<16x32xf32>
    %cst_233 = arith.constant dense<0.000000e+00> : vector<16xf32>
    %564 = vector.multi_reduction <add>, %563, %cst_233 [1] : vector<16x32xf32> to vector<16xf32>
    %565 = vector.shape_cast %564 : vector<16xf32> to vector<16x1xf32>
    %cst_234 = arith.constant 3.200000e+01 : f32
    %566 = vector.broadcast %cst_234 : f32 to vector<16x1xf32>
    %567 = arith.divf %565, %566 : vector<16x1xf32>
    %cst_235 = arith.constant 9.99999974E-6 : f32
    %568 = vector.broadcast %cst_235 : f32 to vector<16x1xf32>
    %569 = arith.addf %567, %568 : vector<16x1xf32>
    %570 = math.rsqrt %569 : vector<16x1xf32>
    %571 = vector.broadcast %570 : vector<16x1xf32> to vector<16x32xf32>
    %572 = arith.mulf %562, %571 : vector<16x32xf32>
    %573 = vector.broadcast %554 : vector<1x32xf32> to vector<16x32xf32>
    %574 = arith.mulf %572, %573 : vector<16x32xf32>
    %575 = vector.broadcast %556 : vector<1x32xf32> to vector<16x32xf32>
    %576 = arith.addf %574, %575 : vector<16x32xf32>
    %c1_236 = arith.constant 1 : index
    %c0_237 = arith.constant 0 : index
    %c0_238 = arith.constant 0 : index
    %577 = vector.load %arg12[%c1_236, %c0_237, %c0_238] : memref<2x32x128xf32, #tpu.memory_space<vmem>>, vector<1x32x128xf32>
    %578 = vector.shape_cast %577 : vector<1x32x128xf32> to vector<32x128xf32>
    %cst_239 = arith.constant dense<0.000000e+00> : vector<16x128xf32>
    %579 = tpu.matmul %576, %578, %cst_239 {dimension_numbers = #tpu.dot_dimension_numbers<[1], [0], [0], [1], [0, 0, 1, 1], [], []>} : vector<16x32xf32>, vector<32x128xf32>, vector<16x128xf32> -> vector<16x128xf32>
    %c1_240 = arith.constant 1 : index
    %c0_241 = arith.constant 0 : index
    %c0_242 = arith.constant 0 : index
    %580 = vector.load %arg13[%c1_240, %c0_241, %c0_242] : memref<2x1x128xf32, #tpu.memory_space<vmem>>, vector<1x1x128xf32>
    %581 = vector.shape_cast %580 : vector<1x1x128xf32> to vector<1x128xf32>
    %582 = vector.broadcast %581 : vector<1x128xf32> to vector<16x128xf32>
    %583 = arith.addf %579, %582 : vector<16x128xf32>
    %cst_243 = arith.constant 0.000000e+00 : f32
    %584 = vector.broadcast %cst_243 : f32 to vector<16x128xf32>
    %585 = arith.maximumf %583, %584 : vector<16x128xf32>
    %c1_244 = arith.constant 1 : index
    %c0_245 = arith.constant 0 : index
    %c0_246 = arith.constant 0 : index
    %586 = vector.load %arg14[%c1_244, %c0_245, %c0_246] : memref<2x128x32xf32, #tpu.memory_space<vmem>>, vector<1x128x32xf32>
    %587 = vector.shape_cast %586 : vector<1x128x32xf32> to vector<128x32xf32>
    %cst_247 = arith.constant dense<0.000000e+00> : vector<16x32xf32>
    %588 = tpu.matmul %585, %587, %cst_247 {dimension_numbers = #tpu.dot_dimension_numbers<[1], [0], [0], [1], [0, 0, 1, 1], [], []>} : vector<16x128xf32>, vector<128x32xf32>, vector<16x32xf32> -> vector<16x32xf32>
    %589 = arith.addf %552, %588 : vector<16x32xf32>
    %c1_248 = arith.constant 1 : index
    %c0_249 = arith.constant 0 : index
    %c0_250 = arith.constant 0 : index
    %590 = vector.load %arg15[%c1_248, %c0_249, %c0_250] : memref<2x1x32xf32, #tpu.memory_space<vmem>>, vector<1x1x32xf32>
    %591 = vector.shape_cast %590 : vector<1x1x32xf32> to vector<1x32xf32>
    %592 = vector.broadcast %591 : vector<1x32xf32> to vector<16x32xf32>
    %593 = arith.addf %589, %592 : vector<16x32xf32>
    %c0_251 = arith.constant 0 : index
    %c0_252 = arith.constant 0 : index
    %594 = vector.load %arg22[%c0_251, %c0_252] : memref<1x32xf32, #tpu.memory_space<vmem>>, vector<1x32xf32>
    %c0_253 = arith.constant 0 : index
    %c0_254 = arith.constant 0 : index
    %595 = vector.load %arg23[%c0_253, %c0_254] : memref<1x32xf32, #tpu.memory_space<vmem>>, vector<1x32xf32>
    %cst_255 = arith.constant dense<0.000000e+00> : vector<16xf32>
    %596 = vector.multi_reduction <add>, %593, %cst_255 [1] : vector<16x32xf32> to vector<16xf32>
    %597 = vector.shape_cast %596 : vector<16xf32> to vector<16x1xf32>
    %cst_256 = arith.constant 3.200000e+01 : f32
    %598 = vector.broadcast %cst_256 : f32 to vector<16x1xf32>
    %599 = arith.divf %597, %598 : vector<16x1xf32>
    %600 = vector.broadcast %599 : vector<16x1xf32> to vector<16x32xf32>
    %601 = arith.subf %593, %600 : vector<16x32xf32>
    %602 = arith.mulf %601, %601 : vector<16x32xf32>
    %cst_257 = arith.constant dense<0.000000e+00> : vector<16xf32>
    %603 = vector.multi_reduction <add>, %602, %cst_257 [1] : vector<16x32xf32> to vector<16xf32>
    %604 = vector.shape_cast %603 : vector<16xf32> to vector<16x1xf32>
    %cst_258 = arith.constant 3.200000e+01 : f32
    %605 = vector.broadcast %cst_258 : f32 to vector<16x1xf32>
    %606 = arith.divf %604, %605 : vector<16x1xf32>
    %cst_259 = arith.constant 9.99999974E-6 : f32
    %607 = vector.broadcast %cst_259 : f32 to vector<16x1xf32>
    %608 = arith.addf %606, %607 : vector<16x1xf32>
    %609 = math.rsqrt %608 : vector<16x1xf32>
    %610 = vector.broadcast %609 : vector<16x1xf32> to vector<16x32xf32>
    %611 = arith.mulf %601, %610 : vector<16x32xf32>
    %612 = vector.broadcast %594 : vector<1x32xf32> to vector<16x32xf32>
    %613 = arith.mulf %611, %612 : vector<16x32xf32>
    %614 = vector.broadcast %595 : vector<1x32xf32> to vector<16x32xf32>
    %615 = arith.addf %613, %614 : vector<16x32xf32>
    %c0_260 = arith.constant 0 : index
    %c0_261 = arith.constant 0 : index
    %616 = vector.load %arg24[%c0_260, %c0_261] : memref<16x32xf32, #tpu.memory_space<vmem>>, vector<16x32xf32>
    tpu.vector_store %arg24[%c0_260, %c0_261], %615 {strides = array<i32>} : memref<16x32xf32, #tpu.memory_space<vmem>>, vector<16x32xf32>,
    return
  }
}

</mosaic_0001>

<llo_original>
// kernel: tpu_custom_call.1
$region0: #{tpu_custom_call.1}
  #allocation0 [shape = 'u32[]', space=smem, size = 0x4, offset = 0x4, fixed_abs, tag = 'smem constant byte address 0x4 - core index']
  #allocation1 [shape = 'u32[144,128]{1,0:T(1,128)}', space=vmem, size = 0x12000, scoped, tag = 'internal scratch']
  %s0 = inlined_call_operand.hbm [shape: f32[16,32], index: 0, kind: input, shape index: {}]
  %s1 = inlined_call_operand.hbm [shape: f32[16,32], index: 1, kind: input, shape index: {}]
  %s2 = inlined_call_operand.hbm [shape: f32[16,16], index: 2, kind: input, shape index: {}]
  %s3 = inlined_call_operand.hbm [shape: f32[16,16], index: 3, kind: input, shape index: {}]
  %s4 = inlined_call_operand.vmem [shape: f32[2,32,96], index: 4, kind: input, shape index: {}]
  %s5 = inlined_call_operand.vmem [shape: f32[2,1,96], index: 5, kind: input, shape index: {}]
  %s6 = inlined_call_operand.vmem [shape: f32[2,32,32], index: 6, kind: input, shape index: {}]
  %s7 = inlined_call_operand.vmem [shape: f32[2,1,32], index: 7, kind: input, shape index: {}]
  %s8 = inlined_call_operand.vmem [shape: f32[2,32,96], index: 8, kind: input, shape index: {}]
  %s9 = inlined_call_operand.vmem [shape: f32[2,1,96], index: 9, kind: input, shape index: {}]
  %s10 = inlined_call_operand.vmem [shape: f32[2,32,32], index: 10, kind: input, shape index: {}]
  %s11 = inlined_call_operand.vmem [shape: f32[2,1,32], index: 11, kind: input, shape index: {}]
  %s12 = inlined_call_operand.vmem [shape: f32[2,32,128], index: 12, kind: input, shape index: {}]
  %s13 = inlined_call_operand.vmem [shape: f32[2,1,128], index: 13, kind: input, shape index: {}]
  %s14 = inlined_call_operand.vmem [shape: f32[2,128,32], index: 14, kind: input, shape index: {}]
  %s15 = inlined_call_operand.vmem [shape: f32[2,1,32], index: 15, kind: input, shape index: {}]
  %s16 = inlined_call_operand.vmem [shape: f32[2,1,32], index: 16, kind: input, shape index: {}]
  %s17 = inlined_call_operand.vmem [shape: f32[2,1,32], index: 17, kind: input, shape index: {}]
  %s18 = inlined_call_operand.vmem [shape: f32[2,1,32], index: 18, kind: input, shape index: {}]
  %s19 = inlined_call_operand.vmem [shape: f32[2,1,32], index: 19, kind: input, shape index: {}]
  %s20 = inlined_call_operand.vmem [shape: f32[2,1,32], index: 20, kind: input, shape index: {}]
  %s21 = inlined_call_operand.vmem [shape: f32[2,1,32], index: 21, kind: input, shape index: {}]
  %s22 = inlined_call_operand.vmem [shape: f32[1,32], index: 22, kind: input, shape index: {}]
  %s23 = inlined_call_operand.vmem [shape: f32[1,32], index: 23, kind: input, shape index: {}]
  %s24 = inlined_call_operand.hbm [shape: f32[16,32], index: 24, kind: output, shape index: {}]
  %s25 = sld [smem:[#allocation0]]
  $region122: #{tpu_custom_call.1} parent=0
    _
  %s27 = ssub.s32 1, %s25
  %s28 = scalar_select 0, %s27, %s25
  $region1: #{tpu_custom_call.1} parent=0
    #allocation2 [shape = 'u8[8192]{0}', space=vmem, size = 0x2000, scoped, tag = 'input window, operand 0, single buffered']
    #allocation3 [shape = 's32[1]{0}', space=sflag, size = 0x4, scoped, tag = 'scoped memory for tpu_custom_call.1']
    #allocation4 [shape = 's32[1]{0}', space=sflag, size = 0x4, scoped, tag = 'scoped memory for tpu_custom_call.1']
    #allocation5 [shape = 'u8[8192]{0}', space=vmem, size = 0x2000, scoped, tag = 'input window, operand 1, single buffered']
    #allocation6 [shape = 's32[1]{0}', space=sflag, size = 0x4, scoped, tag = 'scoped memory for tpu_custom_call.1']
    #allocation7 [shape = 'u8[8192]{0}', space=vmem, size = 0x2000, scoped, tag = 'input window, operand 2, single buffered']
    #allocation8 [shape = 'u8[8192]{0}', space=vmem, size = 0x2000, scoped, tag = 'input window, operand 3, single buffered']
    #allocation9 [shape = 's32[1]{0}', space=sflag, size = 0x4, scoped, tag = 'scoped memory for tpu_custom_call.1']
    #allocation10 [shape = 'u8[8192]{0}', space=vmem, size = 0x2000, scoped, tag = 'output window, operand 0, single buffered']
    %29 = vsyncpa [#allocation3], 0
    %30 = vsyncpa [#allocation6], 0
    %31 = vsyncpa [#allocation9], 0
    %32 = vsyncpa [#allocation4], 0
    // Predicated region
    $region2: #{tpu_custom_call.1} parent=1 // pred_check
      _
    $region3: #{tpu_custom_call.1} parent=1 // pred_check_branch
      %34 = sbr.rel (0) target = $region5
    $region4: #{tpu_custom_call.1} parent=1 // pred_region
      %s36 = ssub.s32 256, 256
      %37 = vsyncadd [#allocation3], %s36
      %s38 = sshll.u32 [#allocation2], 4
      %s39 = int_to_ptr.vmem [resolvable:$true] %s38
      %44 = dma.hbm_to_vmem [thread:$0]  %s0, 256, %s39, [#allocation3], 128, 128, 8
    $region5: #{tpu_custom_call.1} parent=1 // pred_fallthru
      _
    // Predicated region
    $region6: #{tpu_custom_call.1} parent=1 // pred_check
      _
    $region7: #{tpu_custom_call.1} parent=1 // pred_check_branch
      %46 = sbr.rel (0) target = $region9
    $region8: #{tpu_custom_call.1} parent=1 // pred_region
      %s48 = ssub.s32 256, 256
      %49 = vsyncadd [#allocation6], %s48
      %s50 = sshll.u32 [#allocation5], 4
      %s51 = int_to_ptr.vmem [resolvable:$true] %s50
      %56 = dma.hbm_to_vmem [thread:$0]  %s1, 256, %s51, [#allocation6], 128, 128, 8
    $region9: #{tpu_custom_call.1} parent=1 // pred_fallthru
      _
    // Predicated region
    $region10: #{tpu_custom_call.1} parent=1 // pred_check
      _
    $region11: #{tpu_custom_call.1} parent=1 // pred_check_branch
      %58 = sbr.rel (0) target = $region13
    $region12: #{tpu_custom_call.1} parent=1 // pred_region
      %s60 = ssub.s32 256, 256
      %61 = vsyncadd [#allocation6], %s60
      %s62 = sshll.u32 [#allocation7], 4
      %s63 = int_to_ptr.vmem [resolvable:$true] %s62
      %68 = dma.hbm_to_vmem [thread:$0]  %s2, 256, %s63, [#allocation6], 128, 128, 8
    $region13: #{tpu_custom_call.1} parent=1 // pred_fallthru
      _
    // Predicated region
    $region14: #{tpu_custom_call.1} parent=1 // pred_check
      _
    $region15: #{tpu_custom_call.1} parent=1 // pred_check_branch
      %70 = sbr.rel (0) target = $region17
    $region16: #{tpu_custom_call.1} parent=1 // pred_region
      %s72 = ssub.s32 256, 256
      %73 = vsyncadd [#allocation9], %s72
      %s74 = sshll.u32 [#allocation8], 4
      %s75 = int_to_ptr.vmem [resolvable:$true] %s74
      %80 = dma.hbm_to_vmem [thread:$0]  %s3, 256, %s75, [#allocation9], 128, 128, 8
    $region17: #{tpu_custom_call.1} parent=1 // pred_fallthru
      _
    // Predicated region
    $region18: #{tpu_custom_call.1} parent=1 // pred_check
      _
    $region19: #{tpu_custom_call.1} parent=1 // pred_check_branch
      %82 = sbr.rel (0) target = $region21
    $region20: #{tpu_custom_call.1} parent=1 // pred_region
      _
    $region21: #{tpu_custom_call.1} parent=1 // pred_fallthru
      _
    // Predicated region
    $region22: #{tpu_custom_call.1} parent=1 // pred_check
      _
    $region23: #{tpu_custom_call.1} parent=1 // pred_check_branch
      %84 = sbr.rel (0) target = $region25
    $region24: #{tpu_custom_call.1} parent=1 // pred_region
      _
    $region25: #{tpu_custom_call.1} parent=1 // pred_fallthru
      _
    // Predicated region
    $region26: #{tpu_custom_call.1} parent=1 // pred_check
      _
    $region27: #{tpu_custom_call.1} parent=1 // pred_check_branch
      %86 = sbr.rel (0) target = $region29
    $region28: #{tpu_custom_call.1} parent=1 // pred_region
      _
    $region29: #{tpu_custom_call.1} parent=1 // pred_fallthru
      _
    // Predicated region
    $region30: #{tpu_custom_call.1} parent=1 // pred_check
      _
    $region31: #{tpu_custom_call.1} parent=1 // pred_check_branch
      %88 = sbr.rel (0) target = $region33
    $region32: #{tpu_custom_call.1} parent=1 // pred_region
      _
    $region33: #{tpu_custom_call.1} parent=1 // pred_fallthru
      _
    // Predicated region
    $region34: #{tpu_custom_call.1} parent=1 // pred_check
      _
    $region35: #{tpu_custom_call.1} parent=1 // pred_check_branch
      %90 = sbr.rel (0) target = $region37
    $region36: #{tpu_custom_call.1} parent=1 // pred_region
      _
    $region37: #{tpu_custom_call.1} parent=1 // pred_fallthru
      _
    // Predicated region
    $region38: #{tpu_custom_call.1} parent=1 // pred_check
      _
    $region39: #{tpu_custom_call.1} parent=1 // pred_check_branch
      %92 = sbr.rel (0) target = $region41
    $region40: #{tpu_custom_call.1} parent=1 // pred_region
      _
    $region41: #{tpu_custom_call.1} parent=1 // pred_fallthru
      _
    // Predicated region
    $region42: #{tpu_custom_call.1} parent=1 // pred_check
      _
    $region43: #{tpu_custom_call.1} parent=1 // pred_check_branch
      %94 = sbr.rel (0) target = $region45
    $region44: #{tpu_custom_call.1} parent=1 // pred_region
      _
    $region45: #{tpu_custom_call.1} parent=1 // pred_fallthru
      _
    // Predicated region
    $region46: #{tpu_custom_call.1} parent=1 // pred_check
      _
    $region47: #{tpu_custom_call.1} parent=1 // pred_check_branch
      %96 = sbr.rel (0) target = $region49
    $region48: #{tpu_custom_call.1} parent=1 // pred_region
      _
    $region49: #{tpu_custom_call.1} parent=1 // pred_fallthru
      _
    // Predicated region
    $region50: #{tpu_custom_call.1} parent=1 // pred_check
      _
    $region51: #{tpu_custom_call.1} parent=1 // pred_check_branch
      %98 = sbr.rel (0) target = $region53
    $region52: #{tpu_custom_call.1} parent=1 // pred_region
      _
    $region53: #{tpu_custom_call.1} parent=1 // pred_fallthru
      _
    // Predicated region
    $region54: #{tpu_custom_call.1} parent=1 // pred_check
      _
    $region55: #{tpu_custom_call.1} parent=1 // pred_check_branch
      %100 = sbr.rel (0) target = $region57
    $region56: #{tpu_custom_call.1} parent=1 // pred_region
      _
    $region57: #{tpu_custom_call.1} parent=1 // pred_fallthru
      _
    // Predicated region
    $region58: #{tpu_custom_call.1} parent=1 // pred_check
      _
    $region59: #{tpu_custom_call.1} parent=1 // pred_check_branch
      %102 = sbr.rel (0) target = $region61
    $region60: #{tpu_custom_call.1} parent=1 // pred_region
      _
    $region61: #{tpu_custom_call.1} parent=1 // pred_fallthru
      _
    // Predicated region
    $region62: #{tpu_custom_call.1} parent=1 // pred_check
      _
    $region63: #{tpu_custom_call.1} parent=1 // pred_check_branch
      %104 = sbr.rel (0) target = $region65
    $region64: #{tpu_custom_call.1} parent=1 // pred_region
      _
    $region65: #{tpu_custom_call.1} parent=1 // pred_fallthru
      _
    // Predicated region
    $region66: #{tpu_custom_call.1} parent=1 // pred_check
      _
    $region67: #{tpu_custom_call.1} parent=1 // pred_check_branch
      %106 = sbr.rel (0) target = $region69
    $region68: #{tpu_custom_call.1} parent=1 // pred_region
      _
    $region69: #{tpu_custom_call.1} parent=1 // pred_fallthru
      _
    // Predicated region
    $region70: #{tpu_custom_call.1} parent=1 // pred_check
      _
    $region71: #{tpu_custom_call.1} parent=1 // pred_check_branch
      %108 = sbr.rel (0) target = $region73
    $region72: #{tpu_custom_call.1} parent=1 // pred_region
      _
    $region73: #{tpu_custom_call.1} parent=1 // pred_fallthru
      _
    // Predicated region
    $region74: #{tpu_custom_call.1} parent=1 // pred_check
      _
    $region75: #{tpu_custom_call.1} parent=1 // pred_check_branch
      %110 = sbr.rel (0) target = $region77
    $region76: #{tpu_custom_call.1} parent=1 // pred_region
      _
    $region77: #{tpu_custom_call.1} parent=1 // pred_fallthru
      _
    // Predicated region
    $region78: #{tpu_custom_call.1} parent=1 // pred_check
      _
    $region79: #{tpu_custom_call.1} parent=1 // pred_check_branch
      %112 = sbr.rel (0) target = $region81
    $region80: #{tpu_custom_call.1} parent=1 // pred_region
      _
    $region81: #{tpu_custom_call.1} parent=1 // pred_fallthru
      _
    // Predicated region
    $region82: #{tpu_custom_call.1} parent=1 // pred_check
      _
    $region83: #{tpu_custom_call.1} parent=1 // pred_check_branch
      %114 = sbr.rel (0) target = $region85
    $region84: #{tpu_custom_call.1} parent=1 // pred_region
      _
    $region85: #{tpu_custom_call.1} parent=1 // pred_fallthru
      _
    // Predicated region
    $region86: #{tpu_custom_call.1} parent=1 // pred_check
      _
    $region87: #{tpu_custom_call.1} parent=1 // pred_check_branch
      %116 = sbr.rel (0) target = $region89
    $region88: #{tpu_custom_call.1} parent=1 // pred_region
      _
    $region89: #{tpu_custom_call.1} parent=1 // pred_fallthru
      _
    // Predicated region
    $region90: #{tpu_custom_call.1} parent=1 // pred_check
      _
    $region91: #{tpu_custom_call.1} parent=1 // pred_check_branch
      %118 = sbr.rel (0) target = $region93
    $region92: #{tpu_custom_call.1} parent=1 // pred_region
      _
    $region93: #{tpu_custom_call.1} parent=1 // pred_fallthru
      _
    // Predicated region
    $region94: #{tpu_custom_call.1} parent=1 // pred_check
      _
    $region95: #{tpu_custom_call.1} parent=1 // pred_check_branch
      %120 = sbr.rel (0) target = $region97
    $region96: #{tpu_custom_call.1} parent=1 // pred_region
      _
    $region97: #{tpu_custom_call.1} parent=1 // pred_fallthru
      _
    // Predicated region
    $region98: #{tpu_custom_call.1} parent=1 // pred_check
      _
    $region99: #{tpu_custom_call.1} parent=1 // pred_check_branch
      %122 = sbr.rel (0) target = $region101
    $region100: #{tpu_custom_call.1} parent=1 // pred_region
      %123 = dma.done [#allocation3], 256
    $region101: #{tpu_custom_call.1} parent=1 // pred_fallthru
      _
    // Predicated region
    $region102: #{tpu_custom_call.1} parent=1 // pred_check
      _
    $region103: #{tpu_custom_call.1} parent=1 // pred_check_branch
      %125 = sbr.rel (0) target = $region105
    $region104: #{tpu_custom_call.1} parent=1 // pred_region
      %126 = dma.done [#allocation6], 256
    $region105: #{tpu_custom_call.1} parent=1 // pred_fallthru
      _
    // Predicated region
    $region106: #{tpu_custom_call.1} parent=1 // pred_check
      _
    $region107: #{tpu_custom_call.1} parent=1 // pred_check_branch
      %128 = sbr.rel (0) target = $region109
    $region108: #{tpu_custom_call.1} parent=1 // pred_region
      %129 = dma.done [#allocation6], 256
    $region109: #{tpu_custom_call.1} parent=1 // pred_fallthru
      _
    // Predicated region
    $region110: #{tpu_custom_call.1} parent=1 // pred_check
      _
    $region111: #{tpu_custom_call.1} parent=1 // pred_check_branch
      %131 = sbr.rel (0) target = $region113
    $region112: #{tpu_custom_call.1} parent=1 // pred_region
      %132 = dma.done [#allocation9], 256
    $region113: #{tpu_custom_call.1} parent=1 // pred_fallthru
      _
    %v133 = vld [vmem:[#allocation2] sm:$0xff]
    %v134 = vld [vmem:[#allocation2 + $0x8] sm:$0xff]
    %v135 = vld [vmem:[#allocation5] sm:$0xff]
    %v136 = vld [vmem:[#allocation5 + $0x8] sm:$0xff]
    %v137 = vld [vmem:[#allocation7] sm:$0xff]
    %v138 = vld [vmem:[#allocation7 + $0x8] sm:$0xff]
    %v139 = vld [vmem:[#allocation8] sm:$0xff]
    %v140 = vld [vmem:[#allocation8 + $0x8] sm:$0xff]
    %v141 = vld [vmem:[%s16] sm:$0x1]
    %v142 = vld [vmem:[%s17] sm:$0x1]
    %vm143 = vcmask 261120
    %v144 = vsel %vm143, %v133, 0.0
    %145 = vadd.xlane.f32.xlu0 %v144
    %v146 = vpop.xlane.xlu0 %145
    %v147 = vsel %vm143, %v134, 0.0
    %148 = vadd.xlane.f32.xlu0 %v147
    %v149 = vpop.xlane.xlu0 %148
    %v150 = vrcp.pop 32.0
    %v151 = vmul.f32 %v146, %v150
    %v152 = vmul.f32 %v149, %v150
    %v153 = vsub.f32 %v133, %v151
    %v154 = vsub.f32 %v134, %v152
    %v155 = vmul.f32 %v153, %v153
    %v156 = vmul.f32 %v154, %v154
    %v157 = vsel %vm143, %v155, 0.0
    %158 = vadd.xlane.f32.xlu0 %v157
    %v159 = vpop.xlane.xlu0 %158
    %v160 = vsel %vm143, %v156, 0.0
    %161 = vadd.xlane.f32.xlu0 %v160
    %v162 = vpop.xlane.xlu0 %161
    %v163 = vmul.f32 %v159, %v150
    %v164 = vmul.f32 %v162, %v150
    %v165 = vadd.f32 %v163, 1e-05
    %v166 = vadd.f32 %v164, 1e-05
    %v167 = vrsqrt.pop %v165
    %v168 = vrsqrt.pop %v166
    %v169 = vmul.f32 %v153, %v167
    %v170 = vmul.f32 %v154, %v168
    %v172 = vlaneseq
    %v173 = vshrl.u32 %v172, 7
    %v174 = vsub.s32 0, %v173
    %v175 = vrot.slane %v141, %v174
    %v177 = vmul.f32 %v169, %v175
    %v178 = vmul.f32 %v170, %v175
    %v180 = vlaneseq
    %v181 = vshrl.u32 %v180, 7
    %v182 = vsub.s32 0, %v181
    %v183 = vrot.slane %v142, %v182
    %v185 = vadd.f32 %v177, %v183
    %v186 = vadd.f32 %v178, %v183
    %v187 = vld [vmem:[%s4] sm:$0xff]
    %v188 = vld [vmem:[%s4 + $0x8] sm:$0xff]
    %v189 = vld [vmem:[%s4 + $0x10] sm:$0xff]
    %v190 = vld [vmem:[%s4 + $0x18] sm:$0xff]
    %v191 = vld [vmem:[%s5] sm:$0x1]
    %v193 = vlaneseq
    %v194 = vshrl.u32 %v193, 7
    %v195 = vsub.s32 0, %v194
    %v196 = vrot.slane %v191, %v195
    %v199 = vsel %vm143, %v185, 0
    %v202 = vsel %vm143, %v186, 0
    %204 = vmatprep.subr.mxu0 0.0
    %205 = vmatpush1.msra.mxu0 %v187
    %206 = vmatprep.subr.mxu0 0.0
    %207 = vmatpush1.msra.mxu0 %v188
    %208 = vmatprep.subr.mxu0 0.0
    %209 = vmatpush1.msra.mxu0 %v189
    %210 = vmatprep.subr.mxu0 0.0
    %211 = vmatpush1.msra.mxu0 %v190
    %212 = vmatprep.subr.mxu0 0.0
    %213 = vmatpush1.msra.mxu0 0.0
    %214 = vmatprep.subr.mxu0 0.0
    %215 = vmatpush1.msra.mxu0 0.0
    %216 = vmatprep.subr.mxu0 0.0
    %217 = vmatpush1.msra.mxu0 0.0
    %218 = vmatprep.subr.mxu0 0.0
    %219 = vmatpush1.msra.mxu0 0.0
    %220 = vmatprep.subr.mxu0 0.0
    %221 = vmatpush1.msra.mxu0 0.0
    %222 = vmatprep.subr.mxu0 0.0
    %223 = vmatpush1.msra.mxu0 0.0
    %224 = vmatprep.subr.mxu0 0.0
    %225 = vmatpush1.msra.mxu0 0.0
    %226 = vmatprep.subr.mxu0 0.0
    %227 = vmatpush1.msra.mxu0 0.0
    %228 = vmatprep.subr.mxu0 0.0
    %229 = vmatpush1.msra.mxu0 0.0
    %230 = vmatprep.subr.mxu0 0.0
    %231 = vmatpush1.msra.mxu0 0.0
    %232 = vmatprep.subr.mxu0 0.0
    %233 = vmatpush1.msra.mxu0 0.0
    %234 = vmatprep.subr.mxu0 0.0
    %235 = vmatpush1.msra.mxu0 0.0
    %236 = vmatprep.subr.mxu0 0.0
    %237 = vmatpush1.msra.mxu0 0.0
    %238 = vmatprep.subr.mxu0 0.0
    %239 = vmatpush1.msra.mxu0 0.0
    %240 = vmatprep.subr.mxu0 0.0
    %241 = vmatpush1.msra.mxu0 0.0
    %242 = vmatprep.subr.mxu0 0.0
    %243 = vmatpush1.msra.mxu0 0.0
    %244 = vmatprep.subr.mxu0 0.0
    %245 = vmatpush1.msra.mxu0 0.0
    %246 = vmatprep.subr.mxu0 0.0
    %247 = vmatpush1.msra.mxu0 0.0
    %248 = vmatprep.subr.mxu0 0.0
    %249 = vmatpush1.msra.mxu0 0.0
    %250 = vmatprep.subr.mxu0 0.0
    %251 = vmatpush1.msra.mxu0 0.0
    %252 = vmatprep.subr.mxu0 0.0
    %253 = vmatpush1.msra.mxu0 0.0
    %254 = vmatprep.subr.mxu0 0.0
    %255 = vmatpush1.msra.mxu0 0.0
    %256 = vmatprep.subr.mxu0 0.0
    %257 = vmatpush1.msra.mxu0 0.0
    %258 = vmatprep.subr.mxu0 0.0
    %259 = vmatpush1.msra.mxu0 0.0
    %260 = vmatprep.subr.mxu0 0.0
    %261 = vmatpush1.msra.mxu0 0.0
    %262 = vmatprep.subr.mxu0 0.0
    %263 = vmatpush1.msra.mxu0 0.0
    %264 = vmatprep.subr.mxu0 0.0
    %265 = vmatpush1.msra.mxu0 0.0
    %266 = vmatprep.subr.mxu0 0.0
    %267 = vmatpush1.msra.mxu0 0.0
    %268 = vmatprep.mubr.f32.mxu0 0.0
    %269 = vmatmul.mubr.f32.gmra.mrb[0].mxu0 %v199
    %v270 = vpop.f32.mrb[0].mxu0
    %v271 = vadd.f32 %v196, %v270
    %v272 = vpop.f32.mrb[0].mxu0
    %273 = vmatprep.mubr.f32.mxu0 0.0
    %274 = vmatmul.mubr.f32.gmra.mrb[0].mxu0 %v202
    %v275 = vpop.f32.mrb[0].mxu0
    %v276 = vadd.f32 %v196, %v275
    %v277 = vpop.f32.mrb[0].mxu0
    %278 = vdwg.mxu0
    %v279 = vld [vmem:[%s6] sm:$0xff]
    %v280 = vld [vmem:[%s6 + $0x8] sm:$0xff]
    %v281 = vld [vmem:[%s6 + $0x10] sm:$0xff]
    %v282 = vld [vmem:[%s6 + $0x18] sm:$0xff]
    %v283 = vld [vmem:[%s7] sm:$0x1]
    %286 = vrot.lane.b32.xlu0 %v271, 96
    %v287 = vpop.permute.xlu0 %286
    %288 = vrot.lane.b32.xlu0 %v276, 96
    %v289 = vpop.permute.xlu0 %288
    %vm290 = vcmask 64512
    %v291 = vsel %vm290, %v271, 0
    %v293 = vsel %vm290, %v276, 0
    %v295 = vsel %vm290, %v287, 0
    %v297 = vsel %vm290, %v289, 0
    %299 = vmatprep.subr.mxu0 0.0
    %300 = vmatpush1.xpose.msra.mxu0 %v295
    %301 = vmatprep.subr.mxu0 0.0
    %302 = vmatpush1.xpose.msra.mxu0 %v297
    %303 = vmatprep.subr.mxu0 0.0
    %304 = vmatpush1.xpose.msra.mxu0 0.0
    %305 = vmatprep.subr.mxu0 0.0
    %306 = vmatpush1.xpose.msra.mxu0 0.0
    %307 = vmatprep.subr.mxu0 0.0
    %308 = vmatpush1.xpose.msra.mxu0 0.0
    %309 = vmatprep.subr.mxu0 0.0
    %310 = vmatpush1.xpose.msra.mxu0 0.0
    %311 = vmatprep.subr.mxu0 0.0
    %312 = vmatpush1.xpose.msra.mxu0 0.0
    %313 = vmatprep.subr.mxu0 0.0
    %314 = vmatpush1.xpose.msra.mxu0 0.0
    %315 = vmatprep.subr.mxu0 0.0
    %316 = vmatpush1.xpose.msra.mxu0 0.0
    %317 = vmatprep.subr.mxu0 0.0
    %318 = vmatpush1.xpose.msra.mxu0 0.0
    %319 = vmatprep.subr.mxu0 0.0
    %320 = vmatpush1.xpose.msra.mxu0 0.0
    %321 = vmatprep.subr.mxu0 0.0
    %322 = vmatpush1.xpose.msra.mxu0 0.0
    %323 = vmatprep.subr.mxu0 0.0
    %324 = vmatpush1.xpose.msra.mxu0 0.0
    %325 = vmatprep.subr.mxu0 0.0
    %326 = vmatpush1.xpose.msra.mxu0 0.0
    %327 = vmatprep.subr.mxu0 0.0
    %328 = vmatpush1.xpose.msra.mxu0 0.0
    %329 = vmatprep.subr.mxu0 0.0
    %330 = vmatpush1.xpose.msra.mxu0 0.0
    %331 = vmatprep.subr.mxu0 0.0
    %332 = vmatpush1.xpose.msra.mxu0 0.0
    %333 = vmatprep.subr.mxu0 0.0
    %334 = vmatpush1.xpose.msra.mxu0 0.0
    %335 = vmatprep.subr.mxu0 0.0
    %336 = vmatpush1.xpose.msra.mxu0 0.0
    %337 = vmatprep.subr.mxu0 0.0
    %338 = vmatpush1.xpose.msra.mxu0 0.0
    %339 = vmatprep.subr.mxu0 0.0
    %340 = vmatpush1.xpose.msra.mxu0 0.0
    %341 = vmatprep.subr.mxu0 0.0
    %342 = vmatpush1.xpose.msra.mxu0 0.0
    %343 = vmatprep.subr.mxu0 0.0
    %344 = vmatpush1.xpose.msra.mxu0 0.0
    %345 = vmatprep.subr.mxu0 0.0
    %346 = vmatpush1.xpose.msra.mxu0 0.0
    %347 = vmatprep.subr.mxu0 0.0
    %348 = vmatpush1.xpose.msra.mxu0 0.0
    %349 = vmatprep.subr.mxu0 0.0
    %350 = vmatpush1.xpose.msra.mxu0 0.0
    %351 = vmatprep.subr.mxu0 0.0
    %352 = vmatpush1.xpose.msra.mxu0 0.0
    %353 = vmatprep.subr.mxu0 0.0
    %354 = vmatpush1.xpose.msra.mxu0 0.0
    %355 = vmatprep.subr.mxu0 0.0
    %356 = vmatpush1.xpose.msra.mxu0 0.0
    %357 = vmatprep.subr.mxu0 0.0
    %358 = vmatpush1.xpose.msra.mxu0 0.0
    %359 = vmatprep.subr.mxu0 0.0
    %360 = vmatpush1.xpose.msra.mxu0 0.0
    %361 = vmatprep.subr.mxu0 0.0
    %362 = vmatpush1.xpose.msra.mxu0 0.0
    %363 = vmatprep.mubr.f32.mxu0 0.0
    %364 = vmatmul.mubr.f32.gmra.mrb[0].mxu0 %v291
    %v365 = vpop.f32.mrb[0].mxu0
    %v366 = vadd.f32 0.0, %v365
    %v367 = vpop.f32.mrb[0].mxu0
    %368 = vmatprep.mubr.f32.mxu0 0.0
    %369 = vmatmul.mubr.f32.gmra.mrb[0].mxu0 %v293
    %v370 = vpop.f32.mrb[0].mxu0
    %v371 = vadd.f32 0.0, %v370
    %v372 = vpop.f32.mrb[0].mxu0
    %373 = vdwg.mxu0
    %v374 = vmul.f32 %v366, 0.35355338
    %v375 = vmul.f32 %v371, 0.35355338
    %v376 = vadd.f32 %v374, %v137
    %v377 = vadd.f32 %v375, %v138
    %vm378 = vcmask 130048
    %v379 = vsel %vm378, %v376, -inf
    %380 = vmax.xlane.f32.xlu0 %v379
    %v381 = vpop.xlane.xlu0 %380
    %v382 = vsel %vm378, %v377, -inf
    %383 = vmax.xlane.f32.xlu0 %v382
    %v384 = vpop.xlane.xlu0 %383
    %v385 = vsub.f32 %v376, %v381
    %v386 = vsub.f32 %v377, %v384
    %v387 = vmul.f32 %v385, 1.442695
    %v388 = vpow.pop %v387
    %v389 = vmul.f32 %v386, 1.442695
    %v390 = vpow.pop %v389
    %v391 = vsel %vm378, %v388, 0.0
    %392 = vadd.xlane.f32.xlu0 %v391
    %v393 = vpop.xlane.xlu0 %392
    %v394 = vsel %vm378, %v390, 0.0
    %395 = vadd.xlane.f32.xlu0 %v394
    %v396 = vpop.xlane.xlu0 %395
    %v397 = vrcp.pop %v393
    %v398 = vrcp.pop %v396
    %v399 = vmul.f32 %v388, %v397
    %v400 = vmul.f32 %v390, %v398
    %401 = vrot.lane.b32.xlu0 %v271, 64
    %v402 = vpop.permute.xlu0 %401
    %403 = vrot.lane.b32.xlu0 %v276, 64
    %v404 = vpop.permute.xlu0 %403
    %v408 = vsel %vm378, %v399, 0
    %v411 = vsel %vm378, %v400, 0
    %413 = vmatprep.subr.mxu0 0.0
    %414 = vmatpush1.msra.mxu0 %v402
    %415 = vmatprep.subr.mxu0 0.0
    %416 = vmatpush1.msra.mxu0 %v404
    %417 = vmatprep.subr.mxu0 0.0
    %418 = vmatpush1.msra.mxu0 0.0
    %419 = vmatprep.subr.mxu0 0.0
    %420 = vmatpush1.msra.mxu0 0.0
    %421 = vmatprep.subr.mxu0 0.0
    %422 = vmatpush1.msra.mxu0 0.0
    %423 = vmatprep.subr.mxu0 0.0
    %424 = vmatpush1.msra.mxu0 0.0
    %425 = vmatprep.subr.mxu0 0.0
    %426 = vmatpush1.msra.mxu0 0.0
    %427 = vmatprep.subr.mxu0 0.0
    %428 = vmatpush1.msra.mxu0 0.0
    %429 = vmatprep.subr.mxu0 0.0
    %430 = vmatpush1.msra.mxu0 0.0
    %431 = vmatprep.subr.mxu0 0.0
    %432 = vmatpush1.msra.mxu0 0.0
    %433 = vmatprep.subr.mxu0 0.0
    %434 = vmatpush1.msra.mxu0 0.0
    %435 = vmatprep.subr.mxu0 0.0
    %436 = vmatpush1.msra.mxu0 0.0
    %437 = vmatprep.subr.mxu0 0.0
    %438 = vmatpush1.msra.mxu0 0.0
    %439 = vmatprep.subr.mxu0 0.0
    %440 = vmatpush1.msra.mxu0 0.0
    %441 = vmatprep.subr.mxu0 0.0
    %442 = vmatpush1.msra.mxu0 0.0
    %443 = vmatprep.subr.mxu0 0.0
    %444 = vmatpush1.msra.mxu0 0.0
    %445 = vmatprep.subr.mxu0 0.0
    %446 = vmatpush1.msra.mxu0 0.0
    %447 = vmatprep.subr.mxu0 0.0
    %448 = vmatpush1.msra.mxu0 0.0
    %449 = vmatprep.subr.mxu0 0.0
    %450 = vmatpush1.msra.mxu0 0.0
    %451 = vmatprep.subr.mxu0 0.0
    %452 = vmatpush1.msra.mxu0 0.0
    %453 = vmatprep.subr.mxu0 0.0
    %454 = vmatpush1.msra.mxu0 0.0
    %455 = vmatprep.subr.mxu0 0.0
    %456 = vmatpush1.msra.mxu0 0.0
    %457 = vmatprep.subr.mxu0 0.0
    %458 = vmatpush1.msra.mxu0 0.0
    %459 = vmatprep.subr.mxu0 0.0
    %460 = vmatpush1.msra.mxu0 0.0
    %461 = vmatprep.subr.mxu0 0.0
    %462 = vmatpush1.msra.mxu0 0.0
    %463 = vmatprep.subr.mxu0 0.0
    %464 = vmatpush1.msra.mxu0 0.0
    %465 = vmatprep.subr.mxu0 0.0
    %466 = vmatpush1.msra.mxu0 0.0
    %467 = vmatprep.subr.mxu0 0.0
    %468 = vmatpush1.msra.mxu0 0.0
    %469 = vmatprep.subr.mxu0 0.0
    %470 = vmatpush1.msra.mxu0 0.0
    %471 = vmatprep.subr.mxu0 0.0
    %472 = vmatpush1.msra.mxu0 0.0
    %473 = vmatprep.subr.mxu0 0.0
    %474 = vmatpush1.msra.mxu0 0.0
    %475 = vmatprep.subr.mxu0 0.0
    %476 = vmatpush1.msra.mxu0 0.0
    %477 = vmatprep.mubr.f32.mxu0 0.0
    %478 = vmatmul.mubr.f32.gmra.mrb[0].mxu0 %v408
    %v479 = vpop.f32.mrb[0].mxu0
    %v480 = vadd.f32 0.0, %v479
    %v481 = vpop.f32.mrb[0].mxu0
    %482 = vmatprep.mubr.f32.mxu0 0.0
    %483 = vmatmul.mubr.f32.gmra.mrb[0].mxu0 %v411
    %v484 = vpop.f32.mrb[0].mxu0
    %v485 = vadd.f32 0.0, %v484
    %v486 = vpop.f32.mrb[0].mxu0
    %487 = vdwg.mxu0
    %488 = vrot.lane.b32.xlu0 %v271, 120
    %v489 = vpop.permute.xlu0 %488
    %490 = vrot.lane.b32.xlu0 %v276, 120
    %v491 = vpop.permute.xlu0 %490
    %492 = vrot.lane.b32.xlu0 %v271, 88
    %v493 = vpop.permute.xlu0 %492
    %494 = vrot.lane.b32.xlu0 %v276, 88
    %v495 = vpop.permute.xlu0 %494
    %v496 = vsel %vm290, %v489, 0
    %v498 = vsel %vm290, %v491, 0
    %v500 = vsel %vm290, %v493, 0
    %v502 = vsel %vm290, %v495, 0
    %504 = vmatprep.subr.mxu0 0.0
    %505 = vmatpush1.xpose.msra.mxu0 %v500
    %506 = vmatprep.subr.mxu0 0.0
    %507 = vmatpush1.xpose.msra.mxu0 %v502
    %508 = vmatprep.subr.mxu0 0.0
    %509 = vmatpush1.xpose.msra.mxu0 0.0
    %510 = vmatprep.subr.mxu0 0.0
    %511 = vmatpush1.xpose.msra.mxu0 0.0
    %512 = vmatprep.subr.mxu0 0.0
    %513 = vmatpush1.xpose.msra.mxu0 0.0
    %514 = vmatprep.subr.mxu0 0.0
    %515 = vmatpush1.xpose.msra.mxu0 0.0
    %516 = vmatprep.subr.mxu0 0.0
    %517 = vmatpush1.xpose.msra.mxu0 0.0
    %518 = vmatprep.subr.mxu0 0.0
    %519 = vmatpush1.xpose.msra.mxu0 0.0
    %520 = vmatprep.subr.mxu0 0.0
    %521 = vmatpush1.xpose.msra.mxu0 0.0
    %522 = vmatprep.subr.mxu0 0.0
    %523 = vmatpush1.xpose.msra.mxu0 0.0
    %524 = vmatprep.subr.mxu0 0.0
    %525 = vmatpush1.xpose.msra.mxu0 0.0
    %526 = vmatprep.subr.mxu0 0.0
    %527 = vmatpush1.xpose.msra.mxu0 0.0
    %528 = vmatprep.subr.mxu0 0.0
    %529 = vmatpush1.xpose.msra.mxu0 0.0
    %530 = vmatprep.subr.mxu0 0.0
    %531 = vmatpush1.xpose.msra.mxu0 0.0
    %532 = vmatprep.subr.mxu0 0.0
    %533 = vmatpush1.xpose.msra.mxu0 0.0
    %534 = vmatprep.subr.mxu0 0.0
    %535 = vmatpush1.xpose.msra.mxu0 0.0
    %536 = vmatprep.subr.mxu0 0.0
    %537 = vmatpush1.xpose.msra.mxu0 0.0
    %538 = vmatprep.subr.mxu0 0.0
    %539 = vmatpush1.xpose.msra.mxu0 0.0
    %540 = vmatprep.subr.mxu0 0.0
    %541 = vmatpush1.xpose.msra.mxu0 0.0
    %542 = vmatprep.subr.mxu0 0.0
    %543 = vmatpush1.xpose.msra.mxu0 0.0
    %544 = vmatprep.subr.mxu0 0.0
    %545 = vmatpush1.xpose.msra.mxu0 0.0
    %546 = vmatprep.subr.mxu0 0.0
    %547 = vmatpush1.xpose.msra.mxu0 0.0
    %548 = vmatprep.subr.mxu0 0.0
    %549 = vmatpush1.xpose.msra.mxu0 0.0
    %550 = vmatprep.subr.mxu0 0.0
    %551 = vmatpush1.xpose.msra.mxu0 0.0
    %552 = vmatprep.subr.mxu0 0.0
    %553 = vmatpush1.xpose.msra.mxu0 0.0
    %554 = vmatprep.subr.mxu0 0.0
    %555 = vmatpush1.xpose.msra.mxu0 0.0
    %556 = vmatprep.subr.mxu0 0.0
    %557 = vmatpush1.xpose.msra.mxu0 0.0
    %558 = vmatprep.subr.mxu0 0.0
    %559 = vmatpush1.xpose.msra.mxu0 0.0
    %560 = vmatprep.subr.mxu0 0.0
    %561 = vmatpush1.xpose.msra.mxu0 0.0
    %562 = vmatprep.subr.mxu0 0.0
    %563 = vmatpush1.xpose.msra.mxu0 0.0
    %564 = vmatprep.subr.mxu0 0.0
    %565 = vmatpush1.xpose.msra.mxu0 0.0
    %566 = vmatprep.subr.mxu0 0.0
    %567 = vmatpush1.xpose.msra.mxu0 0.0
    %568 = vmatprep.mubr.f32.mxu0 0.0
    %569 = vmatmul.mubr.f32.gmra.mrb[0].mxu0 %v496
    %v570 = vpop.f32.mrb[0].mxu0
    %v571 = vadd.f32 0.0, %v570
    %v572 = vpop.f32.mrb[0].mxu0
    %573 = vmatprep.mubr.f32.mxu0 0.0
    %574 = vmatmul.mubr.f32.gmra.mrb[0].mxu0 %v498
    %v575 = vpop.f32.mrb[0].mxu0
    %v576 = vadd.f32 0.0, %v575
    %v577 = vpop.f32.mrb[0].mxu0
    %578 = vdwg.mxu0
    %v579 = vmul.f32 %v571, 0.35355338
    %v580 = vmul.f32 %v576, 0.35355338
    %v581 = vadd.f32 %v579, %v137
    %v582 = vadd.f32 %v580, %v138
    %v583 = vsel %vm378, %v581, -inf
    %584 = vmax.xlane.f32.xlu0 %v583
    %v585 = vpop.xlane.xlu0 %584
    %v586 = vsel %vm378, %v582, -inf
    %587 = vmax.xlane.f32.xlu0 %v586
    %v588 = vpop.xlane.xlu0 %587
    %v589 = vsub.f32 %v581, %v585
    %v590 = vsub.f32 %v582, %v588
    %v591 = vmul.f32 %v589, 1.442695
    %v592 = vpow.pop %v591
    %v593 = vmul.f32 %v590, 1.442695
    %v594 = vpow.pop %v593
    %v595 = vsel %vm378, %v592, 0.0
    %596 = vadd.xlane.f32.xlu0 %v595
    %v597 = vpop.xlane.xlu0 %596
    %v598 = vsel %vm378, %v594, 0.0
    %599 = vadd.xlane.f32.xlu0 %v598
    %v600 = vpop.xlane.xlu0 %599
    %v601 = vrcp.pop %v597
    %v602 = vrcp.pop %v600
    %v603 = vmul.f32 %v592, %v601
    %v604 = vmul.f32 %v594, %v602
    %605 = vrot.lane.b32.xlu0 %v271, 56
    %v606 = vpop.permute.xlu0 %605
    %607 = vrot.lane.b32.xlu0 %v276, 56
    %v608 = vpop.permute.xlu0 %607
    %v612 = vsel %vm378, %v603, 0
    %v615 = vsel %vm378, %v604, 0
    %617 = vmatprep.subr.mxu0 0.0
    %618 = vmatpush1.msra.mxu0 %v606
    %619 = vmatprep.subr.mxu0 0.0
    %620 = vmatpush1.msra.mxu0 %v608
    %621 = vmatprep.subr.mxu0 0.0
    %622 = vmatpush1.msra.mxu0 0.0
    %623 = vmatprep.subr.mxu0 0.0
    %624 = vmatpush1.msra.mxu0 0.0
    %625 = vmatprep.subr.mxu0 0.0
    %626 = vmatpush1.msra.mxu0 0.0
    %627 = vmatprep.subr.mxu0 0.0
    %628 = vmatpush1.msra.mxu0 0.0
    %629 = vmatprep.subr.mxu0 0.0
    %630 = vmatpush1.msra.mxu0 0.0
    %631 = vmatprep.subr.mxu0 0.0
    %632 = vmatpush1.msra.mxu0 0.0
    %633 = vmatprep.subr.mxu0 0.0
    %634 = vmatpush1.msra.mxu0 0.0
    %635 = vmatprep.subr.mxu0 0.0
    %636 = vmatpush1.msra.mxu0 0.0
    %637 = vmatprep.subr.mxu0 0.0
    %638 = vmatpush1.msra.mxu0 0.0
    %639 = vmatprep.subr.mxu0 0.0
    %640 = vmatpush1.msra.mxu0 0.0
    %641 = vmatprep.subr.mxu0 0.0
    %642 = vmatpush1.msra.mxu0 0.0
    %643 = vmatprep.subr.mxu0 0.0
    %644 = vmatpush1.msra.mxu0 0.0
    %645 = vmatprep.subr.mxu0 0.0
    %646 = vmatpush1.msra.mxu0 0.0
    %647 = vmatprep.subr.mxu0 0.0
    %648 = vmatpush1.msra.mxu0 0.0
    %649 = vmatprep.subr.mxu0 0.0
    %650 = vmatpush1.msra.mxu0 0.0
    %651 = vmatprep.subr.mxu0 0.0
    %652 = vmatpush1.msra.mxu0 0.0
    %653 = vmatprep.subr.mxu0 0.0
    %654 = vmatpush1.msra.mxu0 0.0
    %655 = vmatprep.subr.mxu0 0.0
    %656 = vmatpush1.msra.mxu0 0.0
    %657 = vmatprep.subr.mxu0 0.0
    %658 = vmatpush1.msra.mxu0 0.0
    %659 = vmatprep.subr.mxu0 0.0
    %660 = vmatpush1.msra.mxu0 0.0
    %661 = vmatprep.subr.mxu0 0.0
    %662 = vmatpush1.msra.mxu0 0.0
    %663 = vmatprep.subr.mxu0 0.0
    %664 = vmatpush1.msra.mxu0 0.0
    %665 = vmatprep.subr.mxu0 0.0
    %666 = vmatpush1.msra.mxu0 0.0
    %667 = vmatprep.subr.mxu0 0.0
    %668 = vmatpush1.msra.mxu0 0.0
    %669 = vmatprep.subr.mxu0 0.0
    %670 = vmatpush1.msra.mxu0 0.0
    %671 = vmatprep.subr.mxu0 0.0
    %672 = vmatpush1.msra.mxu0 0.0
    %673 = vmatprep.subr.mxu0 0.0
    %674 = vmatpush1.msra.mxu0 0.0
    %675 = vmatprep.subr.mxu0 0.0
    %676 = vmatpush1.msra.mxu0 0.0
    %677 = vmatprep.subr.mxu0 0.0
    %678 = vmatpush1.msra.mxu0 0.0
    %679 = vmatprep.subr.mxu0 0.0
    %680 = vmatpush1.msra.mxu0 0.0
    %681 = vmatprep.mubr.f32.mxu0 0.0
    %682 = vmatmul.mubr.f32.gmra.mrb[0].mxu0 %v612
    %v683 = vpop.f32.mrb[0].mxu0
    %v684 = vadd.f32 0.0, %v683
    %v685 = vpop.f32.mrb[0].mxu0
    %686 = vmatprep.mubr.f32.mxu0 0.0
    %687 = vmatmul.mubr.f32.gmra.mrb[0].mxu0 %v615
    %v688 = vpop.f32.mrb[0].mxu0
    %v689 = vadd.f32 0.0, %v688
    %v690 = vpop.f32.mrb[0].mxu0
    %691 = vdwg.mxu0
    %v693 = vsel %vm290, %v684, 0
    %v696 = vsel %vm290, %v689, 0
    %698 = vmatprep.subr.mxu0 0.0
    %699 = vmatpush1.msra.mxu0 %v280
    %700 = vmatprep.subr.mxu0 0.0
    %701 = vmatpush1.msra.mxu0 0.0
    %702 = vmatprep.subr.mxu0 0.0
    %703 = vmatpush1.msra.mxu0 0.0
    %704 = vmatprep.subr.mxu0 0.0
    %705 = vmatpush1.msra.mxu0 0.0
    %706 = vmatprep.subr.mxu0 0.0
    %707 = vmatpush1.msra.mxu0 0.0
    %708 = vmatprep.subr.mxu0 0.0
    %709 = vmatpush1.msra.mxu0 0.0
    %710 = vmatprep.subr.mxu0 0.0
    %711 = vmatpush1.msra.mxu0 0.0
    %712 = vmatprep.subr.mxu0 0.0
    %713 = vmatpush1.msra.mxu0 0.0
    %714 = vmatprep.subr.mxu0 0.0
    %715 = vmatpush1.msra.mxu0 0.0
    %716 = vmatprep.subr.mxu0 0.0
    %717 = vmatpush1.msra.mxu0 0.0
    %718 = vmatprep.subr.mxu0 0.0
    %719 = vmatpush1.msra.mxu0 0.0
    %720 = vmatprep.subr.mxu0 0.0
    %721 = vmatpush1.msra.mxu0 0.0
    %722 = vmatprep.subr.mxu0 0.0
    %723 = vmatpush1.msra.mxu0 0.0
    %724 = vmatprep.subr.mxu0 0.0
    %725 = vmatpush1.msra.mxu0 0.0
    %726 = vmatprep.subr.mxu0 0.0
    %727 = vmatpush1.msra.mxu0 0.0
    %728 = vmatprep.subr.mxu0 0.0
    %729 = vmatpush1.msra.mxu0 0.0
    %730 = vmatprep.subr.mxu0 0.0
    %731 = vmatpush1.msra.mxu0 0.0
    %732 = vmatprep.subr.mxu0 0.0
    %733 = vmatpush1.msra.mxu0 0.0
    %734 = vmatprep.subr.mxu0 0.0
    %735 = vmatpush1.msra.mxu0 0.0
    %736 = vmatprep.subr.mxu0 0.0
    %737 = vmatpush1.msra.mxu0 0.0
    %738 = vmatprep.subr.mxu0 0.0
    %739 = vmatpush1.msra.mxu0 0.0
    %740 = vmatprep.subr.mxu0 0.0
    %741 = vmatpush1.msra.mxu0 0.0
    %742 = vmatprep.subr.mxu0 0.0
    %743 = vmatpush1.msra.mxu0 0.0
    %744 = vmatprep.subr.mxu0 0.0
    %745 = vmatpush1.msra.mxu0 0.0
    %746 = vmatprep.subr.mxu0 0.0
    %747 = vmatpush1.msra.mxu0 0.0
    %748 = vmatprep.subr.mxu0 0.0
    %749 = vmatpush1.msra.mxu0 0.0
    %750 = vmatprep.subr.mxu0 0.0
    %751 = vmatpush1.msra.mxu0 0.0
    %752 = vmatprep.subr.mxu0 0.0
    %753 = vmatpush1.msra.mxu0 0.0
    %754 = vmatprep.subr.mxu0 0.0
    %755 = vmatpush1.msra.mxu0 0.0
    %756 = vmatprep.subr.mxu0 0.0
    %757 = vmatpush1.msra.mxu0 0.0
    %758 = vmatprep.subr.mxu0 0.0
    %759 = vmatpush1.msra.mxu0 0.0
    %760 = vmatprep.subr.mxu0 0.0
    %761 = vmatpush1.msra.mxu0 0.0
    %762 = vmatprep.mubr.f32.mxu0 0.0
    %763 = vmatmul.mubr.f32.gmra.mrb[0].mxu0 %v693
    %v764 = vpop.f32.mrb[0].mxu0
    %v765 = vadd.f32 0.0, %v764
    %v766 = vpop.f32.mrb[0].mxu0
    %767 = vmatprep.mubr.f32.mxu0 0.0
    %768 = vmatmul.mubr.f32.gmra.mrb[0].mxu0 %v696
    %v769 = vpop.f32.mrb[0].mxu0
    %v770 = vadd.f32 0.0, %v769
    %v771 = vpop.f32.mrb[0].mxu0
    %772 = vdwg.mxu0
    %v774 = vsel %vm290, %v480, 0
    %v777 = vsel %vm290, %v485, 0
    %779 = vmatprep.subr.mxu0 0.0
    %780 = vmatpush1.msra.mxu0 %v279
    %781 = vmatprep.subr.mxu0 0.0
    %782 = vmatpush1.msra.mxu0 0.0
    %783 = vmatprep.subr.mxu0 0.0
    %784 = vmatpush1.msra.mxu0 0.0
    %785 = vmatprep.subr.mxu0 0.0
    %786 = vmatpush1.msra.mxu0 0.0
    %787 = vmatprep.subr.mxu0 0.0
    %788 = vmatpush1.msra.mxu0 0.0
    %789 = vmatprep.subr.mxu0 0.0
    %790 = vmatpush1.msra.mxu0 0.0
    %791 = vmatprep.subr.mxu0 0.0
    %792 = vmatpush1.msra.mxu0 0.0
    %793 = vmatprep.subr.mxu0 0.0
    %794 = vmatpush1.msra.mxu0 0.0
    %795 = vmatprep.subr.mxu0 0.0
    %796 = vmatpush1.msra.mxu0 0.0
    %797 = vmatprep.subr.mxu0 0.0
    %798 = vmatpush1.msra.mxu0 0.0
    %799 = vmatprep.subr.mxu0 0.0
    %800 = vmatpush1.msra.mxu0 0.0
    %801 = vmatprep.subr.mxu0 0.0
    %802 = vmatpush1.msra.mxu0 0.0
    %803 = vmatprep.subr.mxu0 0.0
    %804 = vmatpush1.msra.mxu0 0.0
    %805 = vmatprep.subr.mxu0 0.0
    %806 = vmatpush1.msra.mxu0 0.0
    %807 = vmatprep.subr.mxu0 0.0
    %808 = vmatpush1.msra.mxu0 0.0
    %809 = vmatprep.subr.mxu0 0.0
    %810 = vmatpush1.msra.mxu0 0.0
    %811 = vmatprep.subr.mxu0 0.0
    %812 = vmatpush1.msra.mxu0 0.0
    %813 = vmatprep.subr.mxu0 0.0
    %814 = vmatpush1.msra.mxu0 0.0
    %815 = vmatprep.subr.mxu0 0.0
    %816 = vmatpush1.msra.mxu0 0.0
    %817 = vmatprep.subr.mxu0 0.0
    %818 = vmatpush1.msra.mxu0 0.0
    %819 = vmatprep.subr.mxu0 0.0
    %820 = vmatpush1.msra.mxu0 0.0
    %821 = vmatprep.subr.mxu0 0.0
    %822 = vmatpush1.msra.mxu0 0.0
    %823 = vmatprep.subr.mxu0 0.0
    %824 = vmatpush1.msra.mxu0 0.0
    %825 = vmatprep.subr.mxu0 0.0
    %826 = vmatpush1.msra.mxu0 0.0
    %827 = vmatprep.subr.mxu0 0.0
    %828 = vmatpush1.msra.mxu0 0.0
    %829 = vmatprep.subr.mxu0 0.0
    %830 = vmatpush1.msra.mxu0 0.0
    %831 = vmatprep.subr.mxu0 0.0
    %832 = vmatpush1.msra.mxu0 0.0
    %833 = vmatprep.subr.mxu0 0.0
    %834 = vmatpush1.msra.mxu0 0.0
    %835 = vmatprep.subr.mxu0 0.0
    %836 = vmatpush1.msra.mxu0 0.0
    %837 = vmatprep.subr.mxu0 0.0
    %838 = vmatpush1.msra.mxu0 0.0
    %839 = vmatprep.subr.mxu0 0.0
    %840 = vmatpush1.msra.mxu0 0.0
    %841 = vmatprep.subr.mxu0 0.0
    %842 = vmatpush1.msra.mxu0 0.0
    %843 = vmatprep.mubr.f32.mxu0 0.0
    %844 = vmatmul.mubr.f32.gmra.mrb[0].mxu0 %v774
    %v845 = vpop.f32.mrb[0].mxu0
    %v846 = vadd.f32 %v765, %v845
    %v847 = vpop.f32.mrb[0].mxu0
    %848 = vmatprep.mubr.f32.mxu0 0.0
    %849 = vmatmul.mubr.f32.gmra.mrb[0].mxu0 %v777
    %v850 = vpop.f32.mrb[0].mxu0
    %v851 = vadd.f32 %v770, %v850
    %v852 = vpop.f32.mrb[0].mxu0
    %853 = vdwg.mxu0
    %854 = vrot.lane.b32.xlu0 %v271, 112
    %v855 = vpop.permute.xlu0 %854
    %856 = vrot.lane.b32.xlu0 %v276, 112
    %v857 = vpop.permute.xlu0 %856
    %858 = vrot.lane.b32.xlu0 %v271, 80
    %v859 = vpop.permute.xlu0 %858
    %860 = vrot.lane.b32.xlu0 %v276, 80
    %v861 = vpop.permute.xlu0 %860
    %v862 = vsel %vm290, %v855, 0
    %v864 = vsel %vm290, %v857, 0
    %v866 = vsel %vm290, %v859, 0
    %v868 = vsel %vm290, %v861, 0
    %870 = vmatprep.subr.mxu0 0.0
    %871 = vmatpush1.xpose.msra.mxu0 %v866
    %872 = vmatprep.subr.mxu0 0.0
    %873 = vmatpush1.xpose.msra.mxu0 %v868
    %874 = vmatprep.subr.mxu0 0.0
    %875 = vmatpush1.xpose.msra.mxu0 0.0
    %876 = vmatprep.subr.mxu0 0.0
    %877 = vmatpush1.xpose.msra.mxu0 0.0
    %878 = vmatprep.subr.mxu0 0.0
    %879 = vmatpush1.xpose.msra.mxu0 0.0
    %880 = vmatprep.subr.mxu0 0.0
    %881 = vmatpush1.xpose.msra.mxu0 0.0
    %882 = vmatprep.subr.mxu0 0.0
    %883 = vmatpush1.xpose.msra.mxu0 0.0
    %884 = vmatprep.subr.mxu0 0.0
    %885 = vmatpush1.xpose.msra.mxu0 0.0
    %886 = vmatprep.subr.mxu0 0.0
    %887 = vmatpush1.xpose.msra.mxu0 0.0
    %888 = vmatprep.subr.mxu0 0.0
    %889 = vmatpush1.xpose.msra.mxu0 0.0
    %890 = vmatprep.subr.mxu0 0.0
    %891 = vmatpush1.xpose.msra.mxu0 0.0
    %892 = vmatprep.subr.mxu0 0.0
    %893 = vmatpush1.xpose.msra.mxu0 0.0
    %894 = vmatprep.subr.mxu0 0.0
    %895 = vmatpush1.xpose.msra.mxu0 0.0
    %896 = vmatprep.subr.mxu0 0.0
    %897 = vmatpush1.xpose.msra.mxu0 0.0
    %898 = vmatprep.subr.mxu0 0.0
    %899 = vmatpush1.xpose.msra.mxu0 0.0
    %900 = vmatprep.subr.mxu0 0.0
    %901 = vmatpush1.xpose.msra.mxu0 0.0
    %902 = vmatprep.subr.mxu0 0.0
    %903 = vmatpush1.xpose.msra.mxu0 0.0
    %904 = vmatprep.subr.mxu0 0.0
    %905 = vmatpush1.xpose.msra.mxu0 0.0
    %906 = vmatprep.subr.mxu0 0.0
    %907 = vmatpush1.xpose.msra.mxu0 0.0
    %908 = vmatprep.subr.mxu0 0.0
    %909 = vmatpush1.xpose.msra.mxu0 0.0
    %910 = vmatprep.subr.mxu0 0.0
    %911 = vmatpush1.xpose.msra.mxu0 0.0
    %912 = vmatprep.subr.mxu0 0.0
    %913 = vmatpush1.xpose.msra.mxu0 0.0
    %914 = vmatprep.subr.mxu0 0.0
    %915 = vmatpush1.xpose.msra.mxu0 0.0
    %916 = vmatprep.subr.mxu0 0.0
    %917 = vmatpush1.xpose.msra.mxu0 0.0
    %918 = vmatprep.subr.mxu0 0.0
    %919 = vmatpush1.xpose.msra.mxu0 0.0
    %920 = vmatprep.subr.mxu0 0.0
    %921 = vmatpush1.xpose.msra.mxu0 0.0
    %922 = vmatprep.subr.mxu0 0.0
    %923 = vmatpush1.xpose.msra.mxu0 0.0
    %924 = vmatprep.subr.mxu0 0.0
    %925 = vmatpush1.xpose.msra.mxu0 0.0
    %926 = vmatprep.subr.mxu0 0.0
    %927 = vmatpush1.xpose.msra.mxu0 0.0
    %928 = vmatprep.subr.mxu0 0.0
    %929 = vmatpush1.xpose.msra.mxu0 0.0
    %930 = vmatprep.subr.mxu0 0.0
    %931 = vmatpush1.xpose.msra.mxu0 0.0
    %932 = vmatprep.subr.mxu0 0.0
    %933 = vmatpush1.xpose.msra.mxu0 0.0
    %934 = vmatprep.mubr.f32.mxu0 0.0
    %935 = vmatmul.mubr.f32.gmra.mrb[0].mxu0 %v862
    %v936 = vpop.f32.mrb[0].mxu0
    %v937 = vadd.f32 0.0, %v936
    %v938 = vpop.f32.mrb[0].mxu0
    %939 = vmatprep.mubr.f32.mxu0 0.0
    %940 = vmatmul.mubr.f32.gmra.mrb[0].mxu0 %v864
    %v941 = vpop.f32.mrb[0].mxu0
    %v942 = vadd.f32 0.0, %v941
    %v943 = vpop.f32.mrb[0].mxu0
    %944 = vdwg.mxu0
    %v945 = vmul.f32 %v937, 0.35355338
    %v946 = vmul.f32 %v942, 0.35355338
    %v947 = vadd.f32 %v945, %v137
    %v948 = vadd.f32 %v946, %v138
    %v949 = vsel %vm378, %v947, -inf
    %950 = vmax.xlane.f32.xlu0 %v949
    %v951 = vpop.xlane.xlu0 %950
    %v952 = vsel %vm378, %v948, -inf
    %953 = vmax.xlane.f32.xlu0 %v952
    %v954 = vpop.xlane.xlu0 %953
    %v955 = vsub.f32 %v947, %v951
    %v956 = vsub.f32 %v948, %v954
    %v957 = vmul.f32 %v955, 1.442695
    %v958 = vpow.pop %v957
    %v959 = vmul.f32 %v956, 1.442695
    %v960 = vpow.pop %v959
    %v961 = vsel %vm378, %v958, 0.0
    %962 = vadd.xlane.f32.xlu0 %v961
    %v963 = vpop.xlane.xlu0 %962
    %v964 = vsel %vm378, %v960, 0.0
    %965 = vadd.xlane.f32.xlu0 %v964
    %v966 = vpop.xlane.xlu0 %965
    %v967 = vrcp.pop %v963
    %v968 = vrcp.pop %v966
    %v969 = vmul.f32 %v958, %v967
    %v970 = vmul.f32 %v960, %v968
    %971 = vrot.lane.b32.xlu0 %v271, 48
    %v972 = vpop.permute.xlu0 %971
    %973 = vrot.lane.b32.xlu0 %v276, 48
    %v974 = vpop.permute.xlu0 %973
    %v978 = vsel %vm378, %v969, 0
    %v981 = vsel %vm378, %v970, 0
    %983 = vmatprep.subr.mxu0 0.0
    %984 = vmatpush1.msra.mxu0 %v972
    %985 = vmatprep.subr.mxu0 0.0
    %986 = vmatpush1.msra.mxu0 %v974
    %987 = vmatprep.subr.mxu0 0.0
    %988 = vmatpush1.msra.mxu0 0.0
    %989 = vmatprep.subr.mxu0 0.0
    %990 = vmatpush1.msra.mxu0 0.0
    %991 = vmatprep.subr.mxu0 0.0
    %992 = vmatpush1.msra.mxu0 0.0
    %993 = vmatprep.subr.mxu0 0.0
    %994 = vmatpush1.msra.mxu0 0.0
    %995 = vmatprep.subr.mxu0 0.0
    %996 = vmatpush1.msra.mxu0 0.0
    %997 = vmatprep.subr.mxu0 0.0
    %998 = vmatpush1.msra.mxu0 0.0
    %999 = vmatprep.subr.mxu0 0.0
    %1000 = vmatpush1.msra.mxu0 0.0
    %1001 = vmatprep.subr.mxu0 0.0
    %1002 = vmatpush1.msra.mxu0 0.0
    %1003 = vmatprep.subr.mxu0 0.0
    %1004 = vmatpush1.msra.mxu0 0.0
    %1005 = vmatprep.subr.mxu0 0.0
    %1006 = vmatpush1.msra.mxu0 0.0
    %1007 = vmatprep.subr.mxu0 0.0
    %1008 = vmatpush1.msra.mxu0 0.0
    %1009 = vmatprep.subr.mxu0 0.0
    %1010 = vmatpush1.msra.mxu0 0.0
    %1011 = vmatprep.subr.mxu0 0.0
    %1012 = vmatpush1.msra.mxu0 0.0
    %1013 = vmatprep.subr.mxu0 0.0
    %1014 = vmatpush1.msra.mxu0 0.0
    %1015 = vmatprep.subr.mxu0 0.0
    %1016 = vmatpush1.msra.mxu0 0.0
    %1017 = vmatprep.subr.mxu0 0.0
    %1018 = vmatpush1.msra.mxu0 0.0
    %1019 = vmatprep.subr.mxu0 0.0
    %1020 = vmatpush1.msra.mxu0 0.0
    %1021 = vmatprep.subr.mxu0 0.0
    %1022 = vmatpush1.msra.mxu0 0.0
    %1023 = vmatprep.subr.mxu0 0.0
    %1024 = vmatpush1.msra.mxu0 0.0
    %1025 = vmatprep.subr.mxu0 0.0
    %1026 = vmatpush1.msra.mxu0 0.0
    %1027 = vmatprep.subr.mxu0 0.0
    %1028 = vmatpush1.msra.mxu0 0.0
    %1029 = vmatprep.subr.mxu0 0.0
    %1030 = vmatpush1.msra.mxu0 0.0
    %1031 = vmatprep.subr.mxu0 0.0
    %1032 = vmatpush1.msra.mxu0 0.0
    %1033 = vmatprep.subr.mxu0 0.0
    %1034 = vmatpush1.msra.mxu0 0.0
    %1035 = vmatprep.subr.mxu0 0.0
    %1036 = vmatpush1.msra.mxu0 0.0
    %1037 = vmatprep.subr.mxu0 0.0
    %1038 = vmatpush1.msra.mxu0 0.0
    %1039 = vmatprep.subr.mxu0 0.0
    %1040 = vmatpush1.msra.mxu0 0.0
    %1041 = vmatprep.subr.mxu0 0.0
    %1042 = vmatpush1.msra.mxu0 0.0
    %1043 = vmatprep.subr.mxu0 0.0
    %1044 = vmatpush1.msra.mxu0 0.0
    %1045 = vmatprep.subr.mxu0 0.0
    %1046 = vmatpush1.msra.mxu0 0.0
    %1047 = vmatprep.mubr.f32.mxu0 0.0
    %1048 = vmatmul.mubr.f32.gmra.mrb[0].mxu0 %v978
    %v1049 = vpop.f32.mrb[0].mxu0
    %v1050 = vadd.f32 0.0, %v1049
    %v1051 = vpop.f32.mrb[0].mxu0
    %1052 = vmatprep.mubr.f32.mxu0 0.0
    %1053 = vmatmul.mubr.f32.gmra.mrb[0].mxu0 %v981
    %v1054 = vpop.f32.mrb[0].mxu0
    %v1055 = vadd.f32 0.0, %v1054
    %v1056 = vpop.f32.mrb[0].mxu0
    %1057 = vdwg.mxu0
    %v1059 = vsel %vm290, %v1050, 0
    %v1062 = vsel %vm290, %v1055, 0
    %1064 = vmatprep.subr.mxu0 0.0
    %1065 = vmatpush1.msra.mxu0 %v281
    %1066 = vmatprep.subr.mxu0 0.0
    %1067 = vmatpush1.msra.mxu0 0.0
    %1068 = vmatprep.subr.mxu0 0.0
    %1069 = vmatpush1.msra.mxu0 0.0
    %1070 = vmatprep.subr.mxu0 0.0
    %1071 = vmatpush1.msra.mxu0 0.0
    %1072 = vmatprep.subr.mxu0 0.0
    %1073 = vmatpush1.msra.mxu0 0.0
    %1074 = vmatprep.subr.mxu0 0.0
    %1075 = vmatpush1.msra.mxu0 0.0
    %1076 = vmatprep.subr.mxu0 0.0
    %1077 = vmatpush1.msra.mxu0 0.0
    %1078 = vmatprep.subr.mxu0 0.0
    %1079 = vmatpush1.msra.mxu0 0.0
    %1080 = vmatprep.subr.mxu0 0.0
    %1081 = vmatpush1.msra.mxu0 0.0
    %1082 = vmatprep.subr.mxu0 0.0
    %1083 = vmatpush1.msra.mxu0 0.0
    %1084 = vmatprep.subr.mxu0 0.0
    %1085 = vmatpush1.msra.mxu0 0.0
    %1086 = vmatprep.subr.mxu0 0.0
    %1087 = vmatpush1.msra.mxu0 0.0
    %1088 = vmatprep.subr.mxu0 0.0
    %1089 = vmatpush1.msra.mxu0 0.0
    %1090 = vmatprep.subr.mxu0 0.0
    %1091 = vmatpush1.msra.mxu0 0.0
    %1092 = vmatprep.subr.mxu0 0.0
    %1093 = vmatpush1.msra.mxu0 0.0
    %1094 = vmatprep.subr.mxu0 0.0
    %1095 = vmatpush1.msra.mxu0 0.0
    %1096 = vmatprep.subr.mxu0 0.0
    %1097 = vmatpush1.msra.mxu0 0.0
    %1098 = vmatprep.subr.mxu0 0.0
    %1099 = vmatpush1.msra.mxu0 0.0
    %1100 = vmatprep.subr.mxu0 0.0
    %1101 = vmatpush1.msra.mxu0 0.0
    %1102 = vmatprep.subr.mxu0 0.0
    %1103 = vmatpush1.msra.mxu0 0.0
    %1104 = vmatprep.subr.mxu0 0.0
    %1105 = vmatpush1.msra.mxu0 0.0
    %1106 = vmatprep.subr.mxu0 0.0
    %1107 = vmatpush1.msra.mxu0 0.0
    %1108 = vmatprep.subr.mxu0 0.0
    %1109 = vmatpush1.msra.mxu0 0.0
    %1110 = vmatprep.subr.mxu0 0.0
    %1111 = vmatpush1.msra.mxu0 0.0
    %1112 = vmatprep.subr.mxu0 0.0
    %1113 = vmatpush1.msra.mxu0 0.0
    %1114 = vmatprep.subr.mxu0 0.0
    %1115 = vmatpush1.msra.mxu0 0.0
    %1116 = vmatprep.subr.mxu0 0.0
    %1117 = vmatpush1.msra.mxu0 0.0
    %1118 = vmatprep.subr.mxu0 0.0
    %1119 = vmatpush1.msra.mxu0 0.0
    %1120 = vmatprep.subr.mxu0 0.0
    %1121 = vmatpush1.msra.mxu0 0.0
    %1122 = vmatprep.subr.mxu0 0.0
    %1123 = vmatpush1.msra.mxu0 0.0
    %1124 = vmatprep.subr.mxu0 0.0
    %1125 = vmatpush1.msra.mxu0 0.0
    %1126 = vmatprep.subr.mxu0 0.0
    %1127 = vmatpush1.msra.mxu0 0.0
    %1128 = vmatprep.mubr.f32.mxu0 0.0
    %1129 = vmatmul.mubr.f32.gmra.mrb[0].mxu0 %v1059
    %v1130 = vpop.f32.mrb[0].mxu0
    %v1131 = vadd.f32 0.0, %v1130
    %v1132 = vpop.f32.mrb[0].mxu0
    %1133 = vmatprep.mubr.f32.mxu0 0.0
    %1134 = vmatmul.mubr.f32.gmra.mrb[0].mxu0 %v1062
    %v1135 = vpop.f32.mrb[0].mxu0
    %v1136 = vadd.f32 0.0, %v1135
    %v1137 = vpop.f32.mrb[0].mxu0
    %1138 = vdwg.mxu0
    %v1139 = vadd.f32 %v846, %v1131
    %v1140 = vadd.f32 %v851, %v1136
    %1141 = vrot.lane.b32.xlu0 %v271, 104
    %v1142 = vpop.permute.xlu0 %1141
    %1143 = vrot.lane.b32.xlu0 %v276, 104
    %v1144 = vpop.permute.xlu0 %1143
    %1145 = vrot.lane.b32.xlu0 %v271, 72
    %v1146 = vpop.permute.xlu0 %1145
    %1147 = vrot.lane.b32.xlu0 %v276, 72
    %v1148 = vpop.permute.xlu0 %1147
    %v1149 = vsel %vm290, %v1142, 0
    %v1151 = vsel %vm290, %v1144, 0
    %v1153 = vsel %vm290, %v1146, 0
    %v1155 = vsel %vm290, %v1148, 0
    %1157 = vmatprep.subr.mxu0 0.0
    %1158 = vmatpush1.xpose.msra.mxu0 %v1153
    %1159 = vmatprep.subr.mxu0 0.0
    %1160 = vmatpush1.xpose.msra.mxu0 %v1155
    %1161 = vmatprep.subr.mxu0 0.0
    %1162 = vmatpush1.xpose.msra.mxu0 0.0
    %1163 = vmatprep.subr.mxu0 0.0
    %1164 = vmatpush1.xpose.msra.mxu0 0.0
    %1165 = vmatprep.subr.mxu0 0.0
    %1166 = vmatpush1.xpose.msra.mxu0 0.0
    %1167 = vmatprep.subr.mxu0 0.0
    %1168 = vmatpush1.xpose.msra.mxu0 0.0
    %1169 = vmatprep.subr.mxu0 0.0
    %1170 = vmatpush1.xpose.msra.mxu0 0.0
    %1171 = vmatprep.subr.mxu0 0.0
    %1172 = vmatpush1.xpose.msra.mxu0 0.0
    %1173 = vmatprep.subr.mxu0 0.0
    %1174 = vmatpush1.xpose.msra.mxu0 0.0
    %1175 = vmatprep.subr.mxu0 0.0
    %1176 = vmatpush1.xpose.msra.mxu0 0.0
    %1177 = vmatprep.subr.mxu0 0.0
    %1178 = vmatpush1.xpose.msra.mxu0 0.0
    %1179 = vmatprep.subr.mxu0 0.0
    %1180 = vmatpush1.xpose.msra.mxu0 0.0
    %1181 = vmatprep.subr.mxu0 0.0
    %1182 = vmatpush1.xpose.msra.mxu0 0.0
    %1183 = vmatprep.subr.mxu0 0.0
    %1184 = vmatpush1.xpose.msra.mxu0 0.0
    %1185 = vmatprep.subr.mxu0 0.0
    %1186 = vmatpush1.xpose.msra.mxu0 0.0
    %1187 = vmatprep.subr.mxu0 0.0
    %1188 = vmatpush1.xpose.msra.mxu0 0.0
    %1189 = vmatprep.subr.mxu0 0.0
    %1190 = vmatpush1.xpose.msra.mxu0 0.0
    %1191 = vmatprep.subr.mxu0 0.0
    %1192 = vmatpush1.xpose.msra.mxu0 0.0
    %1193 = vmatprep.subr.mxu0 0.0
    %1194 = vmatpush1.xpose.msra.mxu0 0.0
    %1195 = vmatprep.subr.mxu0 0.0
    %1196 = vmatpush1.xpose.msra.mxu0 0.0
    %1197 = vmatprep.subr.mxu0 0.0
    %1198 = vmatpush1.xpose.msra.mxu0 0.0
    %1199 = vmatprep.subr.mxu0 0.0
    %1200 = vmatpush1.xpose.msra.mxu0 0.0
    %1201 = vmatprep.subr.mxu0 0.0
    %1202 = vmatpush1.xpose.msra.mxu0 0.0
    %1203 = vmatprep.subr.mxu0 0.0
    %1204 = vmatpush1.xpose.msra.mxu0 0.0
    %1205 = vmatprep.subr.mxu0 0.0
    %1206 = vmatpush1.xpose.msra.mxu0 0.0
    %1207 = vmatprep.subr.mxu0 0.0
    %1208 = vmatpush1.xpose.msra.mxu0 0.0
    %1209 = vmatprep.subr.mxu0 0.0
    %1210 = vmatpush1.xpose.msra.mxu0 0.0
    %1211 = vmatprep.subr.mxu0 0.0
    %1212 = vmatpush1.xpose.msra.mxu0 0.0
    %1213 = vmatprep.subr.mxu0 0.0
    %1214 = vmatpush1.xpose.msra.mxu0 0.0
    %1215 = vmatprep.subr.mxu0 0.0
    %1216 = vmatpush1.xpose.msra.mxu0 0.0
    %1217 = vmatprep.subr.mxu0 0.0
    %1218 = vmatpush1.xpose.msra.mxu0 0.0
    %1219 = vmatprep.subr.mxu0 0.0
    %1220 = vmatpush1.xpose.msra.mxu0 0.0
    %1221 = vmatprep.mubr.f32.mxu0 0.0
    %1222 = vmatmul.mubr.f32.gmra.mrb[0].mxu0 %v1149
    %v1223 = vpop.f32.mrb[0].mxu0
    %v1224 = vadd.f32 0.0, %v1223
    %v1225 = vpop.f32.mrb[0].mxu0
    %1226 = vmatprep.mubr.f32.mxu0 0.0
    %1227 = vmatmul.mubr.f32.gmra.mrb[0].mxu0 %v1151
    %v1228 = vpop.f32.mrb[0].mxu0
    %v1229 = vadd.f32 0.0, %v1228
    %v1230 = vpop.f32.mrb[0].mxu0
    %1231 = vdwg.mxu0
    %v1232 = vmul.f32 %v1224, 0.35355338
    %v1233 = vmul.f32 %v1229, 0.35355338
    %v1234 = vadd.f32 %v1232, %v137
    %v1235 = vadd.f32 %v1233, %v138
    %v1236 = vsel %vm378, %v1234, -inf
    %1237 = vmax.xlane.f32.xlu0 %v1236
    %v1238 = vpop.xlane.xlu0 %1237
    %v1239 = vsel %vm378, %v1235, -inf
    %1240 = vmax.xlane.f32.xlu0 %v1239
    %v1241 = vpop.xlane.xlu0 %1240
    %v1242 = vsub.f32 %v1234, %v1238
    %v1243 = vsub.f32 %v1235, %v1241
    %v1244 = vmul.f32 %v1242, 1.442695
    %v1245 = vpow.pop %v1244
    %v1246 = vmul.f32 %v1243, 1.442695
    %v1247 = vpow.pop %v1246
    %v1248 = vsel %vm378, %v1245, 0.0
    %1249 = vadd.xlane.f32.xlu0 %v1248
    %v1250 = vpop.xlane.xlu0 %1249
    %v1251 = vsel %vm378, %v1247, 0.0
    %1252 = vadd.xlane.f32.xlu0 %v1251
    %v1253 = vpop.xlane.xlu0 %1252
    %v1254 = vrcp.pop %v1250
    %v1255 = vrcp.pop %v1253
    %v1256 = vmul.f32 %v1245, %v1254
    %v1257 = vmul.f32 %v1247, %v1255
    %1258 = vrot.lane.b32.xlu0 %v271, 40
    %v1259 = vpop.permute.xlu0 %1258
    %1260 = vrot.lane.b32.xlu0 %v276, 40
    %v1261 = vpop.permute.xlu0 %1260
    %v1265 = vsel %vm378, %v1256, 0
    %v1268 = vsel %vm378, %v1257, 0
    %1270 = vmatprep.subr.mxu0 0.0
    %1271 = vmatpush1.msra.mxu0 %v1259
    %1272 = vmatprep.subr.mxu0 0.0
    %1273 = vmatpush1.msra.mxu0 %v1261
    %1274 = vmatprep.subr.mxu0 0.0
    %1275 = vmatpush1.msra.mxu0 0.0
    %1276 = vmatprep.subr.mxu0 0.0
    %1277 = vmatpush1.msra.mxu0 0.0
    %1278 = vmatprep.subr.mxu0 0.0
    %1279 = vmatpush1.msra.mxu0 0.0
    %1280 = vmatprep.subr.mxu0 0.0
    %1281 = vmatpush1.msra.mxu0 0.0
    %1282 = vmatprep.subr.mxu0 0.0
    %1283 = vmatpush1.msra.mxu0 0.0
    %1284 = vmatprep.subr.mxu0 0.0
    %1285 = vmatpush1.msra.mxu0 0.0
    %1286 = vmatprep.subr.mxu0 0.0
    %1287 = vmatpush1.msra.mxu0 0.0
    %1288 = vmatprep.subr.mxu0 0.0
    %1289 = vmatpush1.msra.mxu0 0.0
    %1290 = vmatprep.subr.mxu0 0.0
    %1291 = vmatpush1.msra.mxu0 0.0
    %1292 = vmatprep.subr.mxu0 0.0
    %1293 = vmatpush1.msra.mxu0 0.0
    %1294 = vmatprep.subr.mxu0 0.0
    %1295 = vmatpush1.msra.mxu0 0.0
    %1296 = vmatprep.subr.mxu0 0.0
    %1297 = vmatpush1.msra.mxu0 0.0
    %1298 = vmatprep.subr.mxu0 0.0
    %1299 = vmatpush1.msra.mxu0 0.0
    %1300 = vmatprep.subr.mxu0 0.0
    %1301 = vmatpush1.msra.mxu0 0.0
    %1302 = vmatprep.subr.mxu0 0.0
    %1303 = vmatpush1.msra.mxu0 0.0
    %1304 = vmatprep.subr.mxu0 0.0
    %1305 = vmatpush1.msra.mxu0 0.0
    %1306 = vmatprep.subr.mxu0 0.0
    %1307 = vmatpush1.msra.mxu0 0.0
    %1308 = vmatprep.subr.mxu0 0.0
    %1309 = vmatpush1.msra.mxu0 0.0
    %1310 = vmatprep.subr.mxu0 0.0
    %1311 = vmatpush1.msra.mxu0 0.0
    %1312 = vmatprep.subr.mxu0 0.0
    %1313 = vmatpush1.msra.mxu0 0.0
    %1314 = vmatprep.subr.mxu0 0.0
    %1315 = vmatpush1.msra.mxu0 0.0
    %1316 = vmatprep.subr.mxu0 0.0
    %1317 = vmatpush1.msra.mxu0 0.0
    %1318 = vmatprep.subr.mxu0 0.0
    %1319 = vmatpush1.msra.mxu0 0.0
    %1320 = vmatprep.subr.mxu0 0.0
    %1321 = vmatpush1.msra.mxu0 0.0
    %1322 = vmatprep.subr.mxu0 0.0
    %1323 = vmatpush1.msra.mxu0 0.0
    %1324 = vmatprep.subr.mxu0 0.0
    %1325 = vmatpush1.msra.mxu0 0.0
    %1326 = vmatprep.subr.mxu0 0.0
    %1327 = vmatpush1.msra.mxu0 0.0
    %1328 = vmatprep.subr.mxu0 0.0
    %1329 = vmatpush1.msra.mxu0 0.0
    %1330 = vmatprep.subr.mxu0 0.0
    %1331 = vmatpush1.msra.mxu0 0.0
    %1332 = vmatprep.subr.mxu0 0.0
    %1333 = vmatpush1.msra.mxu0 0.0
    %1334 = vmatprep.mubr.f32.mxu0 0.0
    %1335 = vmatmul.mubr.f32.gmra.mrb[0].mxu0 %v1265
    %v1336 = vpop.f32.mrb[0].mxu0
    %v1337 = vadd.f32 0.0, %v1336
    %v1338 = vpop.f32.mrb[0].mxu0
    %1339 = vmatprep.mubr.f32.mxu0 0.0
    %1340 = vmatmul.mubr.f32.gmra.mrb[0].mxu0 %v1268
    %v1341 = vpop.f32.mrb[0].mxu0
    %v1342 = vadd.f32 0.0, %v1341
    %v1343 = vpop.f32.mrb[0].mxu0
    %1344 = vdwg.mxu0
    %v1346 = vsel %vm290, %v1337, 0
    %v1349 = vsel %vm290, %v1342, 0
    %1351 = vmatprep.subr.mxu0 0.0
    %1352 = vmatpush1.msra.mxu0 %v282
    %1353 = vmatprep.subr.mxu0 0.0
    %1354 = vmatpush1.msra.mxu0 0.0
    %1355 = vmatprep.subr.mxu0 0.0
    %1356 = vmatpush1.msra.mxu0 0.0
    %1357 = vmatprep.subr.mxu0 0.0
    %1358 = vmatpush1.msra.mxu0 0.0
    %1359 = vmatprep.subr.mxu0 0.0
    %1360 = vmatpush1.msra.mxu0 0.0
    %1361 = vmatprep.subr.mxu0 0.0
    %1362 = vmatpush1.msra.mxu0 0.0
    %1363 = vmatprep.subr.mxu0 0.0
    %1364 = vmatpush1.msra.mxu0 0.0
    %1365 = vmatprep.subr.mxu0 0.0
    %1366 = vmatpush1.msra.mxu0 0.0
    %1367 = vmatprep.subr.mxu0 0.0
    %1368 = vmatpush1.msra.mxu0 0.0
    %1369 = vmatprep.subr.mxu0 0.0
    %1370 = vmatpush1.msra.mxu0 0.0
    %1371 = vmatprep.subr.mxu0 0.0
    %1372 = vmatpush1.msra.mxu0 0.0
    %1373 = vmatprep.subr.mxu0 0.0
    %1374 = vmatpush1.msra.mxu0 0.0
    %1375 = vmatprep.subr.mxu0 0.0
    %1376 = vmatpush1.msra.mxu0 0.0
    %1377 = vmatprep.subr.mxu0 0.0
    %1378 = vmatpush1.msra.mxu0 0.0
    %1379 = vmatprep.subr.mxu0 0.0
    %1380 = vmatpush1.msra.mxu0 0.0
    %1381 = vmatprep.subr.mxu0 0.0
    %1382 = vmatpush1.msra.mxu0 0.0
    %1383 = vmatprep.subr.mxu0 0.0
    %1384 = vmatpush1.msra.mxu0 0.0
    %1385 = vmatprep.subr.mxu0 0.0
    %1386 = vmatpush1.msra.mxu0 0.0
    %1387 = vmatprep.subr.mxu0 0.0
    %1388 = vmatpush1.msra.mxu0 0.0
    %1389 = vmatprep.subr.mxu0 0.0
    %1390 = vmatpush1.msra.mxu0 0.0
    %1391 = vmatprep.subr.mxu0 0.0
    %1392 = vmatpush1.msra.mxu0 0.0
    %1393 = vmatprep.subr.mxu0 0.0
    %1394 = vmatpush1.msra.mxu0 0.0
    %1395 = vmatprep.subr.mxu0 0.0
    %1396 = vmatpush1.msra.mxu0 0.0
    %1397 = vmatprep.subr.mxu0 0.0
    %1398 = vmatpush1.msra.mxu0 0.0
    %1399 = vmatprep.subr.mxu0 0.0
    %1400 = vmatpush1.msra.mxu0 0.0
    %1401 = vmatprep.subr.mxu0 0.0
    %1402 = vmatpush1.msra.mxu0 0.0
    %1403 = vmatprep.subr.mxu0 0.0
    %1404 = vmatpush1.msra.mxu0 0.0
    %1405 = vmatprep.subr.mxu0 0.0
    %1406 = vmatpush1.msra.mxu0 0.0
    %1407 = vmatprep.subr.mxu0 0.0
    %1408 = vmatpush1.msra.mxu0 0.0
    %1409 = vmatprep.subr.mxu0 0.0
    %1410 = vmatpush1.msra.mxu0 0.0
    %1411 = vmatprep.subr.mxu0 0.0
    %1412 = vmatpush1.msra.mxu0 0.0
    %1413 = vmatprep.subr.mxu0 0.0
    %1414 = vmatpush1.msra.mxu0 0.0
    %1415 = vmatprep.mubr.f32.mxu0 0.0
    %1416 = vmatmul.mubr.f32.gmra.mrb[0].mxu0 %v1346
    %v1417 = vpop.f32.mrb[0].mxu0
    %v1418 = vadd.f32 0.0, %v1417
    %v1419 = vpop.f32.mrb[0].mxu0
    %1420 = vmatprep.mubr.f32.mxu0 0.0
    %1421 = vmatmul.mubr.f32.gmra.mrb[0].mxu0 %v1349
    %v1422 = vpop.f32.mrb[0].mxu0
    %v1423 = vadd.f32 0.0, %v1422
    %v1424 = vpop.f32.mrb[0].mxu0
    %1425 = vdwg.mxu0
    %v1426 = vadd.f32 %v1139, %v1418
    %v1427 = vadd.f32 %v1140, %v1423
    %v1429 = vlaneseq
    %v1430 = vshrl.u32 %v1429, 7
    %v1431 = vsub.s32 0, %v1430
    %v1432 = vrot.slane %v283, %v1431
    %v1434 = vadd.f32 %v1426, %v1432
    %v1435 = vadd.f32 %v1427, %v1432
    %v1436 = vadd.f32 %v133, %v1434
    %v1437 = vadd.f32 %v134, %v1435
    %v1438 = vld [vmem:[%s18] sm:$0x1]
    %v1439 = vld [vmem:[%s19] sm:$0x1]
    %v1440 = vsel %vm143, %v1436, 0.0
    %1441 = vadd.xlane.f32.xlu0 %v1440
    %v1442 = vpop.xlane.xlu0 %1441
    %v1443 = vsel %vm143, %v1437, 0.0
    %1444 = vadd.xlane.f32.xlu0 %v1443
    %v1445 = vpop.xlane.xlu0 %1444
    %v1446 = vmul.f32 %v1442, %v150
    %v1447 = vmul.f32 %v1445, %v150
    %v1448 = vsub.f32 %v1436, %v1446
    %v1449 = vsub.f32 %v1437, %v1447
    %v1450 = vmul.f32 %v1448, %v1448
    %v1451 = vmul.f32 %v1449, %v1449
    %v1452 = vsel %vm143, %v1450, 0.0
    %1453 = vadd.xlane.f32.xlu0 %v1452
    %v1454 = vpop.xlane.xlu0 %1453
    %v1455 = vsel %vm143, %v1451, 0.0
    %1456 = vadd.xlane.f32.xlu0 %v1455
    %v1457 = vpop.xlane.xlu0 %1456
    %v1458 = vmul.f32 %v1454, %v150
    %v1459 = vmul.f32 %v1457, %v150
    %v1460 = vadd.f32 %v1458, 1e-05
    %v1461 = vadd.f32 %v1459, 1e-05
    %v1462 = vrsqrt.pop %v1460
    %v1463 = vrsqrt.pop %v1461
    %v1464 = vmul.f32 %v1448, %v1462
    %v1465 = vmul.f32 %v1449, %v1463
    %v1467 = vlaneseq
    %v1468 = vshrl.u32 %v1467, 7
    %v1469 = vsub.s32 0, %v1468
    %v1470 = vrot.slane %v1438, %v1469
    %v1472 = vmul.f32 %v1464, %v1470
    %v1473 = vmul.f32 %v1465, %v1470
    %v1475 = vlaneseq
    %v1476 = vshrl.u32 %v1475, 7
    %v1477 = vsub.s32 0, %v1476
    %v1478 = vrot.slane %v1439, %v1477
    %v1480 = vadd.f32 %v1472, %v1478
    %v1481 = vadd.f32 %v1473, %v1478
    %v1482 = vld [vmem:[%s8] sm:$0xff]
    %v1483 = vld [vmem:[%s8 + $0x8] sm:$0xff]
    %v1484 = vld [vmem:[%s8 + $0x10] sm:$0xff]
    %v1485 = vld [vmem:[%s8 + $0x18] sm:$0xff]
    %v1486 = vld [vmem:[%s9] sm:$0x1]
    %v1488 = vlaneseq
    %v1489 = vshrl.u32 %v1488, 7
    %v1490 = vsub.s32 0, %v1489
    %v1491 = vrot.slane %v1486, %v1490
    %v1494 = vsel %vm143, %v1480, 0
    %v1497 = vsel %vm143, %v1481, 0
    %1499 = vmatprep.subr.mxu0 0.0
    %1500 = vmatpush1.msra.mxu0 %v1482
    %1501 = vmatprep.subr.mxu0 0.0
    %1502 = vmatpush1.msra.mxu0 %v1483
    %1503 = vmatprep.subr.mxu0 0.0
    %1504 = vmatpush1.msra.mxu0 %v1484
    %1505 = vmatprep.subr.mxu0 0.0
    %1506 = vmatpush1.msra.mxu0 %v1485
    %1507 = vmatprep.subr.mxu0 0.0
    %1508 = vmatpush1.msra.mxu0 0.0
    %1509 = vmatprep.subr.mxu0 0.0
    %1510 = vmatpush1.msra.mxu0 0.0
    %1511 = vmatprep.subr.mxu0 0.0
    %1512 = vmatpush1.msra.mxu0 0.0
    %1513 = vmatprep.subr.mxu0 0.0
    %1514 = vmatpush1.msra.mxu0 0.0
    %1515 = vmatprep.subr.mxu0 0.0
    %1516 = vmatpush1.msra.mxu0 0.0
    %1517 = vmatprep.subr.mxu0 0.0
    %1518 = vmatpush1.msra.mxu0 0.0
    %1519 = vmatprep.subr.mxu0 0.0
    %1520 = vmatpush1.msra.mxu0 0.0
    %1521 = vmatprep.subr.mxu0 0.0
    %1522 = vmatpush1.msra.mxu0 0.0
    %1523 = vmatprep.subr.mxu0 0.0
    %1524 = vmatpush1.msra.mxu0 0.0
    %1525 = vmatprep.subr.mxu0 0.0
    %1526 = vmatpush1.msra.mxu0 0.0
    %1527 = vmatprep.subr.mxu0 0.0
    %1528 = vmatpush1.msra.mxu0 0.0
    %1529 = vmatprep.subr.mxu0 0.0
    %1530 = vmatpush1.msra.mxu0 0.0
    %1531 = vmatprep.subr.mxu0 0.0
    %1532 = vmatpush1.msra.mxu0 0.0
    %1533 = vmatprep.subr.mxu0 0.0
    %1534 = vmatpush1.msra.mxu0 0.0
    %1535 = vmatprep.subr.mxu0 0.0
    %1536 = vmatpush1.msra.mxu0 0.0
    %1537 = vmatprep.subr.mxu0 0.0
    %1538 = vmatpush1.msra.mxu0 0.0
    %1539 = vmatprep.subr.mxu0 0.0
    %1540 = vmatpush1.msra.mxu0 0.0
    %1541 = vmatprep.subr.mxu0 0.0
    %1542 = vmatpush1.msra.mxu0 0.0
    %1543 = vmatprep.subr.mxu0 0.0
    %1544 = vmatpush1.msra.mxu0 0.0
    %1545 = vmatprep.subr.mxu0 0.0
    %1546 = vmatpush1.msra.mxu0 0.0
    %1547 = vmatprep.subr.mxu0 0.0
    %1548 = vmatpush1.msra.mxu0 0.0
    %1549 = vmatprep.subr.mxu0 0.0
    %1550 = vmatpush1.msra.mxu0 0.0
    %1551 = vmatprep.subr.mxu0 0.0
    %1552 = vmatpush1.msra.mxu0 0.0
    %1553 = vmatprep.subr.mxu0 0.0
    %1554 = vmatpush1.msra.mxu0 0.0
    %1555 = vmatprep.subr.mxu0 0.0
    %1556 = vmatpush1.msra.mxu0 0.0
    %1557 = vmatprep.subr.mxu0 0.0
    %1558 = vmatpush1.msra.mxu0 0.0
    %1559 = vmatprep.subr.mxu0 0.0
    %1560 = vmatpush1.msra.mxu0 0.0
    %1561 = vmatprep.subr.mxu0 0.0
    %1562 = vmatpush1.msra.mxu0 0.0
    %1563 = vmatprep.mubr.f32.mxu0 0.0
    %1564 = vmatmul.mubr.f32.gmra.mrb[0].mxu0 %v1494
    %v1565 = vpop.f32.mrb[0].mxu0
    %v1566 = vadd.f32 %v1491, %v1565
    %v1567 = vpop.f32.mrb[0].mxu0
    %1568 = vmatprep.mubr.f32.mxu0 0.0
    %1569 = vmatmul.mubr.f32.gmra.mrb[0].mxu0 %v1497
    %v1570 = vpop.f32.mrb[0].mxu0
    %v1571 = vadd.f32 %v1491, %v1570
    %v1572 = vpop.f32.mrb[0].mxu0
    %1573 = vdwg.mxu0
    %1578 = vrot.lane.b32.xlu0 %v1482, 96
    %v1579 = vpop.permute.xlu0 %1578
    %1580 = vrot.lane.b32.xlu0 %v1483, 96
    %v1581 = vpop.permute.xlu0 %1580
    %1582 = vrot.lane.b32.xlu0 %v1484, 96
    %v1583 = vpop.permute.xlu0 %1582
    %1584 = vrot.lane.b32.xlu0 %v1485, 96
    %v1585 = vpop.permute.xlu0 %1584
    %1590 = vrot.lane.b32.xlu0 %v1491, 96
    %v1591 = vpop.permute.xlu0 %1590
    %v1594 = vsel %vm143, %v135, 0
    %v1597 = vsel %vm143, %v136, 0
    %1599 = vmatprep.subr.mxu0 0.0
    %1600 = vmatpush1.msra.mxu0 %v1579
    %1601 = vmatprep.subr.mxu0 0.0
    %1602 = vmatpush1.msra.mxu0 %v1581
    %1603 = vmatprep.subr.mxu0 0.0
    %1604 = vmatpush1.msra.mxu0 %v1583
    %1605 = vmatprep.subr.mxu0 0.0
    %1606 = vmatpush1.msra.mxu0 %v1585
    %1607 = vmatprep.subr.mxu0 0.0
    %1608 = vmatpush1.msra.mxu0 0.0
    %1609 = vmatprep.subr.mxu0 0.0
    %1610 = vmatpush1.msra.mxu0 0.0
    %1611 = vmatprep.subr.mxu0 0.0
    %1612 = vmatpush1.msra.mxu0 0.0
    %1613 = vmatprep.subr.mxu0 0.0
    %1614 = vmatpush1.msra.mxu0 0.0
    %1615 = vmatprep.subr.mxu0 0.0
    %1616 = vmatpush1.msra.mxu0 0.0
    %1617 = vmatprep.subr.mxu0 0.0
    %1618 = vmatpush1.msra.mxu0 0.0
    %1619 = vmatprep.subr.mxu0 0.0
    %1620 = vmatpush1.msra.mxu0 0.0
    %1621 = vmatprep.subr.mxu0 0.0
    %1622 = vmatpush1.msra.mxu0 0.0
    %1623 = vmatprep.subr.mxu0 0.0
    %1624 = vmatpush1.msra.mxu0 0.0
    %1625 = vmatprep.subr.mxu0 0.0
    %1626 = vmatpush1.msra.mxu0 0.0
    %1627 = vmatprep.subr.mxu0 0.0
    %1628 = vmatpush1.msra.mxu0 0.0
    %1629 = vmatprep.subr.mxu0 0.0
    %1630 = vmatpush1.msra.mxu0 0.0
    %1631 = vmatprep.subr.mxu0 0.0
    %1632 = vmatpush1.msra.mxu0 0.0
    %1633 = vmatprep.subr.mxu0 0.0
    %1634 = vmatpush1.msra.mxu0 0.0
    %1635 = vmatprep.subr.mxu0 0.0
    %1636 = vmatpush1.msra.mxu0 0.0
    %1637 = vmatprep.subr.mxu0 0.0
    %1638 = vmatpush1.msra.mxu0 0.0
    %1639 = vmatprep.subr.mxu0 0.0
    %1640 = vmatpush1.msra.mxu0 0.0
    %1641 = vmatprep.subr.mxu0 0.0
    %1642 = vmatpush1.msra.mxu0 0.0
    %1643 = vmatprep.subr.mxu0 0.0
    %1644 = vmatpush1.msra.mxu0 0.0
    %1645 = vmatprep.subr.mxu0 0.0
    %1646 = vmatpush1.msra.mxu0 0.0
    %1647 = vmatprep.subr.mxu0 0.0
    %1648 = vmatpush1.msra.mxu0 0.0
    %1649 = vmatprep.subr.mxu0 0.0
    %1650 = vmatpush1.msra.mxu0 0.0
    %1651 = vmatprep.subr.mxu0 0.0
    %1652 = vmatpush1.msra.mxu0 0.0
    %1653 = vmatprep.subr.mxu0 0.0
    %1654 = vmatpush1.msra.mxu0 0.0
    %1655 = vmatprep.subr.mxu0 0.0
    %1656 = vmatpush1.msra.mxu0 0.0
    %1657 = vmatprep.subr.mxu0 0.0
    %1658 = vmatpush1.msra.mxu0 0.0
    %1659 = vmatprep.subr.mxu0 0.0
    %1660 = vmatpush1.msra.mxu0 0.0
    %1661 = vmatprep.subr.mxu0 0.0
    %1662 = vmatpush1.msra.mxu0 0.0
    %1663 = vmatprep.mubr.f32.mxu0 0.0
    %1664 = vmatmul.mubr.f32.gmra.mrb[0].mxu0 %v1594
    %v1665 = vpop.f32.mrb[0].mxu0
    %v1666 = vadd.f32 %v1591, %v1665
    %v1667 = vpop.f32.mrb[0].mxu0
    %1668 = vmatprep.mubr.f32.mxu0 0.0
    %1669 = vmatmul.mubr.f32.gmra.mrb[0].mxu0 %v1597
    %v1670 = vpop.f32.mrb[0].mxu0
    %v1671 = vadd.f32 %v1591, %v1670
    %v1672 = vpop.f32.mrb[0].mxu0
    %1673 = vdwg.mxu0
    %v1674 = vld [vmem:[%s10] sm:$0xff]
    %v1675 = vld [vmem:[%s10 + $0x8] sm:$0xff]
    %v1676 = vld [vmem:[%s10 + $0x10] sm:$0xff]
    %v1677 = vld [vmem:[%s10 + $0x18] sm:$0xff]
    %v1678 = vld [vmem:[%s11] sm:$0x1]
    %v1680 = vsel %vm290, %v1566, 0
    %v1683 = vsel %vm290, %v1571, 0
    %v1686 = vsel %vm290, %v1666, 0
    %v1689 = vsel %vm290, %v1671, 0
    %1691 = vmatprep.subr.mxu0 0.0
    %1692 = vmatpush1.xpose.msra.mxu0 %v1686
    %1693 = vmatprep.subr.mxu0 0.0
    %1694 = vmatpush1.xpose.msra.mxu0 %v1689
    %1695 = vmatprep.subr.mxu0 0.0
    %1696 = vmatpush1.xpose.msra.mxu0 0.0
    %1697 = vmatprep.subr.mxu0 0.0
    %1698 = vmatpush1.xpose.msra.mxu0 0.0
    %1699 = vmatprep.subr.mxu0 0.0
    %1700 = vmatpush1.xpose.msra.mxu0 0.0
    %1701 = vmatprep.subr.mxu0 0.0
    %1702 = vmatpush1.xpose.msra.mxu0 0.0
    %1703 = vmatprep.subr.mxu0 0.0
    %1704 = vmatpush1.xpose.msra.mxu0 0.0
    %1705 = vmatprep.subr.mxu0 0.0
    %1706 = vmatpush1.xpose.msra.mxu0 0.0
    %1707 = vmatprep.subr.mxu0 0.0
    %1708 = vmatpush1.xpose.msra.mxu0 0.0
    %1709 = vmatprep.subr.mxu0 0.0
    %1710 = vmatpush1.xpose.msra.mxu0 0.0
    %1711 = vmatprep.subr.mxu0 0.0
    %1712 = vmatpush1.xpose.msra.mxu0 0.0
    %1713 = vmatprep.subr.mxu0 0.0
    %1714 = vmatpush1.xpose.msra.mxu0 0.0
    %1715 = vmatprep.subr.mxu0 0.0
    %1716 = vmatpush1.xpose.msra.mxu0 0.0
    %1717 = vmatprep.subr.mxu0 0.0
    %1718 = vmatpush1.xpose.msra.mxu0 0.0
    %1719 = vmatprep.subr.mxu0 0.0
    %1720 = vmatpush1.xpose.msra.mxu0 0.0
    %1721 = vmatprep.subr.mxu0 0.0
    %1722 = vmatpush1.xpose.msra.mxu0 0.0
    %1723 = vmatprep.subr.mxu0 0.0
    %1724 = vmatpush1.xpose.msra.mxu0 0.0
    %1725 = vmatprep.subr.mxu0 0.0
    %1726 = vmatpush1.xpose.msra.mxu0 0.0
    %1727 = vmatprep.subr.mxu0 0.0
    %1728 = vmatpush1.xpose.msra.mxu0 0.0
    %1729 = vmatprep.subr.mxu0 0.0
    %1730 = vmatpush1.xpose.msra.mxu0 0.0
    %1731 = vmatprep.subr.mxu0 0.0
    %1732 = vmatpush1.xpose.msra.mxu0 0.0
    %1733 = vmatprep.subr.mxu0 0.0
    %1734 = vmatpush1.xpose.msra.mxu0 0.0
    %1735 = vmatprep.subr.mxu0 0.0
    %1736 = vmatpush1.xpose.msra.mxu0 0.0
    %1737 = vmatprep.subr.mxu0 0.0
    %1738 = vmatpush1.xpose.msra.mxu0 0.0
    %1739 = vmatprep.subr.mxu0 0.0
    %1740 = vmatpush1.xpose.msra.mxu0 0.0
    %1741 = vmatprep.subr.mxu0 0.0
    %1742 = vmatpush1.xpose.msra.mxu0 0.0
    %1743 = vmatprep.subr.mxu0 0.0
    %1744 = vmatpush1.xpose.msra.mxu0 0.0
    %1745 = vmatprep.subr.mxu0 0.0
    %1746 = vmatpush1.xpose.msra.mxu0 0.0
    %1747 = vmatprep.subr.mxu0 0.0
    %1748 = vmatpush1.xpose.msra.mxu0 0.0
    %1749 = vmatprep.subr.mxu0 0.0
    %1750 = vmatpush1.xpose.msra.mxu0 0.0
    %1751 = vmatprep.subr.mxu0 0.0
    %1752 = vmatpush1.xpose.msra.mxu0 0.0
    %1753 = vmatprep.subr.mxu0 0.0
    %1754 = vmatpush1.xpose.msra.mxu0 0.0
    %1755 = vmatprep.mubr.f32.mxu0 0.0
    %1756 = vmatmul.mubr.f32.gmra.mrb[0].mxu0 %v1680
    %v1757 = vpop.f32.mrb[0].mxu0
    %v1758 = vadd.f32 0.0, %v1757
    %v1759 = vpop.f32.mrb[0].mxu0
    %1760 = vmatprep.mubr.f32.mxu0 0.0
    %1761 = vmatmul.mubr.f32.gmra.mrb[0].mxu0 %v1683
    %v1762 = vpop.f32.mrb[0].mxu0
    %v1763 = vadd.f32 0.0, %v1762
    %v1764 = vpop.f32.mrb[0].mxu0
    %1765 = vdwg.mxu0
    %v1766 = vmul.f32 %v1758, 0.35355338
    %v1767 = vmul.f32 %v1763, 0.35355338
    %v1768 = vadd.f32 %v1766, %v139
    %v1769 = vadd.f32 %v1767, %v140
    %v1770 = vsel %vm378, %v1768, -inf
    %1771 = vmax.xlane.f32.xlu0 %v1770
    %v1772 = vpop.xlane.xlu0 %1771
    %v1773 = vsel %vm378, %v1769, -inf
    %1774 = vmax.xlane.f32.xlu0 %v1773
    %v1775 = vpop.xlane.xlu0 %1774
    %v1776 = vsub.f32 %v1768, %v1772
    %v1777 = vsub.f32 %v1769, %v1775
    %v1778 = vmul.f32 %v1776, 1.442695
    %v1779 = vpow.pop %v1778
    %v1780 = vmul.f32 %v1777, 1.442695
    %v1781 = vpow.pop %v1780
    %v1782 = vsel %vm378, %v1779, 0.0
    %1783 = vadd.xlane.f32.xlu0 %v1782
    %v1784 = vpop.xlane.xlu0 %1783
    %v1785 = vsel %vm378, %v1781, 0.0
    %1786 = vadd.xlane.f32.xlu0 %v1785
    %v1787 = vpop.xlane.xlu0 %1786
    %v1788 = vrcp.pop %v1784
    %v1789 = vrcp.pop %v1787
    %v1790 = vmul.f32 %v1779, %v1788
    %v1791 = vmul.f32 %v1781, %v1789
    %1792 = vrot.lane.b32.xlu0 %v1666, 96
    %v1793 = vpop.permute.xlu0 %1792
    %1794 = vrot.lane.b32.xlu0 %v1671, 96
    %v1795 = vpop.permute.xlu0 %1794
    %v1799 = vsel %vm378, %v1790, 0
    %v1802 = vsel %vm378, %v1791, 0
    %1804 = vmatprep.subr.mxu0 0.0
    %1805 = vmatpush1.msra.mxu0 %v1793
    %1806 = vmatprep.subr.mxu0 0.0
    %1807 = vmatpush1.msra.mxu0 %v1795
    %1808 = vmatprep.subr.mxu0 0.0
    %1809 = vmatpush1.msra.mxu0 0.0
    %1810 = vmatprep.subr.mxu0 0.0
    %1811 = vmatpush1.msra.mxu0 0.0
    %1812 = vmatprep.subr.mxu0 0.0
    %1813 = vmatpush1.msra.mxu0 0.0
    %1814 = vmatprep.subr.mxu0 0.0
    %1815 = vmatpush1.msra.mxu0 0.0
    %1816 = vmatprep.subr.mxu0 0.0
    %1817 = vmatpush1.msra.mxu0 0.0
    %1818 = vmatprep.subr.mxu0 0.0
    %1819 = vmatpush1.msra.mxu0 0.0
    %1820 = vmatprep.subr.mxu0 0.0
    %1821 = vmatpush1.msra.mxu0 0.0
    %1822 = vmatprep.subr.mxu0 0.0
    %1823 = vmatpush1.msra.mxu0 0.0
    %1824 = vmatprep.subr.mxu0 0.0
    %1825 = vmatpush1.msra.mxu0 0.0
    %1826 = vmatprep.subr.mxu0 0.0
    %1827 = vmatpush1.msra.mxu0 0.0
    %1828 = vmatprep.subr.mxu0 0.0
    %1829 = vmatpush1.msra.mxu0 0.0
    %1830 = vmatprep.subr.mxu0 0.0
    %1831 = vmatpush1.msra.mxu0 0.0
    %1832 = vmatprep.subr.mxu0 0.0
    %1833 = vmatpush1.msra.mxu0 0.0
    %1834 = vmatprep.subr.mxu0 0.0
    %1835 = vmatpush1.msra.mxu0 0.0
    %1836 = vmatprep.subr.mxu0 0.0
    %1837 = vmatpush1.msra.mxu0 0.0
    %1838 = vmatprep.subr.mxu0 0.0
    %1839 = vmatpush1.msra.mxu0 0.0
    %1840 = vmatprep.subr.mxu0 0.0
    %1841 = vmatpush1.msra.mxu0 0.0
    %1842 = vmatprep.subr.mxu0 0.0
    %1843 = vmatpush1.msra.mxu0 0.0
    %1844 = vmatprep.subr.mxu0 0.0
    %1845 = vmatpush1.msra.mxu0 0.0
    %1846 = vmatprep.subr.mxu0 0.0
    %1847 = vmatpush1.msra.mxu0 0.0
    %1848 = vmatprep.subr.mxu0 0.0
    %1849 = vmatpush1.msra.mxu0 0.0
    %1850 = vmatprep.subr.mxu0 0.0
    %1851 = vmatpush1.msra.mxu0 0.0
    %1852 = vmatprep.subr.mxu0 0.0
    %1853 = vmatpush1.msra.mxu0 0.0
    %1854 = vmatprep.subr.mxu0 0.0
    %1855 = vmatpush1.msra.mxu0 0.0
    %1856 = vmatprep.subr.mxu0 0.0
    %1857 = vmatpush1.msra.mxu0 0.0
    %1858 = vmatprep.subr.mxu0 0.0
    %1859 = vmatpush1.msra.mxu0 0.0
    %1860 = vmatprep.subr.mxu0 0.0
    %1861 = vmatpush1.msra.mxu0 0.0
    %1862 = vmatprep.subr.mxu0 0.0
    %1863 = vmatpush1.msra.mxu0 0.0
    %1864 = vmatprep.subr.mxu0 0.0
    %1865 = vmatpush1.msra.mxu0 0.0
    %1866 = vmatprep.subr.mxu0 0.0
    %1867 = vmatpush1.msra.mxu0 0.0
    %1868 = vmatprep.mubr.f32.mxu0 0.0
    %1869 = vmatmul.mubr.f32.gmra.mrb[0].mxu0 %v1799
    %v1870 = vpop.f32.mrb[0].mxu0
    %v1871 = vadd.f32 0.0, %v1870
    %v1872 = vpop.f32.mrb[0].mxu0
    %1873 = vmatprep.mubr.f32.mxu0 0.0
    %1874 = vmatmul.mubr.f32.gmra.mrb[0].mxu0 %v1802
    %v1875 = vpop.f32.mrb[0].mxu0
    %v1876 = vadd.f32 0.0, %v1875
    %v1877 = vpop.f32.mrb[0].mxu0
    %1878 = vdwg.mxu0
    %1879 = vrot.lane.b32.xlu0 %v1566, 120
    %v1880 = vpop.permute.xlu0 %1879
    %1881 = vrot.lane.b32.xlu0 %v1571, 120
    %v1882 = vpop.permute.xlu0 %1881
    %1883 = vrot.lane.b32.xlu0 %v1666, 120
    %v1884 = vpop.permute.xlu0 %1883
    %1885 = vrot.lane.b32.xlu0 %v1671, 120
    %v1886 = vpop.permute.xlu0 %1885
    %v1887 = vsel %vm290, %v1880, 0
    %v1889 = vsel %vm290, %v1882, 0
    %v1891 = vsel %vm290, %v1884, 0
    %v1893 = vsel %vm290, %v1886, 0
    %1895 = vmatprep.subr.mxu0 0.0
    %1896 = vmatpush1.xpose.msra.mxu0 %v1891
    %1897 = vmatprep.subr.mxu0 0.0
    %1898 = vmatpush1.xpose.msra.mxu0 %v1893
    %1899 = vmatprep.subr.mxu0 0.0
    %1900 = vmatpush1.xpose.msra.mxu0 0.0
    %1901 = vmatprep.subr.mxu0 0.0
    %1902 = vmatpush1.xpose.msra.mxu0 0.0
    %1903 = vmatprep.subr.mxu0 0.0
    %1904 = vmatpush1.xpose.msra.mxu0 0.0
    %1905 = vmatprep.subr.mxu0 0.0
    %1906 = vmatpush1.xpose.msra.mxu0 0.0
    %1907 = vmatprep.subr.mxu0 0.0
    %1908 = vmatpush1.xpose.msra.mxu0 0.0
    %1909 = vmatprep.subr.mxu0 0.0
    %1910 = vmatpush1.xpose.msra.mxu0 0.0
    %1911 = vmatprep.subr.mxu0 0.0
    %1912 = vmatpush1.xpose.msra.mxu0 0.0
    %1913 = vmatprep.subr.mxu0 0.0
    %1914 = vmatpush1.xpose.msra.mxu0 0.0
    %1915 = vmatprep.subr.mxu0 0.0
    %1916 = vmatpush1.xpose.msra.mxu0 0.0
    %1917 = vmatprep.subr.mxu0 0.0
    %1918 = vmatpush1.xpose.msra.mxu0 0.0
    %1919 = vmatprep.subr.mxu0 0.0
    %1920 = vmatpush1.xpose.msra.mxu0 0.0
    %1921 = vmatprep.subr.mxu0 0.0
    %1922 = vmatpush1.xpose.msra.mxu0 0.0
    %1923 = vmatprep.subr.mxu0 0.0
    %1924 = vmatpush1.xpose.msra.mxu0 0.0
    %1925 = vmatprep.subr.mxu0 0.0
    %1926 = vmatpush1.xpose.msra.mxu0 0.0
    %1927 = vmatprep.subr.mxu0 0.0
    %1928 = vmatpush1.xpose.msra.mxu0 0.0
    %1929 = vmatprep.subr.mxu0 0.0
    %1930 = vmatpush1.xpose.msra.mxu0 0.0
    %1931 = vmatprep.subr.mxu0 0.0
    %1932 = vmatpush1.xpose.msra.mxu0 0.0
    %1933 = vmatprep.subr.mxu0 0.0
    %1934 = vmatpush1.xpose.msra.mxu0 0.0
    %1935 = vmatprep.subr.mxu0 0.0
    %1936 = vmatpush1.xpose.msra.mxu0 0.0
    %1937 = vmatprep.subr.mxu0 0.0
    %1938 = vmatpush1.xpose.msra.mxu0 0.0
    %1939 = vmatprep.subr.mxu0 0.0
    %1940 = vmatpush1.xpose.msra.mxu0 0.0
    %1941 = vmatprep.subr.mxu0 0.0
    %1942 = vmatpush1.xpose.msra.mxu0 0.0
    %1943 = vmatprep.subr.mxu0 0.0
    %1944 = vmatpush1.xpose.msra.mxu0 0.0
    %1945 = vmatprep.subr.mxu0 0.0
    %1946 = vmatpush1.xpose.msra.mxu0 0.0
    %1947 = vmatprep.subr.mxu0 0.0
    %1948 = vmatpush1.xpose.msra.mxu0 0.0
    %1949 = vmatprep.subr.mxu0 0.0
    %1950 = vmatpush1.xpose.msra.mxu0 0.0
    %1951 = vmatprep.subr.mxu0 0.0
    %1952 = vmatpush1.xpose.msra.mxu0 0.0
    %1953 = vmatprep.subr.mxu0 0.0
    %1954 = vmatpush1.xpose.msra.mxu0 0.0
    %1955 = vmatprep.subr.mxu0 0.0
    %1956 = vmatpush1.xpose.msra.mxu0 0.0
    %1957 = vmatprep.subr.mxu0 0.0
    %1958 = vmatpush1.xpose.msra.mxu0 0.0
    %1959 = vmatprep.mubr.f32.mxu0 0.0
    %1960 = vmatmul.mubr.f32.gmra.mrb[0].mxu0 %v1887
    %v1961 = vpop.f32.mrb[0].mxu0
    %v1962 = vadd.f32 0.0, %v1961
    %v1963 = vpop.f32.mrb[0].mxu0
    %1964 = vmatprep.mubr.f32.mxu0 0.0
    %1965 = vmatmul.mubr.f32.gmra.mrb[0].mxu0 %v1889
    %v1966 = vpop.f32.mrb[0].mxu0
    %v1967 = vadd.f32 0.0, %v1966
    %v1968 = vpop.f32.mrb[0].mxu0
    %1969 = vdwg.mxu0
    %v1970 = vmul.f32 %v1962, 0.35355338
    %v1971 = vmul.f32 %v1967, 0.35355338
    %v1972 = vadd.f32 %v1970, %v139
    %v1973 = vadd.f32 %v1971, %v140
    %v1974 = vsel %vm378, %v1972, -inf
    %1975 = vmax.xlane.f32.xlu0 %v1974
    %v1976 = vpop.xlane.xlu0 %1975
    %v1977 = vsel %vm378, %v1973, -inf
    %1978 = vmax.xlane.f32.xlu0 %v1977
    %v1979 = vpop.xlane.xlu0 %1978
    %v1980 = vsub.f32 %v1972, %v1976
    %v1981 = vsub.f32 %v1973, %v1979
    %v1982 = vmul.f32 %v1980, 1.442695
    %v1983 = vpow.pop %v1982
    %v1984 = vmul.f32 %v1981, 1.442695
    %v1985 = vpow.pop %v1984
    %v1986 = vsel %vm378, %v1983, 0.0
    %1987 = vadd.xlane.f32.xlu0 %v1986
    %v1988 = vpop.xlane.xlu0 %1987
    %v1989 = vsel %vm378, %v1985, 0.0
    %1990 = vadd.xlane.f32.xlu0 %v1989
    %v1991 = vpop.xlane.xlu0 %1990
    %v1992 = vrcp.pop %v1988
    %v1993 = vrcp.pop %v1991
    %v1994 = vmul.f32 %v1983, %v1992
    %v1995 = vmul.f32 %v1985, %v1993
    %1996 = vrot.lane.b32.xlu0 %v1666, 88
    %v1997 = vpop.permute.xlu0 %1996
    %1998 = vrot.lane.b32.xlu0 %v1671, 88
    %v1999 = vpop.permute.xlu0 %1998
    %v2003 = vsel %vm378, %v1994, 0
    %v2006 = vsel %vm378, %v1995, 0
    %2008 = vmatprep.subr.mxu0 0.0
    %2009 = vmatpush1.msra.mxu0 %v1997
    %2010 = vmatprep.subr.mxu0 0.0
    %2011 = vmatpush1.msra.mxu0 %v1999
    %2012 = vmatprep.subr.mxu0 0.0
    %2013 = vmatpush1.msra.mxu0 0.0
    %2014 = vmatprep.subr.mxu0 0.0
    %2015 = vmatpush1.msra.mxu0 0.0
    %2016 = vmatprep.subr.mxu0 0.0
    %2017 = vmatpush1.msra.mxu0 0.0
    %2018 = vmatprep.subr.mxu0 0.0
    %2019 = vmatpush1.msra.mxu0 0.0
    %2020 = vmatprep.subr.mxu0 0.0
    %2021 = vmatpush1.msra.mxu0 0.0
    %2022 = vmatprep.subr.mxu0 0.0
    %2023 = vmatpush1.msra.mxu0 0.0
    %2024 = vmatprep.subr.mxu0 0.0
    %2025 = vmatpush1.msra.mxu0 0.0
    %2026 = vmatprep.subr.mxu0 0.0
    %2027 = vmatpush1.msra.mxu0 0.0
    %2028 = vmatprep.subr.mxu0 0.0
    %2029 = vmatpush1.msra.mxu0 0.0
    %2030 = vmatprep.subr.mxu0 0.0
    %2031 = vmatpush1.msra.mxu0 0.0
    %2032 = vmatprep.subr.mxu0 0.0
    %2033 = vmatpush1.msra.mxu0 0.0
    %2034 = vmatprep.subr.mxu0 0.0
    %2035 = vmatpush1.msra.mxu0 0.0
    %2036 = vmatprep.subr.mxu0 0.0
    %2037 = vmatpush1.msra.mxu0 0.0
    %2038 = vmatprep.subr.mxu0 0.0
    %2039 = vmatpush1.msra.mxu0 0.0
    %2040 = vmatprep.subr.mxu0 0.0
    %2041 = vmatpush1.msra.mxu0 0.0
    %2042 = vmatprep.subr.mxu0 0.0
    %2043 = vmatpush1.msra.mxu0 0.0
    %2044 = vmatprep.subr.mxu0 0.0
    %2045 = vmatpush1.msra.mxu0 0.0
    %2046 = vmatprep.subr.mxu0 0.0
    %2047 = vmatpush1.msra.mxu0 0.0
    %2048 = vmatprep.subr.mxu0 0.0
    %2049 = vmatpush1.msra.mxu0 0.0
    %2050 = vmatprep.subr.mxu0 0.0
    %2051 = vmatpush1.msra.mxu0 0.0
    %2052 = vmatprep.subr.mxu0 0.0
    %2053 = vmatpush1.msra.mxu0 0.0
    %2054 = vmatprep.subr.mxu0 0.0
    %2055 = vmatpush1.msra.mxu0 0.0
    %2056 = vmatprep.subr.mxu0 0.0
    %2057 = vmatpush1.msra.mxu0 0.0
    %2058 = vmatprep.subr.mxu0 0.0
    %2059 = vmatpush1.msra.mxu0 0.0
    %2060 = vmatprep.subr.mxu0 0.0
    %2061 = vmatpush1.msra.mxu0 0.0
    %2062 = vmatprep.subr.mxu0 0.0
    %2063 = vmatpush1.msra.mxu0 0.0
    %2064 = vmatprep.subr.mxu0 0.0
    %2065 = vmatpush1.msra.mxu0 0.0
    %2066 = vmatprep.subr.mxu0 0.0
    %2067 = vmatpush1.msra.mxu0 0.0
    %2068 = vmatprep.subr.mxu0 0.0
    %2069 = vmatpush1.msra.mxu0 0.0
    %2070 = vmatprep.subr.mxu0 0.0
    %2071 = vmatpush1.msra.mxu0 0.0
    %2072 = vmatprep.mubr.f32.mxu0 0.0
    %2073 = vmatmul.mubr.f32.gmra.mrb[0].mxu0 %v2003
    %v2074 = vpop.f32.mrb[0].mxu0
    %v2075 = vadd.f32 0.0, %v2074
    %v2076 = vpop.f32.mrb[0].mxu0
    %2077 = vmatprep.mubr.f32.mxu0 0.0
    %2078 = vmatmul.mubr.f32.gmra.mrb[0].mxu0 %v2006
    %v2079 = vpop.f32.mrb[0].mxu0
    %v2080 = vadd.f32 0.0, %v2079
    %v2081 = vpop.f32.mrb[0].mxu0
    %2082 = vdwg.mxu0
    %v2084 = vsel %vm290, %v2075, 0
    %v2087 = vsel %vm290, %v2080, 0
    %2089 = vmatprep.subr.mxu0 0.0
    %2090 = vmatpush1.msra.mxu0 %v1675
    %2091 = vmatprep.subr.mxu0 0.0
    %2092 = vmatpush1.msra.mxu0 0.0
    %2093 = vmatprep.subr.mxu0 0.0
    %2094 = vmatpush1.msra.mxu0 0.0
    %2095 = vmatprep.subr.mxu0 0.0
    %2096 = vmatpush1.msra.mxu0 0.0
    %2097 = vmatprep.subr.mxu0 0.0
    %2098 = vmatpush1.msra.mxu0 0.0
    %2099 = vmatprep.subr.mxu0 0.0
    %2100 = vmatpush1.msra.mxu0 0.0
    %2101 = vmatprep.subr.mxu0 0.0
    %2102 = vmatpush1.msra.mxu0 0.0
    %2103 = vmatprep.subr.mxu0 0.0
    %2104 = vmatpush1.msra.mxu0 0.0
    %2105 = vmatprep.subr.mxu0 0.0
    %2106 = vmatpush1.msra.mxu0 0.0
    %2107 = vmatprep.subr.mxu0 0.0
    %2108 = vmatpush1.msra.mxu0 0.0
    %2109 = vmatprep.subr.mxu0 0.0
    %2110 = vmatpush1.msra.mxu0 0.0
    %2111 = vmatprep.subr.mxu0 0.0
    %2112 = vmatpush1.msra.mxu0 0.0
    %2113 = vmatprep.subr.mxu0 0.0
    %2114 = vmatpush1.msra.mxu0 0.0
    %2115 = vmatprep.subr.mxu0 0.0
    %2116 = vmatpush1.msra.mxu0 0.0
    %2117 = vmatprep.subr.mxu0 0.0
    %2118 = vmatpush1.msra.mxu0 0.0
    %2119 = vmatprep.subr.mxu0 0.0
    %2120 = vmatpush1.msra.mxu0 0.0
    %2121 = vmatprep.subr.mxu0 0.0
    %2122 = vmatpush1.msra.mxu0 0.0
    %2123 = vmatprep.subr.mxu0 0.0
    %2124 = vmatpush1.msra.mxu0 0.0
    %2125 = vmatprep.subr.mxu0 0.0
    %2126 = vmatpush1.msra.mxu0 0.0
    %2127 = vmatprep.subr.mxu0 0.0
    %2128 = vmatpush1.msra.mxu0 0.0
    %2129 = vmatprep.subr.mxu0 0.0
    %2130 = vmatpush1.msra.mxu0 0.0
    %2131 = vmatprep.subr.mxu0 0.0
    %2132 = vmatpush1.msra.mxu0 0.0
    %2133 = vmatprep.subr.mxu0 0.0
    %2134 = vmatpush1.msra.mxu0 0.0
    %2135 = vmatprep.subr.mxu0 0.0
    %2136 = vmatpush1.msra.mxu0 0.0
    %2137 = vmatprep.subr.mxu0 0.0
    %2138 = vmatpush1.msra.mxu0 0.0
    %2139 = vmatprep.subr.mxu0 0.0
    %2140 = vmatpush1.msra.mxu0 0.0
    %2141 = vmatprep.subr.mxu0 0.0
    %2142 = vmatpush1.msra.mxu0 0.0
    %2143 = vmatprep.subr.mxu0 0.0
    %2144 = vmatpush1.msra.mxu0 0.0
    %2145 = vmatprep.subr.mxu0 0.0
    %2146 = vmatpush1.msra.mxu0 0.0
    %2147 = vmatprep.subr.mxu0 0.0
    %2148 = vmatpush1.msra.mxu0 0.0
    %2149 = vmatprep.subr.mxu0 0.0
    %2150 = vmatpush1.msra.mxu0 0.0
    %2151 = vmatprep.subr.mxu0 0.0
    %2152 = vmatpush1.msra.mxu0 0.0
    %2153 = vmatprep.mubr.f32.mxu0 0.0
    %2154 = vmatmul.mubr.f32.gmra.mrb[0].mxu0 %v2084
    %v2155 = vpop.f32.mrb[0].mxu0
    %v2156 = vadd.f32 0.0, %v2155
    %v2157 = vpop.f32.mrb[0].mxu0
    %2158 = vmatprep.mubr.f32.mxu0 0.0
    %2159 = vmatmul.mubr.f32.gmra.mrb[0].mxu0 %v2087
    %v2160 = vpop.f32.mrb[0].mxu0
    %v2161 = vadd.f32 0.0, %v2160
    %v2162 = vpop.f32.mrb[0].mxu0
    %2163 = vdwg.mxu0
    %v2165 = vsel %vm290, %v1871, 0
    %v2168 = vsel %vm290, %v1876, 0
    %2170 = vmatprep.subr.mxu0 0.0
    %2171 = vmatpush1.msra.mxu0 %v1674
    %2172 = vmatprep.subr.mxu0 0.0
    %2173 = vmatpush1.msra.mxu0 0.0
    %2174 = vmatprep.subr.mxu0 0.0
    %2175 = vmatpush1.msra.mxu0 0.0
    %2176 = vmatprep.subr.mxu0 0.0
    %2177 = vmatpush1.msra.mxu0 0.0
    %2178 = vmatprep.subr.mxu0 0.0
    %2179 = vmatpush1.msra.mxu0 0.0
    %2180 = vmatprep.subr.mxu0 0.0
    %2181 = vmatpush1.msra.mxu0 0.0
    %2182 = vmatprep.subr.mxu0 0.0
    %2183 = vmatpush1.msra.mxu0 0.0
    %2184 = vmatprep.subr.mxu0 0.0
    %2185 = vmatpush1.msra.mxu0 0.0
    %2186 = vmatprep.subr.mxu0 0.0
    %2187 = vmatpush1.msra.mxu0 0.0
    %2188 = vmatprep.subr.mxu0 0.0
    %2189 = vmatpush1.msra.mxu0 0.0
    %2190 = vmatprep.subr.mxu0 0.0
    %2191 = vmatpush1.msra.mxu0 0.0
    %2192 = vmatprep.subr.mxu0 0.0
    %2193 = vmatpush1.msra.mxu0 0.0
    %2194 = vmatprep.subr.mxu0 0.0
    %2195 = vmatpush1.msra.mxu0 0.0
    %2196 = vmatprep.subr.mxu0 0.0
    %2197 = vmatpush1.msra.mxu0 0.0
    %2198 = vmatprep.subr.mxu0 0.0
    %2199 = vmatpush1.msra.mxu0 0.0
    %2200 = vmatprep.subr.mxu0 0.0
    %2201 = vmatpush1.msra.mxu0 0.0
    %2202 = vmatprep.subr.mxu0 0.0
    %2203 = vmatpush1.msra.mxu0 0.0
    %2204 = vmatprep.subr.mxu0 0.0
    %2205 = vmatpush1.msra.mxu0 0.0
    %2206 = vmatprep.subr.mxu0 0.0
    %2207 = vmatpush1.msra.mxu0 0.0
    %2208 = vmatprep.subr.mxu0 0.0
    %2209 = vmatpush1.msra.mxu0 0.0
    %2210 = vmatprep.subr.mxu0 0.0
    %2211 = vmatpush1.msra.mxu0 0.0
    %2212 = vmatprep.subr.mxu0 0.0
    %2213 = vmatpush1.msra.mxu0 0.0
    %2214 = vmatprep.subr.mxu0 0.0
    %2215 = vmatpush1.msra.mxu0 0.0
    %2216 = vmatprep.subr.mxu0 0.0
    %2217 = vmatpush1.msra.mxu0 0.0
    %2218 = vmatprep.subr.mxu0 0.0
    %2219 = vmatpush1.msra.mxu0 0.0
    %2220 = vmatprep.subr.mxu0 0.0
    %2221 = vmatpush1.msra.mxu0 0.0
    %2222 = vmatprep.subr.mxu0 0.0
    %2223 = vmatpush1.msra.mxu0 0.0
    %2224 = vmatprep.subr.mxu0 0.0
    %2225 = vmatpush1.msra.mxu0 0.0
    %2226 = vmatprep.subr.mxu0 0.0
    %2227 = vmatpush1.msra.mxu0 0.0
    %2228 = vmatprep.subr.mxu0 0.0
    %2229 = vmatpush1.msra.mxu0 0.0
    %2230 = vmatprep.subr.mxu0 0.0
    %2231 = vmatpush1.msra.mxu0 0.0
    %2232 = vmatprep.subr.mxu0 0.0
    %2233 = vmatpush1.msra.mxu0 0.0
    %2234 = vmatprep.mubr.f32.mxu0 0.0
    %2235 = vmatmul.mubr.f32.gmra.mrb[0].mxu0 %v2165
    %v2236 = vpop.f32.mrb[0].mxu0
    %v2237 = vadd.f32 %v2156, %v2236
    %v2238 = vpop.f32.mrb[0].mxu0
    %2239 = vmatprep.mubr.f32.mxu0 0.0
    %2240 = vmatmul.mubr.f32.gmra.mrb[0].mxu0 %v2168
    %v2241 = vpop.f32.mrb[0].mxu0
    %v2242 = vadd.f32 %v2161, %v2241
    %v2243 = vpop.f32.mrb[0].mxu0
    %2244 = vdwg.mxu0
    %2245 = vrot.lane.b32.xlu0 %v1566, 112
    %v2246 = vpop.permute.xlu0 %2245
    %2247 = vrot.lane.b32.xlu0 %v1571, 112
    %v2248 = vpop.permute.xlu0 %2247
    %2249 = vrot.lane.b32.xlu0 %v1666, 112
    %v2250 = vpop.permute.xlu0 %2249
    %2251 = vrot.lane.b32.xlu0 %v1671, 112
    %v2252 = vpop.permute.xlu0 %2251
    %v2253 = vsel %vm290, %v2246, 0
    %v2255 = vsel %vm290, %v2248, 0
    %v2257 = vsel %vm290, %v2250, 0
    %v2259 = vsel %vm290, %v2252, 0
    %2261 = vmatprep.subr.mxu0 0.0
    %2262 = vmatpush1.xpose.msra.mxu0 %v2257
    %2263 = vmatprep.subr.mxu0 0.0
    %2264 = vmatpush1.xpose.msra.mxu0 %v2259
    %2265 = vmatprep.subr.mxu0 0.0
    %2266 = vmatpush1.xpose.msra.mxu0 0.0
    %2267 = vmatprep.subr.mxu0 0.0
    %2268 = vmatpush1.xpose.msra.mxu0 0.0
    %2269 = vmatprep.subr.mxu0 0.0
    %2270 = vmatpush1.xpose.msra.mxu0 0.0
    %2271 = vmatprep.subr.mxu0 0.0
    %2272 = vmatpush1.xpose.msra.mxu0 0.0
    %2273 = vmatprep.subr.mxu0 0.0
    %2274 = vmatpush1.xpose.msra.mxu0 0.0
    %2275 = vmatprep.subr.mxu0 0.0
    %2276 = vmatpush1.xpose.msra.mxu0 0.0
    %2277 = vmatprep.subr.mxu0 0.0
    %2278 = vmatpush1.xpose.msra.mxu0 0.0
    %2279 = vmatprep.subr.mxu0 0.0
    %2280 = vmatpush1.xpose.msra.mxu0 0.0
    %2281 = vmatprep.subr.mxu0 0.0
    %2282 = vmatpush1.xpose.msra.mxu0 0.0
    %2283 = vmatprep.subr.mxu0 0.0
    %2284 = vmatpush1.xpose.msra.mxu0 0.0
    %2285 = vmatprep.subr.mxu0 0.0
    %2286 = vmatpush1.xpose.msra.mxu0 0.0
    %2287 = vmatprep.subr.mxu0 0.0
    %2288 = vmatpush1.xpose.msra.mxu0 0.0
    %2289 = vmatprep.subr.mxu0 0.0
    %2290 = vmatpush1.xpose.msra.mxu0 0.0
    %2291 = vmatprep.subr.mxu0 0.0
    %2292 = vmatpush1.xpose.msra.mxu0 0.0
    %2293 = vmatprep.subr.mxu0 0.0
    %2294 = vmatpush1.xpose.msra.mxu0 0.0
    %2295 = vmatprep.subr.mxu0 0.0
    %2296 = vmatpush1.xpose.msra.mxu0 0.0
    %2297 = vmatprep.subr.mxu0 0.0
    %2298 = vmatpush1.xpose.msra.mxu0 0.0
    %2299 = vmatprep.subr.mxu0 0.0
    %2300 = vmatpush1.xpose.msra.mxu0 0.0
    %2301 = vmatprep.subr.mxu0 0.0
    %2302 = vmatpush1.xpose.msra.mxu0 0.0
    %2303 = vmatprep.subr.mxu0 0.0
    %2304 = vmatpush1.xpose.msra.mxu0 0.0
    %2305 = vmatprep.subr.mxu0 0.0
    %2306 = vmatpush1.xpose.msra.mxu0 0.0
    %2307 = vmatprep.subr.mxu0 0.0
    %2308 = vmatpush1.xpose.msra.mxu0 0.0
    %2309 = vmatprep.subr.mxu0 0.0
    %2310 = vmatpush1.xpose.msra.mxu0 0.0
    %2311 = vmatprep.subr.mxu0 0.0
    %2312 = vmatpush1.xpose.msra.mxu0 0.0
    %2313 = vmatprep.subr.mxu0 0.0
    %2314 = vmatpush1.xpose.msra.mxu0 0.0
    %2315 = vmatprep.subr.mxu0 0.0
    %2316 = vmatpush1.xpose.msra.mxu0 0.0
    %2317 = vmatprep.subr.mxu0 0.0
    %2318 = vmatpush1.xpose.msra.mxu0 0.0
    %2319 = vmatprep.subr.mxu0 0.0
    %2320 = vmatpush1.xpose.msra.mxu0 0.0
    %2321 = vmatprep.subr.mxu0 0.0
    %2322 = vmatpush1.xpose.msra.mxu0 0.0
    %2323 = vmatprep.subr.mxu0 0.0
    %2324 = vmatpush1.xpose.msra.mxu0 0.0
    %2325 = vmatprep.mubr.f32.mxu0 0.0
    %2326 = vmatmul.mubr.f32.gmra.mrb[0].mxu0 %v2253
    %v2327 = vpop.f32.mrb[0].mxu0
    %v2328 = vadd.f32 0.0, %v2327
    %v2329 = vpop.f32.mrb[0].mxu0
    %2330 = vmatprep.mubr.f32.mxu0 0.0
    %2331 = vmatmul.mubr.f32.gmra.mrb[0].mxu0 %v2255
    %v2332 = vpop.f32.mrb[0].mxu0
    %v2333 = vadd.f32 0.0, %v2332
    %v2334 = vpop.f32.mrb[0].mxu0
    %2335 = vdwg.mxu0
    %v2336 = vmul.f32 %v2328, 0.35355338
    %v2337 = vmul.f32 %v2333, 0.35355338
    %v2338 = vadd.f32 %v2336, %v139
    %v2339 = vadd.f32 %v2337, %v140
    %v2340 = vsel %vm378, %v2338, -inf
    %2341 = vmax.xlane.f32.xlu0 %v2340
    %v2342 = vpop.xlane.xlu0 %2341
    %v2343 = vsel %vm378, %v2339, -inf
    %2344 = vmax.xlane.f32.xlu0 %v2343
    %v2345 = vpop.xlane.xlu0 %2344
    %v2346 = vsub.f32 %v2338, %v2342
    %v2347 = vsub.f32 %v2339, %v2345
    %v2348 = vmul.f32 %v2346, 1.442695
    %v2349 = vpow.pop %v2348
    %v2350 = vmul.f32 %v2347, 1.442695
    %v2351 = vpow.pop %v2350
    %v2352 = vsel %vm378, %v2349, 0.0
    %2353 = vadd.xlane.f32.xlu0 %v2352
    %v2354 = vpop.xlane.xlu0 %2353
    %v2355 = vsel %vm378, %v2351, 0.0
    %2356 = vadd.xlane.f32.xlu0 %v2355
    %v2357 = vpop.xlane.xlu0 %2356
    %v2358 = vrcp.pop %v2354
    %v2359 = vrcp.pop %v2357
    %v2360 = vmul.f32 %v2349, %v2358
    %v2361 = vmul.f32 %v2351, %v2359
    %2362 = vrot.lane.b32.xlu0 %v1666, 80
    %v2363 = vpop.permute.xlu0 %2362
    %2364 = vrot.lane.b32.xlu0 %v1671, 80
    %v2365 = vpop.permute.xlu0 %2364
    %v2369 = vsel %vm378, %v2360, 0
    %v2372 = vsel %vm378, %v2361, 0
    %2374 = vmatprep.subr.mxu0 0.0
    %2375 = vmatpush1.msra.mxu0 %v2363
    %2376 = vmatprep.subr.mxu0 0.0
    %2377 = vmatpush1.msra.mxu0 %v2365
    %2378 = vmatprep.subr.mxu0 0.0
    %2379 = vmatpush1.msra.mxu0 0.0
    %2380 = vmatprep.subr.mxu0 0.0
    %2381 = vmatpush1.msra.mxu0 0.0
    %2382 = vmatprep.subr.mxu0 0.0
    %2383 = vmatpush1.msra.mxu0 0.0
    %2384 = vmatprep.subr.mxu0 0.0
    %2385 = vmatpush1.msra.mxu0 0.0
    %2386 = vmatprep.subr.mxu0 0.0
    %2387 = vmatpush1.msra.mxu0 0.0
    %2388 = vmatprep.subr.mxu0 0.0
    %2389 = vmatpush1.msra.mxu0 0.0
    %2390 = vmatprep.subr.mxu0 0.0
    %2391 = vmatpush1.msra.mxu0 0.0
    %2392 = vmatprep.subr.mxu0 0.0
    %2393 = vmatpush1.msra.mxu0 0.0
    %2394 = vmatprep.subr.mxu0 0.0
    %2395 = vmatpush1.msra.mxu0 0.0
    %2396 = vmatprep.subr.mxu0 0.0
    %2397 = vmatpush1.msra.mxu0 0.0
    %2398 = vmatprep.subr.mxu0 0.0
    %2399 = vmatpush1.msra.mxu0 0.0
    %2400 = vmatprep.subr.mxu0 0.0
    %2401 = vmatpush1.msra.mxu0 0.0
    %2402 = vmatprep.subr.mxu0 0.0
    %2403 = vmatpush1.msra.mxu0 0.0
    %2404 = vmatprep.subr.mxu0 0.0
    %2405 = vmatpush1.msra.mxu0 0.0
    %2406 = vmatprep.subr.mxu0 0.0
    %2407 = vmatpush1.msra.mxu0 0.0
    %2408 = vmatprep.subr.mxu0 0.0
    %2409 = vmatpush1.msra.mxu0 0.0
    %2410 = vmatprep.subr.mxu0 0.0
    %2411 = vmatpush1.msra.mxu0 0.0
    %2412 = vmatprep.subr.mxu0 0.0
    %2413 = vmatpush1.msra.mxu0 0.0
    %2414 = vmatprep.subr.mxu0 0.0
    %2415 = vmatpush1.msra.mxu0 0.0
    %2416 = vmatprep.subr.mxu0 0.0
    %2417 = vmatpush1.msra.mxu0 0.0
    %2418 = vmatprep.subr.mxu0 0.0
    %2419 = vmatpush1.msra.mxu0 0.0
    %2420 = vmatprep.subr.mxu0 0.0
    %2421 = vmatpush1.msra.mxu0 0.0
    %2422 = vmatprep.subr.mxu0 0.0
    %2423 = vmatpush1.msra.mxu0 0.0
    %2424 = vmatprep.subr.mxu0 0.0
    %2425 = vmatpush1.msra.mxu0 0.0
    %2426 = vmatprep.subr.mxu0 0.0
    %2427 = vmatpush1.msra.mxu0 0.0
    %2428 = vmatprep.subr.mxu0 0.0
    %2429 = vmatpush1.msra.mxu0 0.0
    %2430 = vmatprep.subr.mxu0 0.0
    %2431 = vmatpush1.msra.mxu0 0.0
    %2432 = vmatprep.subr.mxu0 0.0
    %2433 = vmatpush1.msra.mxu0 0.0
    %2434 = vmatprep.subr.mxu0 0.0
    %2435 = vmatpush1.msra.mxu0 0.0
    %2436 = vmatprep.subr.mxu0 0.0
    %2437 = vmatpush1.msra.mxu0 0.0
    %2438 = vmatprep.mubr.f32.mxu0 0.0
    %2439 = vmatmul.mubr.f32.gmra.mrb[0].mxu0 %v2369
    %v2440 = vpop.f32.mrb[0].mxu0
    %v2441 = vadd.f32 0.0, %v2440
    %v2442 = vpop.f32.mrb[0].mxu0
    %2443 = vmatprep.mubr.f32.mxu0 0.0
    %2444 = vmatmul.mubr.f32.gmra.mrb[0].mxu0 %v2372
    %v2445 = vpop.f32.mrb[0].mxu0
    %v2446 = vadd.f32 0.0, %v2445
    %v2447 = vpop.f32.mrb[0].mxu0
    %2448 = vdwg.mxu0
    %v2450 = vsel %vm290, %v2441, 0
    %v2453 = vsel %vm290, %v2446, 0
    %2455 = vmatprep.subr.mxu0 0.0
    %2456 = vmatpush1.msra.mxu0 %v1676
    %2457 = vmatprep.subr.mxu0 0.0
    %2458 = vmatpush1.msra.mxu0 0.0
    %2459 = vmatprep.subr.mxu0 0.0
    %2460 = vmatpush1.msra.mxu0 0.0
    %2461 = vmatprep.subr.mxu0 0.0
    %2462 = vmatpush1.msra.mxu0 0.0
    %2463 = vmatprep.subr.mxu0 0.0
    %2464 = vmatpush1.msra.mxu0 0.0
    %2465 = vmatprep.subr.mxu0 0.0
    %2466 = vmatpush1.msra.mxu0 0.0
    %2467 = vmatprep.subr.mxu0 0.0
    %2468 = vmatpush1.msra.mxu0 0.0
    %2469 = vmatprep.subr.mxu0 0.0
    %2470 = vmatpush1.msra.mxu0 0.0
    %2471 = vmatprep.subr.mxu0 0.0
    %2472 = vmatpush1.msra.mxu0 0.0
    %2473 = vmatprep.subr.mxu0 0.0
    %2474 = vmatpush1.msra.mxu0 0.0
    %2475 = vmatprep.subr.mxu0 0.0
    %2476 = vmatpush1.msra.mxu0 0.0
    %2477 = vmatprep.subr.mxu0 0.0
    %2478 = vmatpush1.msra.mxu0 0.0
    %2479 = vmatprep.subr.mxu0 0.0
    %2480 = vmatpush1.msra.mxu0 0.0
    %2481 = vmatprep.subr.mxu0 0.0
    %2482 = vmatpush1.msra.mxu0 0.0
    %2483 = vmatprep.subr.mxu0 0.0
    %2484 = vmatpush1.msra.mxu0 0.0
    %2485 = vmatprep.subr.mxu0 0.0
    %2486 = vmatpush1.msra.mxu0 0.0
    %2487 = vmatprep.subr.mxu0 0.0
    %2488 = vmatpush1.msra.mxu0 0.0
    %2489 = vmatprep.subr.mxu0 0.0
    %2490 = vmatpush1.msra.mxu0 0.0
    %2491 = vmatprep.subr.mxu0 0.0
    %2492 = vmatpush1.msra.mxu0 0.0
    %2493 = vmatprep.subr.mxu0 0.0
    %2494 = vmatpush1.msra.mxu0 0.0
    %2495 = vmatprep.subr.mxu0 0.0
    %2496 = vmatpush1.msra.mxu0 0.0
    %2497 = vmatprep.subr.mxu0 0.0
    %2498 = vmatpush1.msra.mxu0 0.0
    %2499 = vmatprep.subr.mxu0 0.0
    %2500 = vmatpush1.msra.mxu0 0.0
    %2501 = vmatprep.subr.mxu0 0.0
    %2502 = vmatpush1.msra.mxu0 0.0
    %2503 = vmatprep.subr.mxu0 0.0
    %2504 = vmatpush1.msra.mxu0 0.0
    %2505 = vmatprep.subr.mxu0 0.0
    %2506 = vmatpush1.msra.mxu0 0.0
    %2507 = vmatprep.subr.mxu0 0.0
    %2508 = vmatpush1.msra.mxu0 0.0
    %2509 = vmatprep.subr.mxu0 0.0
    %2510 = vmatpush1.msra.mxu0 0.0
    %2511 = vmatprep.subr.mxu0 0.0
    %2512 = vmatpush1.msra.mxu0 0.0
    %2513 = vmatprep.subr.mxu0 0.0
    %2514 = vmatpush1.msra.mxu0 0.0
    %2515 = vmatprep.subr.mxu0 0.0
    %2516 = vmatpush1.msra.mxu0 0.0
    %2517 = vmatprep.subr.mxu0 0.0
    %2518 = vmatpush1.msra.mxu0 0.0
    %2519 = vmatprep.mubr.f32.mxu0 0.0
    %2520 = vmatmul.mubr.f32.gmra.mrb[0].mxu0 %v2450
    %v2521 = vpop.f32.mrb[0].mxu0
    %v2522 = vadd.f32 0.0, %v2521
    %v2523 = vpop.f32.mrb[0].mxu0
    %2524 = vmatprep.mubr.f32.mxu0 0.0
    %2525 = vmatmul.mubr.f32.gmra.mrb[0].mxu0 %v2453
    %v2526 = vpop.f32.mrb[0].mxu0
    %v2527 = vadd.f32 0.0, %v2526
    %v2528 = vpop.f32.mrb[0].mxu0
    %2529 = vdwg.mxu0
    %v2530 = vadd.f32 %v2237, %v2522
    %v2531 = vadd.f32 %v2242, %v2527
    %2532 = vrot.lane.b32.xlu0 %v1566, 104
    %v2533 = vpop.permute.xlu0 %2532
    %2534 = vrot.lane.b32.xlu0 %v1571, 104
    %v2535 = vpop.permute.xlu0 %2534
    %2536 = vrot.lane.b32.xlu0 %v1666, 104
    %v2537 = vpop.permute.xlu0 %2536
    %2538 = vrot.lane.b32.xlu0 %v1671, 104
    %v2539 = vpop.permute.xlu0 %2538
    %v2540 = vsel %vm290, %v2533, 0
    %v2542 = vsel %vm290, %v2535, 0
    %v2544 = vsel %vm290, %v2537, 0
    %v2546 = vsel %vm290, %v2539, 0
    %2548 = vmatprep.subr.mxu0 0.0
    %2549 = vmatpush1.xpose.msra.mxu0 %v2544
    %2550 = vmatprep.subr.mxu0 0.0
    %2551 = vmatpush1.xpose.msra.mxu0 %v2546
    %2552 = vmatprep.subr.mxu0 0.0
    %2553 = vmatpush1.xpose.msra.mxu0 0.0
    %2554 = vmatprep.subr.mxu0 0.0
    %2555 = vmatpush1.xpose.msra.mxu0 0.0
    %2556 = vmatprep.subr.mxu0 0.0
    %2557 = vmatpush1.xpose.msra.mxu0 0.0
    %2558 = vmatprep.subr.mxu0 0.0
    %2559 = vmatpush1.xpose.msra.mxu0 0.0
    %2560 = vmatprep.subr.mxu0 0.0
    %2561 = vmatpush1.xpose.msra.mxu0 0.0
    %2562 = vmatprep.subr.mxu0 0.0
    %2563 = vmatpush1.xpose.msra.mxu0 0.0
    %2564 = vmatprep.subr.mxu0 0.0
    %2565 = vmatpush1.xpose.msra.mxu0 0.0
    %2566 = vmatprep.subr.mxu0 0.0
    %2567 = vmatpush1.xpose.msra.mxu0 0.0
    %2568 = vmatprep.subr.mxu0 0.0
    %2569 = vmatpush1.xpose.msra.mxu0 0.0
    %2570 = vmatprep.subr.mxu0 0.0
    %2571 = vmatpush1.xpose.msra.mxu0 0.0
    %2572 = vmatprep.subr.mxu0 0.0
    %2573 = vmatpush1.xpose.msra.mxu0 0.0
    %2574 = vmatprep.subr.mxu0 0.0
    %2575 = vmatpush1.xpose.msra.mxu0 0.0
    %2576 = vmatprep.subr.mxu0 0.0
    %2577 = vmatpush1.xpose.msra.mxu0 0.0
    %2578 = vmatprep.subr.mxu0 0.0
    %2579 = vmatpush1.xpose.msra.mxu0 0.0
    %2580 = vmatprep.subr.mxu0 0.0
    %2581 = vmatpush1.xpose.msra.mxu0 0.0
    %2582 = vmatprep.subr.mxu0 0.0
    %2583 = vmatpush1.xpose.msra.mxu0 0.0
    %2584 = vmatprep.subr.mxu0 0.0
    %2585 = vmatpush1.xpose.msra.mxu0 0.0
    %2586 = vmatprep.subr.mxu0 0.0
    %2587 = vmatpush1.xpose.msra.mxu0 0.0
    %2588 = vmatprep.subr.mxu0 0.0
    %2589 = vmatpush1.xpose.msra.mxu0 0.0
    %2590 = vmatprep.subr.mxu0 0.0
    %2591 = vmatpush1.xpose.msra.mxu0 0.0
    %2592 = vmatprep.subr.mxu0 0.0
    %2593 = vmatpush1.xpose.msra.mxu0 0.0
    %2594 = vmatprep.subr.mxu0 0.0
    %2595 = vmatpush1.xpose.msra.mxu0 0.0
    %2596 = vmatprep.subr.mxu0 0.0
    %2597 = vmatpush1.xpose.msra.mxu0 0.0
    %2598 = vmatprep.subr.mxu0 0.0
    %2599 = vmatpush1.xpose.msra.mxu0 0.0
    %2600 = vmatprep.subr.mxu0 0.0
    %2601 = vmatpush1.xpose.msra.mxu0 0.0
    %2602 = vmatprep.subr.mxu0 0.0
    %2603 = vmatpush1.xpose.msra.mxu0 0.0
    %2604 = vmatprep.subr.mxu0 0.0
    %2605 = vmatpush1.xpose.msra.mxu0 0.0
    %2606 = vmatprep.subr.mxu0 0.0
    %2607 = vmatpush1.xpose.msra.mxu0 0.0
    %2608 = vmatprep.subr.mxu0 0.0
    %2609 = vmatpush1.xpose.msra.mxu0 0.0
    %2610 = vmatprep.subr.mxu0 0.0
    %2611 = vmatpush1.xpose.msra.mxu0 0.0
    %2612 = vmatprep.mubr.f32.mxu0 0.0
    %2613 = vmatmul.mubr.f32.gmra.mrb[0].mxu0 %v2540
    %v2614 = vpop.f32.mrb[0].mxu0
    %v2615 = vadd.f32 0.0, %v2614
    %v2616 = vpop.f32.mrb[0].mxu0
    %2617 = vmatprep.mubr.f32.mxu0 0.0
    %2618 = vmatmul.mubr.f32.gmra.mrb[0].mxu0 %v2542
    %v2619 = vpop.f32.mrb[0].mxu0
    %v2620 = vadd.f32 0.0, %v2619
    %v2621 = vpop.f32.mrb[0].mxu0
    %2622 = vdwg.mxu0
    %v2623 = vmul.f32 %v2615, 0.35355338
    %v2624 = vmul.f32 %v2620, 0.35355338
    %v2625 = vadd.f32 %v2623, %v139
    %v2626 = vadd.f32 %v2624, %v140
    %v2627 = vsel %vm378, %v2625, -inf
    %2628 = vmax.xlane.f32.xlu0 %v2627
    %v2629 = vpop.xlane.xlu0 %2628
    %v2630 = vsel %vm378, %v2626, -inf
    %2631 = vmax.xlane.f32.xlu0 %v2630
    %v2632 = vpop.xlane.xlu0 %2631
    %v2633 = vsub.f32 %v2625, %v2629
    %v2634 = vsub.f32 %v2626, %v2632
    %v2635 = vmul.f32 %v2633, 1.442695
    %v2636 = vpow.pop %v2635
    %v2637 = vmul.f32 %v2634, 1.442695
    %v2638 = vpow.pop %v2637
    %v2639 = vsel %vm378, %v2636, 0.0
    %2640 = vadd.xlane.f32.xlu0 %v2639
    %v2641 = vpop.xlane.xlu0 %2640
    %v2642 = vsel %vm378, %v2638, 0.0
    %2643 = vadd.xlane.f32.xlu0 %v2642
    %v2644 = vpop.xlane.xlu0 %2643
    %v2645 = vrcp.pop %v2641
    %v2646 = vrcp.pop %v2644
    %v2647 = vmul.f32 %v2636, %v2645
    %v2648 = vmul.f32 %v2638, %v2646
    %2649 = vrot.lane.b32.xlu0 %v1666, 72
    %v2650 = vpop.permute.xlu0 %2649
    %2651 = vrot.lane.b32.xlu0 %v1671, 72
    %v2652 = vpop.permute.xlu0 %2651
    %v2656 = vsel %vm378, %v2647, 0
    %v2659 = vsel %vm378, %v2648, 0
    %2661 = vmatprep.subr.mxu0 0.0
    %2662 = vmatpush1.msra.mxu0 %v2650
    %2663 = vmatprep.subr.mxu0 0.0
    %2664 = vmatpush1.msra.mxu0 %v2652
    %2665 = vmatprep.subr.mxu0 0.0
    %2666 = vmatpush1.msra.mxu0 0.0
    %2667 = vmatprep.subr.mxu0 0.0
    %2668 = vmatpush1.msra.mxu0 0.0
    %2669 = vmatprep.subr.mxu0 0.0
    %2670 = vmatpush1.msra.mxu0 0.0
    %2671 = vmatprep.subr.mxu0 0.0
    %2672 = vmatpush1.msra.mxu0 0.0
    %2673 = vmatprep.subr.mxu0 0.0
    %2674 = vmatpush1.msra.mxu0 0.0
    %2675 = vmatprep.subr.mxu0 0.0
    %2676 = vmatpush1.msra.mxu0 0.0
    %2677 = vmatprep.subr.mxu0 0.0
    %2678 = vmatpush1.msra.mxu0 0.0
    %2679 = vmatprep.subr.mxu0 0.0
    %2680 = vmatpush1.msra.mxu0 0.0
    %2681 = vmatprep.subr.mxu0 0.0
    %2682 = vmatpush1.msra.mxu0 0.0
    %2683 = vmatprep.subr.mxu0 0.0
    %2684 = vmatpush1.msra.mxu0 0.0
    %2685 = vmatprep.subr.mxu0 0.0
    %2686 = vmatpush1.msra.mxu0 0.0
    %2687 = vmatprep.subr.mxu0 0.0
    %2688 = vmatpush1.msra.mxu0 0.0
    %2689 = vmatprep.subr.mxu0 0.0
    %2690 = vmatpush1.msra.mxu0 0.0
    %2691 = vmatprep.subr.mxu0 0.0
    %2692 = vmatpush1.msra.mxu0 0.0
    %2693 = vmatprep.subr.mxu0 0.0
    %2694 = vmatpush1.msra.mxu0 0.0
    %2695 = vmatprep.subr.mxu0 0.0
    %2696 = vmatpush1.msra.mxu0 0.0
    %2697 = vmatprep.subr.mxu0 0.0
    %2698 = vmatpush1.msra.mxu0 0.0
    %2699 = vmatprep.subr.mxu0 0.0
    %2700 = vmatpush1.msra.mxu0 0.0
    %2701 = vmatprep.subr.mxu0 0.0
    %2702 = vmatpush1.msra.mxu0 0.0
    %2703 = vmatprep.subr.mxu0 0.0
    %2704 = vmatpush1.msra.mxu0 0.0
    %2705 = vmatprep.subr.mxu0 0.0
    %2706 = vmatpush1.msra.mxu0 0.0
    %2707 = vmatprep.subr.mxu0 0.0
    %2708 = vmatpush1.msra.mxu0 0.0
    %2709 = vmatprep.subr.mxu0 0.0
    %2710 = vmatpush1.msra.mxu0 0.0
    %2711 = vmatprep.subr.mxu0 0.0
    %2712 = vmatpush1.msra.mxu0 0.0
    %2713 = vmatprep.subr.mxu0 0.0
    %2714 = vmatpush1.msra.mxu0 0.0
    %2715 = vmatprep.subr.mxu0 0.0
    %2716 = vmatpush1.msra.mxu0 0.0
    %2717 = vmatprep.subr.mxu0 0.0
    %2718 = vmatpush1.msra.mxu0 0.0
    %2719 = vmatprep.subr.mxu0 0.0
    %2720 = vmatpush1.msra.mxu0 0.0
    %2721 = vmatprep.subr.mxu0 0.0
    %2722 = vmatpush1.msra.mxu0 0.0
    %2723 = vmatprep.subr.mxu0 0.0
    %2724 = vmatpush1.msra.mxu0 0.0
    %2725 = vmatprep.mubr.f32.mxu0 0.0
    %2726 = vmatmul.mubr.f32.gmra.mrb[0].mxu0 %v2656
    %v2727 = vpop.f32.mrb[0].mxu0
    %v2728 = vadd.f32 0.0, %v2727
    %v2729 = vpop.f32.mrb[0].mxu0
    %2730 = vmatprep.mubr.f32.mxu0 0.0
    %2731 = vmatmul.mubr.f32.gmra.mrb[0].mxu0 %v2659
    %v2732 = vpop.f32.mrb[0].mxu0
    %v2733 = vadd.f32 0.0, %v2732
    %v2734 = vpop.f32.mrb[0].mxu0
    %2735 = vdwg.mxu0
    %v2737 = vsel %vm290, %v2728, 0
    %v2740 = vsel %vm290, %v2733, 0
    %2742 = vmatprep.subr.mxu0 0.0
    %2743 = vmatpush1.msra.mxu0 %v1677
    %2744 = vmatprep.subr.mxu0 0.0
    %2745 = vmatpush1.msra.mxu0 0.0
    %2746 = vmatprep.subr.mxu0 0.0
    %2747 = vmatpush1.msra.mxu0 0.0
    %2748 = vmatprep.subr.mxu0 0.0
    %2749 = vmatpush1.msra.mxu0 0.0
    %2750 = vmatprep.subr.mxu0 0.0
    %2751 = vmatpush1.msra.mxu0 0.0
    %2752 = vmatprep.subr.mxu0 0.0
    %2753 = vmatpush1.msra.mxu0 0.0
    %2754 = vmatprep.subr.mxu0 0.0
    %2755 = vmatpush1.msra.mxu0 0.0
    %2756 = vmatprep.subr.mxu0 0.0
    %2757 = vmatpush1.msra.mxu0 0.0
    %2758 = vmatprep.subr.mxu0 0.0
    %2759 = vmatpush1.msra.mxu0 0.0
    %2760 = vmatprep.subr.mxu0 0.0
    %2761 = vmatpush1.msra.mxu0 0.0
    %2762 = vmatprep.subr.mxu0 0.0
    %2763 = vmatpush1.msra.mxu0 0.0
    %2764 = vmatprep.subr.mxu0 0.0
    %2765 = vmatpush1.msra.mxu0 0.0
    %2766 = vmatprep.subr.mxu0 0.0
    %2767 = vmatpush1.msra.mxu0 0.0
    %2768 = vmatprep.subr.mxu0 0.0
    %2769 = vmatpush1.msra.mxu0 0.0
    %2770 = vmatprep.subr.mxu0 0.0
    %2771 = vmatpush1.msra.mxu0 0.0
    %2772 = vmatprep.subr.mxu0 0.0
    %2773 = vmatpush1.msra.mxu0 0.0
    %2774 = vmatprep.subr.mxu0 0.0
    %2775 = vmatpush1.msra.mxu0 0.0
    %2776 = vmatprep.subr.mxu0 0.0
    %2777 = vmatpush1.msra.mxu0 0.0
    %2778 = vmatprep.subr.mxu0 0.0
    %2779 = vmatpush1.msra.mxu0 0.0
    %2780 = vmatprep.subr.mxu0 0.0
    %2781 = vmatpush1.msra.mxu0 0.0
    %2782 = vmatprep.subr.mxu0 0.0
    %2783 = vmatpush1.msra.mxu0 0.0
    %2784 = vmatprep.subr.mxu0 0.0
    %2785 = vmatpush1.msra.mxu0 0.0
    %2786 = vmatprep.subr.mxu0 0.0
    %2787 = vmatpush1.msra.mxu0 0.0
    %2788 = vmatprep.subr.mxu0 0.0
    %2789 = vmatpush1.msra.mxu0 0.0
    %2790 = vmatprep.subr.mxu0 0.0
    %2791 = vmatpush1.msra.mxu0 0.0
    %2792 = vmatprep.subr.mxu0 0.0
    %2793 = vmatpush1.msra.mxu0 0.0
    %2794 = vmatprep.subr.mxu0 0.0
    %2795 = vmatpush1.msra.mxu0 0.0
    %2796 = vmatprep.subr.mxu0 0.0
    %2797 = vmatpush1.msra.mxu0 0.0
    %2798 = vmatprep.subr.mxu0 0.0
    %2799 = vmatpush1.msra.mxu0 0.0
    %2800 = vmatprep.subr.mxu0 0.0
    %2801 = vmatpush1.msra.mxu0 0.0
    %2802 = vmatprep.subr.mxu0 0.0
    %2803 = vmatpush1.msra.mxu0 0.0
    %2804 = vmatprep.subr.mxu0 0.0
    %2805 = vmatpush1.msra.mxu0 0.0
    %2806 = vmatprep.mubr.f32.mxu0 0.0
    %2807 = vmatmul.mubr.f32.gmra.mrb[0].mxu0 %v2737
    %v2808 = vpop.f32.mrb[0].mxu0
    %v2809 = vadd.f32 0.0, %v2808
    %v2810 = vpop.f32.mrb[0].mxu0
    %2811 = vmatprep.mubr.f32.mxu0 0.0
    %2812 = vmatmul.mubr.f32.gmra.mrb[0].mxu0 %v2740
    %v2813 = vpop.f32.mrb[0].mxu0
    %v2814 = vadd.f32 0.0, %v2813
    %v2815 = vpop.f32.mrb[0].mxu0
    %2816 = vdwg.mxu0
    %v2817 = vadd.f32 %v2530, %v2809
    %v2818 = vadd.f32 %v2531, %v2814
    %v2820 = vlaneseq
    %v2821 = vshrl.u32 %v2820, 7
    %v2822 = vsub.s32 0, %v2821
    %v2823 = vrot.slane %v1678, %v2822
    %v2825 = vadd.f32 %v2817, %v2823
    %v2826 = vadd.f32 %v2818, %v2823
    %v2827 = vadd.f32 %v1436, %v2825
    %v2828 = vadd.f32 %v1437, %v2826
    %v2829 = vld [vmem:[%s20] sm:$0x1]
    %v2830 = vld [vmem:[%s21] sm:$0x1]
    %v2831 = vsel %vm143, %v2827, 0.0
    %2832 = vadd.xlane.f32.xlu0 %v2831
    %v2833 = vpop.xlane.xlu0 %2832
    %v2834 = vsel %vm143, %v2828, 0.0
    %2835 = vadd.xlane.f32.xlu0 %v2834
    %v2836 = vpop.xlane.xlu0 %2835
    %v2837 = vmul.f32 %v2833, %v150
    %v2838 = vmul.f32 %v2836, %v150
    %v2839 = vsub.f32 %v2827, %v2837
    %v2840 = vsub.f32 %v2828, %v2838
    %v2841 = vmul.f32 %v2839, %v2839
    %v2842 = vmul.f32 %v2840, %v2840
    %v2843 = vsel %vm143, %v2841, 0.0
    %2844 = vadd.xlane.f32.xlu0 %v2843
    %v2845 = vpop.xlane.xlu0 %2844
    %v2846 = vsel %vm143, %v2842, 0.0
    %2847 = vadd.xlane.f32.xlu0 %v2846
    %v2848 = vpop.xlane.xlu0 %2847
    %v2849 = vmul.f32 %v2845, %v150
    %v2850 = vmul.f32 %v2848, %v150
    %v2851 = vadd.f32 %v2849, 1e-05
    %v2852 = vadd.f32 %v2850, 1e-05
    %v2853 = vrsqrt.pop %v2851
    %v2854 = vrsqrt.pop %v2852
    %v2855 = vmul.f32 %v2839, %v2853
    %v2856 = vmul.f32 %v2840, %v2854
    %v2858 = vlaneseq
    %v2859 = vshrl.u32 %v2858, 7
    %v2860 = vsub.s32 0, %v2859
    %v2861 = vrot.slane %v2829, %v2860
    %v2863 = vmul.f32 %v2855, %v2861
    %v2864 = vmul.f32 %v2856, %v2861
    %v2866 = vlaneseq
    %v2867 = vshrl.u32 %v2866, 7
    %v2868 = vsub.s32 0, %v2867
    %v2869 = vrot.slane %v2830, %v2868
    %v2871 = vadd.f32 %v2863, %v2869
    %v2872 = vadd.f32 %v2864, %v2869
    %v2873 = vld [vmem:[%s12] sm:$0xff]
    %v2874 = vld [vmem:[%s12 + $0x8] sm:$0xff]
    %v2875 = vld [vmem:[%s12 + $0x10] sm:$0xff]
    %v2876 = vld [vmem:[%s12 + $0x18] sm:$0xff]
    %v2877 = vld [vmem:[%s13] sm:$0x1]
    %v2879 = vlaneseq
    %v2880 = vshrl.u32 %v2879, 7
    %v2881 = vsub.s32 0, %v2880
    %v2882 = vrot.slane %v2877, %v2881
    %v2885 = vsel %vm143, %v2871, 0
    %v2888 = vsel %vm143, %v2872, 0
    %2890 = vmatprep.subr.mxu0 0.0
    %2891 = vmatpush1.msra.mxu0 %v2873
    %2892 = vmatprep.subr.mxu0 0.0
    %2893 = vmatpush1.msra.mxu0 %v2874
    %2894 = vmatprep.subr.mxu0 0.0
    %2895 = vmatpush1.msra.mxu0 %v2875
    %2896 = vmatprep.subr.mxu0 0.0
    %2897 = vmatpush1.msra.mxu0 %v2876
    %2898 = vmatprep.subr.mxu0 0.0
    %2899 = vmatpush1.msra.mxu0 0.0
    %2900 = vmatprep.subr.mxu0 0.0
    %2901 = vmatpush1.msra.mxu0 0.0
    %2902 = vmatprep.subr.mxu0 0.0
    %2903 = vmatpush1.msra.mxu0 0.0
    %2904 = vmatprep.subr.mxu0 0.0
    %2905 = vmatpush1.msra.mxu0 0.0
    %2906 = vmatprep.subr.mxu0 0.0
    %2907 = vmatpush1.msra.mxu0 0.0
    %2908 = vmatprep.subr.mxu0 0.0
    %2909 = vmatpush1.msra.mxu0 0.0
    %2910 = vmatprep.subr.mxu0 0.0
    %2911 = vmatpush1.msra.mxu0 0.0
    %2912 = vmatprep.subr.mxu0 0.0
    %2913 = vmatpush1.msra.mxu0 0.0
    %2914 = vmatprep.subr.mxu0 0.0
    %2915 = vmatpush1.msra.mxu0 0.0
    %2916 = vmatprep.subr.mxu0 0.0
    %2917 = vmatpush1.msra.mxu0 0.0
    %2918 = vmatprep.subr.mxu0 0.0
    %2919 = vmatpush1.msra.mxu0 0.0
    %2920 = vmatprep.subr.mxu0 0.0
    %2921 = vmatpush1.msra.mxu0 0.0
    %2922 = vmatprep.subr.mxu0 0.0
    %2923 = vmatpush1.msra.mxu0 0.0
    %2924 = vmatprep.subr.mxu0 0.0
    %2925 = vmatpush1.msra.mxu0 0.0
    %2926 = vmatprep.subr.mxu0 0.0
    %2927 = vmatpush1.msra.mxu0 0.0
    %2928 = vmatprep.subr.mxu0 0.0
    %2929 = vmatpush1.msra.mxu0 0.0
    %2930 = vmatprep.subr.mxu0 0.0
    %2931 = vmatpush1.msra.mxu0 0.0
    %2932 = vmatprep.subr.mxu0 0.0
    %2933 = vmatpush1.msra.mxu0 0.0
    %2934 = vmatprep.subr.mxu0 0.0
    %2935 = vmatpush1.msra.mxu0 0.0
    %2936 = vmatprep.subr.mxu0 0.0
    %2937 = vmatpush1.msra.mxu0 0.0
    %2938 = vmatprep.subr.mxu0 0.0
    %2939 = vmatpush1.msra.mxu0 0.0
    %2940 = vmatprep.subr.mxu0 0.0
    %2941 = vmatpush1.msra.mxu0 0.0
    %2942 = vmatprep.subr.mxu0 0.0
    %2943 = vmatpush1.msra.mxu0 0.0
    %2944 = vmatprep.subr.mxu0 0.0
    %2945 = vmatpush1.msra.mxu0 0.0
    %2946 = vmatprep.subr.mxu0 0.0
    %2947 = vmatpush1.msra.mxu0 0.0
    %2948 = vmatprep.subr.mxu0 0.0
    %2949 = vmatpush1.msra.mxu0 0.0
    %2950 = vmatprep.subr.mxu0 0.0
    %2951 = vmatpush1.msra.mxu0 0.0
    %2952 = vmatprep.subr.mxu0 0.0
    %2953 = vmatpush1.msra.mxu0 0.0
    %2954 = vmatprep.mubr.f32.mxu0 0.0
    %2955 = vmatmul.mubr.f32.gmra.mrb[0].mxu0 %v2885
    %v2956 = vpop.f32.mrb[0].mxu0
    %v2957 = vadd.f32 %v2882, %v2956
    %v2958 = vpop.f32.mrb[0].mxu0
    %2959 = vmatprep.mubr.f32.mxu0 0.0
    %2960 = vmatmul.mubr.f32.gmra.mrb[0].mxu0 %v2888
    %v2961 = vpop.f32.mrb[0].mxu0
    %v2962 = vadd.f32 %v2882, %v2961
    %v2963 = vpop.f32.mrb[0].mxu0
    %2964 = vdwg.mxu0
    %v2965 = vmax.f32 %v2957, 0.0
    %v2966 = vmax.f32 %v2962, 0.0
    %v2967 = vld [vmem:[%s14] sm:$0xff]
    %v2968 = vld [vmem:[%s14 + $0x8] sm:$0xff]
    %v2969 = vld [vmem:[%s14 + $0x10] sm:$0xff]
    %v2970 = vld [vmem:[%s14 + $0x18] sm:$0xff]
    %v2971 = vld [vmem:[%s14 + $0x20] sm:$0xff]
    %v2972 = vld [vmem:[%s14 + $0x28] sm:$0xff]
    %v2973 = vld [vmem:[%s14 + $0x30] sm:$0xff]
    %v2974 = vld [vmem:[%s14 + $0x38] sm:$0xff]
    %v2975 = vld [vmem:[%s14 + $0x40] sm:$0xff]
    %v2976 = vld [vmem:[%s14 + $0x48] sm:$0xff]
    %v2977 = vld [vmem:[%s14 + $0x50] sm:$0xff]
    %v2978 = vld [vmem:[%s14 + $0x58] sm:$0xff]
    %v2979 = vld [vmem:[%s14 + $0x60] sm:$0xff]
    %v2980 = vld [vmem:[%s14 + $0x68] sm:$0xff]
    %v2981 = vld [vmem:[%s14 + $0x70] sm:$0xff]
    %v2982 = vld [vmem:[%s14 + $0x78] sm:$0xff]
    %2983 = vmatprep.subr.mxu0 0.0
    %2984 = vmatpush1.msra.mxu0 %v2967
    %2985 = vmatprep.subr.mxu0 0.0
    %2986 = vmatpush1.msra.mxu0 %v2968
    %2987 = vmatprep.subr.mxu0 0.0
    %2988 = vmatpush1.msra.mxu0 %v2969
    %2989 = vmatprep.subr.mxu0 0.0
    %2990 = vmatpush1.msra.mxu0 %v2970
    %2991 = vmatprep.subr.mxu0 0.0
    %2992 = vmatpush1.msra.mxu0 %v2971
    %2993 = vmatprep.subr.mxu0 0.0
    %2994 = vmatpush1.msra.mxu0 %v2972
    %2995 = vmatprep.subr.mxu0 0.0
    %2996 = vmatpush1.msra.mxu0 %v2973
    %2997 = vmatprep.subr.mxu0 0.0
    %2998 = vmatpush1.msra.mxu0 %v2974
    %2999 = vmatprep.subr.mxu0 0.0
    %3000 = vmatpush1.msra.mxu0 %v2975
    %3001 = vmatprep.subr.mxu0 0.0
    %3002 = vmatpush1.msra.mxu0 %v2976
    %3003 = vmatprep.subr.mxu0 0.0
    %3004 = vmatpush1.msra.mxu0 %v2977
    %3005 = vmatprep.subr.mxu0 0.0
    %3006 = vmatpush1.msra.mxu0 %v2978
    %3007 = vmatprep.subr.mxu0 0.0
    %3008 = vmatpush1.msra.mxu0 %v2979
    %3009 = vmatprep.subr.mxu0 0.0
    %3010 = vmatpush1.msra.mxu0 %v2980
    %3011 = vmatprep.subr.mxu0 0.0
    %3012 = vmatpush1.msra.mxu0 %v2981
    %3013 = vmatprep.subr.mxu0 0.0
    %3014 = vmatpush1.msra.mxu0 %v2982
    %3015 = vmatprep.subr.mxu0 0.0
    %3016 = vmatpush1.msra.mxu0 0.0
    %3017 = vmatprep.subr.mxu0 0.0
    %3018 = vmatpush1.msra.mxu0 0.0
    %3019 = vmatprep.subr.mxu0 0.0
    %3020 = vmatpush1.msra.mxu0 0.0
    %3021 = vmatprep.subr.mxu0 0.0
    %3022 = vmatpush1.msra.mxu0 0.0
    %3023 = vmatprep.subr.mxu0 0.0
    %3024 = vmatpush1.msra.mxu0 0.0
    %3025 = vmatprep.subr.mxu0 0.0
    %3026 = vmatpush1.msra.mxu0 0.0
    %3027 = vmatprep.subr.mxu0 0.0
    %3028 = vmatpush1.msra.mxu0 0.0
    %3029 = vmatprep.subr.mxu0 0.0
    %3030 = vmatpush1.msra.mxu0 0.0
    %3031 = vmatprep.subr.mxu0 0.0
    %3032 = vmatpush1.msra.mxu0 0.0
    %3033 = vmatprep.subr.mxu0 0.0
    %3034 = vmatpush1.msra.mxu0 0.0
    %3035 = vmatprep.subr.mxu0 0.0
    %3036 = vmatpush1.msra.mxu0 0.0
    %3037 = vmatprep.subr.mxu0 0.0
    %3038 = vmatpush1.msra.mxu0 0.0
    %3039 = vmatprep.subr.mxu0 0.0
    %3040 = vmatpush1.msra.mxu0 0.0
    %3041 = vmatprep.subr.mxu0 0.0
    %3042 = vmatpush1.msra.mxu0 0.0
    %3043 = vmatprep.subr.mxu0 0.0
    %3044 = vmatpush1.msra.mxu0 0.0
    %3045 = vmatprep.subr.mxu0 0.0
    %3046 = vmatpush1.msra.mxu0 0.0
    %3047 = vmatprep.mubr.f32.mxu0 0.0
    %3048 = vmatmul.mubr.f32.gmra.mrb[0].mxu0 %v2965
    %v3049 = vpop.f32.mrb[0].mxu0
    %v3050 = vadd.f32 0.0, %v3049
    %v3051 = vpop.f32.mrb[0].mxu0
    %3052 = vmatprep.mubr.f32.mxu0 0.0
    %3053 = vmatmul.mubr.f32.gmra.mrb[0].mxu0 %v2966
    %v3054 = vpop.f32.mrb[0].mxu0
    %v3055 = vadd.f32 0.0, %v3054
    %v3056 = vpop.f32.mrb[0].mxu0
    %3057 = vdwg.mxu0
    %v3058 = vadd.f32 %v2827, %v3050
    %v3059 = vadd.f32 %v2828, %v3055
    %v3060 = vld [vmem:[%s15] sm:$0x1]
    %v3062 = vlaneseq
    %v3063 = vshrl.u32 %v3062, 7
    %v3064 = vsub.s32 0, %v3063
    %v3065 = vrot.slane %v3060, %v3064
    %v3067 = vadd.f32 %v3058, %v3065
    %v3068 = vadd.f32 %v3059, %v3065
    %s3069 = scalar_lea.vmem %s16, 1
    %v3070 = vld [vmem:[%s3069] sm:$0x1]
    %s3071 = scalar_lea.vmem %s17, 1
    %v3072 = vld [vmem:[%s3071] sm:$0x1]
    %v3073 = vsel %vm143, %v3067, 0.0
    %3074 = vadd.xlane.f32.xlu0 %v3073
    %v3075 = vpop.xlane.xlu0 %3074
    %v3076 = vsel %vm143, %v3068, 0.0
    %3077 = vadd.xlane.f32.xlu0 %v3076
    %v3078 = vpop.xlane.xlu0 %3077
    %v3079 = vmul.f32 %v3075, %v150
    %v3080 = vmul.f32 %v3078, %v150
    %v3081 = vsub.f32 %v3067, %v3079
    %v3082 = vsub.f32 %v3068, %v3080
    %v3083 = vmul.f32 %v3081, %v3081
    %v3084 = vmul.f32 %v3082, %v3082
    %v3085 = vsel %vm143, %v3083, 0.0
    %3086 = vadd.xlane.f32.xlu0 %v3085
    %v3087 = vpop.xlane.xlu0 %3086
    %v3088 = vsel %vm143, %v3084, 0.0
    %3089 = vadd.xlane.f32.xlu0 %v3088
    %v3090 = vpop.xlane.xlu0 %3089
    %v3091 = vmul.f32 %v3087, %v150
    %v3092 = vmul.f32 %v3090, %v150
    %v3093 = vadd.f32 %v3091, 1e-05
    %v3094 = vadd.f32 %v3092, 1e-05
    %v3095 = vrsqrt.pop %v3093
    %v3096 = vrsqrt.pop %v3094
    %v3097 = vmul.f32 %v3081, %v3095
    %v3098 = vmul.f32 %v3082, %v3096
    %v3100 = vlaneseq
    %v3101 = vshrl.u32 %v3100, 7
    %v3102 = vsub.s32 0, %v3101
    %v3103 = vrot.slane %v3070, %v3102
    %v3105 = vmul.f32 %v3097, %v3103
    %v3106 = vmul.f32 %v3098, %v3103
    %v3108 = vlaneseq
    %v3109 = vshrl.u32 %v3108, 7
    %v3110 = vsub.s32 0, %v3109
    %v3111 = vrot.slane %v3072, %v3110
    %v3113 = vadd.f32 %v3105, %v3111
    %v3114 = vadd.f32 %v3106, %v3111
    %s3115 = scalar_lea.vmem %s4, 32
    %v3116 = vld [vmem:[%s3115] sm:$0xff]
    %v3117 = vld [vmem:[%s3115 + $0x8] sm:$0xff]
    %v3118 = vld [vmem:[%s3115 + $0x10] sm:$0xff]
    %v3119 = vld [vmem:[%s3115 + $0x18] sm:$0xff]
    %s3120 = scalar_lea.vmem %s5, 1
    %v3121 = vld [vmem:[%s3120] sm:$0x1]
    %v3123 = vlaneseq
    %v3124 = vshrl.u32 %v3123, 7
    %v3125 = vsub.s32 0, %v3124
    %v3126 = vrot.slane %v3121, %v3125
    %v3129 = vsel %vm143, %v3113, 0
    %v3132 = vsel %vm143, %v3114, 0
    %3134 = vmatprep.subr.mxu0 0.0
    %3135 = vmatpush1.msra.mxu0 %v3116
    %3136 = vmatprep.subr.mxu0 0.0
    %3137 = vmatpush1.msra.mxu0 %v3117
    %3138 = vmatprep.subr.mxu0 0.0
    %3139 = vmatpush1.msra.mxu0 %v3118
    %3140 = vmatprep.subr.mxu0 0.0
    %3141 = vmatpush1.msra.mxu0 %v3119
    %3142 = vmatprep.subr.mxu0 0.0
    %3143 = vmatpush1.msra.mxu0 0.0
    %3144 = vmatprep.subr.mxu0 0.0
    %3145 = vmatpush1.msra.mxu0 0.0
    %3146 = vmatprep.subr.mxu0 0.0
    %3147 = vmatpush1.msra.mxu0 0.0
    %3148 = vmatprep.subr.mxu0 0.0
    %3149 = vmatpush1.msra.mxu0 0.0
    %3150 = vmatprep.subr.mxu0 0.0
    %3151 = vmatpush1.msra.mxu0 0.0
    %3152 = vmatprep.subr.mxu0 0.0
    %3153 = vmatpush1.msra.mxu0 0.0
    %3154 = vmatprep.subr.mxu0 0.0
    %3155 = vmatpush1.msra.mxu0 0.0
    %3156 = vmatprep.subr.mxu0 0.0
    %3157 = vmatpush1.msra.mxu0 0.0
    %3158 = vmatprep.subr.mxu0 0.0
    %3159 = vmatpush1.msra.mxu0 0.0
    %3160 = vmatprep.subr.mxu0 0.0
    %3161 = vmatpush1.msra.mxu0 0.0
    %3162 = vmatprep.subr.mxu0 0.0
    %3163 = vmatpush1.msra.mxu0 0.0
    %3164 = vmatprep.subr.mxu0 0.0
    %3165 = vmatpush1.msra.mxu0 0.0
    %3166 = vmatprep.subr.mxu0 0.0
    %3167 = vmatpush1.msra.mxu0 0.0
    %3168 = vmatprep.subr.mxu0 0.0
    %3169 = vmatpush1.msra.mxu0 0.0
    %3170 = vmatprep.subr.mxu0 0.0
    %3171 = vmatpush1.msra.mxu0 0.0
    %3172 = vmatprep.subr.mxu0 0.0
    %3173 = vmatpush1.msra.mxu0 0.0
    %3174 = vmatprep.subr.mxu0 0.0
    %3175 = vmatpush1.msra.mxu0 0.0
    %3176 = vmatprep.subr.mxu0 0.0
    %3177 = vmatpush1.msra.mxu0 0.0
    %3178 = vmatprep.subr.mxu0 0.0
    %3179 = vmatpush1.msra.mxu0 0.0
    %3180 = vmatprep.subr.mxu0 0.0
    %3181 = vmatpush1.msra.mxu0 0.0
    %3182 = vmatprep.subr.mxu0 0.0
    %3183 = vmatpush1.msra.mxu0 0.0
    %3184 = vmatprep.subr.mxu0 0.0
    %3185 = vmatpush1.msra.mxu0 0.0
    %3186 = vmatprep.subr.mxu0 0.0
    %3187 = vmatpush1.msra.mxu0 0.0
    %3188 = vmatprep.subr.mxu0 0.0
    %3189 = vmatpush1.msra.mxu0 0.0
    %3190 = vmatprep.subr.mxu0 0.0
    %3191 = vmatpush1.msra.mxu0 0.0
    %3192 = vmatprep.subr.mxu0 0.0
    %3193 = vmatpush1.msra.mxu0 0.0
    %3194 = vmatprep.subr.mxu0 0.0
    %3195 = vmatpush1.msra.mxu0 0.0
    %3196 = vmatprep.subr.mxu0 0.0
    %3197 = vmatpush1.msra.mxu0 0.0
    %3198 = vmatprep.mubr.f32.mxu0 0.0
    %3199 = vmatmul.mubr.f32.gmra.mrb[0].mxu0 %v3129
    %v3200 = vpop.f32.mrb[0].mxu0
    %v3201 = vadd.f32 %v3126, %v3200
    %v3202 = vpop.f32.mrb[0].mxu0
    %3203 = vmatprep.mubr.f32.mxu0 0.0
    %3204 = vmatmul.mubr.f32.gmra.mrb[0].mxu0 %v3132
    %v3205 = vpop.f32.mrb[0].mxu0
    %v3206 = vadd.f32 %v3126, %v3205
    %v3207 = vpop.f32.mrb[0].mxu0
    %3208 = vdwg.mxu0
    %s3209 = scalar_lea.vmem %s6, 32
    %v3210 = vld [vmem:[%s3209] sm:$0xff]
    %v3211 = vld [vmem:[%s3209 + $0x8] sm:$0xff]
    %v3212 = vld [vmem:[%s3209 + $0x10] sm:$0xff]
    %v3213 = vld [vmem:[%s3209 + $0x18] sm:$0xff]
    %s3214 = scalar_lea.vmem %s7, 1
    %v3215 = vld [vmem:[%s3214] sm:$0x1]
    %3218 = vrot.lane.b32.xlu0 %v3201, 96
    %v3219 = vpop.permute.xlu0 %3218
    %3220 = vrot.lane.b32.xlu0 %v3206, 96
    %v3221 = vpop.permute.xlu0 %3220
    %v3222 = vsel %vm290, %v3201, 0
    %v3224 = vsel %vm290, %v3206, 0
    %v3226 = vsel %vm290, %v3219, 0
    %v3228 = vsel %vm290, %v3221, 0
    %3230 = vmatprep.subr.mxu0 0.0
    %3231 = vmatpush1.xpose.msra.mxu0 %v3226
    %3232 = vmatprep.subr.mxu0 0.0
    %3233 = vmatpush1.xpose.msra.mxu0 %v3228
    %3234 = vmatprep.subr.mxu0 0.0
    %3235 = vmatpush1.xpose.msra.mxu0 0.0
    %3236 = vmatprep.subr.mxu0 0.0
    %3237 = vmatpush1.xpose.msra.mxu0 0.0
    %3238 = vmatprep.subr.mxu0 0.0
    %3239 = vmatpush1.xpose.msra.mxu0 0.0
    %3240 = vmatprep.subr.mxu0 0.0
    %3241 = vmatpush1.xpose.msra.mxu0 0.0
    %3242 = vmatprep.subr.mxu0 0.0
    %3243 = vmatpush1.xpose.msra.mxu0 0.0
    %3244 = vmatprep.subr.mxu0 0.0
    %3245 = vmatpush1.xpose.msra.mxu0 0.0
    %3246 = vmatprep.subr.mxu0 0.0
    %3247 = vmatpush1.xpose.msra.mxu0 0.0
    %3248 = vmatprep.subr.mxu0 0.0
    %3249 = vmatpush1.xpose.msra.mxu0 0.0
    %3250 = vmatprep.subr.mxu0 0.0
    %3251 = vmatpush1.xpose.msra.mxu0 0.0
    %3252 = vmatprep.subr.mxu0 0.0
    %3253 = vmatpush1.xpose.msra.mxu0 0.0
    %3254 = vmatprep.subr.mxu0 0.0
    %3255 = vmatpush1.xpose.msra.mxu0 0.0
    %3256 = vmatprep.subr.mxu0 0.0
    %3257 = vmatpush1.xpose.msra.mxu0 0.0
    %3258 = vmatprep.subr.mxu0 0.0
    %3259 = vmatpush1.xpose.msra.mxu0 0.0
    %3260 = vmatprep.subr.mxu0 0.0
    %3261 = vmatpush1.xpose.msra.mxu0 0.0
    %3262 = vmatprep.subr.mxu0 0.0
    %3263 = vmatpush1.xpose.msra.mxu0 0.0
    %3264 = vmatprep.subr.mxu0 0.0
    %3265 = vmatpush1.xpose.msra.mxu0 0.0
    %3266 = vmatprep.subr.mxu0 0.0
    %3267 = vmatpush1.xpose.msra.mxu0 0.0
    %3268 = vmatprep.subr.mxu0 0.0
    %3269 = vmatpush1.xpose.msra.mxu0 0.0
    %3270 = vmatprep.subr.mxu0 0.0
    %3271 = vmatpush1.xpose.msra.mxu0 0.0
    %3272 = vmatprep.subr.mxu0 0.0
    %3273 = vmatpush1.xpose.msra.mxu0 0.0
    %3274 = vmatprep.subr.mxu0 0.0
    %3275 = vmatpush1.xpose.msra.mxu0 0.0
    %3276 = vmatprep.subr.mxu0 0.0
    %3277 = vmatpush1.xpose.msra.mxu0 0.0
    %3278 = vmatprep.subr.mxu0 0.0
    %3279 = vmatpush1.xpose.msra.mxu0 0.0
    %3280 = vmatprep.subr.mxu0 0.0
    %3281 = vmatpush1.xpose.msra.mxu0 0.0
    %3282 = vmatprep.subr.mxu0 0.0
    %3283 = vmatpush1.xpose.msra.mxu0 0.0
    %3284 = vmatprep.subr.mxu0 0.0
    %3285 = vmatpush1.xpose.msra.mxu0 0.0
    %3286 = vmatprep.subr.mxu0 0.0
    %3287 = vmatpush1.xpose.msra.mxu0 0.0
    %3288 = vmatprep.subr.mxu0 0.0
    %3289 = vmatpush1.xpose.msra.mxu0 0.0
    %3290 = vmatprep.subr.mxu0 0.0
    %3291 = vmatpush1.xpose.msra.mxu0 0.0
    %3292 = vmatprep.subr.mxu0 0.0
    %3293 = vmatpush1.xpose.msra.mxu0 0.0
    %3294 = vmatprep.mubr.f32.mxu0 0.0
    %3295 = vmatmul.mubr.f32.gmra.mrb[0].mxu0 %v3222
    %v3296 = vpop.f32.mrb[0].mxu0
    %v3297 = vadd.f32 0.0, %v3296
    %v3298 = vpop.f32.mrb[0].mxu0
    %3299 = vmatprep.mubr.f32.mxu0 0.0
    %3300 = vmatmul.mubr.f32.gmra.mrb[0].mxu0 %v3224
    %v3301 = vpop.f32.mrb[0].mxu0
    %v3302 = vadd.f32 0.0, %v3301
    %v3303 = vpop.f32.mrb[0].mxu0
    %3304 = vdwg.mxu0
    %v3305 = vmul.f32 %v3297, 0.35355338
    %v3306 = vmul.f32 %v3302, 0.35355338
    %v3307 = vadd.f32 %v3305, %v137
    %v3308 = vadd.f32 %v3306, %v138
    %v3309 = vsel %vm378, %v3307, -inf
    %3310 = vmax.xlane.f32.xlu0 %v3309
    %v3311 = vpop.xlane.xlu0 %3310
    %v3312 = vsel %vm378, %v3308, -inf
    %3313 = vmax.xlane.f32.xlu0 %v3312
    %v3314 = vpop.xlane.xlu0 %3313
    %v3315 = vsub.f32 %v3307, %v3311
    %v3316 = vsub.f32 %v3308, %v3314
    %v3317 = vmul.f32 %v3315, 1.442695
    %v3318 = vpow.pop %v3317
    %v3319 = vmul.f32 %v3316, 1.442695
    %v3320 = vpow.pop %v3319
    %v3321 = vsel %vm378, %v3318, 0.0
    %3322 = vadd.xlane.f32.xlu0 %v3321
    %v3323 = vpop.xlane.xlu0 %3322
    %v3324 = vsel %vm378, %v3320, 0.0
    %3325 = vadd.xlane.f32.xlu0 %v3324
    %v3326 = vpop.xlane.xlu0 %3325
    %v3327 = vrcp.pop %v3323
    %v3328 = vrcp.pop %v3326
    %v3329 = vmul.f32 %v3318, %v3327
    %v3330 = vmul.f32 %v3320, %v3328
    %3331 = vrot.lane.b32.xlu0 %v3201, 64
    %v3332 = vpop.permute.xlu0 %3331
    %3333 = vrot.lane.b32.xlu0 %v3206, 64
    %v3334 = vpop.permute.xlu0 %3333
    %v3338 = vsel %vm378, %v3329, 0
    %v3341 = vsel %vm378, %v3330, 0
    %3343 = vmatprep.subr.mxu0 0.0
    %3344 = vmatpush1.msra.mxu0 %v3332
    %3345 = vmatprep.subr.mxu0 0.0
    %3346 = vmatpush1.msra.mxu0 %v3334
    %3347 = vmatprep.subr.mxu0 0.0
    %3348 = vmatpush1.msra.mxu0 0.0
    %3349 = vmatprep.subr.mxu0 0.0
    %3350 = vmatpush1.msra.mxu0 0.0
    %3351 = vmatprep.subr.mxu0 0.0
    %3352 = vmatpush1.msra.mxu0 0.0
    %3353 = vmatprep.subr.mxu0 0.0
    %3354 = vmatpush1.msra.mxu0 0.0
    %3355 = vmatprep.subr.mxu0 0.0
    %3356 = vmatpush1.msra.mxu0 0.0
    %3357 = vmatprep.subr.mxu0 0.0
    %3358 = vmatpush1.msra.mxu0 0.0
    %3359 = vmatprep.subr.mxu0 0.0
    %3360 = vmatpush1.msra.mxu0 0.0
    %3361 = vmatprep.subr.mxu0 0.0
    %3362 = vmatpush1.msra.mxu0 0.0
    %3363 = vmatprep.subr.mxu0 0.0
    %3364 = vmatpush1.msra.mxu0 0.0
    %3365 = vmatprep.subr.mxu0 0.0
    %3366 = vmatpush1.msra.mxu0 0.0
    %3367 = vmatprep.subr.mxu0 0.0
    %3368 = vmatpush1.msra.mxu0 0.0
    %3369 = vmatprep.subr.mxu0 0.0
    %3370 = vmatpush1.msra.mxu0 0.0
    %3371 = vmatprep.subr.mxu0 0.0
    %3372 = vmatpush1.msra.mxu0 0.0
    %3373 = vmatprep.subr.mxu0 0.0
    %3374 = vmatpush1.msra.mxu0 0.0
    %3375 = vmatprep.subr.mxu0 0.0
    %3376 = vmatpush1.msra.mxu0 0.0
    %3377 = vmatprep.subr.mxu0 0.0
    %3378 = vmatpush1.msra.mxu0 0.0
    %3379 = vmatprep.subr.mxu0 0.0
    %3380 = vmatpush1.msra.mxu0 0.0
    %3381 = vmatprep.subr.mxu0 0.0
    %3382 = vmatpush1.msra.mxu0 0.0
    %3383 = vmatprep.subr.mxu0 0.0
    %3384 = vmatpush1.msra.mxu0 0.0
    %3385 = vmatprep.subr.mxu0 0.0
    %3386 = vmatpush1.msra.mxu0 0.0
    %3387 = vmatprep.subr.mxu0 0.0
    %3388 = vmatpush1.msra.mxu0 0.0
    %3389 = vmatprep.subr.mxu0 0.0
    %3390 = vmatpush1.msra.mxu0 0.0
    %3391 = vmatprep.subr.mxu0 0.0
    %3392 = vmatpush1.msra.mxu0 0.0
    %3393 = vmatprep.subr.mxu0 0.0
    %3394 = vmatpush1.msra.mxu0 0.0
    %3395 = vmatprep.subr.mxu0 0.0
    %3396 = vmatpush1.msra.mxu0 0.0
    %3397 = vmatprep.subr.mxu0 0.0
    %3398 = vmatpush1.msra.mxu0 0.0
    %3399 = vmatprep.subr.mxu0 0.0
    %3400 = vmatpush1.msra.mxu0 0.0
    %3401 = vmatprep.subr.mxu0 0.0
    %3402 = vmatpush1.msra.mxu0 0.0
    %3403 = vmatprep.subr.mxu0 0.0
    %3404 = vmatpush1.msra.mxu0 0.0
    %3405 = vmatprep.subr.mxu0 0.0
    %3406 = vmatpush1.msra.mxu0 0.0
    %3407 = vmatprep.mubr.f32.mxu0 0.0
    %3408 = vmatmul.mubr.f32.gmra.mrb[0].mxu0 %v3338
    %v3409 = vpop.f32.mrb[0].mxu0
    %v3410 = vadd.f32 0.0, %v3409
    %v3411 = vpop.f32.mrb[0].mxu0
    %3412 = vmatprep.mubr.f32.mxu0 0.0
    %3413 = vmatmul.mubr.f32.gmra.mrb[0].mxu0 %v3341
    %v3414 = vpop.f32.mrb[0].mxu0
    %v3415 = vadd.f32 0.0, %v3414
    %v3416 = vpop.f32.mrb[0].mxu0
    %3417 = vdwg.mxu0
    %3418 = vrot.lane.b32.xlu0 %v3201, 120
    %v3419 = vpop.permute.xlu0 %3418
    %3420 = vrot.lane.b32.xlu0 %v3206, 120
    %v3421 = vpop.permute.xlu0 %3420
    %3422 = vrot.lane.b32.xlu0 %v3201, 88
    %v3423 = vpop.permute.xlu0 %3422
    %3424 = vrot.lane.b32.xlu0 %v3206, 88
    %v3425 = vpop.permute.xlu0 %3424
    %v3426 = vsel %vm290, %v3419, 0
    %v3428 = vsel %vm290, %v3421, 0
    %v3430 = vsel %vm290, %v3423, 0
    %v3432 = vsel %vm290, %v3425, 0
    %3434 = vmatprep.subr.mxu0 0.0
    %3435 = vmatpush1.xpose.msra.mxu0 %v3430
    %3436 = vmatprep.subr.mxu0 0.0
    %3437 = vmatpush1.xpose.msra.mxu0 %v3432
    %3438 = vmatprep.subr.mxu0 0.0
    %3439 = vmatpush1.xpose.msra.mxu0 0.0
    %3440 = vmatprep.subr.mxu0 0.0
    %3441 = vmatpush1.xpose.msra.mxu0 0.0
    %3442 = vmatprep.subr.mxu0 0.0
    %3443 = vmatpush1.xpose.msra.mxu0 0.0
    %3444 = vmatprep.subr.mxu0 0.0
    %3445 = vmatpush1.xpose.msra.mxu0 0.0
    %3446 = vmatprep.subr.mxu0 0.0
    %3447 = vmatpush1.xpose.msra.mxu0 0.0
    %3448 = vmatprep.subr.mxu0 0.0
    %3449 = vmatpush1.xpose.msra.mxu0 0.0
    %3450 = vmatprep.subr.mxu0 0.0
    %3451 = vmatpush1.xpose.msra.mxu0 0.0
    %3452 = vmatprep.subr.mxu0 0.0
    %3453 = vmatpush1.xpose.msra.mxu0 0.0
    %3454 = vmatprep.subr.mxu0 0.0
    %3455 = vmatpush1.xpose.msra.mxu0 0.0
    %3456 = vmatprep.subr.mxu0 0.0
    %3457 = vmatpush1.xpose.msra.mxu0 0.0
    %3458 = vmatprep.subr.mxu0 0.0
    %3459 = vmatpush1.xpose.msra.mxu0 0.0
    %3460 = vmatprep.subr.mxu0 0.0
    %3461 = vmatpush1.xpose.msra.mxu0 0.0
    %3462 = vmatprep.subr.mxu0 0.0
    %3463 = vmatpush1.xpose.msra.mxu0 0.0
    %3464 = vmatprep.subr.mxu0 0.0
    %3465 = vmatpush1.xpose.msra.mxu0 0.0
    %3466 = vmatprep.subr.mxu0 0.0
    %3467 = vmatpush1.xpose.msra.mxu0 0.0
    %3468 = vmatprep.subr.mxu0 0.0
    %3469 = vmatpush1.xpose.msra.mxu0 0.0
    %3470 = vmatprep.subr.mxu0 0.0
    %3471 = vmatpush1.xpose.msra.mxu0 0.0
    %3472 = vmatprep.subr.mxu0 0.0
    %3473 = vmatpush1.xpose.msra.mxu0 0.0
    %3474 = vmatprep.subr.mxu0 0.0
    %3475 = vmatpush1.xpose.msra.mxu0 0.0
    %3476 = vmatprep.subr.mxu0 0.0
    %3477 = vmatpush1.xpose.msra.mxu0 0.0
    %3478 = vmatprep.subr.mxu0 0.0
    %3479 = vmatpush1.xpose.msra.mxu0 0.0
    %3480 = vmatprep.subr.mxu0 0.0
    %3481 = vmatpush1.xpose.msra.mxu0 0.0
    %3482 = vmatprep.subr.mxu0 0.0
    %3483 = vmatpush1.xpose.msra.mxu0 0.0
    %3484 = vmatprep.subr.mxu0 0.0
    %3485 = vmatpush1.xpose.msra.mxu0 0.0
    %3486 = vmatprep.subr.mxu0 0.0
    %3487 = vmatpush1.xpose.msra.mxu0 0.0
    %3488 = vmatprep.subr.mxu0 0.0
    %3489 = vmatpush1.xpose.msra.mxu0 0.0
    %3490 = vmatprep.subr.mxu0 0.0
    %3491 = vmatpush1.xpose.msra.mxu0 0.0
    %3492 = vmatprep.subr.mxu0 0.0
    %3493 = vmatpush1.xpose.msra.mxu0 0.0
    %3494 = vmatprep.subr.mxu0 0.0
    %3495 = vmatpush1.xpose.msra.mxu0 0.0
    %3496 = vmatprep.subr.mxu0 0.0
    %3497 = vmatpush1.xpose.msra.mxu0 0.0
    %3498 = vmatprep.mubr.f32.mxu0 0.0
    %3499 = vmatmul.mubr.f32.gmra.mrb[0].mxu0 %v3426
    %v3500 = vpop.f32.mrb[0].mxu0
    %v3501 = vadd.f32 0.0, %v3500
    %v3502 = vpop.f32.mrb[0].mxu0
    %3503 = vmatprep.mubr.f32.mxu0 0.0
    %3504 = vmatmul.mubr.f32.gmra.mrb[0].mxu0 %v3428
    %v3505 = vpop.f32.mrb[0].mxu0
    %v3506 = vadd.f32 0.0, %v3505
    %v3507 = vpop.f32.mrb[0].mxu0
    %3508 = vdwg.mxu0
    %v3509 = vmul.f32 %v3501, 0.35355338
    %v3510 = vmul.f32 %v3506, 0.35355338
    %v3511 = vadd.f32 %v3509, %v137
    %v3512 = vadd.f32 %v3510, %v138
    %v3513 = vsel %vm378, %v3511, -inf
    %3514 = vmax.xlane.f32.xlu0 %v3513
    %v3515 = vpop.xlane.xlu0 %3514
    %v3516 = vsel %vm378, %v3512, -inf
    %3517 = vmax.xlane.f32.xlu0 %v3516
    %v3518 = vpop.xlane.xlu0 %3517
    %v3519 = vsub.f32 %v3511, %v3515
    %v3520 = vsub.f32 %v3512, %v3518
    %v3521 = vmul.f32 %v3519, 1.442695
    %v3522 = vpow.pop %v3521
    %v3523 = vmul.f32 %v3520, 1.442695
    %v3524 = vpow.pop %v3523
    %v3525 = vsel %vm378, %v3522, 0.0
    %3526 = vadd.xlane.f32.xlu0 %v3525
    %v3527 = vpop.xlane.xlu0 %3526
    %v3528 = vsel %vm378, %v3524, 0.0
    %3529 = vadd.xlane.f32.xlu0 %v3528
    %v3530 = vpop.xlane.xlu0 %3529
    %v3531 = vrcp.pop %v3527
    %v3532 = vrcp.pop %v3530
    %v3533 = vmul.f32 %v3522, %v3531
    %v3534 = vmul.f32 %v3524, %v3532
    %3535 = vrot.lane.b32.xlu0 %v3201, 56
    %v3536 = vpop.permute.xlu0 %3535
    %3537 = vrot.lane.b32.xlu0 %v3206, 56
    %v3538 = vpop.permute.xlu0 %3537
    %v3542 = vsel %vm378, %v3533, 0
    %v3545 = vsel %vm378, %v3534, 0
    %3547 = vmatprep.subr.mxu0 0.0
    %3548 = vmatpush1.msra.mxu0 %v3536
    %3549 = vmatprep.subr.mxu0 0.0
    %3550 = vmatpush1.msra.mxu0 %v3538
    %3551 = vmatprep.subr.mxu0 0.0
    %3552 = vmatpush1.msra.mxu0 0.0
    %3553 = vmatprep.subr.mxu0 0.0
    %3554 = vmatpush1.msra.mxu0 0.0
    %3555 = vmatprep.subr.mxu0 0.0
    %3556 = vmatpush1.msra.mxu0 0.0
    %3557 = vmatprep.subr.mxu0 0.0
    %3558 = vmatpush1.msra.mxu0 0.0
    %3559 = vmatprep.subr.mxu0 0.0
    %3560 = vmatpush1.msra.mxu0 0.0
    %3561 = vmatprep.subr.mxu0 0.0
    %3562 = vmatpush1.msra.mxu0 0.0
    %3563 = vmatprep.subr.mxu0 0.0
    %3564 = vmatpush1.msra.mxu0 0.0
    %3565 = vmatprep.subr.mxu0 0.0
    %3566 = vmatpush1.msra.mxu0 0.0
    %3567 = vmatprep.subr.mxu0 0.0
    %3568 = vmatpush1.msra.mxu0 0.0
    %3569 = vmatprep.subr.mxu0 0.0
    %3570 = vmatpush1.msra.mxu0 0.0
    %3571 = vmatprep.subr.mxu0 0.0
    %3572 = vmatpush1.msra.mxu0 0.0
    %3573 = vmatprep.subr.mxu0 0.0
    %3574 = vmatpush1.msra.mxu0 0.0
    %3575 = vmatprep.subr.mxu0 0.0
    %3576 = vmatpush1.msra.mxu0 0.0
    %3577 = vmatprep.subr.mxu0 0.0
    %3578 = vmatpush1.msra.mxu0 0.0
    %3579 = vmatprep.subr.mxu0 0.0
    %3580 = vmatpush1.msra.mxu0 0.0
    %3581 = vmatprep.subr.mxu0 0.0
    %3582 = vmatpush1.msra.mxu0 0.0
    %3583 = vmatprep.subr.mxu0 0.0
    %3584 = vmatpush1.msra.mxu0 0.0
    %3585 = vmatprep.subr.mxu0 0.0
    %3586 = vmatpush1.msra.mxu0 0.0
    %3587 = vmatprep.subr.mxu0 0.0
    %3588 = vmatpush1.msra.mxu0 0.0
    %3589 = vmatprep.subr.mxu0 0.0
    %3590 = vmatpush1.msra.mxu0 0.0
    %3591 = vmatprep.subr.mxu0 0.0
    %3592 = vmatpush1.msra.mxu0 0.0
    %3593 = vmatprep.subr.mxu0 0.0
    %3594 = vmatpush1.msra.mxu0 0.0
    %3595 = vmatprep.subr.mxu0 0.0
    %3596 = vmatpush1.msra.mxu0 0.0
    %3597 = vmatprep.subr.mxu0 0.0
    %3598 = vmatpush1.msra.mxu0 0.0
    %3599 = vmatprep.subr.mxu0 0.0
    %3600 = vmatpush1.msra.mxu0 0.0
    %3601 = vmatprep.subr.mxu0 0.0
    %3602 = vmatpush1.msra.mxu0 0.0
    %3603 = vmatprep.subr.mxu0 0.0
    %3604 = vmatpush1.msra.mxu0 0.0
    %3605 = vmatprep.subr.mxu0 0.0
    %3606 = vmatpush1.msra.mxu0 0.0
    %3607 = vmatprep.subr.mxu0 0.0
    %3608 = vmatpush1.msra.mxu0 0.0
    %3609 = vmatprep.subr.mxu0 0.0
    %3610 = vmatpush1.msra.mxu0 0.0
    %3611 = vmatprep.mubr.f32.mxu0 0.0
    %3612 = vmatmul.mubr.f32.gmra.mrb[0].mxu0 %v3542
    %v3613 = vpop.f32.mrb[0].mxu0
    %v3614 = vadd.f32 0.0, %v3613
    %v3615 = vpop.f32.mrb[0].mxu0
    %3616 = vmatprep.mubr.f32.mxu0 0.0
    %3617 = vmatmul.mubr.f32.gmra.mrb[0].mxu0 %v3545
    %v3618 = vpop.f32.mrb[0].mxu0
    %v3619 = vadd.f32 0.0, %v3618
    %v3620 = vpop.f32.mrb[0].mxu0
    %3621 = vdwg.mxu0
    %v3623 = vsel %vm290, %v3614, 0
    %v3626 = vsel %vm290, %v3619, 0
    %3628 = vmatprep.subr.mxu0 0.0
    %3629 = vmatpush1.msra.mxu0 %v3211
    %3630 = vmatprep.subr.mxu0 0.0
    %3631 = vmatpush1.msra.mxu0 0.0
    %3632 = vmatprep.subr.mxu0 0.0
    %3633 = vmatpush1.msra.mxu0 0.0
    %3634 = vmatprep.subr.mxu0 0.0
    %3635 = vmatpush1.msra.mxu0 0.0
    %3636 = vmatprep.subr.mxu0 0.0
    %3637 = vmatpush1.msra.mxu0 0.0
    %3638 = vmatprep.subr.mxu0 0.0
    %3639 = vmatpush1.msra.mxu0 0.0
    %3640 = vmatprep.subr.mxu0 0.0
    %3641 = vmatpush1.msra.mxu0 0.0
    %3642 = vmatprep.subr.mxu0 0.0
    %3643 = vmatpush1.msra.mxu0 0.0
    %3644 = vmatprep.subr.mxu0 0.0
    %3645 = vmatpush1.msra.mxu0 0.0
    %3646 = vmatprep.subr.mxu0 0.0
    %3647 = vmatpush1.msra.mxu0 0.0
    %3648 = vmatprep.subr.mxu0 0.0
    %3649 = vmatpush1.msra.mxu0 0.0
    %3650 = vmatprep.subr.mxu0 0.0
    %3651 = vmatpush1.msra.mxu0 0.0
    %3652 = vmatprep.subr.mxu0 0.0
    %3653 = vmatpush1.msra.mxu0 0.0
    %3654 = vmatprep.subr.mxu0 0.0
    %3655 = vmatpush1.msra.mxu0 0.0
    %3656 = vmatprep.subr.mxu0 0.0
    %3657 = vmatpush1.msra.mxu0 0.0
    %3658 = vmatprep.subr.mxu0 0.0
    %3659 = vmatpush1.msra.mxu0 0.0
    %3660 = vmatprep.subr.mxu0 0.0
    %3661 = vmatpush1.msra.mxu0 0.0
    %3662 = vmatprep.subr.mxu0 0.0
    %3663 = vmatpush1.msra.mxu0 0.0
    %3664 = vmatprep.subr.mxu0 0.0
    %3665 = vmatpush1.msra.mxu0 0.0
    %3666 = vmatprep.subr.mxu0 0.0
    %3667 = vmatpush1.msra.mxu0 0.0
    %3668 = vmatprep.subr.mxu0 0.0
    %3669 = vmatpush1.msra.mxu0 0.0
    %3670 = vmatprep.subr.mxu0 0.0
    %3671 = vmatpush1.msra.mxu0 0.0
    %3672 = vmatprep.subr.mxu0 0.0
    %3673 = vmatpush1.msra.mxu0 0.0
    %3674 = vmatprep.subr.mxu0 0.0
    %3675 = vmatpush1.msra.mxu0 0.0
    %3676 = vmatprep.subr.mxu0 0.0
    %3677 = vmatpush1.msra.mxu0 0.0
    %3678 = vmatprep.subr.mxu0 0.0
    %3679 = vmatpush1.msra.mxu0 0.0
    %3680 = vmatprep.subr.mxu0 0.0
    %3681 = vmatpush1.msra.mxu0 0.0
    %3682 = vmatprep.subr.mxu0 0.0
    %3683 = vmatpush1.msra.mxu0 0.0
    %3684 = vmatprep.subr.mxu0 0.0
    %3685 = vmatpush1.msra.mxu0 0.0
    %3686 = vmatprep.subr.mxu0 0.0
    %3687 = vmatpush1.msra.mxu0 0.0
    %3688 = vmatprep.subr.mxu0 0.0
    %3689 = vmatpush1.msra.mxu0 0.0
    %3690 = vmatprep.subr.mxu0 0.0
    %3691 = vmatpush1.msra.mxu0 0.0
    %3692 = vmatprep.mubr.f32.mxu0 0.0
    %3693 = vmatmul.mubr.f32.gmra.mrb[0].mxu0 %v3623
    %v3694 = vpop.f32.mrb[0].mxu0
    %v3695 = vadd.f32 0.0, %v3694
    %v3696 = vpop.f32.mrb[0].mxu0
    %3697 = vmatprep.mubr.f32.mxu0 0.0
    %3698 = vmatmul.mubr.f32.gmra.mrb[0].mxu0 %v3626
    %v3699 = vpop.f32.mrb[0].mxu0
    %v3700 = vadd.f32 0.0, %v3699
    %v3701 = vpop.f32.mrb[0].mxu0
    %3702 = vdwg.mxu0
    %v3704 = vsel %vm290, %v3410, 0
    %v3707 = vsel %vm290, %v3415, 0
    %3709 = vmatprep.subr.mxu0 0.0
    %3710 = vmatpush1.msra.mxu0 %v3210
    %3711 = vmatprep.subr.mxu0 0.0
    %3712 = vmatpush1.msra.mxu0 0.0
    %3713 = vmatprep.subr.mxu0 0.0
    %3714 = vmatpush1.msra.mxu0 0.0
    %3715 = vmatprep.subr.mxu0 0.0
    %3716 = vmatpush1.msra.mxu0 0.0
    %3717 = vmatprep.subr.mxu0 0.0
    %3718 = vmatpush1.msra.mxu0 0.0
    %3719 = vmatprep.subr.mxu0 0.0
    %3720 = vmatpush1.msra.mxu0 0.0
    %3721 = vmatprep.subr.mxu0 0.0
    %3722 = vmatpush1.msra.mxu0 0.0
    %3723 = vmatprep.subr.mxu0 0.0
    %3724 = vmatpush1.msra.mxu0 0.0
    %3725 = vmatprep.subr.mxu0 0.0
    %3726 = vmatpush1.msra.mxu0 0.0
    %3727 = vmatprep.subr.mxu0 0.0
    %3728 = vmatpush1.msra.mxu0 0.0
    %3729 = vmatprep.subr.mxu0 0.0
    %3730 = vmatpush1.msra.mxu0 0.0
    %3731 = vmatprep.subr.mxu0 0.0
    %3732 = vmatpush1.msra.mxu0 0.0
    %3733 = vmatprep.subr.mxu0 0.0
    %3734 = vmatpush1.msra.mxu0 0.0
    %3735 = vmatprep.subr.mxu0 0.0
    %3736 = vmatpush1.msra.mxu0 0.0
    %3737 = vmatprep.subr.mxu0 0.0
    %3738 = vmatpush1.msra.mxu0 0.0
    %3739 = vmatprep.subr.mxu0 0.0
    %3740 = vmatpush1.msra.mxu0 0.0
    %3741 = vmatprep.subr.mxu0 0.0
    %3742 = vmatpush1.msra.mxu0 0.0
    %3743 = vmatprep.subr.mxu0 0.0
    %3744 = vmatpush1.msra.mxu0 0.0
    %3745 = vmatprep.subr.mxu0 0.0
    %3746 = vmatpush1.msra.mxu0 0.0
    %3747 = vmatprep.subr.mxu0 0.0
    %3748 = vmatpush1.msra.mxu0 0.0
    %3749 = vmatprep.subr.mxu0 0.0
    %3750 = vmatpush1.msra.mxu0 0.0
    %3751 = vmatprep.subr.mxu0 0.0
    %3752 = vmatpush1.msra.mxu0 0.0
    %3753 = vmatprep.subr.mxu0 0.0
    %3754 = vmatpush1.msra.mxu0 0.0
    %3755 = vmatprep.subr.mxu0 0.0
    %3756 = vmatpush1.msra.mxu0 0.0
    %3757 = vmatprep.subr.mxu0 0.0
    %3758 = vmatpush1.msra.mxu0 0.0
    %3759 = vmatprep.subr.mxu0 0.0
    %3760 = vmatpush1.msra.mxu0 0.0
    %3761 = vmatprep.subr.mxu0 0.0
    %3762 = vmatpush1.msra.mxu0 0.0
    %3763 = vmatprep.subr.mxu0 0.0
    %3764 = vmatpush1.msra.mxu0 0.0
    %3765 = vmatprep.subr.mxu0 0.0
    %3766 = vmatpush1.msra.mxu0 0.0
    %3767 = vmatprep.subr.mxu0 0.0
    %3768 = vmatpush1.msra.mxu0 0.0
    %3769 = vmatprep.subr.mxu0 0.0
    %3770 = vmatpush1.msra.mxu0 0.0
    %3771 = vmatprep.subr.mxu0 0.0
    %3772 = vmatpush1.msra.mxu0 0.0
    %3773 = vmatprep.mubr.f32.mxu0 0.0
    %3774 = vmatmul.mubr.f32.gmra.mrb[0].mxu0 %v3704
    %v3775 = vpop.f32.mrb[0].mxu0
    %v3776 = vadd.f32 %v3695, %v3775
    %v3777 = vpop.f32.mrb[0].mxu0
    %3778 = vmatprep.mubr.f32.mxu0 0.0
    %3779 = vmatmul.mubr.f32.gmra.mrb[0].mxu0 %v3707
    %v3780 = vpop.f32.mrb[0].mxu0
    %v3781 = vadd.f32 %v3700, %v3780
    %v3782 = vpop.f32.mrb[0].mxu0
    %3783 = vdwg.mxu0
    %3784 = vrot.lane.b32.xlu0 %v3201, 112
    %v3785 = vpop.permute.xlu0 %3784
    %3786 = vrot.lane.b32.xlu0 %v3206, 112
    %v3787 = vpop.permute.xlu0 %3786
    %3788 = vrot.lane.b32.xlu0 %v3201, 80
    %v3789 = vpop.permute.xlu0 %3788
    %3790 = vrot.lane.b32.xlu0 %v3206, 80
    %v3791 = vpop.permute.xlu0 %3790
    %v3792 = vsel %vm290, %v3785, 0
    %v3794 = vsel %vm290, %v3787, 0
    %v3796 = vsel %vm290, %v3789, 0
    %v3798 = vsel %vm290, %v3791, 0
    %3800 = vmatprep.subr.mxu0 0.0
    %3801 = vmatpush1.xpose.msra.mxu0 %v3796
    %3802 = vmatprep.subr.mxu0 0.0
    %3803 = vmatpush1.xpose.msra.mxu0 %v3798
    %3804 = vmatprep.subr.mxu0 0.0
    %3805 = vmatpush1.xpose.msra.mxu0 0.0
    %3806 = vmatprep.subr.mxu0 0.0
    %3807 = vmatpush1.xpose.msra.mxu0 0.0
    %3808 = vmatprep.subr.mxu0 0.0
    %3809 = vmatpush1.xpose.msra.mxu0 0.0
    %3810 = vmatprep.subr.mxu0 0.0
    %3811 = vmatpush1.xpose.msra.mxu0 0.0
    %3812 = vmatprep.subr.mxu0 0.0
    %3813 = vmatpush1.xpose.msra.mxu0 0.0
    %3814 = vmatprep.subr.mxu0 0.0
    %3815 = vmatpush1.xpose.msra.mxu0 0.0
    %3816 = vmatprep.subr.mxu0 0.0
    %3817 = vmatpush1.xpose.msra.mxu0 0.0
    %3818 = vmatprep.subr.mxu0 0.0
    %3819 = vmatpush1.xpose.msra.mxu0 0.0
    %3820 = vmatprep.subr.mxu0 0.0
    %3821 = vmatpush1.xpose.msra.mxu0 0.0
    %3822 = vmatprep.subr.mxu0 0.0
    %3823 = vmatpush1.xpose.msra.mxu0 0.0
    %3824 = vmatprep.subr.mxu0 0.0
    %3825 = vmatpush1.xpose.msra.mxu0 0.0
    %3826 = vmatprep.subr.mxu0 0.0
    %3827 = vmatpush1.xpose.msra.mxu0 0.0
    %3828 = vmatprep.subr.mxu0 0.0
    %3829 = vmatpush1.xpose.msra.mxu0 0.0
    %3830 = vmatprep.subr.mxu0 0.0
    %3831 = vmatpush1.xpose.msra.mxu0 0.0
    %3832 = vmatprep.subr.mxu0 0.0
    %3833 = vmatpush1.xpose.msra.mxu0 0.0
    %3834 = vmatprep.subr.mxu0 0.0
    %3835 = vmatpush1.xpose.msra.mxu0 0.0
    %3836 = vmatprep.subr.mxu0 0.0
    %3837 = vmatpush1.xpose.msra.mxu0 0.0
    %3838 = vmatprep.subr.mxu0 0.0
    %3839 = vmatpush1.xpose.msra.mxu0 0.0
    %3840 = vmatprep.subr.mxu0 0.0
    %3841 = vmatpush1.xpose.msra.mxu0 0.0
    %3842 = vmatprep.subr.mxu0 0.0
    %3843 = vmatpush1.xpose.msra.mxu0 0.0
    %3844 = vmatprep.subr.mxu0 0.0
    %3845 = vmatpush1.xpose.msra.mxu0 0.0
    %3846 = vmatprep.subr.mxu0 0.0
    %3847 = vmatpush1.xpose.msra.mxu0 0.0
    %3848 = vmatprep.subr.mxu0 0.0
    %3849 = vmatpush1.xpose.msra.mxu0 0.0
    %3850 = vmatprep.subr.mxu0 0.0
    %3851 = vmatpush1.xpose.msra.mxu0 0.0
    %3852 = vmatprep.subr.mxu0 0.0
    %3853 = vmatpush1.xpose.msra.mxu0 0.0
    %3854 = vmatprep.subr.mxu0 0.0
    %3855 = vmatpush1.xpose.msra.mxu0 0.0
    %3856 = vmatprep.subr.mxu0 0.0
    %3857 = vmatpush1.xpose.msra.mxu0 0.0
    %3858 = vmatprep.subr.mxu0 0.0
    %3859 = vmatpush1.xpose.msra.mxu0 0.0
    %3860 = vmatprep.subr.mxu0 0.0
    %3861 = vmatpush1.xpose.msra.mxu0 0.0
    %3862 = vmatprep.subr.mxu0 0.0
    %3863 = vmatpush1.xpose.msra.mxu0 0.0
    %3864 = vmatprep.mubr.f32.mxu0 0.0
    %3865 = vmatmul.mubr.f32.gmra.mrb[0].mxu0 %v3792
    %v3866 = vpop.f32.mrb[0].mxu0
    %v3867 = vadd.f32 0.0, %v3866
    %v3868 = vpop.f32.mrb[0].mxu0
    %3869 = vmatprep.mubr.f32.mxu0 0.0
    %3870 = vmatmul.mubr.f32.gmra.mrb[0].mxu0 %v3794
    %v3871 = vpop.f32.mrb[0].mxu0
    %v3872 = vadd.f32 0.0, %v3871
    %v3873 = vpop.f32.mrb[0].mxu0
    %3874 = vdwg.mxu0
    %v3875 = vmul.f32 %v3867, 0.35355338
    %v3876 = vmul.f32 %v3872, 0.35355338
    %v3877 = vadd.f32 %v3875, %v137
    %v3878 = vadd.f32 %v3876, %v138
    %v3879 = vsel %vm378, %v3877, -inf
    %3880 = vmax.xlane.f32.xlu0 %v3879
    %v3881 = vpop.xlane.xlu0 %3880
    %v3882 = vsel %vm378, %v3878, -inf
    %3883 = vmax.xlane.f32.xlu0 %v3882
    %v3884 = vpop.xlane.xlu0 %3883
    %v3885 = vsub.f32 %v3877, %v3881
    %v3886 = vsub.f32 %v3878, %v3884
    %v3887 = vmul.f32 %v3885, 1.442695
    %v3888 = vpow.pop %v3887
    %v3889 = vmul.f32 %v3886, 1.442695
    %v3890 = vpow.pop %v3889
    %v3891 = vsel %vm378, %v3888, 0.0
    %3892 = vadd.xlane.f32.xlu0 %v3891
    %v3893 = vpop.xlane.xlu0 %3892
    %v3894 = vsel %vm378, %v3890, 0.0
    %3895 = vadd.xlane.f32.xlu0 %v3894
    %v3896 = vpop.xlane.xlu0 %3895
    %v3897 = vrcp.pop %v3893
    %v3898 = vrcp.pop %v3896
    %v3899 = vmul.f32 %v3888, %v3897
    %v3900 = vmul.f32 %v3890, %v3898
    %3901 = vrot.lane.b32.xlu0 %v3201, 48
    %v3902 = vpop.permute.xlu0 %3901
    %3903 = vrot.lane.b32.xlu0 %v3206, 48
    %v3904 = vpop.permute.xlu0 %3903
    %v3908 = vsel %vm378, %v3899, 0
    %v3911 = vsel %vm378, %v3900, 0
    %3913 = vmatprep.subr.mxu0 0.0
    %3914 = vmatpush1.msra.mxu0 %v3902
    %3915 = vmatprep.subr.mxu0 0.0
    %3916 = vmatpush1.msra.mxu0 %v3904
    %3917 = vmatprep.subr.mxu0 0.0
    %3918 = vmatpush1.msra.mxu0 0.0
    %3919 = vmatprep.subr.mxu0 0.0
    %3920 = vmatpush1.msra.mxu0 0.0
    %3921 = vmatprep.subr.mxu0 0.0
    %3922 = vmatpush1.msra.mxu0 0.0
    %3923 = vmatprep.subr.mxu0 0.0
    %3924 = vmatpush1.msra.mxu0 0.0
    %3925 = vmatprep.subr.mxu0 0.0
    %3926 = vmatpush1.msra.mxu0 0.0
    %3927 = vmatprep.subr.mxu0 0.0
    %3928 = vmatpush1.msra.mxu0 0.0
    %3929 = vmatprep.subr.mxu0 0.0
    %3930 = vmatpush1.msra.mxu0 0.0
    %3931 = vmatprep.subr.mxu0 0.0
    %3932 = vmatpush1.msra.mxu0 0.0
    %3933 = vmatprep.subr.mxu0 0.0
    %3934 = vmatpush1.msra.mxu0 0.0
    %3935 = vmatprep.subr.mxu0 0.0
    %3936 = vmatpush1.msra.mxu0 0.0
    %3937 = vmatprep.subr.mxu0 0.0
    %3938 = vmatpush1.msra.mxu0 0.0
    %3939 = vmatprep.subr.mxu0 0.0
    %3940 = vmatpush1.msra.mxu0 0.0
    %3941 = vmatprep.subr.mxu0 0.0
    %3942 = vmatpush1.msra.mxu0 0.0
    %3943 = vmatprep.subr.mxu0 0.0
    %3944 = vmatpush1.msra.mxu0 0.0
    %3945 = vmatprep.subr.mxu0 0.0
    %3946 = vmatpush1.msra.mxu0 0.0
    %3947 = vmatprep.subr.mxu0 0.0
    %3948 = vmatpush1.msra.mxu0 0.0
    %3949 = vmatprep.subr.mxu0 0.0
    %3950 = vmatpush1.msra.mxu0 0.0
    %3951 = vmatprep.subr.mxu0 0.0
    %3952 = vmatpush1.msra.mxu0 0.0
    %3953 = vmatprep.subr.mxu0 0.0
    %3954 = vmatpush1.msra.mxu0 0.0
    %3955 = vmatprep.subr.mxu0 0.0
    %3956 = vmatpush1.msra.mxu0 0.0
    %3957 = vmatprep.subr.mxu0 0.0
    %3958 = vmatpush1.msra.mxu0 0.0
    %3959 = vmatprep.subr.mxu0 0.0
    %3960 = vmatpush1.msra.mxu0 0.0
    %3961 = vmatprep.subr.mxu0 0.0
    %3962 = vmatpush1.msra.mxu0 0.0
    %3963 = vmatprep.subr.mxu0 0.0
    %3964 = vmatpush1.msra.mxu0 0.0
    %3965 = vmatprep.subr.mxu0 0.0
    %3966 = vmatpush1.msra.mxu0 0.0
    %3967 = vmatprep.subr.mxu0 0.0
    %3968 = vmatpush1.msra.mxu0 0.0
    %3969 = vmatprep.subr.mxu0 0.0
    %3970 = vmatpush1.msra.mxu0 0.0
    %3971 = vmatprep.subr.mxu0 0.0
    %3972 = vmatpush1.msra.mxu0 0.0
    %3973 = vmatprep.subr.mxu0 0.0
    %3974 = vmatpush1.msra.mxu0 0.0
    %3975 = vmatprep.subr.mxu0 0.0
    %3976 = vmatpush1.msra.mxu0 0.0
    %3977 = vmatprep.mubr.f32.mxu0 0.0
    %3978 = vmatmul.mubr.f32.gmra.mrb[0].mxu0 %v3908
    %v3979 = vpop.f32.mrb[0].mxu0
    %v3980 = vadd.f32 0.0, %v3979
    %v3981 = vpop.f32.mrb[0].mxu0
    %3982 = vmatprep.mubr.f32.mxu0 0.0
    %3983 = vmatmul.mubr.f32.gmra.mrb[0].mxu0 %v3911
    %v3984 = vpop.f32.mrb[0].mxu0
    %v3985 = vadd.f32 0.0, %v3984
    %v3986 = vpop.f32.mrb[0].mxu0
    %3987 = vdwg.mxu0
    %v3989 = vsel %vm290, %v3980, 0
    %v3992 = vsel %vm290, %v3985, 0
    %3994 = vmatprep.subr.mxu0 0.0
    %3995 = vmatpush1.msra.mxu0 %v3212
    %3996 = vmatprep.subr.mxu0 0.0
    %3997 = vmatpush1.msra.mxu0 0.0
    %3998 = vmatprep.subr.mxu0 0.0
    %3999 = vmatpush1.msra.mxu0 0.0
    %4000 = vmatprep.subr.mxu0 0.0
    %4001 = vmatpush1.msra.mxu0 0.0
    %4002 = vmatprep.subr.mxu0 0.0
    %4003 = vmatpush1.msra.mxu0 0.0
    %4004 = vmatprep.subr.mxu0 0.0
    %4005 = vmatpush1.msra.mxu0 0.0
    %4006 = vmatprep.subr.mxu0 0.0
    %4007 = vmatpush1.msra.mxu0 0.0
    %4008 = vmatprep.subr.mxu0 0.0
    %4009 = vmatpush1.msra.mxu0 0.0
    %4010 = vmatprep.subr.mxu0 0.0
    %4011 = vmatpush1.msra.mxu0 0.0
    %4012 = vmatprep.subr.mxu0 0.0
    %4013 = vmatpush1.msra.mxu0 0.0
    %4014 = vmatprep.subr.mxu0 0.0
    %4015 = vmatpush1.msra.mxu0 0.0
    %4016 = vmatprep.subr.mxu0 0.0
    %4017 = vmatpush1.msra.mxu0 0.0
    %4018 = vmatprep.subr.mxu0 0.0
    %4019 = vmatpush1.msra.mxu0 0.0
    %4020 = vmatprep.subr.mxu0 0.0
    %4021 = vmatpush1.msra.mxu0 0.0
    %4022 = vmatprep.subr.mxu0 0.0
    %4023 = vmatpush1.msra.mxu0 0.0
    %4024 = vmatprep.subr.mxu0 0.0
    %4025 = vmatpush1.msra.mxu0 0.0
    %4026 = vmatprep.subr.mxu0 0.0
    %4027 = vmatpush1.msra.mxu0 0.0
    %4028 = vmatprep.subr.mxu0 0.0
    %4029 = vmatpush1.msra.mxu0 0.0
    %4030 = vmatprep.subr.mxu0 0.0
    %4031 = vmatpush1.msra.mxu0 0.0
    %4032 = vmatprep.subr.mxu0 0.0
    %4033 = vmatpush1.msra.mxu0 0.0
    %4034 = vmatprep.subr.mxu0 0.0
    %4035 = vmatpush1.msra.mxu0 0.0
    %4036 = vmatprep.subr.mxu0 0.0
    %4037 = vmatpush1.msra.mxu0 0.0
    %4038 = vmatprep.subr.mxu0 0.0
    %4039 = vmatpush1.msra.mxu0 0.0
    %4040 = vmatprep.subr.mxu0 0.0
    %4041 = vmatpush1.msra.mxu0 0.0
    %4042 = vmatprep.subr.mxu0 0.0
    %4043 = vmatpush1.msra.mxu0 0.0
    %4044 = vmatprep.subr.mxu0 0.0
    %4045 = vmatpush1.msra.mxu0 0.0
    %4046 = vmatprep.subr.mxu0 0.0
    %4047 = vmatpush1.msra.mxu0 0.0
    %4048 = vmatprep.subr.mxu0 0.0
    %4049 = vmatpush1.msra.mxu0 0.0
    %4050 = vmatprep.subr.mxu0 0.0
    %4051 = vmatpush1.msra.mxu0 0.0
    %4052 = vmatprep.subr.mxu0 0.0
    %4053 = vmatpush1.msra.mxu0 0.0
    %4054 = vmatprep.subr.mxu0 0.0
    %4055 = vmatpush1.msra.mxu0 0.0
    %4056 = vmatprep.subr.mxu0 0.0
    %4057 = vmatpush1.msra.mxu0 0.0
    %4058 = vmatprep.mubr.f32.mxu0 0.0
    %4059 = vmatmul.mubr.f32.gmra.mrb[0].mxu0 %v3989
    %v4060 = vpop.f32.mrb[0].mxu0
    %v4061 = vadd.f32 0.0, %v4060
    %v4062 = vpop.f32.mrb[0].mxu0
    %4063 = vmatprep.mubr.f32.mxu0 0.0
    %4064 = vmatmul.mubr.f32.gmra.mrb[0].mxu0 %v3992
    %v4065 = vpop.f32.mrb[0].mxu0
    %v4066 = vadd.f32 0.0, %v4065
    %v4067 = vpop.f32.mrb[0].mxu0
    %4068 = vdwg.mxu0
    %v4069 = vadd.f32 %v3776, %v4061
    %v4070 = vadd.f32 %v3781, %v4066
    %4071 = vrot.lane.b32.xlu0 %v3201, 104
    %v4072 = vpop.permute.xlu0 %4071
    %4073 = vrot.lane.b32.xlu0 %v3206, 104
    %v4074 = vpop.permute.xlu0 %4073
    %4075 = vrot.lane.b32.xlu0 %v3201, 72
    %v4076 = vpop.permute.xlu0 %4075
    %4077 = vrot.lane.b32.xlu0 %v3206, 72
    %v4078 = vpop.permute.xlu0 %4077
    %v4079 = vsel %vm290, %v4072, 0
    %v4081 = vsel %vm290, %v4074, 0
    %v4083 = vsel %vm290, %v4076, 0
    %v4085 = vsel %vm290, %v4078, 0
    %4087 = vmatprep.subr.mxu0 0.0
    %4088 = vmatpush1.xpose.msra.mxu0 %v4083
    %4089 = vmatprep.subr.mxu0 0.0
    %4090 = vmatpush1.xpose.msra.mxu0 %v4085
    %4091 = vmatprep.subr.mxu0 0.0
    %4092 = vmatpush1.xpose.msra.mxu0 0.0
    %4093 = vmatprep.subr.mxu0 0.0
    %4094 = vmatpush1.xpose.msra.mxu0 0.0
    %4095 = vmatprep.subr.mxu0 0.0
    %4096 = vmatpush1.xpose.msra.mxu0 0.0
    %4097 = vmatprep.subr.mxu0 0.0
    %4098 = vmatpush1.xpose.msra.mxu0 0.0
    %4099 = vmatprep.subr.mxu0 0.0
    %4100 = vmatpush1.xpose.msra.mxu0 0.0
    %4101 = vmatprep.subr.mxu0 0.0
    %4102 = vmatpush1.xpose.msra.mxu0 0.0
    %4103 = vmatprep.subr.mxu0 0.0
    %4104 = vmatpush1.xpose.msra.mxu0 0.0
    %4105 = vmatprep.subr.mxu0 0.0
    %4106 = vmatpush1.xpose.msra.mxu0 0.0
    %4107 = vmatprep.subr.mxu0 0.0
    %4108 = vmatpush1.xpose.msra.mxu0 0.0
    %4109 = vmatprep.subr.mxu0 0.0
    %4110 = vmatpush1.xpose.msra.mxu0 0.0
    %4111 = vmatprep.subr.mxu0 0.0
    %4112 = vmatpush1.xpose.msra.mxu0 0.0
    %4113 = vmatprep.subr.mxu0 0.0
    %4114 = vmatpush1.xpose.msra.mxu0 0.0
    %4115 = vmatprep.subr.mxu0 0.0
    %4116 = vmatpush1.xpose.msra.mxu0 0.0
    %4117 = vmatprep.subr.mxu0 0.0
    %4118 = vmatpush1.xpose.msra.mxu0 0.0
    %4119 = vmatprep.subr.mxu0 0.0
    %4120 = vmatpush1.xpose.msra.mxu0 0.0
    %4121 = vmatprep.subr.mxu0 0.0
    %4122 = vmatpush1.xpose.msra.mxu0 0.0
    %4123 = vmatprep.subr.mxu0 0.0
    %4124 = vmatpush1.xpose.msra.mxu0 0.0
    %4125 = vmatprep.subr.mxu0 0.0
    %4126 = vmatpush1.xpose.msra.mxu0 0.0
    %4127 = vmatprep.subr.mxu0 0.0
    %4128 = vmatpush1.xpose.msra.mxu0 0.0
    %4129 = vmatprep.subr.mxu0 0.0
    %4130 = vmatpush1.xpose.msra.mxu0 0.0
    %4131 = vmatprep.subr.mxu0 0.0
    %4132 = vmatpush1.xpose.msra.mxu0 0.0
    %4133 = vmatprep.subr.mxu0 0.0
    %4134 = vmatpush1.xpose.msra.mxu0 0.0
    %4135 = vmatprep.subr.mxu0 0.0
    %4136 = vmatpush1.xpose.msra.mxu0 0.0
    %4137 = vmatprep.subr.mxu0 0.0
    %4138 = vmatpush1.xpose.msra.mxu0 0.0
    %4139 = vmatprep.subr.mxu0 0.0
    %4140 = vmatpush1.xpose.msra.mxu0 0.0
    %4141 = vmatprep.subr.mxu0 0.0
    %4142 = vmatpush1.xpose.msra.mxu0 0.0
    %4143 = vmatprep.subr.mxu0 0.0
    %4144 = vmatpush1.xpose.msra.mxu0 0.0
    %4145 = vmatprep.subr.mxu0 0.0
    %4146 = vmatpush1.xpose.msra.mxu0 0.0
    %4147 = vmatprep.subr.mxu0 0.0
    %4148 = vmatpush1.xpose.msra.mxu0 0.0
    %4149 = vmatprep.subr.mxu0 0.0
    %4150 = vmatpush1.xpose.msra.mxu0 0.0
    %4151 = vmatprep.mubr.f32.mxu0 0.0
    %4152 = vmatmul.mubr.f32.gmra.mrb[0].mxu0 %v4079
    %v4153 = vpop.f32.mrb[0].mxu0
    %v4154 = vadd.f32 0.0, %v4153
    %v4155 = vpop.f32.mrb[0].mxu0
    %4156 = vmatprep.mubr.f32.mxu0 0.0
    %4157 = vmatmul.mubr.f32.gmra.mrb[0].mxu0 %v4081
    %v4158 = vpop.f32.mrb[0].mxu0
    %v4159 = vadd.f32 0.0, %v4158
    %v4160 = vpop.f32.mrb[0].mxu0
    %4161 = vdwg.mxu0
    %v4162 = vmul.f32 %v4154, 0.35355338
    %v4163 = vmul.f32 %v4159, 0.35355338
    %v4164 = vadd.f32 %v4162, %v137
    %v4165 = vadd.f32 %v4163, %v138
    %v4166 = vsel %vm378, %v4164, -inf
    %4167 = vmax.xlane.f32.xlu0 %v4166
    %v4168 = vpop.xlane.xlu0 %4167
    %v4169 = vsel %vm378, %v4165, -inf
    %4170 = vmax.xlane.f32.xlu0 %v4169
    %v4171 = vpop.xlane.xlu0 %4170
    %v4172 = vsub.f32 %v4164, %v4168
    %v4173 = vsub.f32 %v4165, %v4171
    %v4174 = vmul.f32 %v4172, 1.442695
    %v4175 = vpow.pop %v4174
    %v4176 = vmul.f32 %v4173, 1.442695
    %v4177 = vpow.pop %v4176
    %v4178 = vsel %vm378, %v4175, 0.0
    %4179 = vadd.xlane.f32.xlu0 %v4178
    %v4180 = vpop.xlane.xlu0 %4179
    %v4181 = vsel %vm378, %v4177, 0.0
    %4182 = vadd.xlane.f32.xlu0 %v4181
    %v4183 = vpop.xlane.xlu0 %4182
    %v4184 = vrcp.pop %v4180
    %v4185 = vrcp.pop %v4183
    %v4186 = vmul.f32 %v4175, %v4184
    %v4187 = vmul.f32 %v4177, %v4185
    %4188 = vrot.lane.b32.xlu0 %v3201, 40
    %v4189 = vpop.permute.xlu0 %4188
    %4190 = vrot.lane.b32.xlu0 %v3206, 40
    %v4191 = vpop.permute.xlu0 %4190
    %v4195 = vsel %vm378, %v4186, 0
    %v4198 = vsel %vm378, %v4187, 0
    %4200 = vmatprep.subr.mxu0 0.0
    %4201 = vmatpush1.msra.mxu0 %v4189
    %4202 = vmatprep.subr.mxu0 0.0
    %4203 = vmatpush1.msra.mxu0 %v4191
    %4204 = vmatprep.subr.mxu0 0.0
    %4205 = vmatpush1.msra.mxu0 0.0
    %4206 = vmatprep.subr.mxu0 0.0
    %4207 = vmatpush1.msra.mxu0 0.0
    %4208 = vmatprep.subr.mxu0 0.0
    %4209 = vmatpush1.msra.mxu0 0.0
    %4210 = vmatprep.subr.mxu0 0.0
    %4211 = vmatpush1.msra.mxu0 0.0
    %4212 = vmatprep.subr.mxu0 0.0
    %4213 = vmatpush1.msra.mxu0 0.0
    %4214 = vmatprep.subr.mxu0 0.0
    %4215 = vmatpush1.msra.mxu0 0.0
    %4216 = vmatprep.subr.mxu0 0.0
    %4217 = vmatpush1.msra.mxu0 0.0
    %4218 = vmatprep.subr.mxu0 0.0
    %4219 = vmatpush1.msra.mxu0 0.0
    %4220 = vmatprep.subr.mxu0 0.0
    %4221 = vmatpush1.msra.mxu0 0.0
    %4222 = vmatprep.subr.mxu0 0.0
    %4223 = vmatpush1.msra.mxu0 0.0
    %4224 = vmatprep.subr.mxu0 0.0
    %4225 = vmatpush1.msra.mxu0 0.0
    %4226 = vmatprep.subr.mxu0 0.0
    %4227 = vmatpush1.msra.mxu0 0.0
    %4228 = vmatprep.subr.mxu0 0.0
    %4229 = vmatpush1.msra.mxu0 0.0
    %4230 = vmatprep.subr.mxu0 0.0
    %4231 = vmatpush1.msra.mxu0 0.0
    %4232 = vmatprep.subr.mxu0 0.0
    %4233 = vmatpush1.msra.mxu0 0.0
    %4234 = vmatprep.subr.mxu0 0.0
    %4235 = vmatpush1.msra.mxu0 0.0
    %4236 = vmatprep.subr.mxu0 0.0
    %4237 = vmatpush1.msra.mxu0 0.0
    %4238 = vmatprep.subr.mxu0 0.0
    %4239 = vmatpush1.msra.mxu0 0.0
    %4240 = vmatprep.subr.mxu0 0.0
    %4241 = vmatpush1.msra.mxu0 0.0
    %4242 = vmatprep.subr.mxu0 0.0
    %4243 = vmatpush1.msra.mxu0 0.0
    %4244 = vmatprep.subr.mxu0 0.0
    %4245 = vmatpush1.msra.mxu0 0.0
    %4246 = vmatprep.subr.mxu0 0.0
    %4247 = vmatpush1.msra.mxu0 0.0
    %4248 = vmatprep.subr.mxu0 0.0
    %4249 = vmatpush1.msra.mxu0 0.0
    %4250 = vmatprep.subr.mxu0 0.0
    %4251 = vmatpush1.msra.mxu0 0.0
    %4252 = vmatprep.subr.mxu0 0.0
    %4253 = vmatpush1.msra.mxu0 0.0
    %4254 = vmatprep.subr.mxu0 0.0
    %4255 = vmatpush1.msra.mxu0 0.0
    %4256 = vmatprep.subr.mxu0 0.0
    %4257 = vmatpush1.msra.mxu0 0.0
    %4258 = vmatprep.subr.mxu0 0.0
    %4259 = vmatpush1.msra.mxu0 0.0
    %4260 = vmatprep.subr.mxu0 0.0
    %4261 = vmatpush1.msra.mxu0 0.0
    %4262 = vmatprep.subr.mxu0 0.0
    %4263 = vmatpush1.msra.mxu0 0.0
    %4264 = vmatprep.mubr.f32.mxu0 0.0
    %4265 = vmatmul.mubr.f32.gmra.mrb[0].mxu0 %v4195
    %v4266 = vpop.f32.mrb[0].mxu0
    %v4267 = vadd.f32 0.0, %v4266
    %v4268 = vpop.f32.mrb[0].mxu0
    %4269 = vmatprep.mubr.f32.mxu0 0.0
    %4270 = vmatmul.mubr.f32.gmra.mrb[0].mxu0 %v4198
    %v4271 = vpop.f32.mrb[0].mxu0
    %v4272 = vadd.f32 0.0, %v4271
    %v4273 = vpop.f32.mrb[0].mxu0
    %4274 = vdwg.mxu0
    %v4276 = vsel %vm290, %v4267, 0
    %v4279 = vsel %vm290, %v4272, 0
    %4281 = vmatprep.subr.mxu0 0.0
    %4282 = vmatpush1.msra.mxu0 %v3213
    %4283 = vmatprep.subr.mxu0 0.0
    %4284 = vmatpush1.msra.mxu0 0.0
    %4285 = vmatprep.subr.mxu0 0.0
    %4286 = vmatpush1.msra.mxu0 0.0
    %4287 = vmatprep.subr.mxu0 0.0
    %4288 = vmatpush1.msra.mxu0 0.0
    %4289 = vmatprep.subr.mxu0 0.0
    %4290 = vmatpush1.msra.mxu0 0.0
    %4291 = vmatprep.subr.mxu0 0.0
    %4292 = vmatpush1.msra.mxu0 0.0
    %4293 = vmatprep.subr.mxu0 0.0
    %4294 = vmatpush1.msra.mxu0 0.0
    %4295 = vmatprep.subr.mxu0 0.0
    %4296 = vmatpush1.msra.mxu0 0.0
    %4297 = vmatprep.subr.mxu0 0.0
    %4298 = vmatpush1.msra.mxu0 0.0
    %4299 = vmatprep.subr.mxu0 0.0
    %4300 = vmatpush1.msra.mxu0 0.0
    %4301 = vmatprep.subr.mxu0 0.0
    %4302 = vmatpush1.msra.mxu0 0.0
    %4303 = vmatprep.subr.mxu0 0.0
    %4304 = vmatpush1.msra.mxu0 0.0
    %4305 = vmatprep.subr.mxu0 0.0
    %4306 = vmatpush1.msra.mxu0 0.0
    %4307 = vmatprep.subr.mxu0 0.0
    %4308 = vmatpush1.msra.mxu0 0.0
    %4309 = vmatprep.subr.mxu0 0.0
    %4310 = vmatpush1.msra.mxu0 0.0
    %4311 = vmatprep.subr.mxu0 0.0
    %4312 = vmatpush1.msra.mxu0 0.0
    %4313 = vmatprep.subr.mxu0 0.0
    %4314 = vmatpush1.msra.mxu0 0.0
    %4315 = vmatprep.subr.mxu0 0.0
    %4316 = vmatpush1.msra.mxu0 0.0
    %4317 = vmatprep.subr.mxu0 0.0
    %4318 = vmatpush1.msra.mxu0 0.0
    %4319 = vmatprep.subr.mxu0 0.0
    %4320 = vmatpush1.msra.mxu0 0.0
    %4321 = vmatprep.subr.mxu0 0.0
    %4322 = vmatpush1.msra.mxu0 0.0
    %4323 = vmatprep.subr.mxu0 0.0
    %4324 = vmatpush1.msra.mxu0 0.0
    %4325 = vmatprep.subr.mxu0 0.0
    %4326 = vmatpush1.msra.mxu0 0.0
    %4327 = vmatprep.subr.mxu0 0.0
    %4328 = vmatpush1.msra.mxu0 0.0
    %4329 = vmatprep.subr.mxu0 0.0
    %4330 = vmatpush1.msra.mxu0 0.0
    %4331 = vmatprep.subr.mxu0 0.0
    %4332 = vmatpush1.msra.mxu0 0.0
    %4333 = vmatprep.subr.mxu0 0.0
    %4334 = vmatpush1.msra.mxu0 0.0
    %4335 = vmatprep.subr.mxu0 0.0
    %4336 = vmatpush1.msra.mxu0 0.0
    %4337 = vmatprep.subr.mxu0 0.0
    %4338 = vmatpush1.msra.mxu0 0.0
    %4339 = vmatprep.subr.mxu0 0.0
    %4340 = vmatpush1.msra.mxu0 0.0
    %4341 = vmatprep.subr.mxu0 0.0
    %4342 = vmatpush1.msra.mxu0 0.0
    %4343 = vmatprep.subr.mxu0 0.0
    %4344 = vmatpush1.msra.mxu0 0.0
    %4345 = vmatprep.mubr.f32.mxu0 0.0
    %4346 = vmatmul.mubr.f32.gmra.mrb[0].mxu0 %v4276
    %v4347 = vpop.f32.mrb[0].mxu0
    %v4348 = vadd.f32 0.0, %v4347
    %v4349 = vpop.f32.mrb[0].mxu0
    %4350 = vmatprep.mubr.f32.mxu0 0.0
    %4351 = vmatmul.mubr.f32.gmra.mrb[0].mxu0 %v4279
    %v4352 = vpop.f32.mrb[0].mxu0
    %v4353 = vadd.f32 0.0, %v4352
    %v4354 = vpop.f32.mrb[0].mxu0
    %4355 = vdwg.mxu0
    %v4356 = vadd.f32 %v4069, %v4348
    %v4357 = vadd.f32 %v4070, %v4353
    %v4359 = vlaneseq
    %v4360 = vshrl.u32 %v4359, 7
    %v4361 = vsub.s32 0, %v4360
    %v4362 = vrot.slane %v3215, %v4361
    %v4364 = vadd.f32 %v4356, %v4362
    %v4365 = vadd.f32 %v4357, %v4362
    %v4366 = vadd.f32 %v3067, %v4364
    %v4367 = vadd.f32 %v3068, %v4365
    %s4368 = scalar_lea.vmem %s18, 1
    %v4369 = vld [vmem:[%s4368] sm:$0x1]
    %s4370 = scalar_lea.vmem %s19, 1
    %v4371 = vld [vmem:[%s4370] sm:$0x1]
    %v4372 = vsel %vm143, %v4366, 0.0
    %4373 = vadd.xlane.f32.xlu0 %v4372
    %v4374 = vpop.xlane.xlu0 %4373
    %v4375 = vsel %vm143, %v4367, 0.0
    %4376 = vadd.xlane.f32.xlu0 %v4375
    %v4377 = vpop.xlane.xlu0 %4376
    %v4378 = vmul.f32 %v4374, %v150
    %v4379 = vmul.f32 %v4377, %v150
    %v4380 = vsub.f32 %v4366, %v4378
    %v4381 = vsub.f32 %v4367, %v4379
    %v4382 = vmul.f32 %v4380, %v4380
    %v4383 = vmul.f32 %v4381, %v4381
    %v4384 = vsel %vm143, %v4382, 0.0
    %4385 = vadd.xlane.f32.xlu0 %v4384
    %v4386 = vpop.xlane.xlu0 %4385
    %v4387 = vsel %vm143, %v4383, 0.0
    %4388 = vadd.xlane.f32.xlu0 %v4387
    %v4389 = vpop.xlane.xlu0 %4388
    %v4390 = vmul.f32 %v4386, %v150
    %v4391 = vmul.f32 %v4389, %v150
    %v4392 = vadd.f32 %v4390, 1e-05
    %v4393 = vadd.f32 %v4391, 1e-05
    %v4394 = vrsqrt.pop %v4392
    %v4395 = vrsqrt.pop %v4393
    %v4396 = vmul.f32 %v4380, %v4394
    %v4397 = vmul.f32 %v4381, %v4395
    %v4399 = vlaneseq
    %v4400 = vshrl.u32 %v4399, 7
    %v4401 = vsub.s32 0, %v4400
    %v4402 = vrot.slane %v4369, %v4401
    %v4404 = vmul.f32 %v4396, %v4402
    %v4405 = vmul.f32 %v4397, %v4402
    %v4407 = vlaneseq
    %v4408 = vshrl.u32 %v4407, 7
    %v4409 = vsub.s32 0, %v4408
    %v4410 = vrot.slane %v4371, %v4409
    %v4412 = vadd.f32 %v4404, %v4410
    %v4413 = vadd.f32 %v4405, %v4410
    %s4414 = scalar_lea.vmem %s8, 32
    %v4415 = vld [vmem:[%s4414] sm:$0xff]
    %v4416 = vld [vmem:[%s4414 + $0x8] sm:$0xff]
    %v4417 = vld [vmem:[%s4414 + $0x10] sm:$0xff]
    %v4418 = vld [vmem:[%s4414 + $0x18] sm:$0xff]
    %s4419 = scalar_lea.vmem %s9, 1
    %v4420 = vld [vmem:[%s4419] sm:$0x1]
    %v4422 = vlaneseq
    %v4423 = vshrl.u32 %v4422, 7
    %v4424 = vsub.s32 0, %v4423
    %v4425 = vrot.slane %v4420, %v4424
    %v4428 = vsel %vm143, %v4412, 0
    %v4431 = vsel %vm143, %v4413, 0
    %4433 = vmatprep.subr.mxu0 0.0
    %4434 = vmatpush1.msra.mxu0 %v4415
    %4435 = vmatprep.subr.mxu0 0.0
    %4436 = vmatpush1.msra.mxu0 %v4416
    %4437 = vmatprep.subr.mxu0 0.0
    %4438 = vmatpush1.msra.mxu0 %v4417
    %4439 = vmatprep.subr.mxu0 0.0
    %4440 = vmatpush1.msra.mxu0 %v4418
    %4441 = vmatprep.subr.mxu0 0.0
    %4442 = vmatpush1.msra.mxu0 0.0
    %4443 = vmatprep.subr.mxu0 0.0
    %4444 = vmatpush1.msra.mxu0 0.0
    %4445 = vmatprep.subr.mxu0 0.0
    %4446 = vmatpush1.msra.mxu0 0.0
    %4447 = vmatprep.subr.mxu0 0.0
    %4448 = vmatpush1.msra.mxu0 0.0
    %4449 = vmatprep.subr.mxu0 0.0
    %4450 = vmatpush1.msra.mxu0 0.0
    %4451 = vmatprep.subr.mxu0 0.0
    %4452 = vmatpush1.msra.mxu0 0.0
    %4453 = vmatprep.subr.mxu0 0.0
    %4454 = vmatpush1.msra.mxu0 0.0
    %4455 = vmatprep.subr.mxu0 0.0
    %4456 = vmatpush1.msra.mxu0 0.0
    %4457 = vmatprep.subr.mxu0 0.0
    %4458 = vmatpush1.msra.mxu0 0.0
    %4459 = vmatprep.subr.mxu0 0.0
    %4460 = vmatpush1.msra.mxu0 0.0
    %4461 = vmatprep.subr.mxu0 0.0
    %4462 = vmatpush1.msra.mxu0 0.0
    %4463 = vmatprep.subr.mxu0 0.0
    %4464 = vmatpush1.msra.mxu0 0.0
    %4465 = vmatprep.subr.mxu0 0.0
    %4466 = vmatpush1.msra.mxu0 0.0
    %4467 = vmatprep.subr.mxu0 0.0
    %4468 = vmatpush1.msra.mxu0 0.0
    %4469 = vmatprep.subr.mxu0 0.0
    %4470 = vmatpush1.msra.mxu0 0.0
    %4471 = vmatprep.subr.mxu0 0.0
    %4472 = vmatpush1.msra.mxu0 0.0
    %4473 = vmatprep.subr.mxu0 0.0
    %4474 = vmatpush1.msra.mxu0 0.0
    %4475 = vmatprep.subr.mxu0 0.0
    %4476 = vmatpush1.msra.mxu0 0.0
    %4477 = vmatprep.subr.mxu0 0.0
    %4478 = vmatpush1.msra.mxu0 0.0
    %4479 = vmatprep.subr.mxu0 0.0
    %4480 = vmatpush1.msra.mxu0 0.0
    %4481 = vmatprep.subr.mxu0 0.0
    %4482 = vmatpush1.msra.mxu0 0.0
    %4483 = vmatprep.subr.mxu0 0.0
    %4484 = vmatpush1.msra.mxu0 0.0
    %4485 = vmatprep.subr.mxu0 0.0
    %4486 = vmatpush1.msra.mxu0 0.0
    %4487 = vmatprep.subr.mxu0 0.0
    %4488 = vmatpush1.msra.mxu0 0.0
    %4489 = vmatprep.subr.mxu0 0.0
    %4490 = vmatpush1.msra.mxu0 0.0
    %4491 = vmatprep.subr.mxu0 0.0
    %4492 = vmatpush1.msra.mxu0 0.0
    %4493 = vmatprep.subr.mxu0 0.0
    %4494 = vmatpush1.msra.mxu0 0.0
    %4495 = vmatprep.subr.mxu0 0.0
    %4496 = vmatpush1.msra.mxu0 0.0
    %4497 = vmatprep.mubr.f32.mxu0 0.0
    %4498 = vmatmul.mubr.f32.gmra.mrb[0].mxu0 %v4428
    %v4499 = vpop.f32.mrb[0].mxu0
    %v4500 = vadd.f32 %v4425, %v4499
    %v4501 = vpop.f32.mrb[0].mxu0
    %4502 = vmatprep.mubr.f32.mxu0 0.0
    %4503 = vmatmul.mubr.f32.gmra.mrb[0].mxu0 %v4431
    %v4504 = vpop.f32.mrb[0].mxu0
    %v4505 = vadd.f32 %v4425, %v4504
    %v4506 = vpop.f32.mrb[0].mxu0
    %4507 = vdwg.mxu0
    %4512 = vrot.lane.b32.xlu0 %v4415, 96
    %v4513 = vpop.permute.xlu0 %4512
    %4514 = vrot.lane.b32.xlu0 %v4416, 96
    %v4515 = vpop.permute.xlu0 %4514
    %4516 = vrot.lane.b32.xlu0 %v4417, 96
    %v4517 = vpop.permute.xlu0 %4516
    %4518 = vrot.lane.b32.xlu0 %v4418, 96
    %v4519 = vpop.permute.xlu0 %4518
    %4524 = vrot.lane.b32.xlu0 %v4425, 96
    %v4525 = vpop.permute.xlu0 %4524
    %4527 = vmatprep.subr.mxu0 0.0
    %4528 = vmatpush1.msra.mxu0 %v4513
    %4529 = vmatprep.subr.mxu0 0.0
    %4530 = vmatpush1.msra.mxu0 %v4515
    %4531 = vmatprep.subr.mxu0 0.0
    %4532 = vmatpush1.msra.mxu0 %v4517
    %4533 = vmatprep.subr.mxu0 0.0
    %4534 = vmatpush1.msra.mxu0 %v4519
    %4535 = vmatprep.subr.mxu0 0.0
    %4536 = vmatpush1.msra.mxu0 0.0
    %4537 = vmatprep.subr.mxu0 0.0
    %4538 = vmatpush1.msra.mxu0 0.0
    %4539 = vmatprep.subr.mxu0 0.0
    %4540 = vmatpush1.msra.mxu0 0.0
    %4541 = vmatprep.subr.mxu0 0.0
    %4542 = vmatpush1.msra.mxu0 0.0
    %4543 = vmatprep.subr.mxu0 0.0
    %4544 = vmatpush1.msra.mxu0 0.0
    %4545 = vmatprep.subr.mxu0 0.0
    %4546 = vmatpush1.msra.mxu0 0.0
    %4547 = vmatprep.subr.mxu0 0.0
    %4548 = vmatpush1.msra.mxu0 0.0
    %4549 = vmatprep.subr.mxu0 0.0
    %4550 = vmatpush1.msra.mxu0 0.0
    %4551 = vmatprep.subr.mxu0 0.0
    %4552 = vmatpush1.msra.mxu0 0.0
    %4553 = vmatprep.subr.mxu0 0.0
    %4554 = vmatpush1.msra.mxu0 0.0
    %4555 = vmatprep.subr.mxu0 0.0
    %4556 = vmatpush1.msra.mxu0 0.0
    %4557 = vmatprep.subr.mxu0 0.0
    %4558 = vmatpush1.msra.mxu0 0.0
    %4559 = vmatprep.subr.mxu0 0.0
    %4560 = vmatpush1.msra.mxu0 0.0
    %4561 = vmatprep.subr.mxu0 0.0
    %4562 = vmatpush1.msra.mxu0 0.0
    %4563 = vmatprep.subr.mxu0 0.0
    %4564 = vmatpush1.msra.mxu0 0.0
    %4565 = vmatprep.subr.mxu0 0.0
    %4566 = vmatpush1.msra.mxu0 0.0
    %4567 = vmatprep.subr.mxu0 0.0
    %4568 = vmatpush1.msra.mxu0 0.0
    %4569 = vmatprep.subr.mxu0 0.0
    %4570 = vmatpush1.msra.mxu0 0.0
    %4571 = vmatprep.subr.mxu0 0.0
    %4572 = vmatpush1.msra.mxu0 0.0
    %4573 = vmatprep.subr.mxu0 0.0
    %4574 = vmatpush1.msra.mxu0 0.0
    %4575 = vmatprep.subr.mxu0 0.0
    %4576 = vmatpush1.msra.mxu0 0.0
    %4577 = vmatprep.subr.mxu0 0.0
    %4578 = vmatpush1.msra.mxu0 0.0
    %4579 = vmatprep.subr.mxu0 0.0
    %4580 = vmatpush1.msra.mxu0 0.0
    %4581 = vmatprep.subr.mxu0 0.0
    %4582 = vmatpush1.msra.mxu0 0.0
    %4583 = vmatprep.subr.mxu0 0.0
    %4584 = vmatpush1.msra.mxu0 0.0
    %4585 = vmatprep.subr.mxu0 0.0
    %4586 = vmatpush1.msra.mxu0 0.0
    %4587 = vmatprep.subr.mxu0 0.0
    %4588 = vmatpush1.msra.mxu0 0.0
    %4589 = vmatprep.subr.mxu0 0.0
    %4590 = vmatpush1.msra.mxu0 0.0
    %4591 = vmatprep.mubr.f32.mxu0 0.0
    %4592 = vmatmul.mubr.f32.gmra.mrb[0].mxu0 %v1594
    %v4593 = vpop.f32.mrb[0].mxu0
    %v4594 = vadd.f32 %v4525, %v4593
    %v4595 = vpop.f32.mrb[0].mxu0
    %4596 = vmatprep.mubr.f32.mxu0 0.0
    %4597 = vmatmul.mubr.f32.gmra.mrb[0].mxu0 %v1597
    %v4598 = vpop.f32.mrb[0].mxu0
    %v4599 = vadd.f32 %v4525, %v4598
    %v4600 = vpop.f32.mrb[0].mxu0
    %4601 = vdwg.mxu0
    %s4602 = scalar_lea.vmem %s10, 32
    %v4603 = vld [vmem:[%s4602] sm:$0xff]
    %v4604 = vld [vmem:[%s4602 + $0x8] sm:$0xff]
    %v4605 = vld [vmem:[%s4602 + $0x10] sm:$0xff]
    %v4606 = vld [vmem:[%s4602 + $0x18] sm:$0xff]
    %s4607 = scalar_lea.vmem %s11, 1
    %v4608 = vld [vmem:[%s4607] sm:$0x1]
    %v4610 = vsel %vm290, %v4500, 0
    %v4613 = vsel %vm290, %v4505, 0
    %v4616 = vsel %vm290, %v4594, 0
    %v4619 = vsel %vm290, %v4599, 0
    %4621 = vmatprep.subr.mxu0 0.0
    %4622 = vmatpush1.xpose.msra.mxu0 %v4616
    %4623 = vmatprep.subr.mxu0 0.0
    %4624 = vmatpush1.xpose.msra.mxu0 %v4619
    %4625 = vmatprep.subr.mxu0 0.0
    %4626 = vmatpush1.xpose.msra.mxu0 0.0
    %4627 = vmatprep.subr.mxu0 0.0
    %4628 = vmatpush1.xpose.msra.mxu0 0.0
    %4629 = vmatprep.subr.mxu0 0.0
    %4630 = vmatpush1.xpose.msra.mxu0 0.0
    %4631 = vmatprep.subr.mxu0 0.0
    %4632 = vmatpush1.xpose.msra.mxu0 0.0
    %4633 = vmatprep.subr.mxu0 0.0
    %4634 = vmatpush1.xpose.msra.mxu0 0.0
    %4635 = vmatprep.subr.mxu0 0.0
    %4636 = vmatpush1.xpose.msra.mxu0 0.0
    %4637 = vmatprep.subr.mxu0 0.0
    %4638 = vmatpush1.xpose.msra.mxu0 0.0
    %4639 = vmatprep.subr.mxu0 0.0
    %4640 = vmatpush1.xpose.msra.mxu0 0.0
    %4641 = vmatprep.subr.mxu0 0.0
    %4642 = vmatpush1.xpose.msra.mxu0 0.0
    %4643 = vmatprep.subr.mxu0 0.0
    %4644 = vmatpush1.xpose.msra.mxu0 0.0
    %4645 = vmatprep.subr.mxu0 0.0
    %4646 = vmatpush1.xpose.msra.mxu0 0.0
    %4647 = vmatprep.subr.mxu0 0.0
    %4648 = vmatpush1.xpose.msra.mxu0 0.0
    %4649 = vmatprep.subr.mxu0 0.0
    %4650 = vmatpush1.xpose.msra.mxu0 0.0
    %4651 = vmatprep.subr.mxu0 0.0
    %4652 = vmatpush1.xpose.msra.mxu0 0.0
    %4653 = vmatprep.subr.mxu0 0.0
    %4654 = vmatpush1.xpose.msra.mxu0 0.0
    %4655 = vmatprep.subr.mxu0 0.0
    %4656 = vmatpush1.xpose.msra.mxu0 0.0
    %4657 = vmatprep.subr.mxu0 0.0
    %4658 = vmatpush1.xpose.msra.mxu0 0.0
    %4659 = vmatprep.subr.mxu0 0.0
    %4660 = vmatpush1.xpose.msra.mxu0 0.0
    %4661 = vmatprep.subr.mxu0 0.0
    %4662 = vmatpush1.xpose.msra.mxu0 0.0
    %4663 = vmatprep.subr.mxu0 0.0
    %4664 = vmatpush1.xpose.msra.mxu0 0.0
    %4665 = vmatprep.subr.mxu0 0.0
    %4666 = vmatpush1.xpose.msra.mxu0 0.0
    %4667 = vmatprep.subr.mxu0 0.0
    %4668 = vmatpush1.xpose.msra.mxu0 0.0
    %4669 = vmatprep.subr.mxu0 0.0
    %4670 = vmatpush1.xpose.msra.mxu0 0.0
    %4671 = vmatprep.subr.mxu0 0.0
    %4672 = vmatpush1.xpose.msra.mxu0 0.0
    %4673 = vmatprep.subr.mxu0 0.0
    %4674 = vmatpush1.xpose.msra.mxu0 0.0
    %4675 = vmatprep.subr.mxu0 0.0
    %4676 = vmatpush1.xpose.msra.mxu0 0.0
    %4677 = vmatprep.subr.mxu0 0.0
    %4678 = vmatpush1.xpose.msra.mxu0 0.0
    %4679 = vmatprep.subr.mxu0 0.0
    %4680 = vmatpush1.xpose.msra.mxu0 0.0
    %4681 = vmatprep.subr.mxu0 0.0
    %4682 = vmatpush1.xpose.msra.mxu0 0.0
    %4683 = vmatprep.subr.mxu0 0.0
    %4684 = vmatpush1.xpose.msra.mxu0 0.0
    %4685 = vmatprep.mubr.f32.mxu0 0.0
    %4686 = vmatmul.mubr.f32.gmra.mrb[0].mxu0 %v4610
    %v4687 = vpop.f32.mrb[0].mxu0
    %v4688 = vadd.f32 0.0, %v4687
    %v4689 = vpop.f32.mrb[0].mxu0
    %4690 = vmatprep.mubr.f32.mxu0 0.0
    %4691 = vmatmul.mubr.f32.gmra.mrb[0].mxu0 %v4613
    %v4692 = vpop.f32.mrb[0].mxu0
    %v4693 = vadd.f32 0.0, %v4692
    %v4694 = vpop.f32.mrb[0].mxu0
    %4695 = vdwg.mxu0
    %v4696 = vmul.f32 %v4688, 0.35355338
    %v4697 = vmul.f32 %v4693, 0.35355338
    %v4698 = vadd.f32 %v4696, %v139
    %v4699 = vadd.f32 %v4697, %v140
    %v4700 = vsel %vm378, %v4698, -inf
    %4701 = vmax.xlane.f32.xlu0 %v4700
    %v4702 = vpop.xlane.xlu0 %4701
    %v4703 = vsel %vm378, %v4699, -inf
    %4704 = vmax.xlane.f32.xlu0 %v4703
    %v4705 = vpop.xlane.xlu0 %4704
    %v4706 = vsub.f32 %v4698, %v4702
    %v4707 = vsub.f32 %v4699, %v4705
    %v4708 = vmul.f32 %v4706, 1.442695
    %v4709 = vpow.pop %v4708
    %v4710 = vmul.f32 %v4707, 1.442695
    %v4711 = vpow.pop %v4710
    %v4712 = vsel %vm378, %v4709, 0.0
    %4713 = vadd.xlane.f32.xlu0 %v4712
    %v4714 = vpop.xlane.xlu0 %4713
    %v4715 = vsel %vm378, %v4711, 0.0
    %4716 = vadd.xlane.f32.xlu0 %v4715
    %v4717 = vpop.xlane.xlu0 %4716
    %v4718 = vrcp.pop %v4714
    %v4719 = vrcp.pop %v4717
    %v4720 = vmul.f32 %v4709, %v4718
    %v4721 = vmul.f32 %v4711, %v4719
    %4722 = vrot.lane.b32.xlu0 %v4594, 96
    %v4723 = vpop.permute.xlu0 %4722
    %4724 = vrot.lane.b32.xlu0 %v4599, 96
    %v4725 = vpop.permute.xlu0 %4724
    %v4729 = vsel %vm378, %v4720, 0
    %v4732 = vsel %vm378, %v4721, 0
    %4734 = vmatprep.subr.mxu0 0.0
    %4735 = vmatpush1.msra.mxu0 %v4723
    %4736 = vmatprep.subr.mxu0 0.0
    %4737 = vmatpush1.msra.mxu0 %v4725
    %4738 = vmatprep.subr.mxu0 0.0
    %4739 = vmatpush1.msra.mxu0 0.0
    %4740 = vmatprep.subr.mxu0 0.0
    %4741 = vmatpush1.msra.mxu0 0.0
    %4742 = vmatprep.subr.mxu0 0.0
    %4743 = vmatpush1.msra.mxu0 0.0
    %4744 = vmatprep.subr.mxu0 0.0
    %4745 = vmatpush1.msra.mxu0 0.0
    %4746 = vmatprep.subr.mxu0 0.0
    %4747 = vmatpush1.msra.mxu0 0.0
    %4748 = vmatprep.subr.mxu0 0.0
    %4749 = vmatpush1.msra.mxu0 0.0
    %4750 = vmatprep.subr.mxu0 0.0
    %4751 = vmatpush1.msra.mxu0 0.0
    %4752 = vmatprep.subr.mxu0 0.0
    %4753 = vmatpush1.msra.mxu0 0.0
    %4754 = vmatprep.subr.mxu0 0.0
    %4755 = vmatpush1.msra.mxu0 0.0
    %4756 = vmatprep.subr.mxu0 0.0
    %4757 = vmatpush1.msra.mxu0 0.0
    %4758 = vmatprep.subr.mxu0 0.0
    %4759 = vmatpush1.msra.mxu0 0.0
    %4760 = vmatprep.subr.mxu0 0.0
    %4761 = vmatpush1.msra.mxu0 0.0
    %4762 = vmatprep.subr.mxu0 0.0
    %4763 = vmatpush1.msra.mxu0 0.0
    %4764 = vmatprep.subr.mxu0 0.0
    %4765 = vmatpush1.msra.mxu0 0.0
    %4766 = vmatprep.subr.mxu0 0.0
    %4767 = vmatpush1.msra.mxu0 0.0
    %4768 = vmatprep.subr.mxu0 0.0
    %4769 = vmatpush1.msra.mxu0 0.0
    %4770 = vmatprep.subr.mxu0 0.0
    %4771 = vmatpush1.msra.mxu0 0.0
    %4772 = vmatprep.subr.mxu0 0.0
    %4773 = vmatpush1.msra.mxu0 0.0
    %4774 = vmatprep.subr.mxu0 0.0
    %4775 = vmatpush1.msra.mxu0 0.0
    %4776 = vmatprep.subr.mxu0 0.0
    %4777 = vmatpush1.msra.mxu0 0.0
    %4778 = vmatprep.subr.mxu0 0.0
    %4779 = vmatpush1.msra.mxu0 0.0
    %4780 = vmatprep.subr.mxu0 0.0
    %4781 = vmatpush1.msra.mxu0 0.0
    %4782 = vmatprep.subr.mxu0 0.0
    %4783 = vmatpush1.msra.mxu0 0.0
    %4784 = vmatprep.subr.mxu0 0.0
    %4785 = vmatpush1.msra.mxu0 0.0
    %4786 = vmatprep.subr.mxu0 0.0
    %4787 = vmatpush1.msra.mxu0 0.0
    %4788 = vmatprep.subr.mxu0 0.0
    %4789 = vmatpush1.msra.mxu0 0.0
    %4790 = vmatprep.subr.mxu0 0.0
    %4791 = vmatpush1.msra.mxu0 0.0
    %4792 = vmatprep.subr.mxu0 0.0
    %4793 = vmatpush1.msra.mxu0 0.0
    %4794 = vmatprep.subr.mxu0 0.0
    %4795 = vmatpush1.msra.mxu0 0.0
    %4796 = vmatprep.subr.mxu0 0.0
    %4797 = vmatpush1.msra.mxu0 0.0
    %4798 = vmatprep.mubr.f32.mxu0 0.0
    %4799 = vmatmul.mubr.f32.gmra.mrb[0].mxu0 %v4729
    %v4800 = vpop.f32.mrb[0].mxu0
    %v4801 = vadd.f32 0.0, %v4800
    %v4802 = vpop.f32.mrb[0].mxu0
    %4803 = vmatprep.mubr.f32.mxu0 0.0
    %4804 = vmatmul.mubr.f32.gmra.mrb[0].mxu0 %v4732
    %v4805 = vpop.f32.mrb[0].mxu0
    %v4806 = vadd.f32 0.0, %v4805
    %v4807 = vpop.f32.mrb[0].mxu0
    %4808 = vdwg.mxu0
    %4809 = vrot.lane.b32.xlu0 %v4500, 120
    %v4810 = vpop.permute.xlu0 %4809
    %4811 = vrot.lane.b32.xlu0 %v4505, 120
    %v4812 = vpop.permute.xlu0 %4811
    %4813 = vrot.lane.b32.xlu0 %v4594, 120
    %v4814 = vpop.permute.xlu0 %4813
    %4815 = vrot.lane.b32.xlu0 %v4599, 120
    %v4816 = vpop.permute.xlu0 %4815
    %v4817 = vsel %vm290, %v4810, 0
    %v4819 = vsel %vm290, %v4812, 0
    %v4821 = vsel %vm290, %v4814, 0
    %v4823 = vsel %vm290, %v4816, 0
    %4825 = vmatprep.subr.mxu0 0.0
    %4826 = vmatpush1.xpose.msra.mxu0 %v4821
    %4827 = vmatprep.subr.mxu0 0.0
    %4828 = vmatpush1.xpose.msra.mxu0 %v4823
    %4829 = vmatprep.subr.mxu0 0.0
    %4830 = vmatpush1.xpose.msra.mxu0 0.0
    %4831 = vmatprep.subr.mxu0 0.0
    %4832 = vmatpush1.xpose.msra.mxu0 0.0
    %4833 = vmatprep.subr.mxu0 0.0
    %4834 = vmatpush1.xpose.msra.mxu0 0.0
    %4835 = vmatprep.subr.mxu0 0.0
    %4836 = vmatpush1.xpose.msra.mxu0 0.0
    %4837 = vmatprep.subr.mxu0 0.0
    %4838 = vmatpush1.xpose.msra.mxu0 0.0
    %4839 = vmatprep.subr.mxu0 0.0
    %4840 = vmatpush1.xpose.msra.mxu0 0.0
    %4841 = vmatprep.subr.mxu0 0.0
    %4842 = vmatpush1.xpose.msra.mxu0 0.0
    %4843 = vmatprep.subr.mxu0 0.0
    %4844 = vmatpush1.xpose.msra.mxu0 0.0
    %4845 = vmatprep.subr.mxu0 0.0
    %4846 = vmatpush1.xpose.msra.mxu0 0.0
    %4847 = vmatprep.subr.mxu0 0.0
    %4848 = vmatpush1.xpose.msra.mxu0 0.0
    %4849 = vmatprep.subr.mxu0 0.0
    %4850 = vmatpush1.xpose.msra.mxu0 0.0
    %4851 = vmatprep.subr.mxu0 0.0
    %4852 = vmatpush1.xpose.msra.mxu0 0.0
    %4853 = vmatprep.subr.mxu0 0.0
    %4854 = vmatpush1.xpose.msra.mxu0 0.0
    %4855 = vmatprep.subr.mxu0 0.0
    %4856 = vmatpush1.xpose.msra.mxu0 0.0
    %4857 = vmatprep.subr.mxu0 0.0
    %4858 = vmatpush1.xpose.msra.mxu0 0.0
    %4859 = vmatprep.subr.mxu0 0.0
    %4860 = vmatpush1.xpose.msra.mxu0 0.0
    %4861 = vmatprep.subr.mxu0 0.0
    %4862 = vmatpush1.xpose.msra.mxu0 0.0
    %4863 = vmatprep.subr.mxu0 0.0
    %4864 = vmatpush1.xpose.msra.mxu0 0.0
    %4865 = vmatprep.subr.mxu0 0.0
    %4866 = vmatpush1.xpose.msra.mxu0 0.0
    %4867 = vmatprep.subr.mxu0 0.0
    %4868 = vmatpush1.xpose.msra.mxu0 0.0
    %4869 = vmatprep.subr.mxu0 0.0
    %4870 = vmatpush1.xpose.msra.mxu0 0.0
    %4871 = vmatprep.subr.mxu0 0.0
    %4872 = vmatpush1.xpose.msra.mxu0 0.0
    %4873 = vmatprep.subr.mxu0 0.0
    %4874 = vmatpush1.xpose.msra.mxu0 0.0
    %4875 = vmatprep.subr.mxu0 0.0
    %4876 = vmatpush1.xpose.msra.mxu0 0.0
    %4877 = vmatprep.subr.mxu0 0.0
    %4878 = vmatpush1.xpose.msra.mxu0 0.0
    %4879 = vmatprep.subr.mxu0 0.0
    %4880 = vmatpush1.xpose.msra.mxu0 0.0
    %4881 = vmatprep.subr.mxu0 0.0
    %4882 = vmatpush1.xpose.msra.mxu0 0.0
    %4883 = vmatprep.subr.mxu0 0.0
    %4884 = vmatpush1.xpose.msra.mxu0 0.0
    %4885 = vmatprep.subr.mxu0 0.0
    %4886 = vmatpush1.xpose.msra.mxu0 0.0
    %4887 = vmatprep.subr.mxu0 0.0
    %4888 = vmatpush1.xpose.msra.mxu0 0.0
    %4889 = vmatprep.mubr.f32.mxu0 0.0
    %4890 = vmatmul.mubr.f32.gmra.mrb[0].mxu0 %v4817
    %v4891 = vpop.f32.mrb[0].mxu0
    %v4892 = vadd.f32 0.0, %v4891
    %v4893 = vpop.f32.mrb[0].mxu0
    %4894 = vmatprep.mubr.f32.mxu0 0.0
    %4895 = vmatmul.mubr.f32.gmra.mrb[0].mxu0 %v4819
    %v4896 = vpop.f32.mrb[0].mxu0
    %v4897 = vadd.f32 0.0, %v4896
    %v4898 = vpop.f32.mrb[0].mxu0
    %4899 = vdwg.mxu0
    %v4900 = vmul.f32 %v4892, 0.35355338
    %v4901 = vmul.f32 %v4897, 0.35355338
    %v4902 = vadd.f32 %v4900, %v139
    %v4903 = vadd.f32 %v4901, %v140
    %v4904 = vsel %vm378, %v4902, -inf
    %4905 = vmax.xlane.f32.xlu0 %v4904
    %v4906 = vpop.xlane.xlu0 %4905
    %v4907 = vsel %vm378, %v4903, -inf
    %4908 = vmax.xlane.f32.xlu0 %v4907
    %v4909 = vpop.xlane.xlu0 %4908
    %v4910 = vsub.f32 %v4902, %v4906
    %v4911 = vsub.f32 %v4903, %v4909
    %v4912 = vmul.f32 %v4910, 1.442695
    %v4913 = vpow.pop %v4912
    %v4914 = vmul.f32 %v4911, 1.442695
    %v4915 = vpow.pop %v4914
    %v4916 = vsel %vm378, %v4913, 0.0
    %4917 = vadd.xlane.f32.xlu0 %v4916
    %v4918 = vpop.xlane.xlu0 %4917
    %v4919 = vsel %vm378, %v4915, 0.0
    %4920 = vadd.xlane.f32.xlu0 %v4919
    %v4921 = vpop.xlane.xlu0 %4920
    %v4922 = vrcp.pop %v4918
    %v4923 = vrcp.pop %v4921
    %v4924 = vmul.f32 %v4913, %v4922
    %v4925 = vmul.f32 %v4915, %v4923
    %4926 = vrot.lane.b32.xlu0 %v4594, 88
    %v4927 = vpop.permute.xlu0 %4926
    %4928 = vrot.lane.b32.xlu0 %v4599, 88
    %v4929 = vpop.permute.xlu0 %4928
    %v4933 = vsel %vm378, %v4924, 0
    %v4936 = vsel %vm378, %v4925, 0
    %4938 = vmatprep.subr.mxu0 0.0
    %4939 = vmatpush1.msra.mxu0 %v4927
    %4940 = vmatprep.subr.mxu0 0.0
    %4941 = vmatpush1.msra.mxu0 %v4929
    %4942 = vmatprep.subr.mxu0 0.0
    %4943 = vmatpush1.msra.mxu0 0.0
    %4944 = vmatprep.subr.mxu0 0.0
    %4945 = vmatpush1.msra.mxu0 0.0
    %4946 = vmatprep.subr.mxu0 0.0
    %4947 = vmatpush1.msra.mxu0 0.0
    %4948 = vmatprep.subr.mxu0 0.0
    %4949 = vmatpush1.msra.mxu0 0.0
    %4950 = vmatprep.subr.mxu0 0.0
    %4951 = vmatpush1.msra.mxu0 0.0
    %4952 = vmatprep.subr.mxu0 0.0
    %4953 = vmatpush1.msra.mxu0 0.0
    %4954 = vmatprep.subr.mxu0 0.0
    %4955 = vmatpush1.msra.mxu0 0.0
    %4956 = vmatprep.subr.mxu0 0.0
    %4957 = vmatpush1.msra.mxu0 0.0
    %4958 = vmatprep.subr.mxu0 0.0
    %4959 = vmatpush1.msra.mxu0 0.0
    %4960 = vmatprep.subr.mxu0 0.0
    %4961 = vmatpush1.msra.mxu0 0.0
    %4962 = vmatprep.subr.mxu0 0.0
    %4963 = vmatpush1.msra.mxu0 0.0
    %4964 = vmatprep.subr.mxu0 0.0
    %4965 = vmatpush1.msra.mxu0 0.0
    %4966 = vmatprep.subr.mxu0 0.0
    %4967 = vmatpush1.msra.mxu0 0.0
    %4968 = vmatprep.subr.mxu0 0.0
    %4969 = vmatpush1.msra.mxu0 0.0
    %4970 = vmatprep.subr.mxu0 0.0
    %4971 = vmatpush1.msra.mxu0 0.0
    %4972 = vmatprep.subr.mxu0 0.0
    %4973 = vmatpush1.msra.mxu0 0.0
    %4974 = vmatprep.subr.mxu0 0.0
    %4975 = vmatpush1.msra.mxu0 0.0
    %4976 = vmatprep.subr.mxu0 0.0
    %4977 = vmatpush1.msra.mxu0 0.0
    %4978 = vmatprep.subr.mxu0 0.0
    %4979 = vmatpush1.msra.mxu0 0.0
    %4980 = vmatprep.subr.mxu0 0.0
    %4981 = vmatpush1.msra.mxu0 0.0
    %4982 = vmatprep.subr.mxu0 0.0
    %4983 = vmatpush1.msra.mxu0 0.0
    %4984 = vmatprep.subr.mxu0 0.0
    %4985 = vmatpush1.msra.mxu0 0.0
    %4986 = vmatprep.subr.mxu0 0.0
    %4987 = vmatpush1.msra.mxu0 0.0
    %4988 = vmatprep.subr.mxu0 0.0
    %4989 = vmatpush1.msra.mxu0 0.0
    %4990 = vmatprep.subr.mxu0 0.0
    %4991 = vmatpush1.msra.mxu0 0.0
    %4992 = vmatprep.subr.mxu0 0.0
    %4993 = vmatpush1.msra.mxu0 0.0
    %4994 = vmatprep.subr.mxu0 0.0
    %4995 = vmatpush1.msra.mxu0 0.0
    %4996 = vmatprep.subr.mxu0 0.0
    %4997 = vmatpush1.msra.mxu0 0.0
    %4998 = vmatprep.subr.mxu0 0.0
    %4999 = vmatpush1.msra.mxu0 0.0
    %5000 = vmatprep.subr.mxu0 0.0
    %5001 = vmatpush1.msra.mxu0 0.0
    %5002 = vmatprep.mubr.f32.mxu0 0.0
    %5003 = vmatmul.mubr.f32.gmra.mrb[0].mxu0 %v4933
    %v5004 = vpop.f32.mrb[0].mxu0
    %v5005 = vadd.f32 0.0, %v5004
    %v5006 = vpop.f32.mrb[0].mxu0
    %5007 = vmatprep.mubr.f32.mxu0 0.0
    %5008 = vmatmul.mubr.f32.gmra.mrb[0].mxu0 %v4936
    %v5009 = vpop.f32.mrb[0].mxu0
    %v5010 = vadd.f32 0.0, %v5009
    %v5011 = vpop.f32.mrb[0].mxu0
    %5012 = vdwg.mxu0
    %v5014 = vsel %vm290, %v5005, 0
    %v5017 = vsel %vm290, %v5010, 0
    %5019 = vmatprep.subr.mxu0 0.0
    %5020 = vmatpush1.msra.mxu0 %v4604
    %5021 = vmatprep.subr.mxu0 0.0
    %5022 = vmatpush1.msra.mxu0 0.0
    %5023 = vmatprep.subr.mxu0 0.0
    %5024 = vmatpush1.msra.mxu0 0.0
    %5025 = vmatprep.subr.mxu0 0.0
    %5026 = vmatpush1.msra.mxu0 0.0
    %5027 = vmatprep.subr.mxu0 0.0
    %5028 = vmatpush1.msra.mxu0 0.0
    %5029 = vmatprep.subr.mxu0 0.0
    %5030 = vmatpush1.msra.mxu0 0.0
    %5031 = vmatprep.subr.mxu0 0.0
    %5032 = vmatpush1.msra.mxu0 0.0
    %5033 = vmatprep.subr.mxu0 0.0
    %5034 = vmatpush1.msra.mxu0 0.0
    %5035 = vmatprep.subr.mxu0 0.0
    %5036 = vmatpush1.msra.mxu0 0.0
    %5037 = vmatprep.subr.mxu0 0.0
    %5038 = vmatpush1.msra.mxu0 0.0
    %5039 = vmatprep.subr.mxu0 0.0
    %5040 = vmatpush1.msra.mxu0 0.0
    %5041 = vmatprep.subr.mxu0 0.0
    %5042 = vmatpush1.msra.mxu0 0.0
    %5043 = vmatprep.subr.mxu0 0.0
    %5044 = vmatpush1.msra.mxu0 0.0
    %5045 = vmatprep.subr.mxu0 0.0
    %5046 = vmatpush1.msra.mxu0 0.0
    %5047 = vmatprep.subr.mxu0 0.0
    %5048 = vmatpush1.msra.mxu0 0.0
    %5049 = vmatprep.subr.mxu0 0.0
    %5050 = vmatpush1.msra.mxu0 0.0
    %5051 = vmatprep.subr.mxu0 0.0
    %5052 = vmatpush1.msra.mxu0 0.0
    %5053 = vmatprep.subr.mxu0 0.0
    %5054 = vmatpush1.msra.mxu0 0.0
    %5055 = vmatprep.subr.mxu0 0.0
    %5056 = vmatpush1.msra.mxu0 0.0
    %5057 = vmatprep.subr.mxu0 0.0
    %5058 = vmatpush1.msra.mxu0 0.0
    %5059 = vmatprep.subr.mxu0 0.0
    %5060 = vmatpush1.msra.mxu0 0.0
    %5061 = vmatprep.subr.mxu0 0.0
    %5062 = vmatpush1.msra.mxu0 0.0
    %5063 = vmatprep.subr.mxu0 0.0
    %5064 = vmatpush1.msra.mxu0 0.0
    %5065 = vmatprep.subr.mxu0 0.0
    %5066 = vmatpush1.msra.mxu0 0.0
    %5067 = vmatprep.subr.mxu0 0.0
    %5068 = vmatpush1.msra.mxu0 0.0
    %5069 = vmatprep.subr.mxu0 0.0
    %5070 = vmatpush1.msra.mxu0 0.0
    %5071 = vmatprep.subr.mxu0 0.0
    %5072 = vmatpush1.msra.mxu0 0.0
    %5073 = vmatprep.subr.mxu0 0.0
    %5074 = vmatpush1.msra.mxu0 0.0
    %5075 = vmatprep.subr.mxu0 0.0
    %5076 = vmatpush1.msra.mxu0 0.0
    %5077 = vmatprep.subr.mxu0 0.0
    %5078 = vmatpush1.msra.mxu0 0.0
    %5079 = vmatprep.subr.mxu0 0.0
    %5080 = vmatpush1.msra.mxu0 0.0
    %5081 = vmatprep.subr.mxu0 0.0
    %5082 = vmatpush1.msra.mxu0 0.0
    %5083 = vmatprep.mubr.f32.mxu0 0.0
    %5084 = vmatmul.mubr.f32.gmra.mrb[0].mxu0 %v5014
    %v5085 = vpop.f32.mrb[0].mxu0
    %v5086 = vadd.f32 0.0, %v5085
    %v5087 = vpop.f32.mrb[0].mxu0
    %5088 = vmatprep.mubr.f32.mxu0 0.0
    %5089 = vmatmul.mubr.f32.gmra.mrb[0].mxu0 %v5017
    %v5090 = vpop.f32.mrb[0].mxu0
    %v5091 = vadd.f32 0.0, %v5090
    %v5092 = vpop.f32.mrb[0].mxu0
    %5093 = vdwg.mxu0
    %v5095 = vsel %vm290, %v4801, 0
    %v5098 = vsel %vm290, %v4806, 0
    %5100 = vmatprep.subr.mxu0 0.0
    %5101 = vmatpush1.msra.mxu0 %v4603
    %5102 = vmatprep.subr.mxu0 0.0
    %5103 = vmatpush1.msra.mxu0 0.0
    %5104 = vmatprep.subr.mxu0 0.0
    %5105 = vmatpush1.msra.mxu0 0.0
    %5106 = vmatprep.subr.mxu0 0.0
    %5107 = vmatpush1.msra.mxu0 0.0
    %5108 = vmatprep.subr.mxu0 0.0
    %5109 = vmatpush1.msra.mxu0 0.0
    %5110 = vmatprep.subr.mxu0 0.0
    %5111 = vmatpush1.msra.mxu0 0.0
    %5112 = vmatprep.subr.mxu0 0.0
    %5113 = vmatpush1.msra.mxu0 0.0
    %5114 = vmatprep.subr.mxu0 0.0
    %5115 = vmatpush1.msra.mxu0 0.0
    %5116 = vmatprep.subr.mxu0 0.0
    %5117 = vmatpush1.msra.mxu0 0.0
    %5118 = vmatprep.subr.mxu0 0.0
    %5119 = vmatpush1.msra.mxu0 0.0
    %5120 = vmatprep.subr.mxu0 0.0
    %5121 = vmatpush1.msra.mxu0 0.0
    %5122 = vmatprep.subr.mxu0 0.0
    %5123 = vmatpush1.msra.mxu0 0.0
    %5124 = vmatprep.subr.mxu0 0.0
    %5125 = vmatpush1.msra.mxu0 0.0
    %5126 = vmatprep.subr.mxu0 0.0
    %5127 = vmatpush1.msra.mxu0 0.0
    %5128 = vmatprep.subr.mxu0 0.0
    %5129 = vmatpush1.msra.mxu0 0.0
    %5130 = vmatprep.subr.mxu0 0.0
    %5131 = vmatpush1.msra.mxu0 0.0
    %5132 = vmatprep.subr.mxu0 0.0
    %5133 = vmatpush1.msra.mxu0 0.0
    %5134 = vmatprep.subr.mxu0 0.0
    %5135 = vmatpush1.msra.mxu0 0.0
    %5136 = vmatprep.subr.mxu0 0.0
    %5137 = vmatpush1.msra.mxu0 0.0
    %5138 = vmatprep.subr.mxu0 0.0
    %5139 = vmatpush1.msra.mxu0 0.0
    %5140 = vmatprep.subr.mxu0 0.0
    %5141 = vmatpush1.msra.mxu0 0.0
    %5142 = vmatprep.subr.mxu0 0.0
    %5143 = vmatpush1.msra.mxu0 0.0
    %5144 = vmatprep.subr.mxu0 0.0
    %5145 = vmatpush1.msra.mxu0 0.0
    %5146 = vmatprep.subr.mxu0 0.0
    %5147 = vmatpush1.msra.mxu0 0.0
    %5148 = vmatprep.subr.mxu0 0.0
    %5149 = vmatpush1.msra.mxu0 0.0
    %5150 = vmatprep.subr.mxu0 0.0
    %5151 = vmatpush1.msra.mxu0 0.0
    %5152 = vmatprep.subr.mxu0 0.0
    %5153 = vmatpush1.msra.mxu0 0.0
    %5154 = vmatprep.subr.mxu0 0.0
    %5155 = vmatpush1.msra.mxu0 0.0
    %5156 = vmatprep.subr.mxu0 0.0
    %5157 = vmatpush1.msra.mxu0 0.0
    %5158 = vmatprep.subr.mxu0 0.0
    %5159 = vmatpush1.msra.mxu0 0.0
    %5160 = vmatprep.subr.mxu0 0.0
    %5161 = vmatpush1.msra.mxu0 0.0
    %5162 = vmatprep.subr.mxu0 0.0
    %5163 = vmatpush1.msra.mxu0 0.0
    %5164 = vmatprep.mubr.f32.mxu0 0.0
    %5165 = vmatmul.mubr.f32.gmra.mrb[0].mxu0 %v5095
    %v5166 = vpop.f32.mrb[0].mxu0
    %v5167 = vadd.f32 %v5086, %v5166
    %v5168 = vpop.f32.mrb[0].mxu0
    %5169 = vmatprep.mubr.f32.mxu0 0.0
    %5170 = vmatmul.mubr.f32.gmra.mrb[0].mxu0 %v5098
    %v5171 = vpop.f32.mrb[0].mxu0
    %v5172 = vadd.f32 %v5091, %v5171
    %v5173 = vpop.f32.mrb[0].mxu0
    %5174 = vdwg.mxu0
    %5175 = vrot.lane.b32.xlu0 %v4500, 112
    %v5176 = vpop.permute.xlu0 %5175
    %5177 = vrot.lane.b32.xlu0 %v4505, 112
    %v5178 = vpop.permute.xlu0 %5177
    %5179 = vrot.lane.b32.xlu0 %v4594, 112
    %v5180 = vpop.permute.xlu0 %5179
    %5181 = vrot.lane.b32.xlu0 %v4599, 112
    %v5182 = vpop.permute.xlu0 %5181
    %v5183 = vsel %vm290, %v5176, 0
    %v5185 = vsel %vm290, %v5178, 0
    %v5187 = vsel %vm290, %v5180, 0
    %v5189 = vsel %vm290, %v5182, 0
    %5191 = vmatprep.subr.mxu0 0.0
    %5192 = vmatpush1.xpose.msra.mxu0 %v5187
    %5193 = vmatprep.subr.mxu0 0.0
    %5194 = vmatpush1.xpose.msra.mxu0 %v5189
    %5195 = vmatprep.subr.mxu0 0.0
    %5196 = vmatpush1.xpose.msra.mxu0 0.0
    %5197 = vmatprep.subr.mxu0 0.0
    %5198 = vmatpush1.xpose.msra.mxu0 0.0
    %5199 = vmatprep.subr.mxu0 0.0
    %5200 = vmatpush1.xpose.msra.mxu0 0.0
    %5201 = vmatprep.subr.mxu0 0.0
    %5202 = vmatpush1.xpose.msra.mxu0 0.0
    %5203 = vmatprep.subr.mxu0 0.0
    %5204 = vmatpush1.xpose.msra.mxu0 0.0
    %5205 = vmatprep.subr.mxu0 0.0
    %5206 = vmatpush1.xpose.msra.mxu0 0.0
    %5207 = vmatprep.subr.mxu0 0.0
    %5208 = vmatpush1.xpose.msra.mxu0 0.0
    %5209 = vmatprep.subr.mxu0 0.0
    %5210 = vmatpush1.xpose.msra.mxu0 0.0
    %5211 = vmatprep.subr.mxu0 0.0
    %5212 = vmatpush1.xpose.msra.mxu0 0.0
    %5213 = vmatprep.subr.mxu0 0.0
    %5214 = vmatpush1.xpose.msra.mxu0 0.0
    %5215 = vmatprep.subr.mxu0 0.0
    %5216 = vmatpush1.xpose.msra.mxu0 0.0
    %5217 = vmatprep.subr.mxu0 0.0
    %5218 = vmatpush1.xpose.msra.mxu0 0.0
    %5219 = vmatprep.subr.mxu0 0.0
    %5220 = vmatpush1.xpose.msra.mxu0 0.0
    %5221 = vmatprep.subr.mxu0 0.0
    %5222 = vmatpush1.xpose.msra.mxu0 0.0
    %5223 = vmatprep.subr.mxu0 0.0
    %5224 = vmatpush1.xpose.msra.mxu0 0.0
    %5225 = vmatprep.subr.mxu0 0.0
    %5226 = vmatpush1.xpose.msra.mxu0 0.0
    %5227 = vmatprep.subr.mxu0 0.0
    %5228 = vmatpush1.xpose.msra.mxu0 0.0
    %5229 = vmatprep.subr.mxu0 0.0
    %5230 = vmatpush1.xpose.msra.mxu0 0.0
    %5231 = vmatprep.subr.mxu0 0.0
    %5232 = vmatpush1.xpose.msra.mxu0 0.0
    %5233 = vmatprep.subr.mxu0 0.0
    %5234 = vmatpush1.xpose.msra.mxu0 0.0
    %5235 = vmatprep.subr.mxu0 0.0
    %5236 = vmatpush1.xpose.msra.mxu0 0.0
    %5237 = vmatprep.subr.mxu0 0.0
    %5238 = vmatpush1.xpose.msra.mxu0 0.0
    %5239 = vmatprep.subr.mxu0 0.0
    %5240 = vmatpush1.xpose.msra.mxu0 0.0
    %5241 = vmatprep.subr.mxu0 0.0
    %5242 = vmatpush1.xpose.msra.mxu0 0.0
    %5243 = vmatprep.subr.mxu0 0.0
    %5244 = vmatpush1.xpose.msra.mxu0 0.0
    %5245 = vmatprep.subr.mxu0 0.0
    %5246 = vmatpush1.xpose.msra.mxu0 0.0
    %5247 = vmatprep.subr.mxu0 0.0
    %5248 = vmatpush1.xpose.msra.mxu0 0.0
    %5249 = vmatprep.subr.mxu0 0.0
    %5250 = vmatpush1.xpose.msra.mxu0 0.0
    %5251 = vmatprep.subr.mxu0 0.0
    %5252 = vmatpush1.xpose.msra.mxu0 0.0
    %5253 = vmatprep.subr.mxu0 0.0
    %5254 = vmatpush1.xpose.msra.mxu0 0.0
    %5255 = vmatprep.mubr.f32.mxu0 0.0
    %5256 = vmatmul.mubr.f32.gmra.mrb[0].mxu0 %v5183
    %v5257 = vpop.f32.mrb[0].mxu0
    %v5258 = vadd.f32 0.0, %v5257
    %v5259 = vpop.f32.mrb[0].mxu0
    %5260 = vmatprep.mubr.f32.mxu0 0.0
    %5261 = vmatmul.mubr.f32.gmra.mrb[0].mxu0 %v5185
    %v5262 = vpop.f32.mrb[0].mxu0
    %v5263 = vadd.f32 0.0, %v5262
    %v5264 = vpop.f32.mrb[0].mxu0
    %5265 = vdwg.mxu0
    %v5266 = vmul.f32 %v5258, 0.35355338
    %v5267 = vmul.f32 %v5263, 0.35355338
    %v5268 = vadd.f32 %v5266, %v139
    %v5269 = vadd.f32 %v5267, %v140
    %v5270 = vsel %vm378, %v5268, -inf
    %5271 = vmax.xlane.f32.xlu0 %v5270
    %v5272 = vpop.xlane.xlu0 %5271
    %v5273 = vsel %vm378, %v5269, -inf
    %5274 = vmax.xlane.f32.xlu0 %v5273
    %v5275 = vpop.xlane.xlu0 %5274
    %v5276 = vsub.f32 %v5268, %v5272
    %v5277 = vsub.f32 %v5269, %v5275
    %v5278 = vmul.f32 %v5276, 1.442695
    %v5279 = vpow.pop %v5278
    %v5280 = vmul.f32 %v5277, 1.442695
    %v5281 = vpow.pop %v5280
    %v5282 = vsel %vm378, %v5279, 0.0
    %5283 = vadd.xlane.f32.xlu0 %v5282
    %v5284 = vpop.xlane.xlu0 %5283
    %v5285 = vsel %vm378, %v5281, 0.0
    %5286 = vadd.xlane.f32.xlu0 %v5285
    %v5287 = vpop.xlane.xlu0 %5286
    %v5288 = vrcp.pop %v5284
    %v5289 = vrcp.pop %v5287
    %v5290 = vmul.f32 %v5279, %v5288
    %v5291 = vmul.f32 %v5281, %v5289
    %5292 = vrot.lane.b32.xlu0 %v4594, 80
    %v5293 = vpop.permute.xlu0 %5292
    %5294 = vrot.lane.b32.xlu0 %v4599, 80
    %v5295 = vpop.permute.xlu0 %5294
    %v5299 = vsel %vm378, %v5290, 0
    %v5302 = vsel %vm378, %v5291, 0
    %5304 = vmatprep.subr.mxu0 0.0
    %5305 = vmatpush1.msra.mxu0 %v5293
    %5306 = vmatprep.subr.mxu0 0.0
    %5307 = vmatpush1.msra.mxu0 %v5295
    %5308 = vmatprep.subr.mxu0 0.0
    %5309 = vmatpush1.msra.mxu0 0.0
    %5310 = vmatprep.subr.mxu0 0.0
    %5311 = vmatpush1.msra.mxu0 0.0
    %5312 = vmatprep.subr.mxu0 0.0
    %5313 = vmatpush1.msra.mxu0 0.0
    %5314 = vmatprep.subr.mxu0 0.0
    %5315 = vmatpush1.msra.mxu0 0.0
    %5316 = vmatprep.subr.mxu0 0.0
    %5317 = vmatpush1.msra.mxu0 0.0
    %5318 = vmatprep.subr.mxu0 0.0
    %5319 = vmatpush1.msra.mxu0 0.0
    %5320 = vmatprep.subr.mxu0 0.0
    %5321 = vmatpush1.msra.mxu0 0.0
    %5322 = vmatprep.subr.mxu0 0.0
    %5323 = vmatpush1.msra.mxu0 0.0
    %5324 = vmatprep.subr.mxu0 0.0
    %5325 = vmatpush1.msra.mxu0 0.0
    %5326 = vmatprep.subr.mxu0 0.0
    %5327 = vmatpush1.msra.mxu0 0.0
    %5328 = vmatprep.subr.mxu0 0.0
    %5329 = vmatpush1.msra.mxu0 0.0
    %5330 = vmatprep.subr.mxu0 0.0
    %5331 = vmatpush1.msra.mxu0 0.0
    %5332 = vmatprep.subr.mxu0 0.0
    %5333 = vmatpush1.msra.mxu0 0.0
    %5334 = vmatprep.subr.mxu0 0.0
    %5335 = vmatpush1.msra.mxu0 0.0
    %5336 = vmatprep.subr.mxu0 0.0
    %5337 = vmatpush1.msra.mxu0 0.0
    %5338 = vmatprep.subr.mxu0 0.0
    %5339 = vmatpush1.msra.mxu0 0.0
    %5340 = vmatprep.subr.mxu0 0.0
    %5341 = vmatpush1.msra.mxu0 0.0
    %5342 = vmatprep.subr.mxu0 0.0
    %5343 = vmatpush1.msra.mxu0 0.0
    %5344 = vmatprep.subr.mxu0 0.0
    %5345 = vmatpush1.msra.mxu0 0.0
    %5346 = vmatprep.subr.mxu0 0.0
    %5347 = vmatpush1.msra.mxu0 0.0
    %5348 = vmatprep.subr.mxu0 0.0
    %5349 = vmatpush1.msra.mxu0 0.0
    %5350 = vmatprep.subr.mxu0 0.0
    %5351 = vmatpush1.msra.mxu0 0.0
    %5352 = vmatprep.subr.mxu0 0.0
    %5353 = vmatpush1.msra.mxu0 0.0
    %5354 = vmatprep.subr.mxu0 0.0
    %5355 = vmatpush1.msra.mxu0 0.0
    %5356 = vmatprep.subr.mxu0 0.0
    %5357 = vmatpush1.msra.mxu0 0.0
    %5358 = vmatprep.subr.mxu0 0.0
    %5359 = vmatpush1.msra.mxu0 0.0
    %5360 = vmatprep.subr.mxu0 0.0
    %5361 = vmatpush1.msra.mxu0 0.0
    %5362 = vmatprep.subr.mxu0 0.0
    %5363 = vmatpush1.msra.mxu0 0.0
    %5364 = vmatprep.subr.mxu0 0.0
    %5365 = vmatpush1.msra.mxu0 0.0
    %5366 = vmatprep.subr.mxu0 0.0
    %5367 = vmatpush1.msra.mxu0 0.0
    %5368 = vmatprep.mubr.f32.mxu0 0.0
    %5369 = vmatmul.mubr.f32.gmra.mrb[0].mxu0 %v5299
    %v5370 = vpop.f32.mrb[0].mxu0
    %v5371 = vadd.f32 0.0, %v5370
    %v5372 = vpop.f32.mrb[0].mxu0
    %5373 = vmatprep.mubr.f32.mxu0 0.0
    %5374 = vmatmul.mubr.f32.gmra.mrb[0].mxu0 %v5302
    %v5375 = vpop.f32.mrb[0].mxu0
    %v5376 = vadd.f32 0.0, %v5375
    %v5377 = vpop.f32.mrb[0].mxu0
    %5378 = vdwg.mxu0
    %v5380 = vsel %vm290, %v5371, 0
    %v5383 = vsel %vm290, %v5376, 0
    %5385 = vmatprep.subr.mxu0 0.0
    %5386 = vmatpush1.msra.mxu0 %v4605
    %5387 = vmatprep.subr.mxu0 0.0
    %5388 = vmatpush1.msra.mxu0 0.0
    %5389 = vmatprep.subr.mxu0 0.0
    %5390 = vmatpush1.msra.mxu0 0.0
    %5391 = vmatprep.subr.mxu0 0.0
    %5392 = vmatpush1.msra.mxu0 0.0
    %5393 = vmatprep.subr.mxu0 0.0
    %5394 = vmatpush1.msra.mxu0 0.0
    %5395 = vmatprep.subr.mxu0 0.0
    %5396 = vmatpush1.msra.mxu0 0.0
    %5397 = vmatprep.subr.mxu0 0.0
    %5398 = vmatpush1.msra.mxu0 0.0
    %5399 = vmatprep.subr.mxu0 0.0
    %5400 = vmatpush1.msra.mxu0 0.0
    %5401 = vmatprep.subr.mxu0 0.0
    %5402 = vmatpush1.msra.mxu0 0.0
    %5403 = vmatprep.subr.mxu0 0.0
    %5404 = vmatpush1.msra.mxu0 0.0
    %5405 = vmatprep.subr.mxu0 0.0
    %5406 = vmatpush1.msra.mxu0 0.0
    %5407 = vmatprep.subr.mxu0 0.0
    %5408 = vmatpush1.msra.mxu0 0.0
    %5409 = vmatprep.subr.mxu0 0.0
    %5410 = vmatpush1.msra.mxu0 0.0
    %5411 = vmatprep.subr.mxu0 0.0
    %5412 = vmatpush1.msra.mxu0 0.0
    %5413 = vmatprep.subr.mxu0 0.0
    %5414 = vmatpush1.msra.mxu0 0.0
    %5415 = vmatprep.subr.mxu0 0.0
    %5416 = vmatpush1.msra.mxu0 0.0
    %5417 = vmatprep.subr.mxu0 0.0
    %5418 = vmatpush1.msra.mxu0 0.0
    %5419 = vmatprep.subr.mxu0 0.0
    %5420 = vmatpush1.msra.mxu0 0.0
    %5421 = vmatprep.subr.mxu0 0.0
    %5422 = vmatpush1.msra.mxu0 0.0
    %5423 = vmatprep.subr.mxu0 0.0
    %5424 = vmatpush1.msra.mxu0 0.0
    %5425 = vmatprep.subr.mxu0 0.0
    %5426 = vmatpush1.msra.mxu0 0.0
    %5427 = vmatprep.subr.mxu0 0.0
    %5428 = vmatpush1.msra.mxu0 0.0
    %5429 = vmatprep.subr.mxu0 0.0
    %5430 = vmatpush1.msra.mxu0 0.0
    %5431 = vmatprep.subr.mxu0 0.0
    %5432 = vmatpush1.msra.mxu0 0.0
    %5433 = vmatprep.subr.mxu0 0.0
    %5434 = vmatpush1.msra.mxu0 0.0
    %5435 = vmatprep.subr.mxu0 0.0
    %5436 = vmatpush1.msra.mxu0 0.0
    %5437 = vmatprep.subr.mxu0 0.0
    %5438 = vmatpush1.msra.mxu0 0.0
    %5439 = vmatprep.subr.mxu0 0.0
    %5440 = vmatpush1.msra.mxu0 0.0
    %5441 = vmatprep.subr.mxu0 0.0
    %5442 = vmatpush1.msra.mxu0 0.0
    %5443 = vmatprep.subr.mxu0 0.0
    %5444 = vmatpush1.msra.mxu0 0.0
    %5445 = vmatprep.subr.mxu0 0.0
    %5446 = vmatpush1.msra.mxu0 0.0
    %5447 = vmatprep.subr.mxu0 0.0
    %5448 = vmatpush1.msra.mxu0 0.0
    %5449 = vmatprep.mubr.f32.mxu0 0.0
    %5450 = vmatmul.mubr.f32.gmra.mrb[0].mxu0 %v5380
    %v5451 = vpop.f32.mrb[0].mxu0
    %v5452 = vadd.f32 0.0, %v5451
    %v5453 = vpop.f32.mrb[0].mxu0
    %5454 = vmatprep.mubr.f32.mxu0 0.0
    %5455 = vmatmul.mubr.f32.gmra.mrb[0].mxu0 %v5383
    %v5456 = vpop.f32.mrb[0].mxu0
    %v5457 = vadd.f32 0.0, %v5456
    %v5458 = vpop.f32.mrb[0].mxu0
    %5459 = vdwg.mxu0
    %v5460 = vadd.f32 %v5167, %v5452
    %v5461 = vadd.f32 %v5172, %v5457
    %5462 = vrot.lane.b32.xlu0 %v4500, 104
    %v5463 = vpop.permute.xlu0 %5462
    %5464 = vrot.lane.b32.xlu0 %v4505, 104
    %v5465 = vpop.permute.xlu0 %5464
    %5466 = vrot.lane.b32.xlu0 %v4594, 104
    %v5467 = vpop.permute.xlu0 %5466
    %5468 = vrot.lane.b32.xlu0 %v4599, 104
    %v5469 = vpop.permute.xlu0 %5468
    %v5470 = vsel %vm290, %v5463, 0
    %v5472 = vsel %vm290, %v5465, 0
    %v5474 = vsel %vm290, %v5467, 0
    %v5476 = vsel %vm290, %v5469, 0
    %5478 = vmatprep.subr.mxu0 0.0
    %5479 = vmatpush1.xpose.msra.mxu0 %v5474
    %5480 = vmatprep.subr.mxu0 0.0
    %5481 = vmatpush1.xpose.msra.mxu0 %v5476
    %5482 = vmatprep.subr.mxu0 0.0
    %5483 = vmatpush1.xpose.msra.mxu0 0.0
    %5484 = vmatprep.subr.mxu0 0.0
    %5485 = vmatpush1.xpose.msra.mxu0 0.0
    %5486 = vmatprep.subr.mxu0 0.0
    %5487 = vmatpush1.xpose.msra.mxu0 0.0
    %5488 = vmatprep.subr.mxu0 0.0
    %5489 = vmatpush1.xpose.msra.mxu0 0.0
    %5490 = vmatprep.subr.mxu0 0.0
    %5491 = vmatpush1.xpose.msra.mxu0 0.0
    %5492 = vmatprep.subr.mxu0 0.0
    %5493 = vmatpush1.xpose.msra.mxu0 0.0
    %5494 = vmatprep.subr.mxu0 0.0
    %5495 = vmatpush1.xpose.msra.mxu0 0.0
    %5496 = vmatprep.subr.mxu0 0.0
    %5497 = vmatpush1.xpose.msra.mxu0 0.0
    %5498 = vmatprep.subr.mxu0 0.0
    %5499 = vmatpush1.xpose.msra.mxu0 0.0
    %5500 = vmatprep.subr.mxu0 0.0
    %5501 = vmatpush1.xpose.msra.mxu0 0.0
    %5502 = vmatprep.subr.mxu0 0.0
    %5503 = vmatpush1.xpose.msra.mxu0 0.0
    %5504 = vmatprep.subr.mxu0 0.0
    %5505 = vmatpush1.xpose.msra.mxu0 0.0
    %5506 = vmatprep.subr.mxu0 0.0
    %5507 = vmatpush1.xpose.msra.mxu0 0.0
    %5508 = vmatprep.subr.mxu0 0.0
    %5509 = vmatpush1.xpose.msra.mxu0 0.0
    %5510 = vmatprep.subr.mxu0 0.0
    %5511 = vmatpush1.xpose.msra.mxu0 0.0
    %5512 = vmatprep.subr.mxu0 0.0
    %5513 = vmatpush1.xpose.msra.mxu0 0.0
    %5514 = vmatprep.subr.mxu0 0.0
    %5515 = vmatpush1.xpose.msra.mxu0 0.0
    %5516 = vmatprep.subr.mxu0 0.0
    %5517 = vmatpush1.xpose.msra.mxu0 0.0
    %5518 = vmatprep.subr.mxu0 0.0
    %5519 = vmatpush1.xpose.msra.mxu0 0.0
    %5520 = vmatprep.subr.mxu0 0.0
    %5521 = vmatpush1.xpose.msra.mxu0 0.0
    %5522 = vmatprep.subr.mxu0 0.0
    %5523 = vmatpush1.xpose.msra.mxu0 0.0
    %5524 = vmatprep.subr.mxu0 0.0
    %5525 = vmatpush1.xpose.msra.mxu0 0.0
    %5526 = vmatprep.subr.mxu0 0.0
    %5527 = vmatpush1.xpose.msra.mxu0 0.0
    %5528 = vmatprep.subr.mxu0 0.0
    %5529 = vmatpush1.xpose.msra.mxu0 0.0
    %5530 = vmatprep.subr.mxu0 0.0
    %5531 = vmatpush1.xpose.msra.mxu0 0.0
    %5532 = vmatprep.subr.mxu0 0.0
    %5533 = vmatpush1.xpose.msra.mxu0 0.0
    %5534 = vmatprep.subr.mxu0 0.0
    %5535 = vmatpush1.xpose.msra.mxu0 0.0
    %5536 = vmatprep.subr.mxu0 0.0
    %5537 = vmatpush1.xpose.msra.mxu0 0.0
    %5538 = vmatprep.subr.mxu0 0.0
    %5539 = vmatpush1.xpose.msra.mxu0 0.0
    %5540 = vmatprep.subr.mxu0 0.0
    %5541 = vmatpush1.xpose.msra.mxu0 0.0
    %5542 = vmatprep.mubr.f32.mxu0 0.0
    %5543 = vmatmul.mubr.f32.gmra.mrb[0].mxu0 %v5470
    %v5544 = vpop.f32.mrb[0].mxu0
    %v5545 = vadd.f32 0.0, %v5544
    %v5546 = vpop.f32.mrb[0].mxu0
    %5547 = vmatprep.mubr.f32.mxu0 0.0
    %5548 = vmatmul.mubr.f32.gmra.mrb[0].mxu0 %v5472
    %v5549 = vpop.f32.mrb[0].mxu0
    %v5550 = vadd.f32 0.0, %v5549
    %v5551 = vpop.f32.mrb[0].mxu0
    %5552 = vdwg.mxu0
    %v5553 = vmul.f32 %v5545, 0.35355338
    %v5554 = vmul.f32 %v5550, 0.35355338
    %v5555 = vadd.f32 %v5553, %v139
    %v5556 = vadd.f32 %v5554, %v140
    %v5557 = vsel %vm378, %v5555, -inf
    %5558 = vmax.xlane.f32.xlu0 %v5557
    %v5559 = vpop.xlane.xlu0 %5558
    %v5560 = vsel %vm378, %v5556, -inf
    %5561 = vmax.xlane.f32.xlu0 %v5560
    %v5562 = vpop.xlane.xlu0 %5561
    %v5563 = vsub.f32 %v5555, %v5559
    %v5564 = vsub.f32 %v5556, %v5562
    %v5565 = vmul.f32 %v5563, 1.442695
    %v5566 = vpow.pop %v5565
    %v5567 = vmul.f32 %v5564, 1.442695
    %v5568 = vpow.pop %v5567
    %v5569 = vsel %vm378, %v5566, 0.0
    %5570 = vadd.xlane.f32.xlu0 %v5569
    %v5571 = vpop.xlane.xlu0 %5570
    %v5572 = vsel %vm378, %v5568, 0.0
    %5573 = vadd.xlane.f32.xlu0 %v5572
    %v5574 = vpop.xlane.xlu0 %5573
    %v5575 = vrcp.pop %v5571
    %v5576 = vrcp.pop %v5574
    %v5577 = vmul.f32 %v5566, %v5575
    %v5578 = vmul.f32 %v5568, %v5576
    %5579 = vrot.lane.b32.xlu0 %v4594, 72
    %v5580 = vpop.permute.xlu0 %5579
    %5581 = vrot.lane.b32.xlu0 %v4599, 72
    %v5582 = vpop.permute.xlu0 %5581
    %v5586 = vsel %vm378, %v5577, 0
    %v5589 = vsel %vm378, %v5578, 0
    %5591 = vmatprep.subr.mxu0 0.0
    %5592 = vmatpush1.msra.mxu0 %v5580
    %5593 = vmatprep.subr.mxu0 0.0
    %5594 = vmatpush1.msra.mxu0 %v5582
    %5595 = vmatprep.subr.mxu0 0.0
    %5596 = vmatpush1.msra.mxu0 0.0
    %5597 = vmatprep.subr.mxu0 0.0
    %5598 = vmatpush1.msra.mxu0 0.0
    %5599 = vmatprep.subr.mxu0 0.0
    %5600 = vmatpush1.msra.mxu0 0.0
    %5601 = vmatprep.subr.mxu0 0.0
    %5602 = vmatpush1.msra.mxu0 0.0
    %5603 = vmatprep.subr.mxu0 0.0
    %5604 = vmatpush1.msra.mxu0 0.0
    %5605 = vmatprep.subr.mxu0 0.0
    %5606 = vmatpush1.msra.mxu0 0.0
    %5607 = vmatprep.subr.mxu0 0.0
    %5608 = vmatpush1.msra.mxu0 0.0
    %5609 = vmatprep.subr.mxu0 0.0
    %5610 = vmatpush1.msra.mxu0 0.0
    %5611 = vmatprep.subr.mxu0 0.0
    %5612 = vmatpush1.msra.mxu0 0.0
    %5613 = vmatprep.subr.mxu0 0.0
    %5614 = vmatpush1.msra.mxu0 0.0
    %5615 = vmatprep.subr.mxu0 0.0
    %5616 = vmatpush1.msra.mxu0 0.0
    %5617 = vmatprep.subr.mxu0 0.0
    %5618 = vmatpush1.msra.mxu0 0.0
    %5619 = vmatprep.subr.mxu0 0.0
    %5620 = vmatpush1.msra.mxu0 0.0
    %5621 = vmatprep.subr.mxu0 0.0
    %5622 = vmatpush1.msra.mxu0 0.0
    %5623 = vmatprep.subr.mxu0 0.0
    %5624 = vmatpush1.msra.mxu0 0.0
    %5625 = vmatprep.subr.mxu0 0.0
    %5626 = vmatpush1.msra.mxu0 0.0
    %5627 = vmatprep.subr.mxu0 0.0
    %5628 = vmatpush1.msra.mxu0 0.0
    %5629 = vmatprep.subr.mxu0 0.0
    %5630 = vmatpush1.msra.mxu0 0.0
    %5631 = vmatprep.subr.mxu0 0.0
    %5632 = vmatpush1.msra.mxu0 0.0
    %5633 = vmatprep.subr.mxu0 0.0
    %5634 = vmatpush1.msra.mxu0 0.0
    %5635 = vmatprep.subr.mxu0 0.0
    %5636 = vmatpush1.msra.mxu0 0.0
    %5637 = vmatprep.subr.mxu0 0.0
    %5638 = vmatpush1.msra.mxu0 0.0
    %5639 = vmatprep.subr.mxu0 0.0
    %5640 = vmatpush1.msra.mxu0 0.0
    %5641 = vmatprep.subr.mxu0 0.0
    %5642 = vmatpush1.msra.mxu0 0.0
    %5643 = vmatprep.subr.mxu0 0.0
    %5644 = vmatpush1.msra.mxu0 0.0
    %5645 = vmatprep.subr.mxu0 0.0
    %5646 = vmatpush1.msra.mxu0 0.0
    %5647 = vmatprep.subr.mxu0 0.0
    %5648 = vmatpush1.msra.mxu0 0.0
    %5649 = vmatprep.subr.mxu0 0.0
    %5650 = vmatpush1.msra.mxu0 0.0
    %5651 = vmatprep.subr.mxu0 0.0
    %5652 = vmatpush1.msra.mxu0 0.0
    %5653 = vmatprep.subr.mxu0 0.0
    %5654 = vmatpush1.msra.mxu0 0.0
    %5655 = vmatprep.mubr.f32.mxu0 0.0
    %5656 = vmatmul.mubr.f32.gmra.mrb[0].mxu0 %v5586
    %v5657 = vpop.f32.mrb[0].mxu0
    %v5658 = vadd.f32 0.0, %v5657
    %v5659 = vpop.f32.mrb[0].mxu0
    %5660 = vmatprep.mubr.f32.mxu0 0.0
    %5661 = vmatmul.mubr.f32.gmra.mrb[0].mxu0 %v5589
    %v5662 = vpop.f32.mrb[0].mxu0
    %v5663 = vadd.f32 0.0, %v5662
    %v5664 = vpop.f32.mrb[0].mxu0
    %5665 = vdwg.mxu0
    %v5667 = vsel %vm290, %v5658, 0
    %v5670 = vsel %vm290, %v5663, 0
    %5672 = vmatprep.subr.mxu0 0.0
    %5673 = vmatpush1.msra.mxu0 %v4606
    %5674 = vmatprep.subr.mxu0 0.0
    %5675 = vmatpush1.msra.mxu0 0.0
    %5676 = vmatprep.subr.mxu0 0.0
    %5677 = vmatpush1.msra.mxu0 0.0
    %5678 = vmatprep.subr.mxu0 0.0
    %5679 = vmatpush1.msra.mxu0 0.0
    %5680 = vmatprep.subr.mxu0 0.0
    %5681 = vmatpush1.msra.mxu0 0.0
    %5682 = vmatprep.subr.mxu0 0.0
    %5683 = vmatpush1.msra.mxu0 0.0
    %5684 = vmatprep.subr.mxu0 0.0
    %5685 = vmatpush1.msra.mxu0 0.0
    %5686 = vmatprep.subr.mxu0 0.0
    %5687 = vmatpush1.msra.mxu0 0.0
    %5688 = vmatprep.subr.mxu0 0.0
    %5689 = vmatpush1.msra.mxu0 0.0
    %5690 = vmatprep.subr.mxu0 0.0
    %5691 = vmatpush1.msra.mxu0 0.0
    %5692 = vmatprep.subr.mxu0 0.0
    %5693 = vmatpush1.msra.mxu0 0.0
    %5694 = vmatprep.subr.mxu0 0.0
    %5695 = vmatpush1.msra.mxu0 0.0
    %5696 = vmatprep.subr.mxu0 0.0
    %5697 = vmatpush1.msra.mxu0 0.0
    %5698 = vmatprep.subr.mxu0 0.0
    %5699 = vmatpush1.msra.mxu0 0.0
    %5700 = vmatprep.subr.mxu0 0.0
    %5701 = vmatpush1.msra.mxu0 0.0
    %5702 = vmatprep.subr.mxu0 0.0
    %5703 = vmatpush1.msra.mxu0 0.0
    %5704 = vmatprep.subr.mxu0 0.0
    %5705 = vmatpush1.msra.mxu0 0.0
    %5706 = vmatprep.subr.mxu0 0.0
    %5707 = vmatpush1.msra.mxu0 0.0
    %5708 = vmatprep.subr.mxu0 0.0
    %5709 = vmatpush1.msra.mxu0 0.0
    %5710 = vmatprep.subr.mxu0 0.0
    %5711 = vmatpush1.msra.mxu0 0.0
    %5712 = vmatprep.subr.mxu0 0.0
    %5713 = vmatpush1.msra.mxu0 0.0
    %5714 = vmatprep.subr.mxu0 0.0
    %5715 = vmatpush1.msra.mxu0 0.0
    %5716 = vmatprep.subr.mxu0 0.0
    %5717 = vmatpush1.msra.mxu0 0.0
    %5718 = vmatprep.subr.mxu0 0.0
    %5719 = vmatpush1.msra.mxu0 0.0
    %5720 = vmatprep.subr.mxu0 0.0
    %5721 = vmatpush1.msra.mxu0 0.0
    %5722 = vmatprep.subr.mxu0 0.0
    %5723 = vmatpush1.msra.mxu0 0.0
    %5724 = vmatprep.subr.mxu0 0.0
    %5725 = vmatpush1.msra.mxu0 0.0
    %5726 = vmatprep.subr.mxu0 0.0
    %5727 = vmatpush1.msra.mxu0 0.0
    %5728 = vmatprep.subr.mxu0 0.0
    %5729 = vmatpush1.msra.mxu0 0.0
    %5730 = vmatprep.subr.mxu0 0.0
    %5731 = vmatpush1.msra.mxu0 0.0
    %5732 = vmatprep.subr.mxu0 0.0
    %5733 = vmatpush1.msra.mxu0 0.0
    %5734 = vmatprep.subr.mxu0 0.0
    %5735 = vmatpush1.msra.mxu0 0.0
    %5736 = vmatprep.mubr.f32.mxu0 0.0
    %5737 = vmatmul.mubr.f32.gmra.mrb[0].mxu0 %v5667
    %v5738 = vpop.f32.mrb[0].mxu0
    %v5739 = vadd.f32 0.0, %v5738
    %v5740 = vpop.f32.mrb[0].mxu0
    %5741 = vmatprep.mubr.f32.mxu0 0.0
    %5742 = vmatmul.mubr.f32.gmra.mrb[0].mxu0 %v5670
    %v5743 = vpop.f32.mrb[0].mxu0
    %v5744 = vadd.f32 0.0, %v5743
    %v5745 = vpop.f32.mrb[0].mxu0
    %5746 = vdwg.mxu0
    %v5747 = vadd.f32 %v5460, %v5739
    %v5748 = vadd.f32 %v5461, %v5744
    %v5750 = vlaneseq
    %v5751 = vshrl.u32 %v5750, 7
    %v5752 = vsub.s32 0, %v5751
    %v5753 = vrot.slane %v4608, %v5752
    %v5755 = vadd.f32 %v5747, %v5753
    %v5756 = vadd.f32 %v5748, %v5753
    %v5757 = vadd.f32 %v4366, %v5755
    %v5758 = vadd.f32 %v4367, %v5756
    %s5759 = scalar_lea.vmem %s20, 1
    %v5760 = vld [vmem:[%s5759] sm:$0x1]
    %s5761 = scalar_lea.vmem %s21, 1
    %v5762 = vld [vmem:[%s5761] sm:$0x1]
    %v5763 = vsel %vm143, %v5757, 0.0
    %5764 = vadd.xlane.f32.xlu0 %v5763
    %v5765 = vpop.xlane.xlu0 %5764
    %v5766 = vsel %vm143, %v5758, 0.0
    %5767 = vadd.xlane.f32.xlu0 %v5766
    %v5768 = vpop.xlane.xlu0 %5767
    %v5769 = vmul.f32 %v5765, %v150
    %v5770 = vmul.f32 %v5768, %v150
    %v5771 = vsub.f32 %v5757, %v5769
    %v5772 = vsub.f32 %v5758, %v5770
    %v5773 = vmul.f32 %v5771, %v5771
    %v5774 = vmul.f32 %v5772, %v5772
    %v5775 = vsel %vm143, %v5773, 0.0
    %5776 = vadd.xlane.f32.xlu0 %v5775
    %v5777 = vpop.xlane.xlu0 %5776
    %v5778 = vsel %vm143, %v5774, 0.0
    %5779 = vadd.xlane.f32.xlu0 %v5778
    %v5780 = vpop.xlane.xlu0 %5779
    %v5781 = vmul.f32 %v5777, %v150
    %v5782 = vmul.f32 %v5780, %v150
    %v5783 = vadd.f32 %v5781, 1e-05
    %v5784 = vadd.f32 %v5782, 1e-05
    %v5785 = vrsqrt.pop %v5783
    %v5786 = vrsqrt.pop %v5784
    %v5787 = vmul.f32 %v5771, %v5785
    %v5788 = vmul.f32 %v5772, %v5786
    %v5790 = vlaneseq
    %v5791 = vshrl.u32 %v5790, 7
    %v5792 = vsub.s32 0, %v5791
    %v5793 = vrot.slane %v5760, %v5792
    %v5795 = vmul.f32 %v5787, %v5793
    %v5796 = vmul.f32 %v5788, %v5793
    %v5798 = vlaneseq
    %v5799 = vshrl.u32 %v5798, 7
    %v5800 = vsub.s32 0, %v5799
    %v5801 = vrot.slane %v5762, %v5800
    %v5803 = vadd.f32 %v5795, %v5801
    %v5804 = vadd.f32 %v5796, %v5801
    %s5805 = scalar_lea.vmem %s12, 32
    %v5806 = vld [vmem:[%s5805] sm:$0xff]
    %v5807 = vld [vmem:[%s5805 + $0x8] sm:$0xff]
    %v5808 = vld [vmem:[%s5805 + $0x10] sm:$0xff]
    %v5809 = vld [vmem:[%s5805 + $0x18] sm:$0xff]
    %s5810 = scalar_lea.vmem %s13, 1
    %v5811 = vld [vmem:[%s5810] sm:$0x1]
    %v5813 = vlaneseq
    %v5814 = vshrl.u32 %v5813, 7
    %v5815 = vsub.s32 0, %v5814
    %v5816 = vrot.slane %v5811, %v5815
    %v5819 = vsel %vm143, %v5803, 0
    %v5822 = vsel %vm143, %v5804, 0
    %5824 = vmatprep.subr.mxu0 0.0
    %5825 = vmatpush1.msra.mxu0 %v5806
    %5826 = vmatprep.subr.mxu0 0.0
    %5827 = vmatpush1.msra.mxu0 %v5807
    %5828 = vmatprep.subr.mxu0 0.0
    %5829 = vmatpush1.msra.mxu0 %v5808
    %5830 = vmatprep.subr.mxu0 0.0
    %5831 = vmatpush1.msra.mxu0 %v5809
    %5832 = vmatprep.subr.mxu0 0.0
    %5833 = vmatpush1.msra.mxu0 0.0
    %5834 = vmatprep.subr.mxu0 0.0
    %5835 = vmatpush1.msra.mxu0 0.0
    %5836 = vmatprep.subr.mxu0 0.0
    %5837 = vmatpush1.msra.mxu0 0.0
    %5838 = vmatprep.subr.mxu0 0.0
    %5839 = vmatpush1.msra.mxu0 0.0
    %5840 = vmatprep.subr.mxu0 0.0
    %5841 = vmatpush1.msra.mxu0 0.0
    %5842 = vmatprep.subr.mxu0 0.0
    %5843 = vmatpush1.msra.mxu0 0.0
    %5844 = vmatprep.subr.mxu0 0.0
    %5845 = vmatpush1.msra.mxu0 0.0
    %5846 = vmatprep.subr.mxu0 0.0
    %5847 = vmatpush1.msra.mxu0 0.0
    %5848 = vmatprep.subr.mxu0 0.0
    %5849 = vmatpush1.msra.mxu0 0.0
    %5850 = vmatprep.subr.mxu0 0.0
    %5851 = vmatpush1.msra.mxu0 0.0
    %5852 = vmatprep.subr.mxu0 0.0
    %5853 = vmatpush1.msra.mxu0 0.0
    %5854 = vmatprep.subr.mxu0 0.0
    %5855 = vmatpush1.msra.mxu0 0.0
    %5856 = vmatprep.subr.mxu0 0.0
    %5857 = vmatpush1.msra.mxu0 0.0
    %5858 = vmatprep.subr.mxu0 0.0
    %5859 = vmatpush1.msra.mxu0 0.0
    %5860 = vmatprep.subr.mxu0 0.0
    %5861 = vmatpush1.msra.mxu0 0.0
    %5862 = vmatprep.subr.mxu0 0.0
    %5863 = vmatpush1.msra.mxu0 0.0
    %5864 = vmatprep.subr.mxu0 0.0
    %5865 = vmatpush1.msra.mxu0 0.0
    %5866 = vmatprep.subr.mxu0 0.0
    %5867 = vmatpush1.msra.mxu0 0.0
    %5868 = vmatprep.subr.mxu0 0.0
    %5869 = vmatpush1.msra.mxu0 0.0
    %5870 = vmatprep.subr.mxu0 0.0
    %5871 = vmatpush1.msra.mxu0 0.0
    %5872 = vmatprep.subr.mxu0 0.0
    %5873 = vmatpush1.msra.mxu0 0.0
    %5874 = vmatprep.subr.mxu0 0.0
    %5875 = vmatpush1.msra.mxu0 0.0
    %5876 = vmatprep.subr.mxu0 0.0
    %5877 = vmatpush1.msra.mxu0 0.0
    %5878 = vmatprep.subr.mxu0 0.0
    %5879 = vmatpush1.msra.mxu0 0.0
    %5880 = vmatprep.subr.mxu0 0.0
    %5881 = vmatpush1.msra.mxu0 0.0
    %5882 = vmatprep.subr.mxu0 0.0
    %5883 = vmatpush1.msra.mxu0 0.0
    %5884 = vmatprep.subr.mxu0 0.0
    %5885 = vmatpush1.msra.mxu0 0.0
    %5886 = vmatprep.subr.mxu0 0.0
    %5887 = vmatpush1.msra.mxu0 0.0
    %5888 = vmatprep.mubr.f32.mxu0 0.0
    %5889 = vmatmul.mubr.f32.gmra.mrb[0].mxu0 %v5819
    %v5890 = vpop.f32.mrb[0].mxu0
    %v5891 = vadd.f32 %v5816, %v5890
    %v5892 = vpop.f32.mrb[0].mxu0
    %5893 = vmatprep.mubr.f32.mxu0 0.0
    %5894 = vmatmul.mubr.f32.gmra.mrb[0].mxu0 %v5822
    %v5895 = vpop.f32.mrb[0].mxu0
    %v5896 = vadd.f32 %v5816, %v5895
    %v5897 = vpop.f32.mrb[0].mxu0
    %5898 = vdwg.mxu0
    %v5899 = vmax.f32 %v5891, 0.0
    %v5900 = vmax.f32 %v5896, 0.0
    %s5901 = scalar_lea.vmem %s14, 128
    %v5902 = vld [vmem:[%s5901] sm:$0xff]
    %v5903 = vld [vmem:[%s5901 + $0x8] sm:$0xff]
    %v5904 = vld [vmem:[%s5901 + $0x10] sm:$0xff]
    %v5905 = vld [vmem:[%s5901 + $0x18] sm:$0xff]
    %v5906 = vld [vmem:[%s5901 + $0x20] sm:$0xff]
    %v5907 = vld [vmem:[%s5901 + $0x28] sm:$0xff]
    %v5908 = vld [vmem:[%s5901 + $0x30] sm:$0xff]
    %v5909 = vld [vmem:[%s5901 + $0x38] sm:$0xff]
    %v5910 = vld [vmem:[%s5901 + $0x40] sm:$0xff]
    %v5911 = vld [vmem:[%s5901 + $0x48] sm:$0xff]
    %v5912 = vld [vmem:[%s5901 + $0x50] sm:$0xff]
    %v5913 = vld [vmem:[%s5901 + $0x58] sm:$0xff]
    %v5914 = vld [vmem:[%s5901 + $0x60] sm:$0xff]
    %v5915 = vld [vmem:[%s5901 + $0x68] sm:$0xff]
    %v5916 = vld [vmem:[%s5901 + $0x70] sm:$0xff]
    %v5917 = vld [vmem:[%s5901 + $0x78] sm:$0xff]
    %5918 = vmatprep.subr.mxu0 0.0
    %5919 = vmatpush1.msra.mxu0 %v5902
    %5920 = vmatprep.subr.mxu0 0.0
    %5921 = vmatpush1.msra.mxu0 %v5903
    %5922 = vmatprep.subr.mxu0 0.0
    %5923 = vmatpush1.msra.mxu0 %v5904
    %5924 = vmatprep.subr.mxu0 0.0
    %5925 = vmatpush1.msra.mxu0 %v5905
    %5926 = vmatprep.subr.mxu0 0.0
    %5927 = vmatpush1.msra.mxu0 %v5906
    %5928 = vmatprep.subr.mxu0 0.0
    %5929 = vmatpush1.msra.mxu0 %v5907
    %5930 = vmatprep.subr.mxu0 0.0
    %5931 = vmatpush1.msra.mxu0 %v5908
    %5932 = vmatprep.subr.mxu0 0.0
    %5933 = vmatpush1.msra.mxu0 %v5909
    %5934 = vmatprep.subr.mxu0 0.0
    %5935 = vmatpush1.msra.mxu0 %v5910
    %5936 = vmatprep.subr.mxu0 0.0
    %5937 = vmatpush1.msra.mxu0 %v5911
    %5938 = vmatprep.subr.mxu0 0.0
    %5939 = vmatpush1.msra.mxu0 %v5912
    %5940 = vmatprep.subr.mxu0 0.0
    %5941 = vmatpush1.msra.mxu0 %v5913
    %5942 = vmatprep.subr.mxu0 0.0
    %5943 = vmatpush1.msra.mxu0 %v5914
    %5944 = vmatprep.subr.mxu0 0.0
    %5945 = vmatpush1.msra.mxu0 %v5915
    %5946 = vmatprep.subr.mxu0 0.0
    %5947 = vmatpush1.msra.mxu0 %v5916
    %5948 = vmatprep.subr.mxu0 0.0
    %5949 = vmatpush1.msra.mxu0 %v5917
    %5950 = vmatprep.subr.mxu0 0.0
    %5951 = vmatpush1.msra.mxu0 0.0
    %5952 = vmatprep.subr.mxu0 0.0
    %5953 = vmatpush1.msra.mxu0 0.0
    %5954 = vmatprep.subr.mxu0 0.0
    %5955 = vmatpush1.msra.mxu0 0.0
    %5956 = vmatprep.subr.mxu0 0.0
    %5957 = vmatpush1.msra.mxu0 0.0
    %5958 = vmatprep.subr.mxu0 0.0
    %5959 = vmatpush1.msra.mxu0 0.0
    %5960 = vmatprep.subr.mxu0 0.0
    %5961 = vmatpush1.msra.mxu0 0.0
    %5962 = vmatprep.subr.mxu0 0.0
    %5963 = vmatpush1.msra.mxu0 0.0
    %5964 = vmatprep.subr.mxu0 0.0
    %5965 = vmatpush1.msra.mxu0 0.0
    %5966 = vmatprep.subr.mxu0 0.0
    %5967 = vmatpush1.msra.mxu0 0.0
    %5968 = vmatprep.subr.mxu0 0.0
    %5969 = vmatpush1.msra.mxu0 0.0
    %5970 = vmatprep.subr.mxu0 0.0
    %5971 = vmatpush1.msra.mxu0 0.0
    %5972 = vmatprep.subr.mxu0 0.0
    %5973 = vmatpush1.msra.mxu0 0.0
    %5974 = vmatprep.subr.mxu0 0.0
    %5975 = vmatpush1.msra.mxu0 0.0
    %5976 = vmatprep.subr.mxu0 0.0
    %5977 = vmatpush1.msra.mxu0 0.0
    %5978 = vmatprep.subr.mxu0 0.0
    %5979 = vmatpush1.msra.mxu0 0.0
    %5980 = vmatprep.subr.mxu0 0.0
    %5981 = vmatpush1.msra.mxu0 0.0
    %5982 = vmatprep.mubr.f32.mxu0 0.0
    %5983 = vmatmul.mubr.f32.gmra.mrb[0].mxu0 %v5899
    %v5984 = vpop.f32.mrb[0].mxu0
    %v5985 = vadd.f32 0.0, %v5984
    %v5986 = vpop.f32.mrb[0].mxu0
    %5987 = vmatprep.mubr.f32.mxu0 0.0
    %5988 = vmatmul.mubr.f32.gmra.mrb[0].mxu0 %v5900
    %v5989 = vpop.f32.mrb[0].mxu0
    %v5990 = vadd.f32 0.0, %v5989
    %v5991 = vpop.f32.mrb[0].mxu0
    %5992 = vdwg.mxu0
    %v5993 = vadd.f32 %v5757, %v5985
    %v5994 = vadd.f32 %v5758, %v5990
    %s5995 = scalar_lea.vmem %s15, 1
    %v5996 = vld [vmem:[%s5995] sm:$0x1]
    %v5998 = vlaneseq
    %v5999 = vshrl.u32 %v5998, 7
    %v6000 = vsub.s32 0, %v5999
    %v6001 = vrot.slane %v5996, %v6000
    %v6003 = vadd.f32 %v5993, %v6001
    %v6004 = vadd.f32 %v5994, %v6001
    %v6005 = vld [vmem:[%s22] sm:$0x1]
    %v6006 = vld [vmem:[%s23] sm:$0x1]
    %v6007 = vsel %vm143, %v6003, 0.0
    %6008 = vadd.xlane.f32.xlu0 %v6007
    %v6009 = vpop.xlane.xlu0 %6008
    %v6010 = vsel %vm143, %v6004, 0.0
    %6011 = vadd.xlane.f32.xlu0 %v6010
    %v6012 = vpop.xlane.xlu0 %6011
    %v6013 = vmul.f32 %v6009, %v150
    %v6014 = vmul.f32 %v6012, %v150
    %v6015 = vsub.f32 %v6003, %v6013
    %v6016 = vsub.f32 %v6004, %v6014
    %v6017 = vmul.f32 %v6015, %v6015
    %v6018 = vmul.f32 %v6016, %v6016
    %v6019 = vsel %vm143, %v6017, 0.0
    %6020 = vadd.xlane.f32.xlu0 %v6019
    %v6021 = vpop.xlane.xlu0 %6020
    %v6022 = vsel %vm143, %v6018, 0.0
    %6023 = vadd.xlane.f32.xlu0 %v6022
    %v6024 = vpop.xlane.xlu0 %6023
    %v6025 = vmul.f32 %v6021, %v150
    %v6026 = vmul.f32 %v6024, %v150
    %v6027 = vadd.f32 %v6025, 1e-05
    %v6028 = vadd.f32 %v6026, 1e-05
    %v6029 = vrsqrt.pop %v6027
    %v6030 = vrsqrt.pop %v6028
    %v6031 = vmul.f32 %v6015, %v6029
    %v6032 = vmul.f32 %v6016, %v6030
    %v6034 = vlaneseq
    %v6035 = vshrl.u32 %v6034, 7
    %v6036 = vsub.s32 0, %v6035
    %v6037 = vrot.slane %v6005, %v6036
    %v6039 = vmul.f32 %v6031, %v6037
    %v6040 = vmul.f32 %v6032, %v6037
    %v6042 = vlaneseq
    %v6043 = vshrl.u32 %v6042, 7
    %v6044 = vsub.s32 0, %v6043
    %v6045 = vrot.slane %v6006, %v6044
    %v6047 = vadd.f32 %v6039, %v6045
    %v6048 = vadd.f32 %v6040, %v6045
    %6049 = vst.msk [vmem:[#allocation10] sm:$0xff] %vm143, %v6047
    %6050 = vst.msk [vmem:[#allocation10 + $0x8] sm:$0xff] %vm143, %v6048
    // Predicated region
    $region114: #{tpu_custom_call.1} parent=1 // pred_check
      _
    $region115: #{tpu_custom_call.1} parent=1 // pred_check_branch
      %6052 = sbr.rel (0) target = $region117
    $region116: #{tpu_custom_call.1} parent=1 // pred_region
      %s6054 = ssub.s32 256, 256
      %6055 = vsyncadd [#allocation4], %s6054
      %s6056 = sshll.u32 [#allocation10], 4
      %s6057 = int_to_ptr.vmem [resolvable:$true] %s6056
      %6062 = dma.vmem_to_hbm [thread:$0]  %s6057, 256, %s24, [#allocation4], 128, 128, 8
    $region117: #{tpu_custom_call.1} parent=1 // pred_fallthru
      _
    // Predicated region
    $region118: #{tpu_custom_call.1} parent=1 // pred_check
      _
    $region119: #{tpu_custom_call.1} parent=1 // pred_check_branch
      %6064 = sbr.rel (0) target = $region121
    $region120: #{tpu_custom_call.1} parent=1 // pred_region
      %6065 = dma.done [#allocation4], 256
    $region121: #{tpu_custom_call.1} parent=1 // pred_fallthru
      _
    %6066 = vsyncpa [#allocation3], 1
    %6067 = vsyncpa [#allocation6], 1
    %6068 = vsyncpa [#allocation9], 1
    %6069 = vsyncpa [#allocation4], 1

</llo_original>
